<compile_context>
chip_gen: v6e
topology: v6e:2x2x1
jax: 0.10.0
libtpu: 0.0.40
codegen_flags: <defaults>
</compile_context>

<pallas_src>
from functools import partial

import jax
import jax.numpy as jnp
import numpy as np
from jax.experimental import pallas as pl
from jax.experimental.pallas import tpu as pltpu

EPS = 1e-5


# ----------------------------------------------------------------------------
# Kernels
# ----------------------------------------------------------------------------
def _conv1x1_stats_kernel(x_ref, w_ref, z_ref, st_ref):
    """z = x @ w (bf16 operands, f32 acc); accumulate (sum, sumsq) of z."""
    i = pl.program_id(0)
    z = jnp.dot(x_ref[...].astype(jnp.bfloat16), w_ref[...],
                preferred_element_type=jnp.float32)
    z_ref[...] = z.astype(z_ref.dtype)

    s = jnp.sum(z, axis=0, keepdims=True)
    q = jnp.sum(z * z, axis=0, keepdims=True)

    @pl.when(i == 0)
    def _():
        st_ref[...] = jnp.zeros_like(st_ref)

    st_ref[...] += jnp.concatenate([s, q], axis=0)          # (2, C)


def _bn_relu_conv1x1_stats_kernel(y_ref, s_ref, t_ref, w_ref, z_ref, st_ref):
    """z = relu(y*scale+shift) @ w ; accumulate (sum, sumsq) of z."""
    i = pl.program_id(0)
    a = jnp.maximum(y_ref[...].astype(jnp.float32) * s_ref[...] + t_ref[...],
                    0.0)
    z = jnp.dot(a.astype(jnp.bfloat16), w_ref[...],
                preferred_element_type=jnp.float32)
    z_ref[...] = z.astype(z_ref.dtype)

    s = jnp.sum(z, axis=0, keepdims=True)
    q = jnp.sum(z * z, axis=0, keepdims=True)

    @pl.when(i == 0)
    def _():
        st_ref[...] = jnp.zeros_like(st_ref)

    st_ref[...] += jnp.concatenate([s, q], axis=0)          # (2, C)


def _bn_relu_conv3x3_stats_kernel(z1_ref, s_ref, t_ref, w_ref,
                                  z2_ref, st_ref, pad_ref):
    """Per image: a1 = relu(bn1(z1)); conv3x3(pad=1) as 9 accumulated tap
    matmuls from a zero-padded VMEM scratch; accumulate (sum, sumsq) of z2."""
    n = pl.program_id(0)
    _, H, W, Cp = z1_ref.shape
    Co = w_ref.shape[2]

    # Zero the padded scratch ONCE; the interior is overwritten every step and
    # the 1-wide borders (plus the sublane-alignment padding) stay zero.
    @pl.when(n == 0)
    def _():
        pad_ref[...] = jnp.zeros_like(pad_ref)

    a1 = jnp.maximum(z1_ref[0].astype(jnp.float32) * s_ref[...] + t_ref[...],
                     0.0)                                    # (H, W, Cp) f32
    pad_ref[1:H + 1, 1:W + 1, :] = a1.astype(pad_ref.dtype)

    # 9 accumulated tap matmuls (no lane-axis concat, no 9*Cp reshape).
    acc = jnp.zeros((H * W, Co), jnp.float32)
    for k in range(9):
        kh, kw = divmod(k, 3)
        tap = pad_ref[kh:kh + H, kw:kw + W, :]               # (H, W, Cp) bf16
        acc = acc + jnp.dot(tap.reshape(H * W, Cp), w_ref[k],
                            preferred_element_type=jnp.float32)

    z2_ref[...] = acc.reshape(1, H, W, Co).astype(z2_ref.dtype)

    s = jnp.sum(acc, axis=0, keepdims=True)
    q = jnp.sum(acc * acc, axis=0, keepdims=True)

    @pl.when(n == 0)
    def _():
        st_ref[...] = jnp.zeros_like(st_ref)

    st_ref[...] += jnp.concatenate([s, q], axis=0)           # (2, C)


def _bn_add_relu_kernel(z_ref, x_ref, s_ref, t_ref, o_ref):
    """Lane-dense slab: out = relu(z*scale + shift + residual)."""
    o_ref[...] = jnp.maximum(
        z_ref[...].astype(jnp.float32) * s_ref[...] + t_ref[...] + x_ref[...],
        0.0)


# ----------------------------------------------------------------------------
# Helpers
# ----------------------------------------------------------------------------
def _row_tile(rows: int, target: int) -> int:
    """Largest multiple-of-16 divisor of `rows` <= target (bf16 sublane packing).
    Falls back to the full extent when no such divisor exists (tiling disabled)."""
    best = None
    t = 16
    while t <= min(rows, target):
        if rows % t == 0:
            best = t
        t += 16
    return best if best is not None else rows


def _bn_affine(stats, count, gamma, beta):
    """Fold accumulated (sum, sumsq) into a per-channel affine (scale, shift)."""
    mu = stats[0] / count
    var = stats[1] / count - mu * mu                          # biased variance
    scale = gamma.astype(jnp.float32) * jax.lax.rsqrt(var + EPS)
    shift = beta.astype(jnp.float32) - mu * scale
    return scale.reshape(1, -1), shift.reshape(1, -1)


def _default_vmem_limit():
    """~3/4 of physical VMEM, capped at 100 MiB (96 MiB on v5e/v6e, 48 on v7x)."""
    try:
        cap = pltpu.get_tpu_info().vmem_capacity_bytes
        return int(min(100 * 1024 * 1024, (cap * 3) // 4))
    except Exception:
        return 48 * 1024 * 1024


_VMEM_LIMIT = _default_vmem_limit()


def _cparams(dims):
    return pltpu.CompilerParams(dimension_semantics=dims,
                                vmem_limit_bytes=_VMEM_LIMIT)


# ----------------------------------------------------------------------------
# Forward  (NHWC end-to-end; conv weights in PyTorch OIHW layout)
# ----------------------------------------------------------------------------
@partial(jax.jit, static_argnames=("row_tile",))
def bottleneck_forward(x_nhwc, w1, w2, w3, g1, b1, g2, b2, g3, b3, *,
                       row_tile=1024):
    f32, bf16 = jnp.float32, jnp.bfloat16
    x = x_nhwc.astype(f32)
    N, H, W, Cin = x.shape
    planes = w1.shape[0]
    Cout = w3.shape[0]
    assert Cout == Cin, "identity residual requires inplanes == planes * 4"
    NHW = N * H * W

    # Repack weights for in-kernel bf16 matmuls.
    w1k = w1[:, :, 0, 0].T.astype(bf16)                       # (Cin, planes)
    w2k = jnp.transpose(w2, (2, 3, 1, 0)).reshape(9, planes, planes).astype(bf16)
    w3k = w3[:, :, 0, 0].T.astype(bf16)                       # (planes, Cout)

    tm = _row_tile(NHW, row_tile)
    nt = NHW // tm

    # ---- pass 1: conv1 (1x1) + BN1 stats, tiled over NHW rows ----------------
    xf = x.reshape(NHW, Cin)
    z1, st1 = pl.pallas_call(
        _conv1x1_stats_kernel,
        grid=(nt,),
        in_specs=[pl.BlockSpec((tm, Cin), lambda i: (i, 0)),
                  pl.BlockSpec((Cin, planes), lambda i: (0, 0))],
        out_specs=(pl.BlockSpec((tm, planes), lambda i: (i, 0)),
                   pl.BlockSpec((2, planes), lambda i: (0, 0))),
        out_shape=(jax.ShapeDtypeStruct((NHW, planes), bf16),
                   jax.ShapeDtypeStruct((2, planes), f32)),
        compiler_params=_cparams(("arbitrary",)),
        cost_estimate=pl.CostEstimate(
            flops=2 * NHW * Cin * planes, transcendentals=0,
            bytes_accessed=4 * NHW * Cin + 2 * NHW * planes + 2 * Cin * planes),
    )(xf, w1k)
    s1, t1 = _bn_affine(st1, NHW, g1, b1)

    # ---- pass 2: BN1+ReLU -> conv2 (3x3, pad 1) + BN2 stats ------------------
    Wp = ((W + 2 + 7) // 8) * 8                 # pad scratch sublane dim to x8
    z1i = z1.reshape(N, H, W, planes)
    z2, st2 = pl.pallas_call(
        _bn_relu_conv3x3_stats_kernel,
        grid=(N,),
        in_specs=[pl.BlockSpec((1, H, W, planes), lambda n: (n, 0, 0, 0)),
                  pl.BlockSpec((1, planes), lambda n: (0, 0)),
                  pl.BlockSpec((1, planes), lambda n: (0, 0)),
                  pl.BlockSpec((9, planes, planes), lambda n: (0, 0, 0))],
        out_specs=(pl.BlockSpec((1, H, W, planes), lambda n: (n, 0, 0, 0)),
                   pl.BlockSpec((2, planes), lambda n: (0, 0))),
        out_shape=(jax.ShapeDtypeStruct((N, H, W, planes), bf16),
                   jax.ShapeDtypeStruct((2, planes), f32)),
        scratch_shapes=[pltpu.VMEM((H + 2, Wp, planes), bf16)],
        compiler_params=_cparams(("arbitrary",)),
        cost_estimate=pl.CostEstimate(
            flops=2 * NHW * 9 * planes * planes, transcendentals=0,
            bytes_accessed=2 * 2 * NHW * planes + 2 * 9 * planes * planes),
    )(z1i, s1, t1, w2k)
    s2, t2 = _bn_affine(st2, NHW, g2, b2)

    # ---- pass 3: BN2+ReLU -> conv3 (1x1) + BN3 stats -------------------------
    z2f = z2.reshape(NHW, planes)
    z3, st3 = pl.pallas_call(
        _bn_relu_conv1x1_stats_kernel,
        grid=(nt,),
        in_specs=[pl.BlockSpec((tm, planes), lambda i: (i, 0)),
                  pl.BlockSpec((1, planes), lambda i: (0, 0)),
                  pl.BlockSpec((1, planes), lambda i: (0, 0)),
                  pl.BlockSpec((planes, Cout), lambda i: (0, 0))],
        out_specs=(pl.BlockSpec((tm, Cout), lambda i: (i, 0)),
                   pl.BlockSpec((2, Cout), lambda i: (0, 0))),
        out_shape=(jax.ShapeDtypeStruct((NHW, Cout), bf16),
                   jax.ShapeDtypeStruct((2, Cout), f32)),
        compiler_params=_cparams(("arbitrary",)),
        cost_estimate=pl.CostEstimate(
            flops=2 * NHW * planes * Cout, transcendentals=0,
            bytes_accessed=2 * NHW * planes + 2 * NHW * Cout + 2 * planes * Cout),
    )(z2f, s2, t2, w3k)
    s3, t3 = _bn_affine(st3, NHW, g3, b3)

    # ---- pass 4: BN3 + residual + ReLU on a lane-dense (N*H, W*C) slab -------
    L = W * Cout
    R = N * H
    z3s = z3.reshape(R, L)
    xs = x.reshape(R, L)                       # contiguous NHWC -> free reshape
    s3w = jnp.tile(s3, (1, W))                 # per-lane scale for the slab
    t3w = jnp.tile(t3, (1, W))
    tr = _row_tile(R, row_tile)
    nr = R // tr
    out = pl.pallas_call(
        _bn_add_relu_kernel,
        grid=(nr,),
        in_specs=[pl.BlockSpec((tr, L), lambda i: (i, 0)),
                  pl.BlockSpec((tr, L), lambda i: (i, 0)),
                  pl.BlockSpec((1, L), lambda i: (0, 0)),
                  pl.BlockSpec((1, L), lambda i: (0, 0))],
        out_specs=pl.BlockSpec((tr, L), lambda i: (i, 0)),
        out_shape=jax.ShapeDtypeStruct((R, L), f32),
        compiler_params=_cparams(("parallel",)),
        cost_estimate=pl.CostEstimate(
            flops=3 * R * L, transcendentals=0,
            bytes_accessed=2 * R * L + 4 * R * L + 4 * R * L),
    )(z3s, xs, s3w, t3w)

    return out.reshape(N, H, W, Cout)          # NHWC, no transpose


# ----------------------------------------------------------------------------
# Pure-JAX reference (PyTorch training-mode forward), NHWC
# ----------------------------------------------------------------------------
def reference(x, w1, w2, w3, g1, b1, g2, b2, g3, b3):
    dn = ('NHWC', 'OIHW', 'NHWC')

    def conv(x, w, pad):
        return jax.lax.conv_general_dilated(
            x, w, window_strides=(1, 1), padding=pad, dimension_numbers=dn)

    def bn(x, g, b):
        mu = jnp.mean(x, axis=(0, 1, 2), keepdims=True)
        var = jnp.mean((x - mu) ** 2, axis=(0, 1, 2), keepdims=True)
        return (x - mu) * jax.lax.rsqrt(var + EPS) * g + b

    out = jax.nn.relu(bn(conv(x, w1, 'VALID'), g1, b1))
    out = jax.nn.relu(bn(conv(out, w2, [(1, 1), (1, 1)]), g2, b2))
    out = bn(conv(out, w3, 'VALID'), g3, b3)
    return jax.nn.relu(out + x)


if __name__ == "__main__":
    # Bottleneck(inplanes=16, planes=4, stride=1, downsample=None):
    # identity residual requires inplanes == planes * expansion.
    inplanes, planes = 16, 4
    N, H, W = 2, 16, 16

    key = jax.random.PRNGKey(0)
    ks = jax.random.split(key, 10)
    w1 = 0.1 * jax.random.normal(ks[0], (planes, inplanes, 1, 1), jnp.float32)
    w2 = 0.1 * jax.random.normal(ks[1], (planes, planes, 3, 3), jnp.float32)
    w3 = 0.1 * jax.random.normal(ks[2], (planes * 4, planes, 1, 1), jnp.float32)
    g1 = 1.0 + 0.1 * jax.random.normal(ks[3], (planes,), jnp.float32)
    b1 = 0.1 * jax.random.normal(ks[4], (planes,), jnp.float32)
    g2 = 1.0 + 0.1 * jax.random.normal(ks[5], (planes,), jnp.float32)
    b2 = 0.1 * jax.random.normal(ks[6], (planes,), jnp.float32)
    g3 = 1.0 + 0.1 * jax.random.normal(ks[7], (planes * 4,), jnp.float32)
    b3 = 0.1 * jax.random.normal(ks[8], (planes * 4,), jnp.float32)
    x = jax.random.normal(ks[9], (N, H, W, inplanes), jnp.float32)   # NHWC

    # row_tile=256 so the demo (NHW = 512 rows) exercises a multi-step grid
    # and the in-kernel stats accumulation.
    out = bottleneck_forward(x, w1, w2, w3, g1, b1, g2, b2, g3, b3, row_tile=256)
    out = jax.block_until_ready(out)

    ref = jax.block_until_ready(reference(x, w1, w2, w3, g1, b1, g2, b2, g3, b3))

    err = float(np.max(np.abs(np.asarray(out) - np.asarray(ref))))
    # bf16 intermediates through three BN stages: tolerance widened accordingly.
    if not np.allclose(np.asarray(out), np.asarray(ref), atol=5e-2, rtol=5e-2):
        raise SystemExit("MISMATCH: max abs err = %g" % err)
    print("KERNEL_OK")
</pallas_src>

<mosaic_0001>
module attributes {stable_mosaic.version = 11 : i64} {
  func.func @_conv1x1_stats_kernel(%arg0: i32, %arg1: memref<256x16xf32, #tpu.memory_space<vmem>>, %arg2: memref<16x4xbf16, #tpu.memory_space<vmem>>, %arg3: memref<256x4xbf16, #tpu.memory_space<vmem>>, %arg4: memref<2x4xf32, #tpu.memory_space<vmem>>) attributes {dimension_semantics = [#tpu.dimension_semantics<arbitrary>], iteration_bounds = array<i64: 2>, scalar_prefetch = 0 : i64, scratch_operands = 0 : i64, tpu.core_type = #tpu.core_type<tc>, window_params = [{transform_indices = @transform_0, window_bounds = array<i64: 256, 16>}, {pipeline_mode = #tpu.pipeline_mode<synchronous>, transform_indices = @transform_1, window_bounds = array<i64: 16, 4>}, {transform_indices = @transform_2, window_bounds = array<i64: 256, 4>}, {pipeline_mode = #tpu.pipeline_mode<synchronous>, transform_indices = @transform_3, window_bounds = array<i64: 2, 4>}]} {
    %c0 = arith.constant 0 : index
    %c0_0 = arith.constant 0 : index
    %0 = vector.load %arg1[%c0, %c0_0] : memref<256x16xf32, #tpu.memory_space<vmem>>, vector<256x16xf32>
    %1 = arith.truncf %0 : vector<256x16xf32> to vector<256x16xbf16>
    %c0_1 = arith.constant 0 : index
    %c0_2 = arith.constant 0 : index
    %2 = vector.load %arg2[%c0_1, %c0_2] : memref<16x4xbf16, #tpu.memory_space<vmem>>, vector<16x4xbf16>
    %cst = arith.constant dense<0.000000e+00> : vector<256x4xf32>
    %3 = tpu.matmul %1, %2, %cst {dimension_numbers = #tpu.dot_dimension_numbers<[1], [0], [0], [1], [0, 0, 1, 1], [], []>} : vector<256x16xbf16>, vector<16x4xbf16>, vector<256x4xf32> -> vector<256x4xf32>
    %4 = arith.truncf %3 : vector<256x4xf32> to vector<256x4xbf16>
    %c0_3 = arith.constant 0 : index
    %c0_4 = arith.constant 0 : index
    %5 = vector.load %arg3[%c0_3, %c0_4] : memref<256x4xbf16, #tpu.memory_space<vmem>>, vector<256x4xbf16>
    tpu.vector_store %arg3[%c0_3, %c0_4], %4 {strides = array<i32>} : memref<256x4xbf16, #tpu.memory_space<vmem>>, vector<256x4xbf16>,
    %cst_5 = arith.constant dense<0.000000e+00> : vector<4xf32>
    %6 = vector.multi_reduction <add>, %3, %cst_5 [0] : vector<256x4xf32> to vector<4xf32>
    %7 = vector.shape_cast %6 : vector<4xf32> to vector<1x4xf32>
    %8 = arith.mulf %3, %3 : vector<256x4xf32>
    %cst_6 = arith.constant dense<0.000000e+00> : vector<4xf32>
    %9 = vector.multi_reduction <add>, %8, %cst_6 [0] : vector<256x4xf32> to vector<4xf32>
    %10 = vector.shape_cast %9 : vector<4xf32> to vector<1x4xf32>
    %c0_i32 = arith.constant 0 : i32
    %11 = arith.cmpi eq, %arg0, %c0_i32 : i32
    %12 = arith.extui %11 : i1 to i32
    %c0_i32_7 = arith.constant 0 : i32
    %13 = arith.cmpi ne, %12, %c0_i32_7 : i32
    scf.if %13 {
      %cst_12 = arith.constant 0.000000e+00 : f32
      %18 = vector.broadcast %cst_12 : f32 to vector<2x4xf32>
      %c0_13 = arith.constant 0 : index
      %c0_14 = arith.constant 0 : index
      %19 = vector.load %arg4[%c0_13, %c0_14] : memref<2x4xf32, #tpu.memory_space<vmem>>, vector<2x4xf32>
      tpu.vector_store %arg4[%c0_13, %c0_14], %18 {strides = array<i32>} : memref<2x4xf32, #tpu.memory_space<vmem>>, vector<2x4xf32>,
    } else {
    }
    %c0_8 = arith.constant 0 : index
    %c0_9 = arith.constant 0 : index
    %14 = vector.load %arg4[%c0_8, %c0_9] : memref<2x4xf32, #tpu.memory_space<vmem>>, vector<2x4xf32>
    %15 = tpu.concatenate %7, %10 in 0 : vector<1x4xf32>, vector<1x4xf32> -> vector<2x4xf32>
    %16 = arith.addf %14, %15 : vector<2x4xf32>
    %c0_10 = arith.constant 0 : index
    %c0_11 = arith.constant 0 : index
    %17 = vector.load %arg4[%c0_10, %c0_11] : memref<2x4xf32, #tpu.memory_space<vmem>>, vector<2x4xf32>
    tpu.vector_store %arg4[%c0_10, %c0_11], %16 {strides = array<i32>} : memref<2x4xf32, #tpu.memory_space<vmem>>, vector<2x4xf32>,
    return
  }
  func.func @transform_0(%arg0: i32) -> (i32, i32) {
    %c0_i32 = arith.constant 0 : i32
    %c0_i32_0 = arith.constant 0 : i32
    return %arg0, %c0_i32 : i32, i32
  }
  func.func @transform_1(%arg0: i32) -> (i32, i32) {
    %c0_i32 = arith.constant 0 : i32
    %c0_i32_0 = arith.constant 0 : i32
    %c0_i32_1 = arith.constant 0 : i32
    return %c0_i32, %c0_i32_0 : i32, i32
  }
  func.func @transform_2(%arg0: i32) -> (i32, i32) {
    %c0_i32 = arith.constant 0 : i32
    %c0_i32_0 = arith.constant 0 : i32
    return %arg0, %c0_i32 : i32, i32
  }
  func.func @transform_3(%arg0: i32) -> (i32, i32) {
    %c0_i32 = arith.constant 0 : i32
    %c0_i32_0 = arith.constant 0 : i32
    %c0_i32_1 = arith.constant 0 : i32
    return %c0_i32, %c0_i32_0 : i32, i32
  }
}

module attributes {stable_mosaic.version = 11 : i64} {
  func.func @_bn_relu_conv1x1_stats_kernel(%arg0: i32, %arg1: memref<256x4xbf16, #tpu.memory_space<vmem>>, %arg2: memref<1x4xf32, #tpu.memory_space<vmem>>, %arg3: memref<1x4xf32, #tpu.memory_space<vmem>>, %arg4: memref<4x16xbf16, #tpu.memory_space<vmem>>, %arg5: memref<256x16xbf16, #tpu.memory_space<vmem>>, %arg6: memref<2x16xf32, #tpu.memory_space<vmem>>) attributes {dimension_semantics = [#tpu.dimension_semantics<arbitrary>], iteration_bounds = array<i64: 2>, scalar_prefetch = 0 : i64, scratch_operands = 0 : i64, tpu.core_type = #tpu.core_type<tc>, window_params = [{transform_indices = @transform_0, window_bounds = array<i64: 256, 4>}, {pipeline_mode = #tpu.pipeline_mode<synchronous>, transform_indices = @transform_1, window_bounds = array<i64: 1, 4>}, {pipeline_mode = #tpu.pipeline_mode<synchronous>, transform_indices = @transform_2, window_bounds = array<i64: 1, 4>}, {pipeline_mode = #tpu.pipeline_mode<synchronous>, transform_indices = @transform_3, window_bounds = array<i64: 4, 16>}, {transform_indices = @transform_4, window_bounds = array<i64: 256, 16>}, {pipeline_mode = #tpu.pipeline_mode<synchronous>, transform_indices = @transform_5, window_bounds = array<i64: 2, 16>}]} {
    %c0 = arith.constant 0 : index
    %c0_0 = arith.constant 0 : index
    %0 = vector.load %arg1[%c0, %c0_0] : memref<256x4xbf16, #tpu.memory_space<vmem>>, vector<256x4xbf16>
    %1 = arith.extf %0 : vector<256x4xbf16> to vector<256x4xf32>
    %c0_1 = arith.constant 0 : index
    %c0_2 = arith.constant 0 : index
    %2 = vector.load %arg2[%c0_1, %c0_2] : memref<1x4xf32, #tpu.memory_space<vmem>>, vector<1x4xf32>
    %3 = vector.broadcast %2 : vector<1x4xf32> to vector<256x4xf32>
    %4 = arith.mulf %1, %3 : vector<256x4xf32>
    %c0_3 = arith.constant 0 : index
    %c0_4 = arith.constant 0 : index
    %5 = vector.load %arg3[%c0_3, %c0_4] : memref<1x4xf32, #tpu.memory_space<vmem>>, vector<1x4xf32>
    %6 = vector.broadcast %5 : vector<1x4xf32> to vector<256x4xf32>
    %7 = arith.addf %4, %6 : vector<256x4xf32>
    %cst = arith.constant 0.000000e+00 : f32
    %8 = vector.broadcast %cst : f32 to vector<256x4xf32>
    %9 = arith.maximumf %7, %8 : vector<256x4xf32>
    %10 = arith.truncf %9 : vector<256x4xf32> to vector<256x4xbf16>
    %c0_5 = arith.constant 0 : index
    %c0_6 = arith.constant 0 : index
    %11 = vector.load %arg4[%c0_5, %c0_6] : memref<4x16xbf16, #tpu.memory_space<vmem>>, vector<4x16xbf16>
    %cst_7 = arith.constant dense<0.000000e+00> : vector<256x16xf32>
    %12 = tpu.matmul %10, %11, %cst_7 {dimension_numbers = #tpu.dot_dimension_numbers<[1], [0], [0], [1], [0, 0, 1, 1], [], []>} : vector<256x4xbf16>, vector<4x16xbf16>, vector<256x16xf32> -> vector<256x16xf32>
    %13 = arith.truncf %12 : vector<256x16xf32> to vector<256x16xbf16>
    %c0_8 = arith.constant 0 : index
    %c0_9 = arith.constant 0 : index
    %14 = vector.load %arg5[%c0_8, %c0_9] : memref<256x16xbf16, #tpu.memory_space<vmem>>, vector<256x16xbf16>
    tpu.vector_store %arg5[%c0_8, %c0_9], %13 {strides = array<i32>} : memref<256x16xbf16, #tpu.memory_space<vmem>>, vector<256x16xbf16>,
    %cst_10 = arith.constant dense<0.000000e+00> : vector<16xf32>
    %15 = vector.multi_reduction <add>, %12, %cst_10 [0] : vector<256x16xf32> to vector<16xf32>
    %16 = vector.shape_cast %15 : vector<16xf32> to vector<1x16xf32>
    %17 = arith.mulf %12, %12 : vector<256x16xf32>
    %cst_11 = arith.constant dense<0.000000e+00> : vector<16xf32>
    %18 = vector.multi_reduction <add>, %17, %cst_11 [0] : vector<256x16xf32> to vector<16xf32>
    %19 = vector.shape_cast %18 : vector<16xf32> to vector<1x16xf32>
    %c0_i32 = arith.constant 0 : i32
    %20 = arith.cmpi eq, %arg0, %c0_i32 : i32
    %21 = arith.extui %20 : i1 to i32
    %c0_i32_12 = arith.constant 0 : i32
    %22 = arith.cmpi ne, %21, %c0_i32_12 : i32
    scf.if %22 {
      %cst_17 = arith.constant 0.000000e+00 : f32
      %27 = vector.broadcast %cst_17 : f32 to vector<2x16xf32>
      %c0_18 = arith.constant 0 : index
      %c0_19 = arith.constant 0 : index
      %28 = vector.load %arg6[%c0_18, %c0_19] : memref<2x16xf32, #tpu.memory_space<vmem>>, vector<2x16xf32>
      tpu.vector_store %arg6[%c0_18, %c0_19], %27 {strides = array<i32>} : memref<2x16xf32, #tpu.memory_space<vmem>>, vector<2x16xf32>,
    } else {
    }
    %c0_13 = arith.constant 0 : index
    %c0_14 = arith.constant 0 : index
    %23 = vector.load %arg6[%c0_13, %c0_14] : memref<2x16xf32, #tpu.memory_space<vmem>>, vector<2x16xf32>
    %24 = tpu.concatenate %16, %19 in 0 : vector<1x16xf32>, vector<1x16xf32> -> vector<2x16xf32>
    %25 = arith.addf %23, %24 : vector<2x16xf32>
    %c0_15 = arith.constant 0 : index
    %c0_16 = arith.constant 0 : index
    %26 = vector.load %arg6[%c0_15, %c0_16] : memref<2x16xf32, #tpu.memory_space<vmem>>, vector<2x16xf32>
    tpu.vector_store %arg6[%c0_15, %c0_16], %25 {strides = array<i32>} : memref<2x16xf32, #tpu.memory_space<vmem>>, vector<2x16xf32>,
    return
  }
  func.func @transform_0(%arg0: i32) -> (i32, i32) {
    %c0_i32 = arith.constant 0 : i32
    %c0_i32_0 = arith.constant 0 : i32
    return %arg0, %c0_i32 : i32, i32
  }
  func.func @transform_1(%arg0: i32) -> (i32, i32) {
    %c0_i32 = arith.constant 0 : i32
    %c0_i32_0 = arith.constant 0 : i32
    %c0_i32_1 = arith.constant 0 : i32
    return %c0_i32, %c0_i32_0 : i32, i32
  }
  func.func @transform_2(%arg0: i32) -> (i32, i32) {
    %c0_i32 = arith.constant 0 : i32
    %c0_i32_0 = arith.constant 0 : i32
    %c0_i32_1 = arith.constant 0 : i32
    return %c0_i32, %c0_i32_0 : i32, i32
  }
  func.func @transform_3(%arg0: i32) -> (i32, i32) {
    %c0_i32 = arith.constant 0 : i32
    %c0_i32_0 = arith.constant 0 : i32
    %c0_i32_1 = arith.constant 0 : i32
    return %c0_i32, %c0_i32_0 : i32, i32
  }
  func.func @transform_4(%arg0: i32) -> (i32, i32) {
    %c0_i32 = arith.constant 0 : i32
    %c0_i32_0 = arith.constant 0 : i32
    return %arg0, %c0_i32 : i32, i32
  }
  func.func @transform_5(%arg0: i32) -> (i32, i32) {
    %c0_i32 = arith.constant 0 : i32
    %c0_i32_0 = arith.constant 0 : i32
    %c0_i32_1 = arith.constant 0 : i32
    return %c0_i32, %c0_i32_0 : i32, i32
  }
}

module attributes {stable_mosaic.version = 11 : i64} {
  func.func @_bn_relu_conv3x3_stats_kernel(%arg0: i32, %arg1: memref<1x16x16x4xbf16, #tpu.memory_space<vmem>>, %arg2: memref<1x4xf32, #tpu.memory_space<vmem>>, %arg3: memref<1x4xf32, #tpu.memory_space<vmem>>, %arg4: memref<9x4x4xbf16, #tpu.memory_space<vmem>>, %arg5: memref<1x16x16x4xbf16, #tpu.memory_space<vmem>>, %arg6: memref<2x4xf32, #tpu.memory_space<vmem>>, %arg7: memref<18x24x4xbf16, #tpu.memory_space<vmem>>) attributes {dimension_semantics = [#tpu.dimension_semantics<arbitrary>], iteration_bounds = array<i64: 2>, scalar_prefetch = 0 : i64, scratch_operands = 1 : i64, tpu.core_type = #tpu.core_type<tc>, window_params = [{transform_indices = @transform_0, window_bounds = array<i64: 1, 16, 16, 4>}, {pipeline_mode = #tpu.pipeline_mode<synchronous>, transform_indices = @transform_1, window_bounds = array<i64: 1, 4>}, {pipeline_mode = #tpu.pipeline_mode<synchronous>, transform_indices = @transform_2, window_bounds = array<i64: 1, 4>}, {pipeline_mode = #tpu.pipeline_mode<synchronous>, transform_indices = @transform_3, window_bounds = array<i64: 9, 4, 4>}, {transform_indices = @transform_4, window_bounds = array<i64: 1, 16, 16, 4>}, {pipeline_mode = #tpu.pipeline_mode<synchronous>, transform_indices = @transform_5, window_bounds = array<i64: 2, 4>}]} {
    %c0_i32 = arith.constant 0 : i32
    %0 = arith.cmpi eq, %arg0, %c0_i32 : i32
    %1 = arith.extui %0 : i1 to i32
    %c0_i32_0 = arith.constant 0 : i32
    %2 = arith.cmpi ne, %1, %c0_i32_0 : i32
    scf.if %2 {
      %cst_79 = arith.constant 0.000000e+00 : bf16
      %88 = vector.broadcast %cst_79 : bf16 to vector<18x24x4xbf16>
      %c0_80 = arith.constant 0 : index
      %c0_81 = arith.constant 0 : index
      %c0_82 = arith.constant 0 : index
      %89 = vector.load %arg7[%c0_80, %c0_81, %c0_82] : memref<18x24x4xbf16, #tpu.memory_space<vmem>>, vector<18x24x4xbf16>
      tpu.vector_store %arg7[%c0_80, %c0_81, %c0_82], %88 {strides = array<i32>} : memref<18x24x4xbf16, #tpu.memory_space<vmem>>, vector<18x24x4xbf16>,
    } else {
    }
    %c0 = arith.constant 0 : index
    %c0_1 = arith.constant 0 : index
    %c0_2 = arith.constant 0 : index
    %c0_3 = arith.constant 0 : index
    %3 = vector.load %arg1[%c0, %c0_1, %c0_2, %c0_3] : memref<1x16x16x4xbf16, #tpu.memory_space<vmem>>, vector<1x16x16x4xbf16>
    %4 = vector.shape_cast %3 : vector<1x16x16x4xbf16> to vector<16x16x4xbf16>
    %5 = arith.extf %4 : vector<16x16x4xbf16> to vector<16x16x4xf32>
    %c0_4 = arith.constant 0 : index
    %c0_5 = arith.constant 0 : index
    %6 = vector.load %arg2[%c0_4, %c0_5] : memref<1x4xf32, #tpu.memory_space<vmem>>, vector<1x4xf32>
    %7 = vector.shape_cast %6 : vector<1x4xf32> to vector<1x1x4xf32>
    %8 = vector.broadcast %7 : vector<1x1x4xf32> to vector<16x16x4xf32>
    %9 = arith.mulf %5, %8 : vector<16x16x4xf32>
    %c0_6 = arith.constant 0 : index
    %c0_7 = arith.constant 0 : index
    %10 = vector.load %arg3[%c0_6, %c0_7] : memref<1x4xf32, #tpu.memory_space<vmem>>, vector<1x4xf32>
    %11 = vector.shape_cast %10 : vector<1x4xf32> to vector<1x1x4xf32>
    %12 = vector.broadcast %11 : vector<1x1x4xf32> to vector<16x16x4xf32>
    %13 = arith.addf %9, %12 : vector<16x16x4xf32>
    %cst = arith.constant 0.000000e+00 : f32
    %14 = vector.broadcast %cst : f32 to vector<16x16x4xf32>
    %15 = arith.maximumf %13, %14 : vector<16x16x4xf32>
    %16 = arith.truncf %15 : vector<16x16x4xf32> to vector<16x16x4xbf16>
    %c1 = arith.constant 1 : index
    %c1_8 = arith.constant 1 : index
    %c0_9 = arith.constant 0 : index
    %17 = vector.load %arg7[%c1, %c1_8, %c0_9] : memref<18x24x4xbf16, #tpu.memory_space<vmem>>, vector<16x16x4xbf16>
    tpu.vector_store %arg7[%c1, %c1_8, %c0_9], %16 {strides = array<i32>} : memref<18x24x4xbf16, #tpu.memory_space<vmem>>, vector<16x16x4xbf16>,
    %cst_10 = arith.constant 0.000000e+00 : f32
    %18 = vector.broadcast %cst_10 : f32 to vector<256x4xf32>
    %c0_11 = arith.constant 0 : index
    %c0_12 = arith.constant 0 : index
    %c0_13 = arith.constant 0 : index
    %19 = vector.load %arg7[%c0_11, %c0_12, %c0_13] : memref<18x24x4xbf16, #tpu.memory_space<vmem>>, vector<16x16x4xbf16>
    %20 = vector.shape_cast %19 : vector<16x16x4xbf16> to vector<256x4xbf16>
    %c0_14 = arith.constant 0 : index
    %c0_15 = arith.constant 0 : index
    %c0_16 = arith.constant 0 : index
    %21 = vector.load %arg4[%c0_14, %c0_15, %c0_16] : memref<9x4x4xbf16, #tpu.memory_space<vmem>>, vector<1x4x4xbf16>
    %22 = vector.shape_cast %21 : vector<1x4x4xbf16> to vector<4x4xbf16>
    %cst_17 = arith.constant dense<0.000000e+00> : vector<256x4xf32>
    %23 = tpu.matmul %20, %22, %cst_17 {dimension_numbers = #tpu.dot_dimension_numbers<[1], [0], [0], [1], [0, 0, 1, 1], [], []>} : vector<256x4xbf16>, vector<4x4xbf16>, vector<256x4xf32> -> vector<256x4xf32>
    %24 = arith.addf %18, %23 : vector<256x4xf32>
    %c0_18 = arith.constant 0 : index
    %c1_19 = arith.constant 1 : index
    %c0_20 = arith.constant 0 : index
    %25 = vector.load %arg7[%c0_18, %c1_19, %c0_20] : memref<18x24x4xbf16, #tpu.memory_space<vmem>>, vector<16x16x4xbf16>
    %26 = vector.shape_cast %25 : vector<16x16x4xbf16> to vector<256x4xbf16>
    %c1_21 = arith.constant 1 : index
    %c0_22 = arith.constant 0 : index
    %c0_23 = arith.constant 0 : index
    %27 = vector.load %arg4[%c1_21, %c0_22, %c0_23] : memref<9x4x4xbf16, #tpu.memory_space<vmem>>, vector<1x4x4xbf16>
    %28 = vector.shape_cast %27 : vector<1x4x4xbf16> to vector<4x4xbf16>
    %cst_24 = arith.constant dense<0.000000e+00> : vector<256x4xf32>
    %29 = tpu.matmul %26, %28, %cst_24 {dimension_numbers = #tpu.dot_dimension_numbers<[1], [0], [0], [1], [0, 0, 1, 1], [], []>} : vector<256x4xbf16>, vector<4x4xbf16>, vector<256x4xf32> -> vector<256x4xf32>
    %30 = arith.addf %24, %29 : vector<256x4xf32>
    %c0_25 = arith.constant 0 : index
    %c2 = arith.constant 2 : index
    %c0_26 = arith.constant 0 : index
    %31 = vector.load %arg7[%c0_25, %c2, %c0_26] : memref<18x24x4xbf16, #tpu.memory_space<vmem>>, vector<16x16x4xbf16>
    %32 = vector.shape_cast %31 : vector<16x16x4xbf16> to vector<256x4xbf16>
    %c2_27 = arith.constant 2 : index
    %c0_28 = arith.constant 0 : index
    %c0_29 = arith.constant 0 : index
    %33 = vector.load %arg4[%c2_27, %c0_28, %c0_29] : memref<9x4x4xbf16, #tpu.memory_space<vmem>>, vector<1x4x4xbf16>
    %34 = vector.shape_cast %33 : vector<1x4x4xbf16> to vector<4x4xbf16>
    %cst_30 = arith.constant dense<0.000000e+00> : vector<256x4xf32>
    %35 = tpu.matmul %32, %34, %cst_30 {dimension_numbers = #tpu.dot_dimension_numbers<[1], [0], [0], [1], [0, 0, 1, 1], [], []>} : vector<256x4xbf16>, vector<4x4xbf16>, vector<256x4xf32> -> vector<256x4xf32>
    %36 = arith.addf %30, %35 : vector<256x4xf32>
    %c1_31 = arith.constant 1 : index
    %c0_32 = arith.constant 0 : index
    %c0_33 = arith.constant 0 : index
    %37 = vector.load %arg7[%c1_31, %c0_32, %c0_33] : memref<18x24x4xbf16, #tpu.memory_space<vmem>>, vector<16x16x4xbf16>
    %38 = vector.shape_cast %37 : vector<16x16x4xbf16> to vector<256x4xbf16>
    %c3 = arith.constant 3 : index
    %c0_34 = arith.constant 0 : index
    %c0_35 = arith.constant 0 : index
    %39 = vector.load %arg4[%c3, %c0_34, %c0_35] : memref<9x4x4xbf16, #tpu.memory_space<vmem>>, vector<1x4x4xbf16>
    %40 = vector.shape_cast %39 : vector<1x4x4xbf16> to vector<4x4xbf16>
    %cst_36 = arith.constant dense<0.000000e+00> : vector<256x4xf32>
    %41 = tpu.matmul %38, %40, %cst_36 {dimension_numbers = #tpu.dot_dimension_numbers<[1], [0], [0], [1], [0, 0, 1, 1], [], []>} : vector<256x4xbf16>, vector<4x4xbf16>, vector<256x4xf32> -> vector<256x4xf32>
    %42 = arith.addf %36, %41 : vector<256x4xf32>
    %c1_37 = arith.constant 1 : index
    %c1_38 = arith.constant 1 : index
    %c0_39 = arith.constant 0 : index
    %43 = vector.load %arg7[%c1_37, %c1_38, %c0_39] : memref<18x24x4xbf16, #tpu.memory_space<vmem>>, vector<16x16x4xbf16>
    %44 = vector.shape_cast %43 : vector<16x16x4xbf16> to vector<256x4xbf16>
    %c4 = arith.constant 4 : index
    %c0_40 = arith.constant 0 : index
    %c0_41 = arith.constant 0 : index
    %45 = vector.load %arg4[%c4, %c0_40, %c0_41] : memref<9x4x4xbf16, #tpu.memory_space<vmem>>, vector<1x4x4xbf16>
    %46 = vector.shape_cast %45 : vector<1x4x4xbf16> to vector<4x4xbf16>
    %cst_42 = arith.constant dense<0.000000e+00> : vector<256x4xf32>
    %47 = tpu.matmul %44, %46, %cst_42 {dimension_numbers = #tpu.dot_dimension_numbers<[1], [0], [0], [1], [0, 0, 1, 1], [], []>} : vector<256x4xbf16>, vector<4x4xbf16>, vector<256x4xf32> -> vector<256x4xf32>
    %48 = arith.addf %42, %47 : vector<256x4xf32>
    %c1_43 = arith.constant 1 : index
    %c2_44 = arith.constant 2 : index
    %c0_45 = arith.constant 0 : index
    %49 = vector.load %arg7[%c1_43, %c2_44, %c0_45] : memref<18x24x4xbf16, #tpu.memory_space<vmem>>, vector<16x16x4xbf16>
    %50 = vector.shape_cast %49 : vector<16x16x4xbf16> to vector<256x4xbf16>
    %c5 = arith.constant 5 : index
    %c0_46 = arith.constant 0 : index
    %c0_47 = arith.constant 0 : index
    %51 = vector.load %arg4[%c5, %c0_46, %c0_47] : memref<9x4x4xbf16, #tpu.memory_space<vmem>>, vector<1x4x4xbf16>
    %52 = vector.shape_cast %51 : vector<1x4x4xbf16> to vector<4x4xbf16>
    %cst_48 = arith.constant dense<0.000000e+00> : vector<256x4xf32>
    %53 = tpu.matmul %50, %52, %cst_48 {dimension_numbers = #tpu.dot_dimension_numbers<[1], [0], [0], [1], [0, 0, 1, 1], [], []>} : vector<256x4xbf16>, vector<4x4xbf16>, vector<256x4xf32> -> vector<256x4xf32>
    %54 = arith.addf %48, %53 : vector<256x4xf32>
    %c2_49 = arith.constant 2 : index
    %c0_50 = arith.constant 0 : index
    %c0_51 = arith.constant 0 : index
    %55 = vector.load %arg7[%c2_49, %c0_50, %c0_51] : memref<18x24x4xbf16, #tpu.memory_space<vmem>>, vector<16x16x4xbf16>
    %56 = vector.shape_cast %55 : vector<16x16x4xbf16> to vector<256x4xbf16>
    %c6 = arith.constant 6 : index
    %c0_52 = arith.constant 0 : index
    %c0_53 = arith.constant 0 : index
    %57 = vector.load %arg4[%c6, %c0_52, %c0_53] : memref<9x4x4xbf16, #tpu.memory_space<vmem>>, vector<1x4x4xbf16>
    %58 = vector.shape_cast %57 : vector<1x4x4xbf16> to vector<4x4xbf16>
    %cst_54 = arith.constant dense<0.000000e+00> : vector<256x4xf32>
    %59 = tpu.matmul %56, %58, %cst_54 {dimension_numbers = #tpu.dot_dimension_numbers<[1], [0], [0], [1], [0, 0, 1, 1], [], []>} : vector<256x4xbf16>, vector<4x4xbf16>, vector<256x4xf32> -> vector<256x4xf32>
    %60 = arith.addf %54, %59 : vector<256x4xf32>
    %c2_55 = arith.constant 2 : index
    %c1_56 = arith.constant 1 : index
    %c0_57 = arith.constant 0 : index
    %61 = vector.load %arg7[%c2_55, %c1_56, %c0_57] : memref<18x24x4xbf16, #tpu.memory_space<vmem>>, vector<16x16x4xbf16>
    %62 = vector.shape_cast %61 : vector<16x16x4xbf16> to vector<256x4xbf16>
    %c7 = arith.constant 7 : index
    %c0_58 = arith.constant 0 : index
    %c0_59 = arith.constant 0 : index
    %63 = vector.load %arg4[%c7, %c0_58, %c0_59] : memref<9x4x4xbf16, #tpu.memory_space<vmem>>, vector<1x4x4xbf16>
    %64 = vector.shape_cast %63 : vector<1x4x4xbf16> to vector<4x4xbf16>
    %cst_60 = arith.constant dense<0.000000e+00> : vector<256x4xf32>
    %65 = tpu.matmul %62, %64, %cst_60 {dimension_numbers = #tpu.dot_dimension_numbers<[1], [0], [0], [1], [0, 0, 1, 1], [], []>} : vector<256x4xbf16>, vector<4x4xbf16>, vector<256x4xf32> -> vector<256x4xf32>
    %66 = arith.addf %60, %65 : vector<256x4xf32>
    %c2_61 = arith.constant 2 : index
    %c2_62 = arith.constant 2 : index
    %c0_63 = arith.constant 0 : index
    %67 = vector.load %arg7[%c2_61, %c2_62, %c0_63] : memref<18x24x4xbf16, #tpu.memory_space<vmem>>, vector<16x16x4xbf16>
    %68 = vector.shape_cast %67 : vector<16x16x4xbf16> to vector<256x4xbf16>
    %c8 = arith.constant 8 : index
    %c0_64 = arith.constant 0 : index
    %c0_65 = arith.constant 0 : index
    %69 = vector.load %arg4[%c8, %c0_64, %c0_65] : memref<9x4x4xbf16, #tpu.memory_space<vmem>>, vector<1x4x4xbf16>
    %70 = vector.shape_cast %69 : vector<1x4x4xbf16> to vector<4x4xbf16>
    %cst_66 = arith.constant dense<0.000000e+00> : vector<256x4xf32>
    %71 = tpu.matmul %68, %70, %cst_66 {dimension_numbers = #tpu.dot_dimension_numbers<[1], [0], [0], [1], [0, 0, 1, 1], [], []>} : vector<256x4xbf16>, vector<4x4xbf16>, vector<256x4xf32> -> vector<256x4xf32>
    %72 = arith.addf %66, %71 : vector<256x4xf32>
    %73 = vector.shape_cast %72 : vector<256x4xf32> to vector<1x16x16x4xf32>
    %74 = arith.truncf %73 : vector<1x16x16x4xf32> to vector<1x16x16x4xbf16>
    %c0_67 = arith.constant 0 : index
    %c0_68 = arith.constant 0 : index
    %c0_69 = arith.constant 0 : index
    %c0_70 = arith.constant 0 : index
    %75 = vector.load %arg5[%c0_67, %c0_68, %c0_69, %c0_70] : memref<1x16x16x4xbf16, #tpu.memory_space<vmem>>, vector<1x16x16x4xbf16>
    tpu.vector_store %arg5[%c0_67, %c0_68, %c0_69, %c0_70], %74 {strides = array<i32>} : memref<1x16x16x4xbf16, #tpu.memory_space<vmem>>, vector<1x16x16x4xbf16>,
    %cst_71 = arith.constant dense<0.000000e+00> : vector<4xf32>
    %76 = vector.multi_reduction <add>, %72, %cst_71 [0] : vector<256x4xf32> to vector<4xf32>
    %77 = vector.shape_cast %76 : vector<4xf32> to vector<1x4xf32>
    %78 = arith.mulf %72, %72 : vector<256x4xf32>
    %cst_72 = arith.constant dense<0.000000e+00> : vector<4xf32>
    %79 = vector.multi_reduction <add>, %78, %cst_72 [0] : vector<256x4xf32> to vector<4xf32>
    %80 = vector.shape_cast %79 : vector<4xf32> to vector<1x4xf32>
    %c0_i32_73 = arith.constant 0 : i32
    %81 = arith.cmpi eq, %arg0, %c0_i32_73 : i32
    %82 = arith.extui %81 : i1 to i32
    %c0_i32_74 = arith.constant 0 : i32
    %83 = arith.cmpi ne, %82, %c0_i32_74 : i32
    scf.if %83 {
      %cst_79 = arith.constant 0.000000e+00 : f32
      %88 = vector.broadcast %cst_79 : f32 to vector<2x4xf32>
      %c0_80 = arith.constant 0 : index
      %c0_81 = arith.constant 0 : index
      %89 = vector.load %arg6[%c0_80, %c0_81] : memref<2x4xf32, #tpu.memory_space<vmem>>, vector<2x4xf32>
      tpu.vector_store %arg6[%c0_80, %c0_81], %88 {strides = array<i32>} : memref<2x4xf32, #tpu.memory_space<vmem>>, vector<2x4xf32>,
    } else {
    }
    %c0_75 = arith.constant 0 : index
    %c0_76 = arith.constant 0 : index
    %84 = vector.load %arg6[%c0_75, %c0_76] : memref<2x4xf32, #tpu.memory_space<vmem>>, vector<2x4xf32>
    %85 = tpu.concatenate %77, %80 in 0 : vector<1x4xf32>, vector<1x4xf32> -> vector<2x4xf32>
    %86 = arith.addf %84, %85 : vector<2x4xf32>
    %c0_77 = arith.constant 0 : index
    %c0_78 = arith.constant 0 : index
    %87 = vector.load %arg6[%c0_77, %c0_78] : memref<2x4xf32, #tpu.memory_space<vmem>>, vector<2x4xf32>
    tpu.vector_store %arg6[%c0_77, %c0_78], %86 {strides = array<i32>} : memref<2x4xf32, #tpu.memory_space<vmem>>, vector<2x4xf32>,
    return
  }
  func.func @transform_0(%arg0: i32) -> (i32, i32, i32, i32) {
    %c0_i32 = arith.constant 0 : i32
    %c0_i32_0 = arith.constant 0 : i32
    %c0_i32_1 = arith.constant 0 : i32
    %c0_i32_2 = arith.constant 0 : i32
    return %arg0, %c0_i32, %c0_i32_0, %c0_i32_1 : i32, i32, i32, i32
  }
  func.func @transform_1(%arg0: i32) -> (i32, i32) {
    %c0_i32 = arith.constant 0 : i32
    %c0_i32_0 = arith.constant 0 : i32
    %c0_i32_1 = arith.constant 0 : i32
    return %c0_i32, %c0_i32_0 : i32, i32
  }
  func.func @transform_2(%arg0: i32) -> (i32, i32) {
    %c0_i32 = arith.constant 0 : i32
    %c0_i32_0 = arith.constant 0 : i32
    %c0_i32_1 = arith.constant 0 : i32
    return %c0_i32, %c0_i32_0 : i32, i32
  }
  func.func @transform_3(%arg0: i32) -> (i32, i32, i32) {
    %c0_i32 = arith.constant 0 : i32
    %c0_i32_0 = arith.constant 0 : i32
    %c0_i32_1 = arith.constant 0 : i32
    %c0_i32_2 = arith.constant 0 : i32
    return %c0_i32, %c0_i32_0, %c0_i32_1 : i32, i32, i32
  }
  func.func @transform_4(%arg0: i32) -> (i32, i32, i32, i32) {
    %c0_i32 = arith.constant 0 : i32
    %c0_i32_0 = arith.constant 0 : i32
    %c0_i32_1 = arith.constant 0 : i32
    %c0_i32_2 = arith.constant 0 : i32
    return %arg0, %c0_i32, %c0_i32_0, %c0_i32_1 : i32, i32, i32, i32
  }
  func.func @transform_5(%arg0: i32) -> (i32, i32) {
    %c0_i32 = arith.constant 0 : i32
    %c0_i32_0 = arith.constant 0 : i32
    %c0_i32_1 = arith.constant 0 : i32
    return %c0_i32, %c0_i32_0 : i32, i32
  }
}

module attributes {stable_mosaic.version = 11 : i64} {
  func.func @_bn_add_relu_kernel(%arg0: i32, %arg1: memref<32x256xbf16, #tpu.memory_space<vmem>>, %arg2: memref<32x256xf32, #tpu.memory_space<vmem>>, %arg3: memref<1x256xf32, #tpu.memory_space<vmem>>, %arg4: memref<1x256xf32, #tpu.memory_space<vmem>>, %arg5: memref<32x256xf32, #tpu.memory_space<vmem>>) attributes {dimension_semantics = [#tpu.dimension_semantics<parallel>], iteration_bounds = array<i64: 1>, scalar_prefetch = 0 : i64, scratch_operands = 0 : i64, tpu.core_type = #tpu.core_type<tc>, window_params = [{transform_indices = @transform_0, window_bounds = array<i64: 32, 256>}, {transform_indices = @transform_1, window_bounds = array<i64: 32, 256>}, {pipeline_mode = #tpu.pipeline_mode<synchronous>, transform_indices = @transform_2, window_bounds = array<i64: 1, 256>}, {pipeline_mode = #tpu.pipeline_mode<synchronous>, transform_indices = @transform_3, window_bounds = array<i64: 1, 256>}, {transform_indices = @transform_4, window_bounds = array<i64: 32, 256>}]} {
    %c0 = arith.constant 0 : index
    %c0_0 = arith.constant 0 : index
    %0 = vector.load %arg1[%c0, %c0_0] : memref<32x256xbf16, #tpu.memory_space<vmem>>, vector<32x256xbf16>
    %1 = arith.extf %0 : vector<32x256xbf16> to vector<32x256xf32>
    %c0_1 = arith.constant 0 : index
    %c0_2 = arith.constant 0 : index
    %2 = vector.load %arg3[%c0_1, %c0_2] : memref<1x256xf32, #tpu.memory_space<vmem>>, vector<1x256xf32>
    %3 = vector.broadcast %2 : vector<1x256xf32> to vector<32x256xf32>
    %4 = arith.mulf %1, %3 : vector<32x256xf32>
    %c0_3 = arith.constant 0 : index
    %c0_4 = arith.constant 0 : index
    %5 = vector.load %arg4[%c0_3, %c0_4] : memref<1x256xf32, #tpu.memory_space<vmem>>, vector<1x256xf32>
    %6 = vector.broadcast %5 : vector<1x256xf32> to vector<32x256xf32>
    %7 = arith.addf %4, %6 : vector<32x256xf32>
    %c0_5 = arith.constant 0 : index
    %c0_6 = arith.constant 0 : index
    %8 = vector.load %arg2[%c0_5, %c0_6] : memref<32x256xf32, #tpu.memory_space<vmem>>, vector<32x256xf32>
    %9 = arith.addf %7, %8 : vector<32x256xf32>
    %cst = arith.constant 0.000000e+00 : f32
    %10 = vector.broadcast %cst : f32 to vector<32x256xf32>
    %11 = arith.maximumf %9, %10 : vector<32x256xf32>
    %c0_7 = arith.constant 0 : index
    %c0_8 = arith.constant 0 : index
    %12 = vector.load %arg5[%c0_7, %c0_8] : memref<32x256xf32, #tpu.memory_space<vmem>>, vector<32x256xf32>
    tpu.vector_store %arg5[%c0_7, %c0_8], %11 {strides = array<i32>} : memref<32x256xf32, #tpu.memory_space<vmem>>, vector<32x256xf32>,
    return
  }
  func.func @transform_0(%arg0: i32) -> (i32, i32) {
    %c0_i32 = arith.constant 0 : i32
    %c0_i32_0 = arith.constant 0 : i32
    return %arg0, %c0_i32 : i32, i32
  }
  func.func @transform_1(%arg0: i32) -> (i32, i32) {
    %c0_i32 = arith.constant 0 : i32
    %c0_i32_0 = arith.constant 0 : i32
    return %arg0, %c0_i32 : i32, i32
  }
  func.func @transform_2(%arg0: i32) -> (i32, i32) {
    %c0_i32 = arith.constant 0 : i32
    %c0_i32_0 = arith.constant 0 : i32
    %c0_i32_1 = arith.constant 0 : i32
    return %c0_i32, %c0_i32_0 : i32, i32
  }
  func.func @transform_3(%arg0: i32) -> (i32, i32) {
    %c0_i32 = arith.constant 0 : i32
    %c0_i32_0 = arith.constant 0 : i32
    %c0_i32_1 = arith.constant 0 : i32
    return %c0_i32, %c0_i32_0 : i32, i32
  }
  func.func @transform_4(%arg0: i32) -> (i32, i32) {
    %c0_i32 = arith.constant 0 : i32
    %c0_i32_0 = arith.constant 0 : i32
    return %arg0, %c0_i32 : i32, i32
  }
}

</mosaic_0001>

<llo_original>
// kernel: bottleneck_forward.4
$region0: #{bottleneck_forward.4}
  #allocation0 [shape = 'u32[]', space=smem, size = 0x4, offset = 0x4, fixed_abs, tag = 'smem constant byte address 0x4 - core index']
  #allocation1 [shape = 'u32[144,128]{1,0:T(1,128)}', space=vmem, size = 0x12000, scoped, tag = 'internal scratch']
  %s0 = inlined_call_operand.hbm [shape: f32[512,16], index: 0, kind: input, shape index: {}]
  %s1 = inlined_call_operand.vmem [shape: bf16[16,4], index: 1, kind: input, shape index: {}]
  %s2 = inlined_call_operand.vmem [shape: bf16[512,4], index: 2, kind: output, shape index: {0}]
  %s3 = inlined_call_operand.vmem [shape: f32[2,4], index: 3, kind: output, shape index: {1}]
  %4 = xla_tuple %s2, %s3
  %s5 = sld [smem:[#allocation0]]
  $region57: #{bottleneck_forward.4} parent=0
    _
  %s7 = ssub.s32 1, %s5
  %s8 = scalar_select 0, %s7, %s5
  $region1: #{bottleneck_forward.4} parent=0
    #allocation2 [shape = 'u8[262144]{0}', space=vmem, size = 0x40000, scoped, tag = 'input window, operand 0']
    #allocation3 [shape = 's32[2]{0}', space=sflag, size = 0x8, scoped, tag = 'scoped memory for bottleneck_forward.4']
    %9 = vsyncpa [#allocation3], 0
    %s10 = scalar_lea.sflag [#allocation3], 1
    %11 = vsyncpa %s10, 0
    loop: start=0, step=1, limit=4
    $region2: #{bottleneck_forward.4} parent=1 // loop_pre_header
      _
    $region3: #{bottleneck_forward.4} parent=1 // loop_header
      %s13 = sphi 0, %s17
      %p14 = scmp.ge.s32.totalorder %s13, 4
      %s23 = sphi 0, %s25
      %s26 = sphi 0, %s23
      %s27 = sphi 0, %s26
      %s43 = sphi 0, %s27
      %s47 = sphi 0, %s47
      %s49 = sphi 0, %s47
      %s50 = sphi 0, %s49
      %s64 = sphi 0, %s50
      %s70 = sphi 0, %s72
      %s73 = sphi 0, %s70
      %s74 = sphi 0, %s73
      %s90 = sphi 0, %s74
      %s94 = sphi 0, %s94
      %s96 = sphi 0, %s94
      %s97 = sphi 0, %s96
      %s111 = sphi 0, %s97
    $region4: #{bottleneck_forward.4} parent=1 // loop_header_branch
      %16 = sbr.rel (%p14) target = $region8
    $region5: #{bottleneck_forward.4} parent=1 // loop_body
      %s18 = ssub.s32 %s13, 1
      %s19 = ssub.s32 %s13, 2
      %s20 = sadd.s32 %s13, 1
      %s21 = ssub.s32 %s13, %s20
      %p22 = scmp.eq.s32.totalorder %s21, 0
      %s24 = sadd.s32 %s23, 1
      %s25 = scalar_select %p22, %s23, %s24
      %p28 = pneg %p22
      %p29 = scmp.eq.s32.totalorder %s13, 1
      %p30 = por %p28, %p29
      %p31 = scmp.ne.s32.totalorder %s23, %s26
      %p32 = scmp.eq.s32.totalorder %s13, 0
      %p33 = por %p31, %p32
      %p34 = scmp.ne.s32.totalorder %s23, %s26
      %p35 = scmp.eq.s32.totalorder %s18, 1
      %p36 = por %p34, %p35
      %p37 = scmp.ne.s32.totalorder %s26, %s27
      %p38 = scmp.eq.s32.totalorder %s18, 0
      %p39 = por %p37, %p38
      %p40 = scmp.ne.s32.totalorder %s26, %s27
      %p41 = scmp.eq.s32.totalorder %s19, 1
      %p42 = por %p40, %p41
      %p44 = scmp.ne.s32.totalorder %s27, %s43
      %p45 = scmp.eq.s32.totalorder %s19, 0
      %p46 = por %p44, %p45
      %s48 = sadd.s32 %s47, 1
      %p51 = scmp.eq.s32.totalorder %s13, 1
      %p52 = scmp.ne.s32.totalorder %s47, %s49
      %p53 = scmp.eq.s32.totalorder %s13, 0
      %p54 = por %p52, %p53
      %p55 = scmp.ne.s32.totalorder %s47, %s49
      %p56 = scmp.eq.s32.totalorder %s18, 1
      %p57 = por %p55, %p56
      %p58 = scmp.ne.s32.totalorder %s49, %s50
      %p59 = scmp.eq.s32.totalorder %s18, 0
      %p60 = por %p58, %p59
      %p61 = scmp.ne.s32.totalorder %s49, %s50
      %p62 = scmp.eq.s32.totalorder %s19, 1
      %p63 = por %p61, %p62
      %p65 = scmp.ne.s32.totalorder %s50, %s64
      %p66 = scmp.eq.s32.totalorder %s19, 0
      %p67 = por %p65, %p66
      %s68 = ssub.s32 %s13, %s20
      %p69 = scmp.eq.s32.totalorder %s68, 0
      %s71 = sadd.s32 %s70, 1
      %s72 = scalar_select %p69, %s70, %s71
      %p75 = pneg %p69
      %p76 = scmp.eq.s32.totalorder %s13, 1
      %p77 = por %p75, %p76
      %p78 = scmp.ne.s32.totalorder %s70, %s73
      %p79 = scmp.eq.s32.totalorder %s13, 0
      %p80 = por %p78, %p79
      %p81 = scmp.ne.s32.totalorder %s70, %s73
      %p82 = scmp.eq.s32.totalorder %s18, 1
      %p83 = por %p81, %p82
      %p84 = scmp.ne.s32.totalorder %s73, %s74
      %p85 = scmp.eq.s32.totalorder %s18, 0
      %p86 = por %p84, %p85
      %p87 = scmp.ne.s32.totalorder %s73, %s74
      %p88 = scmp.eq.s32.totalorder %s19, 1
      %p89 = por %p87, %p88
      %p91 = scmp.ne.s32.totalorder %s74, %s90
      %p92 = scmp.eq.s32.totalorder %s19, 0
      %p93 = por %p91, %p92
      %s95 = sadd.s32 %s94, 1
      %p98 = scmp.eq.s32.totalorder %s13, 1
      %p99 = scmp.ne.s32.totalorder %s94, %s96
      %p100 = scmp.eq.s32.totalorder %s13, 0
      %p101 = por %p99, %p100
      %p102 = scmp.ne.s32.totalorder %s94, %s96
      %p103 = scmp.eq.s32.totalorder %s18, 1
      %p104 = por %p102, %p103
      %p105 = scmp.ne.s32.totalorder %s96, %s97
      %p106 = scmp.eq.s32.totalorder %s18, 0
      %p107 = por %p105, %p106
      %p108 = scmp.ne.s32.totalorder %s96, %s97
      %p109 = scmp.eq.s32.totalorder %s19, 1
      %p110 = por %p108, %p109
      %p112 = scmp.ne.s32.totalorder %s97, %s111
      %p113 = scmp.eq.s32.totalorder %s19, 0
      %p114 = por %p112, %p113
      %p115 = scmp.le.s32.totalorder 1, %s13
      %p116 = scmp.lt.s32.totalorder %s13, 3
      %p117 = pnand %p115, %p116
      %p118 = pneg %p117
      // Predicated region
      $region9: #{bottleneck_forward.4} parent=5 // pred_check
        _
      $region10: #{bottleneck_forward.4} parent=5 // pred_check_branch
        %120 = sbr.rel (%p117) target = $region12
      $region11: #{bottleneck_forward.4} parent=5 // pred_region
        %s121 = ssub.s32 %s13, 1
        // Predicated region
        $region13: #{bottleneck_forward.4} parent=11 // pred_check
          %p122 = pneg %p60
        $region14: #{bottleneck_forward.4} parent=11 // pred_check_branch
          %124 = sbr.rel (%p122) target = $region16
        $region15: #{bottleneck_forward.4} parent=11 // pred_region
          _
        $region16: #{bottleneck_forward.4} parent=11 // pred_fallthru
          _
      $region12: #{bottleneck_forward.4} parent=5 // pred_fallthru
        _
      %p125 = scmp.lt.s32.totalorder %s13, 2
      // Predicated region
      $region17: #{bottleneck_forward.4} parent=5 // pred_check
        %p126 = pneg %p125
      $region18: #{bottleneck_forward.4} parent=5 // pred_check_branch
        %128 = sbr.rel (%p126) target = $region20
      $region19: #{bottleneck_forward.4} parent=5 // pred_region
        // Predicated region
        $region21: #{bottleneck_forward.4} parent=19 // pred_check
          %p129 = pneg %p33
        $region22: #{bottleneck_forward.4} parent=19 // pred_check_branch
          %131 = sbr.rel (%p129) target = $region24
        $region23: #{bottleneck_forward.4} parent=19 // pred_region
          %s132 = sand.u32 %s23, 1
          %s133 = scalar_lea.sflag [#allocation3], %s132
          %s134 = sand.u32 %s23, 1
          %s135 = smul.addr %s134, 256
          %s136 = scalar_lea.vmem [#allocation2], %s135
          %s137 = smul.u32 32, %s13
          %s139 = ssub.s32 4096, 4096
          %140 = vsyncadd %s133, %s139
          %s141 = smul.addr %s137, 128
          %s142 = scalar_lea.hbm %s0, %s141
          %s143 = sshll.u32 %s136, 4
          %s144 = int_to_ptr.vmem [resolvable:$true] %s143
          %149 = dma.hbm_to_vmem [thread:$0]  %s142, 4096, %s144, %s133, 128, 128, 8
        $region24: #{bottleneck_forward.4} parent=19 // pred_fallthru
          _
      $region20: #{bottleneck_forward.4} parent=5 // pred_fallthru
        _
      %p150 = scmp.le.s32.totalorder 1, %s13
      %p151 = scmp.lt.s32.totalorder %s13, 3
      %p152 = pnand %p150, %p151
      %p153 = pneg %p152
      // Predicated region
      $region25: #{bottleneck_forward.4} parent=5 // pred_check
        _
      $region26: #{bottleneck_forward.4} parent=5 // pred_check_branch
        %155 = sbr.rel (%p152) target = $region28
      $region27: #{bottleneck_forward.4} parent=5 // pred_region
        %s156 = ssub.s32 %s13, 1
        %s157 = sand.u32 %s26, 1
        %s158 = scalar_lea.sflag [#allocation3], %s157
        %s159 = sand.u32 %s26, 1
        %s160 = smul.addr %s159, 256
        %s161 = scalar_lea.vmem [#allocation2], %s160
        // Predicated region
        $region29: #{bottleneck_forward.4} parent=27 // pred_check
          %p162 = pneg %p39
        $region30: #{bottleneck_forward.4} parent=27 // pred_check_branch
          %164 = sbr.rel (%p162) target = $region32
        $region31: #{bottleneck_forward.4} parent=27 // pred_region
          %165 = dma.done %s158, 4096
        $region32: #{bottleneck_forward.4} parent=27 // pred_fallthru
          _
        %s166 = sand.u32 %s26, 1
        %s167 = scalar_lea.sflag [#allocation3], %s166
        %s168 = sand.u32 %s26, 1
        %s169 = smul.addr %s168, 256
        %s170 = scalar_lea.vmem [#allocation2], %s169
        %p171 = pneg %p39
        %p172 = pneg %p36
        %p173 = pneg %p60
        %p174 = pneg %p57
        %p175 = pneg %p86
        %p176 = pneg %p83
        %s177 = smul.u32 32, %s18
        %p178 = scmp.lt.s32.totalorder %s177, 63
        %s179 = scalar_select %p178, %s177, 63
        %s180 = smul.addr %s179, 4
        %s181 = scalar_lea.vmem %s2, %s180
        %p182 = pneg %p107
        %p183 = pneg %p104
        %s184 = smul.u32 32, %s18
        %s185 = smul.u32 32, %s18
        %p186 = scmp.lt.s32.totalorder %s185, 63
        %s187 = scalar_select %p186, %s185, 63
        %s188 = smul.addr %s187, 4
        %s189 = scalar_lea.vmem %s2, %s188
        %s190 = smul.u32 32, %s18
        %v192 = vld [vmem:[%s161] sm:$0xff]
        %v193 = vld [vmem:[%s161 + $0x8] sm:$0xff]
        %v194 = vld [vmem:[%s161 + $0x10] sm:$0xff]
        %v195 = vld [vmem:[%s161 + $0x18] sm:$0xff]
        %v196 = vld [vmem:[%s161 + $0x20] sm:$0xff]
        %v197 = vld [vmem:[%s161 + $0x28] sm:$0xff]
        %v198 = vld [vmem:[%s161 + $0x30] sm:$0xff]
        %v199 = vld [vmem:[%s161 + $0x38] sm:$0xff]
        %v200 = vld [vmem:[%s161 + $0x40] sm:$0xff]
        %v201 = vld [vmem:[%s161 + $0x48] sm:$0xff]
        %v202 = vld [vmem:[%s161 + $0x50] sm:$0xff]
        %v203 = vld [vmem:[%s161 + $0x58] sm:$0xff]
        %v204 = vld [vmem:[%s161 + $0x60] sm:$0xff]
        %v205 = vld [vmem:[%s161 + $0x68] sm:$0xff]
        %v206 = vld [vmem:[%s161 + $0x70] sm:$0xff]
        %v207 = vld [vmem:[%s161 + $0x78] sm:$0xff]
        %v208 = vld [vmem:[%s161 + $0x80] sm:$0xff]
        %v209 = vld [vmem:[%s161 + $0x88] sm:$0xff]
        %v210 = vld [vmem:[%s161 + $0x90] sm:$0xff]
        %v211 = vld [vmem:[%s161 + $0x98] sm:$0xff]
        %v212 = vld [vmem:[%s161 + $0xa0] sm:$0xff]
        %v213 = vld [vmem:[%s161 + $0xa8] sm:$0xff]
        %v214 = vld [vmem:[%s161 + $0xb0] sm:$0xff]
        %v215 = vld [vmem:[%s161 + $0xb8] sm:$0xff]
        %v216 = vld [vmem:[%s161 + $0xc0] sm:$0xff]
        %v217 = vld [vmem:[%s161 + $0xc8] sm:$0xff]
        %v218 = vld [vmem:[%s161 + $0xd0] sm:$0xff]
        %v219 = vld [vmem:[%s161 + $0xd8] sm:$0xff]
        %v220 = vld [vmem:[%s161 + $0xe0] sm:$0xff]
        %v221 = vld [vmem:[%s161 + $0xe8] sm:$0xff]
        %v222 = vld [vmem:[%s161 + $0xf0] sm:$0xff]
        %v223 = vld [vmem:[%s161 + $0xf8] sm:$0xff]
        %v224 = vpack.c.bf16 %v193, %v192
        %v225 = vpack.c.bf16 %v195, %v194
        %v226 = vpack.c.bf16 %v197, %v196
        %v227 = vpack.c.bf16 %v199, %v198
        %v228 = vpack.c.bf16 %v201, %v200
        %v229 = vpack.c.bf16 %v203, %v202
        %v230 = vpack.c.bf16 %v205, %v204
        %v231 = vpack.c.bf16 %v207, %v206
        %v232 = vpack.c.bf16 %v209, %v208
        %v233 = vpack.c.bf16 %v211, %v210
        %v234 = vpack.c.bf16 %v213, %v212
        %v235 = vpack.c.bf16 %v215, %v214
        %v236 = vpack.c.bf16 %v217, %v216
        %v237 = vpack.c.bf16 %v219, %v218
        %v238 = vpack.c.bf16 %v221, %v220
        %v239 = vpack.c.bf16 %v223, %v222
        %v240 = vld [vmem:[%s1] sm:$0xf]
        %v241 = vld [vmem:[%s1 + $0x4] sm:$0xf]
        %v244 = vunpack.c.l.b16 %v240
        %v245 = vunpack.c.l.b16 %v241
        %v246 = vpack.c.b16 %v245, %v244
        %vm248 = vcmask 130048
        %v250 = vsel %vm248, %v224, 0
        %v253 = vsel %vm248, %v225, 0
        %v256 = vsel %vm248, %v226, 0
        %v259 = vsel %vm248, %v227, 0
        %v262 = vsel %vm248, %v228, 0
        %v265 = vsel %vm248, %v229, 0
        %v268 = vsel %vm248, %v230, 0
        %v271 = vsel %vm248, %v231, 0
        %v274 = vsel %vm248, %v232, 0
        %v277 = vsel %vm248, %v233, 0
        %v280 = vsel %vm248, %v234, 0
        %v283 = vsel %vm248, %v235, 0
        %v286 = vsel %vm248, %v236, 0
        %v289 = vsel %vm248, %v237, 0
        %v292 = vsel %vm248, %v238, 0
        %v295 = vsel %vm248, %v239, 0
        %297 = vmatprep.subr.bf16.mxu0 0
        %298 = vmatpush1.bf16.msra.mxu0 0
        %299 = vmatprep.subr.bf16.mxu0 0
        %300 = vmatpush1.bf16.msra.mxu0 0
        %301 = vmatprep.subr.bf16.mxu0 0
        %302 = vmatpush1.bf16.msra.mxu0 0
        %303 = vmatprep.subr.bf16.mxu0 0
        %304 = vmatpush1.bf16.msra.mxu0 0
        %305 = vmatprep.subr.bf16.mxu0 0
        %306 = vmatpush1.bf16.msra.mxu0 0
        %307 = vmatprep.subr.bf16.mxu0 0
        %308 = vmatpush1.bf16.msra.mxu0 0
        %309 = vmatprep.subr.bf16.mxu0 0
        %310 = vmatpush1.bf16.msra.mxu0 0
        %311 = vmatprep.subr.bf16.mxu0 0
        %312 = vmatpush1.bf16.msra.mxu0 %v246
        %313 = vmatprep.subr.bf16.mxu0 0
        %314 = vmatpush2.bf16.msra.mxu0 0
        %315 = vmatprep.subr.bf16.mxu0 0
        %316 = vmatpush2.bf16.msra.mxu0 0
        %317 = vmatprep.subr.bf16.mxu0 0
        %318 = vmatpush2.bf16.msra.mxu0 0
        %319 = vmatprep.subr.bf16.mxu0 0
        %320 = vmatpush2.bf16.msra.mxu0 0
        %321 = vmatprep.subr.bf16.mxu0 0
        %322 = vmatpush2.bf16.msra.mxu0 0
        %323 = vmatprep.subr.bf16.mxu0 0
        %324 = vmatpush2.bf16.msra.mxu0 0
        %325 = vmatprep.subr.bf16.mxu0 0
        %326 = vmatpush2.bf16.msra.mxu0 0
        %327 = vmatprep.subr.bf16.mxu0 0
        %328 = vmatpush2.bf16.msra.mxu0 0
        %329 = vmatprep.mubr.bf16.mxu0 0
        %330 = vmatmul.mubr.bf16.gmra.mxu0 %v250
        %v331 = vpop.f32.mrf.mxu0
        %v332 = vadd.f32 0.0, %v331
        %v333 = vpop.f32.mrf.mxu0
        %v334 = vpop.f32.mrf.mxu0
        %v335 = vadd.f32 0.0, %v334
        %v336 = vpop.f32.mrf.mxu0
        %337 = vmatprep.mubr.bf16.mxu0 0
        %338 = vmatmul.mubr.bf16.gmra.mxu0 %v253
        %v339 = vpop.f32.mrf.mxu0
        %v340 = vadd.f32 0.0, %v339
        %v341 = vpop.f32.mrf.mxu0
        %v342 = vpop.f32.mrf.mxu0
        %v343 = vadd.f32 0.0, %v342
        %v344 = vpop.f32.mrf.mxu0
        %345 = vmatprep.mubr.bf16.mxu0 0
        %346 = vmatmul.mubr.bf16.gmra.mxu0 %v256
        %v347 = vpop.f32.mrf.mxu0
        %v348 = vadd.f32 0.0, %v347
        %v349 = vpop.f32.mrf.mxu0
        %v350 = vpop.f32.mrf.mxu0
        %v351 = vadd.f32 0.0, %v350
        %v352 = vpop.f32.mrf.mxu0
        %353 = vmatprep.mubr.bf16.mxu0 0
        %354 = vmatmul.mubr.bf16.gmra.mxu0 %v259
        %v355 = vpop.f32.mrf.mxu0
        %v356 = vadd.f32 0.0, %v355
        %v357 = vpop.f32.mrf.mxu0
        %v358 = vpop.f32.mrf.mxu0
        %v359 = vadd.f32 0.0, %v358
        %v360 = vpop.f32.mrf.mxu0
        %361 = vmatprep.mubr.bf16.mxu0 0
        %362 = vmatmul.mubr.bf16.gmra.mxu0 %v262
        %v363 = vpop.f32.mrf.mxu0
        %v364 = vadd.f32 0.0, %v363
        %v365 = vpop.f32.mrf.mxu0
        %v366 = vpop.f32.mrf.mxu0
        %v367 = vadd.f32 0.0, %v366
        %v368 = vpop.f32.mrf.mxu0
        %369 = vmatprep.mubr.bf16.mxu0 0
        %370 = vmatmul.mubr.bf16.gmra.mxu0 %v265
        %v371 = vpop.f32.mrf.mxu0
        %v372 = vadd.f32 0.0, %v371
        %v373 = vpop.f32.mrf.mxu0
        %v374 = vpop.f32.mrf.mxu0
        %v375 = vadd.f32 0.0, %v374
        %v376 = vpop.f32.mrf.mxu0
        %377 = vmatprep.mubr.bf16.mxu0 0
        %378 = vmatmul.mubr.bf16.gmra.mxu0 %v268
        %v379 = vpop.f32.mrf.mxu0
        %v380 = vadd.f32 0.0, %v379
        %v381 = vpop.f32.mrf.mxu0
        %v382 = vpop.f32.mrf.mxu0
        %v383 = vadd.f32 0.0, %v382
        %v384 = vpop.f32.mrf.mxu0
        %385 = vmatprep.mubr.bf16.mxu0 0
        %386 = vmatmul.mubr.bf16.gmra.mxu0 %v271
        %v387 = vpop.f32.mrf.mxu0
        %v388 = vadd.f32 0.0, %v387
        %v389 = vpop.f32.mrf.mxu0
        %v390 = vpop.f32.mrf.mxu0
        %v391 = vadd.f32 0.0, %v390
        %v392 = vpop.f32.mrf.mxu0
        %393 = vmatprep.mubr.bf16.mxu0 0
        %394 = vmatmul.mubr.bf16.gmra.mxu0 %v274
        %v395 = vpop.f32.mrf.mxu0
        %v396 = vadd.f32 0.0, %v395
        %v397 = vpop.f32.mrf.mxu0
        %v398 = vpop.f32.mrf.mxu0
        %v399 = vadd.f32 0.0, %v398
        %v400 = vpop.f32.mrf.mxu0
        %401 = vmatprep.mubr.bf16.mxu0 0
        %402 = vmatmul.mubr.bf16.gmra.mxu0 %v277
        %v403 = vpop.f32.mrf.mxu0
        %v404 = vadd.f32 0.0, %v403
        %v405 = vpop.f32.mrf.mxu0
        %v406 = vpop.f32.mrf.mxu0
        %v407 = vadd.f32 0.0, %v406
        %v408 = vpop.f32.mrf.mxu0
        %409 = vmatprep.mubr.bf16.mxu0 0
        %410 = vmatmul.mubr.bf16.gmra.mxu0 %v280
        %v411 = vpop.f32.mrf.mxu0
        %v412 = vadd.f32 0.0, %v411
        %v413 = vpop.f32.mrf.mxu0
        %v414 = vpop.f32.mrf.mxu0
        %v415 = vadd.f32 0.0, %v414
        %v416 = vpop.f32.mrf.mxu0
        %417 = vmatprep.mubr.bf16.mxu0 0
        %418 = vmatmul.mubr.bf16.gmra.mxu0 %v283
        %v419 = vpop.f32.mrf.mxu0
        %v420 = vadd.f32 0.0, %v419
        %v421 = vpop.f32.mrf.mxu0
        %v422 = vpop.f32.mrf.mxu0
        %v423 = vadd.f32 0.0, %v422
        %v424 = vpop.f32.mrf.mxu0
        %425 = vmatprep.mubr.bf16.mxu0 0
        %426 = vmatmul.mubr.bf16.gmra.mxu0 %v286
        %v427 = vpop.f32.mrf.mxu0
        %v428 = vadd.f32 0.0, %v427
        %v429 = vpop.f32.mrf.mxu0
        %v430 = vpop.f32.mrf.mxu0
        %v431 = vadd.f32 0.0, %v430
        %v432 = vpop.f32.mrf.mxu0
        %433 = vmatprep.mubr.bf16.mxu0 0
        %434 = vmatmul.mubr.bf16.gmra.mxu0 %v289
        %v435 = vpop.f32.mrf.mxu0
        %v436 = vadd.f32 0.0, %v435
        %v437 = vpop.f32.mrf.mxu0
        %v438 = vpop.f32.mrf.mxu0
        %v439 = vadd.f32 0.0, %v438
        %v440 = vpop.f32.mrf.mxu0
        %441 = vmatprep.mubr.bf16.mxu0 0
        %442 = vmatmul.mubr.bf16.gmra.mxu0 %v292
        %v443 = vpop.f32.mrf.mxu0
        %v444 = vadd.f32 0.0, %v443
        %v445 = vpop.f32.mrf.mxu0
        %v446 = vpop.f32.mrf.mxu0
        %v447 = vadd.f32 0.0, %v446
        %v448 = vpop.f32.mrf.mxu0
        %449 = vmatprep.mubr.bf16.mxu0 0
        %450 = vmatmul.mubr.bf16.gmra.mxu0 %v295
        %v451 = vpop.f32.mrf.mxu0
        %v452 = vadd.f32 0.0, %v451
        %v453 = vpop.f32.mrf.mxu0
        %v454 = vpop.f32.mrf.mxu0
        %v455 = vadd.f32 0.0, %v454
        %v456 = vpop.f32.mrf.mxu0
        %457 = vdwg.mxu0
        %v458 = vpack.c.bf16 %v335, %v332
        %v459 = vpack.c.bf16 %v343, %v340
        %v460 = vpack.c.bf16 %v351, %v348
        %v461 = vpack.c.bf16 %v359, %v356
        %v462 = vpack.c.bf16 %v367, %v364
        %v463 = vpack.c.bf16 %v375, %v372
        %v464 = vpack.c.bf16 %v383, %v380
        %v465 = vpack.c.bf16 %v391, %v388
        %v466 = vpack.c.bf16 %v399, %v396
        %v467 = vpack.c.bf16 %v407, %v404
        %v468 = vpack.c.bf16 %v415, %v412
        %v469 = vpack.c.bf16 %v423, %v420
        %v470 = vpack.c.bf16 %v431, %v428
        %v471 = vpack.c.bf16 %v439, %v436
        %v472 = vpack.c.bf16 %v447, %v444
        %v473 = vpack.c.bf16 %v455, %v452
        %v490 = vunpack.c.l.b16 %v458
        %v491 = vunpack.c.h.b16 %v458
        %v492 = vunpack.c.l.b16 %v459
        %v493 = vunpack.c.h.b16 %v459
        %v494 = vunpack.c.l.b16 %v460
        %v495 = vunpack.c.h.b16 %v460
        %v496 = vunpack.c.l.b16 %v461
        %v497 = vunpack.c.h.b16 %v461
        %v498 = vunpack.c.l.b16 %v462
        %v499 = vunpack.c.h.b16 %v462
        %v500 = vunpack.c.l.b16 %v463
        %v501 = vunpack.c.h.b16 %v463
        %v502 = vunpack.c.l.b16 %v464
        %v503 = vunpack.c.h.b16 %v464
        %v504 = vunpack.c.l.b16 %v465
        %v505 = vunpack.c.h.b16 %v465
        %v506 = vunpack.c.l.b16 %v466
        %v507 = vunpack.c.h.b16 %v466
        %v508 = vunpack.c.l.b16 %v467
        %v509 = vunpack.c.h.b16 %v467
        %v510 = vunpack.c.l.b16 %v468
        %v511 = vunpack.c.h.b16 %v468
        %v512 = vunpack.c.l.b16 %v469
        %v513 = vunpack.c.h.b16 %v469
        %v514 = vunpack.c.l.b16 %v470
        %v515 = vunpack.c.h.b16 %v470
        %v516 = vunpack.c.l.b16 %v471
        %v517 = vunpack.c.h.b16 %v471
        %v518 = vunpack.c.l.b16 %v472
        %v519 = vunpack.c.h.b16 %v472
        %v520 = vunpack.c.l.b16 %v473
        %v521 = vunpack.c.h.b16 %v473
        %v522 = vpack.c.b16 %v490, %v490
        %v523 = vpack.c.b16 %v491, %v491
        %v524 = vpack.c.b16 %v492, %v492
        %v525 = vpack.c.b16 %v493, %v493
        %v526 = vpack.c.b16 %v494, %v494
        %v527 = vpack.c.b16 %v495, %v495
        %v528 = vpack.c.b16 %v496, %v496
        %v529 = vpack.c.b16 %v497, %v497
        %v530 = vpack.c.b16 %v498, %v498
        %v531 = vpack.c.b16 %v499, %v499
        %v532 = vpack.c.b16 %v500, %v500
        %v533 = vpack.c.b16 %v501, %v501
        %v534 = vpack.c.b16 %v502, %v502
        %v535 = vpack.c.b16 %v503, %v503
        %v536 = vpack.c.b16 %v504, %v504
        %v537 = vpack.c.b16 %v505, %v505
        %v538 = vpack.c.b16 %v506, %v506
        %v539 = vpack.c.b16 %v507, %v507
        %v540 = vpack.c.b16 %v508, %v508
        %v541 = vpack.c.b16 %v509, %v509
        %v542 = vpack.c.b16 %v510, %v510
        %v543 = vpack.c.b16 %v511, %v511
        %v544 = vpack.c.b16 %v512, %v512
        %v545 = vpack.c.b16 %v513, %v513
        %v546 = vpack.c.b16 %v514, %v514
        %v547 = vpack.c.b16 %v515, %v515
        %v548 = vpack.c.b16 %v516, %v516
        %v549 = vpack.c.b16 %v517, %v517
        %v550 = vpack.c.b16 %v518, %v518
        %v551 = vpack.c.b16 %v519, %v519
        %v552 = vpack.c.b16 %v520, %v520
        %v553 = vpack.c.b16 %v521, %v521
        %vm586 = vcmask 27648
        %587 = vst.msk [vmem:[%s189] sm:$0xf] %vm586, %v522
        %588 = vst.msk [vmem:[%s189 + $0x4] sm:$0xf] %vm586, %v523
        %589 = vst.msk [vmem:[%s189 + $0x8] sm:$0xf] %vm586, %v524
        %590 = vst.msk [vmem:[%s189 + $0xc] sm:$0xf] %vm586, %v525
        %591 = vst.msk [vmem:[%s189 + $0x10] sm:$0xf] %vm586, %v526
        %592 = vst.msk [vmem:[%s189 + $0x14] sm:$0xf] %vm586, %v527
        %593 = vst.msk [vmem:[%s189 + $0x18] sm:$0xf] %vm586, %v528
        %594 = vst.msk [vmem:[%s189 + $0x1c] sm:$0xf] %vm586, %v529
        %595 = vst.msk [vmem:[%s189 + $0x20] sm:$0xf] %vm586, %v530
        %596 = vst.msk [vmem:[%s189 + $0x24] sm:$0xf] %vm586, %v531
        %597 = vst.msk [vmem:[%s189 + $0x28] sm:$0xf] %vm586, %v532
        %598 = vst.msk [vmem:[%s189 + $0x2c] sm:$0xf] %vm586, %v533
        %599 = vst.msk [vmem:[%s189 + $0x30] sm:$0xf] %vm586, %v534
        %600 = vst.msk [vmem:[%s189 + $0x34] sm:$0xf] %vm586, %v535
        %601 = vst.msk [vmem:[%s189 + $0x38] sm:$0xf] %vm586, %v536
        %602 = vst.msk [vmem:[%s189 + $0x3c] sm:$0xf] %vm586, %v537
        %603 = vst.msk [vmem:[%s189 + $0x40] sm:$0xf] %vm586, %v538
        %604 = vst.msk [vmem:[%s189 + $0x44] sm:$0xf] %vm586, %v539
        %605 = vst.msk [vmem:[%s189 + $0x48] sm:$0xf] %vm586, %v540
        %606 = vst.msk [vmem:[%s189 + $0x4c] sm:$0xf] %vm586, %v541
        %607 = vst.msk [vmem:[%s189 + $0x50] sm:$0xf] %vm586, %v542
        %608 = vst.msk [vmem:[%s189 + $0x54] sm:$0xf] %vm586, %v543
        %609 = vst.msk [vmem:[%s189 + $0x58] sm:$0xf] %vm586, %v544
        %610 = vst.msk [vmem:[%s189 + $0x5c] sm:$0xf] %vm586, %v545
        %611 = vst.msk [vmem:[%s189 + $0x60] sm:$0xf] %vm586, %v546
        %612 = vst.msk [vmem:[%s189 + $0x64] sm:$0xf] %vm586, %v547
        %613 = vst.msk [vmem:[%s189 + $0x68] sm:$0xf] %vm586, %v548
        %614 = vst.msk [vmem:[%s189 + $0x6c] sm:$0xf] %vm586, %v549
        %615 = vst.msk [vmem:[%s189 + $0x70] sm:$0xf] %vm586, %v550
        %616 = vst.msk [vmem:[%s189 + $0x74] sm:$0xf] %vm586, %v551
        %617 = vst.msk [vmem:[%s189 + $0x78] sm:$0xf] %vm586, %v552
        %618 = vst.msk [vmem:[%s189 + $0x7c] sm:$0xf] %vm586, %v553
        %vm619 = vcmask 31744
        %v620 = vsel %vm619, %v332, 0.0
        %v621 = vsel %vm619, %v335, 0.0
        %v622 = vadd.f32 %v620, %v621
        %v623 = vsel %vm619, %v340, 0.0
        %v624 = vadd.f32 %v622, %v623
        %v625 = vsel %vm619, %v343, 0.0
        %v626 = vadd.f32 %v624, %v625
        %v627 = vsel %vm619, %v348, 0.0
        %v628 = vadd.f32 %v626, %v627
        %v629 = vsel %vm619, %v351, 0.0
        %v630 = vadd.f32 %v628, %v629
        %v631 = vsel %vm619, %v356, 0.0
        %v632 = vadd.f32 %v630, %v631
        %v633 = vsel %vm619, %v359, 0.0
        %v634 = vadd.f32 %v632, %v633
        %v635 = vsel %vm619, %v364, 0.0
        %v636 = vadd.f32 %v634, %v635
        %v637 = vsel %vm619, %v367, 0.0
        %v638 = vadd.f32 %v636, %v637
        %v639 = vsel %vm619, %v372, 0.0
        %v640 = vadd.f32 %v638, %v639
        %v641 = vsel %vm619, %v375, 0.0
        %v642 = vadd.f32 %v640, %v641
        %v643 = vsel %vm619, %v380, 0.0
        %v644 = vadd.f32 %v642, %v643
        %v645 = vsel %vm619, %v383, 0.0
        %v646 = vadd.f32 %v644, %v645
        %v647 = vsel %vm619, %v388, 0.0
        %v648 = vadd.f32 %v646, %v647
        %v649 = vsel %vm619, %v391, 0.0
        %v650 = vadd.f32 %v648, %v649
        %v651 = vsel %vm619, %v396, 0.0
        %v652 = vadd.f32 %v650, %v651
        %v653 = vsel %vm619, %v399, 0.0
        %v654 = vadd.f32 %v652, %v653
        %v655 = vsel %vm619, %v404, 0.0
        %v656 = vadd.f32 %v654, %v655
        %v657 = vsel %vm619, %v407, 0.0
        %v658 = vadd.f32 %v656, %v657
        %v659 = vsel %vm619, %v412, 0.0
        %v660 = vadd.f32 %v658, %v659
        %v661 = vsel %vm619, %v415, 0.0
        %v662 = vadd.f32 %v660, %v661
        %v663 = vsel %vm619, %v420, 0.0
        %v664 = vadd.f32 %v662, %v663
        %v665 = vsel %vm619, %v423, 0.0
        %v666 = vadd.f32 %v664, %v665
        %v667 = vsel %vm619, %v428, 0.0
        %v668 = vadd.f32 %v666, %v667
        %v669 = vsel %vm619, %v431, 0.0
        %v670 = vadd.f32 %v668, %v669
        %v671 = vsel %vm619, %v436, 0.0
        %v672 = vadd.f32 %v670, %v671
        %v673 = vsel %vm619, %v439, 0.0
        %v674 = vadd.f32 %v672, %v673
        %v675 = vsel %vm619, %v444, 0.0
        %v676 = vadd.f32 %v674, %v675
        %v677 = vsel %vm619, %v447, 0.0
        %v678 = vadd.f32 %v676, %v677
        %v679 = vsel %vm619, %v452, 0.0
        %v680 = vadd.f32 %v678, %v679
        %v681 = vsel %vm619, %v455, 0.0
        %v682 = vadd.f32 %v680, %v681
        %v683 = vrot.slane %v682, 4
        %v684 = vadd.f32 %v682, %v683
        %v685 = vrot.slane %v684, 2
        %v686 = vadd.f32 %v684, %v685
        %v687 = vrot.slane %v686, 1
        %v688 = vadd.f32 %v686, %v687
        %v689 = vmul.f32 %v332, %v332
        %v690 = vmul.f32 %v335, %v335
        %v691 = vmul.f32 %v340, %v340
        %v692 = vmul.f32 %v343, %v343
        %v693 = vmul.f32 %v348, %v348
        %v694 = vmul.f32 %v351, %v351
        %v695 = vmul.f32 %v356, %v356
        %v696 = vmul.f32 %v359, %v359
        %v697 = vmul.f32 %v364, %v364
        %v698 = vmul.f32 %v367, %v367
        %v699 = vmul.f32 %v372, %v372
        %v700 = vmul.f32 %v375, %v375
        %v701 = vmul.f32 %v380, %v380
        %v702 = vmul.f32 %v383, %v383
        %v703 = vmul.f32 %v388, %v388
        %v704 = vmul.f32 %v391, %v391
        %v705 = vmul.f32 %v396, %v396
        %v706 = vmul.f32 %v399, %v399
        %v707 = vmul.f32 %v404, %v404
        %v708 = vmul.f32 %v407, %v407
        %v709 = vmul.f32 %v412, %v412
        %v710 = vmul.f32 %v415, %v415
        %v711 = vmul.f32 %v420, %v420
        %v712 = vmul.f32 %v423, %v423
        %v713 = vmul.f32 %v428, %v428
        %v714 = vmul.f32 %v431, %v431
        %v715 = vmul.f32 %v436, %v436
        %v716 = vmul.f32 %v439, %v439
        %v717 = vmul.f32 %v444, %v444
        %v718 = vmul.f32 %v447, %v447
        %v719 = vmul.f32 %v452, %v452
        %v720 = vmul.f32 %v455, %v455
        %v721 = vsel %vm619, %v689, 0.0
        %v722 = vsel %vm619, %v690, 0.0
        %v723 = vadd.f32 %v721, %v722
        %v724 = vsel %vm619, %v691, 0.0
        %v725 = vadd.f32 %v723, %v724
        %v726 = vsel %vm619, %v692, 0.0
        %v727 = vadd.f32 %v725, %v726
        %v728 = vsel %vm619, %v693, 0.0
        %v729 = vadd.f32 %v727, %v728
        %v730 = vsel %vm619, %v694, 0.0
        %v731 = vadd.f32 %v729, %v730
        %v732 = vsel %vm619, %v695, 0.0
        %v733 = vadd.f32 %v731, %v732
        %v734 = vsel %vm619, %v696, 0.0
        %v735 = vadd.f32 %v733, %v734
        %v736 = vsel %vm619, %v697, 0.0
        %v737 = vadd.f32 %v735, %v736
        %v738 = vsel %vm619, %v698, 0.0
        %v739 = vadd.f32 %v737, %v738
        %v740 = vsel %vm619, %v699, 0.0
        %v741 = vadd.f32 %v739, %v740
        %v742 = vsel %vm619, %v700, 0.0
        %v743 = vadd.f32 %v741, %v742
        %v744 = vsel %vm619, %v701, 0.0
        %v745 = vadd.f32 %v743, %v744
        %v746 = vsel %vm619, %v702, 0.0
        %v747 = vadd.f32 %v745, %v746
        %v748 = vsel %vm619, %v703, 0.0
        %v749 = vadd.f32 %v747, %v748
        %v750 = vsel %vm619, %v704, 0.0
        %v751 = vadd.f32 %v749, %v750
        %v752 = vsel %vm619, %v705, 0.0
        %v753 = vadd.f32 %v751, %v752
        %v754 = vsel %vm619, %v706, 0.0
        %v755 = vadd.f32 %v753, %v754
        %v756 = vsel %vm619, %v707, 0.0
        %v757 = vadd.f32 %v755, %v756
        %v758 = vsel %vm619, %v708, 0.0
        %v759 = vadd.f32 %v757, %v758
        %v760 = vsel %vm619, %v709, 0.0
        %v761 = vadd.f32 %v759, %v760
        %v762 = vsel %vm619, %v710, 0.0
        %v763 = vadd.f32 %v761, %v762
        %v764 = vsel %vm619, %v711, 0.0
        %v765 = vadd.f32 %v763, %v764
        %v766 = vsel %vm619, %v712, 0.0
        %v767 = vadd.f32 %v765, %v766
        %v768 = vsel %vm619, %v713, 0.0
        %v769 = vadd.f32 %v767, %v768
        %v770 = vsel %vm619, %v714, 0.0
        %v771 = vadd.f32 %v769, %v770
        %v772 = vsel %vm619, %v715, 0.0
        %v773 = vadd.f32 %v771, %v772
        %v774 = vsel %vm619, %v716, 0.0
        %v775 = vadd.f32 %v773, %v774
        %v776 = vsel %vm619, %v717, 0.0
        %v777 = vadd.f32 %v775, %v776
        %v778 = vsel %vm619, %v718, 0.0
        %v779 = vadd.f32 %v777, %v778
        %v780 = vsel %vm619, %v719, 0.0
        %v781 = vadd.f32 %v779, %v780
        %v782 = vsel %vm619, %v720, 0.0
        %v783 = vadd.f32 %v781, %v782
        %v784 = vrot.slane %v783, 4
        %v785 = vadd.f32 %v783, %v784
        %v786 = vrot.slane %v785, 2
        %v787 = vadd.f32 %v785, %v786
        %v788 = vrot.slane %v787, 1
        %v789 = vadd.f32 %v787, %v788
        %p790 = scmp.eq.s32.totalorder %s18, 0
        // Predicated region
        $region33: #{bottleneck_forward.4} parent=27 // pred_check
          %p791 = pneg %p790
        $region34: #{bottleneck_forward.4} parent=27 // pred_check_branch
          %793 = sbr.rel (%p791) target = $region36
        $region35: #{bottleneck_forward.4} parent=27 // pred_region
          %vm794 = vcmask 25600
          %795 = vst.msk [vmem:[%s3] sm:$0x3] %vm794, 0.0
        $region36: #{bottleneck_forward.4} parent=27 // pred_fallthru
          _
        %v796 = vld [vmem:[%s3] sm:$0x3]
        %vm797 = vcmask 1040384
        %v798 = vsel %vm797, %v688, %v789
        %v799 = vadd.f32 %v796, %v798
        %vm800 = vcmask 25600
        %801 = vst.msk [vmem:[%s3] sm:$0x3] %vm800, %v799
        %s802 = smul.u32 32, %s18
        %p803 = scmp.lt.s32.totalorder %s802, 63
        %s804 = scalar_select %p803, %s802, 63
        %s805 = smul.addr %s804, 4
        %s806 = scalar_lea.vmem %s2, %s805
        // Predicated region
        $region37: #{bottleneck_forward.4} parent=27 // pred_check
          %p807 = pneg %p83
        $region38: #{bottleneck_forward.4} parent=27 // pred_check_branch
          %809 = sbr.rel (%p807) target = $region40
        $region39: #{bottleneck_forward.4} parent=27 // pred_region
          %s810 = smul.u32 32, %s18
        $region40: #{bottleneck_forward.4} parent=27 // pred_fallthru
          _
        // Predicated region
        $region41: #{bottleneck_forward.4} parent=27 // pred_check
          %p811 = pneg %p104
        $region42: #{bottleneck_forward.4} parent=27 // pred_check_branch
          %813 = sbr.rel (%p811) target = $region44
        $region43: #{bottleneck_forward.4} parent=27 // pred_region
          _
        $region44: #{bottleneck_forward.4} parent=27 // pred_fallthru
          _
        // Predicated region
        $region45: #{bottleneck_forward.4} parent=27 // pred_check
          %p814 = pneg %p104
        $region46: #{bottleneck_forward.4} parent=27 // pred_check_branch
          %816 = sbr.rel (%p814) target = $region48
        $region47: #{bottleneck_forward.4} parent=27 // pred_region
          _
        $region48: #{bottleneck_forward.4} parent=27 // pred_fallthru
          _
      $region28: #{bottleneck_forward.4} parent=5 // pred_fallthru
        _
      %p817 = scmp.le.s32.totalorder 2, %s13
      // Predicated region
      $region49: #{bottleneck_forward.4} parent=5 // pred_check
        %p818 = pneg %p817
      $region50: #{bottleneck_forward.4} parent=5 // pred_check_branch
        %820 = sbr.rel (%p818) target = $region52
      $region51: #{bottleneck_forward.4} parent=5 // pred_region
        %s821 = ssub.s32 %s13, 2
        // Predicated region
        $region53: #{bottleneck_forward.4} parent=51 // pred_check
          %p822 = pneg %p89
        $region54: #{bottleneck_forward.4} parent=51 // pred_check_branch
          %824 = sbr.rel (%p822) target = $region56
        $region55: #{bottleneck_forward.4} parent=51 // pred_region
          %s825 = smul.u32 32, %s19
          %p826 = scmp.lt.s32.totalorder %s825, 63
          %s827 = scalar_select %p826, %s825, 63
          %s828 = smul.addr %s827, 4
          %s829 = scalar_lea.vmem %s2, %s828
        $region56: #{bottleneck_forward.4} parent=51 // pred_fallthru
          _
      $region52: #{bottleneck_forward.4} parent=5 // pred_fallthru
        _
    $region6: #{bottleneck_forward.4} parent=1 // loop_footer
      %s17 = sadd.s32 1, %s13
    $region7: #{bottleneck_forward.4} parent=1 // loop_footer_branch
      %12 = sbr.rel target = $region3
    $region8: #{bottleneck_forward.4} parent=1 // loop_exit
      _
    %830 = vsyncpa [#allocation3], 1
    %s831 = scalar_lea.sflag [#allocation3], 1
    %832 = vsyncpa %s831, 1

// kernel: bottleneck_forward.6
$region0: #{bottleneck_forward.6}
  #allocation0 [shape = 'u32[]', space=smem, size = 0x4, offset = 0x4, fixed_abs, tag = 'smem constant byte address 0x4 - core index']
  #allocation1 [shape = 'u32[144,128]{1,0:T(1,128)}', space=vmem, size = 0x12000, scoped, tag = 'internal scratch']
  %s0 = inlined_call_operand.vmem [shape: bf16[512,4], index: 0, kind: input, shape index: {}]
  %s1 = inlined_call_operand.vmem [shape: f32[1,4], index: 1, kind: input, shape index: {}]
  %s2 = inlined_call_operand.vmem [shape: f32[1,4], index: 2, kind: input, shape index: {}]
  %s3 = inlined_call_operand.vmem [shape: bf16[4,16], index: 3, kind: input, shape index: {}]
  %s4 = inlined_call_operand.vmem [shape: bf16[512,16], index: 4, kind: output, shape index: {0}]
  %s5 = inlined_call_operand.vmem [shape: f32[2,16], index: 5, kind: output, shape index: {1}]
  %6 = xla_tuple %s4, %s5
  %s7 = sld [smem:[#allocation0]]
  $region61: #{bottleneck_forward.6} parent=0
    _
  %s9 = ssub.s32 1, %s7
  %s10 = scalar_select 0, %s9, %s7
  loop: start=0, step=1, limit=4
  $region2: #{bottleneck_forward.6} parent=0 // loop_pre_header
    _
  $region3: #{bottleneck_forward.6} parent=0 // loop_header
    %s12 = sphi 0, %s16
    %p13 = scmp.ge.s32.totalorder %s12, 4
    %s22 = sphi 0, %s24
    %s25 = sphi 0, %s22
    %s26 = sphi 0, %s25
    %s42 = sphi 0, %s26
    %s46 = sphi 0, %s46
    %s48 = sphi 0, %s46
    %s49 = sphi 0, %s48
    %s63 = sphi 0, %s49
    %s67 = sphi 0, %s67
    %s69 = sphi 0, %s67
    %s70 = sphi 0, %s69
    %s84 = sphi 0, %s70
    %s88 = sphi 0, %s88
    %s90 = sphi 0, %s88
    %s91 = sphi 0, %s90
    %s105 = sphi 0, %s91
    %s111 = sphi 0, %s113
    %s114 = sphi 0, %s111
    %s115 = sphi 0, %s114
    %s131 = sphi 0, %s115
    %s135 = sphi 0, %s135
    %s137 = sphi 0, %s135
    %s138 = sphi 0, %s137
    %s152 = sphi 0, %s138
  $region4: #{bottleneck_forward.6} parent=0 // loop_header_branch
    %15 = sbr.rel (%p13) target = $region8
  $region5: #{bottleneck_forward.6} parent=0 // loop_body
    %s17 = ssub.s32 %s12, 1
    %s18 = ssub.s32 %s12, 2
    %s19 = sadd.s32 %s12, 1
    %s20 = ssub.s32 %s12, %s19
    %p21 = scmp.eq.s32.totalorder %s20, 0
    %s23 = sadd.s32 %s22, 1
    %s24 = scalar_select %p21, %s22, %s23
    %p27 = pneg %p21
    %p28 = scmp.eq.s32.totalorder %s12, 1
    %p29 = por %p27, %p28
    %p30 = scmp.ne.s32.totalorder %s22, %s25
    %p31 = scmp.eq.s32.totalorder %s12, 0
    %p32 = por %p30, %p31
    %p33 = scmp.ne.s32.totalorder %s22, %s25
    %p34 = scmp.eq.s32.totalorder %s17, 1
    %p35 = por %p33, %p34
    %p36 = scmp.ne.s32.totalorder %s25, %s26
    %p37 = scmp.eq.s32.totalorder %s17, 0
    %p38 = por %p36, %p37
    %p39 = scmp.ne.s32.totalorder %s25, %s26
    %p40 = scmp.eq.s32.totalorder %s18, 1
    %p41 = por %p39, %p40
    %p43 = scmp.ne.s32.totalorder %s26, %s42
    %p44 = scmp.eq.s32.totalorder %s18, 0
    %p45 = por %p43, %p44
    %s47 = sadd.s32 %s46, 1
    %p50 = scmp.eq.s32.totalorder %s12, 1
    %p51 = scmp.ne.s32.totalorder %s46, %s48
    %p52 = scmp.eq.s32.totalorder %s12, 0
    %p53 = por %p51, %p52
    %p54 = scmp.ne.s32.totalorder %s46, %s48
    %p55 = scmp.eq.s32.totalorder %s17, 1
    %p56 = por %p54, %p55
    %p57 = scmp.ne.s32.totalorder %s48, %s49
    %p58 = scmp.eq.s32.totalorder %s17, 0
    %p59 = por %p57, %p58
    %p60 = scmp.ne.s32.totalorder %s48, %s49
    %p61 = scmp.eq.s32.totalorder %s18, 1
    %p62 = por %p60, %p61
    %p64 = scmp.ne.s32.totalorder %s49, %s63
    %p65 = scmp.eq.s32.totalorder %s18, 0
    %p66 = por %p64, %p65
    %s68 = sadd.s32 %s67, 1
    %p71 = scmp.eq.s32.totalorder %s12, 1
    %p72 = scmp.ne.s32.totalorder %s67, %s69
    %p73 = scmp.eq.s32.totalorder %s12, 0
    %p74 = por %p72, %p73
    %p75 = scmp.ne.s32.totalorder %s67, %s69
    %p76 = scmp.eq.s32.totalorder %s17, 1
    %p77 = por %p75, %p76
    %p78 = scmp.ne.s32.totalorder %s69, %s70
    %p79 = scmp.eq.s32.totalorder %s17, 0
    %p80 = por %p78, %p79
    %p81 = scmp.ne.s32.totalorder %s69, %s70
    %p82 = scmp.eq.s32.totalorder %s18, 1
    %p83 = por %p81, %p82
    %p85 = scmp.ne.s32.totalorder %s70, %s84
    %p86 = scmp.eq.s32.totalorder %s18, 0
    %p87 = por %p85, %p86
    %s89 = sadd.s32 %s88, 1
    %p92 = scmp.eq.s32.totalorder %s12, 1
    %p93 = scmp.ne.s32.totalorder %s88, %s90
    %p94 = scmp.eq.s32.totalorder %s12, 0
    %p95 = por %p93, %p94
    %p96 = scmp.ne.s32.totalorder %s88, %s90
    %p97 = scmp.eq.s32.totalorder %s17, 1
    %p98 = por %p96, %p97
    %p99 = scmp.ne.s32.totalorder %s90, %s91
    %p100 = scmp.eq.s32.totalorder %s17, 0
    %p101 = por %p99, %p100
    %p102 = scmp.ne.s32.totalorder %s90, %s91
    %p103 = scmp.eq.s32.totalorder %s18, 1
    %p104 = por %p102, %p103
    %p106 = scmp.ne.s32.totalorder %s91, %s105
    %p107 = scmp.eq.s32.totalorder %s18, 0
    %p108 = por %p106, %p107
    %s109 = ssub.s32 %s12, %s19
    %p110 = scmp.eq.s32.totalorder %s109, 0
    %s112 = sadd.s32 %s111, 1
    %s113 = scalar_select %p110, %s111, %s112
    %p116 = pneg %p110
    %p117 = scmp.eq.s32.totalorder %s12, 1
    %p118 = por %p116, %p117
    %p119 = scmp.ne.s32.totalorder %s111, %s114
    %p120 = scmp.eq.s32.totalorder %s12, 0
    %p121 = por %p119, %p120
    %p122 = scmp.ne.s32.totalorder %s111, %s114
    %p123 = scmp.eq.s32.totalorder %s17, 1
    %p124 = por %p122, %p123
    %p125 = scmp.ne.s32.totalorder %s114, %s115
    %p126 = scmp.eq.s32.totalorder %s17, 0
    %p127 = por %p125, %p126
    %p128 = scmp.ne.s32.totalorder %s114, %s115
    %p129 = scmp.eq.s32.totalorder %s18, 1
    %p130 = por %p128, %p129
    %p132 = scmp.ne.s32.totalorder %s115, %s131
    %p133 = scmp.eq.s32.totalorder %s18, 0
    %p134 = por %p132, %p133
    %s136 = sadd.s32 %s135, 1
    %p139 = scmp.eq.s32.totalorder %s12, 1
    %p140 = scmp.ne.s32.totalorder %s135, %s137
    %p141 = scmp.eq.s32.totalorder %s12, 0
    %p142 = por %p140, %p141
    %p143 = scmp.ne.s32.totalorder %s135, %s137
    %p144 = scmp.eq.s32.totalorder %s17, 1
    %p145 = por %p143, %p144
    %p146 = scmp.ne.s32.totalorder %s137, %s138
    %p147 = scmp.eq.s32.totalorder %s17, 0
    %p148 = por %p146, %p147
    %p149 = scmp.ne.s32.totalorder %s137, %s138
    %p150 = scmp.eq.s32.totalorder %s18, 1
    %p151 = por %p149, %p150
    %p153 = scmp.ne.s32.totalorder %s138, %s152
    %p154 = scmp.eq.s32.totalorder %s18, 0
    %p155 = por %p153, %p154
    %p156 = scmp.le.s32.totalorder 1, %s12
    %p157 = scmp.lt.s32.totalorder %s12, 3
    %p158 = pnand %p156, %p157
    %p159 = pneg %p158
    // Predicated region
    $region9: #{bottleneck_forward.6} parent=5 // pred_check
      _
    $region10: #{bottleneck_forward.6} parent=5 // pred_check_branch
      %161 = sbr.rel (%p158) target = $region12
    $region11: #{bottleneck_forward.6} parent=5 // pred_region
      %s162 = ssub.s32 %s12, 1
      // Predicated region
      $region13: #{bottleneck_forward.6} parent=11 // pred_check
        %p163 = pneg %p59
      $region14: #{bottleneck_forward.6} parent=11 // pred_check_branch
        %165 = sbr.rel (%p163) target = $region16
      $region15: #{bottleneck_forward.6} parent=11 // pred_region
        _
      $region16: #{bottleneck_forward.6} parent=11 // pred_fallthru
        _
      // Predicated region
      $region17: #{bottleneck_forward.6} parent=11 // pred_check
        %p166 = pneg %p80
      $region18: #{bottleneck_forward.6} parent=11 // pred_check_branch
        %168 = sbr.rel (%p166) target = $region20
      $region19: #{bottleneck_forward.6} parent=11 // pred_region
        _
      $region20: #{bottleneck_forward.6} parent=11 // pred_fallthru
        _
      // Predicated region
      $region21: #{bottleneck_forward.6} parent=11 // pred_check
        %p169 = pneg %p101
      $region22: #{bottleneck_forward.6} parent=11 // pred_check_branch
        %171 = sbr.rel (%p169) target = $region24
      $region23: #{bottleneck_forward.6} parent=11 // pred_region
        _
      $region24: #{bottleneck_forward.6} parent=11 // pred_fallthru
        _
    $region12: #{bottleneck_forward.6} parent=5 // pred_fallthru
      _
    %p172 = scmp.lt.s32.totalorder %s12, 2
    // Predicated region
    $region25: #{bottleneck_forward.6} parent=5 // pred_check
      %p173 = pneg %p172
    $region26: #{bottleneck_forward.6} parent=5 // pred_check_branch
      %175 = sbr.rel (%p173) target = $region28
    $region27: #{bottleneck_forward.6} parent=5 // pred_region
      // Predicated region
      $region29: #{bottleneck_forward.6} parent=27 // pred_check
        %p176 = pneg %p32
      $region30: #{bottleneck_forward.6} parent=27 // pred_check_branch
        %178 = sbr.rel (%p176) target = $region32
      $region31: #{bottleneck_forward.6} parent=27 // pred_region
        %s179 = smul.u32 32, %s12
        %p180 = scmp.lt.s32.totalorder %s179, 63
        %s181 = scalar_select %p180, %s179, 63
        %s182 = smul.addr %s181, 4
        %s183 = scalar_lea.vmem %s0, %s182
        %s184 = smul.u32 32, %s12
      $region32: #{bottleneck_forward.6} parent=27 // pred_fallthru
        _
    $region28: #{bottleneck_forward.6} parent=5 // pred_fallthru
      _
    %p185 = scmp.le.s32.totalorder 1, %s12
    %p186 = scmp.lt.s32.totalorder %s12, 3
    %p187 = pnand %p185, %p186
    %p188 = pneg %p187
    // Predicated region
    $region33: #{bottleneck_forward.6} parent=5 // pred_check
      _
    $region34: #{bottleneck_forward.6} parent=5 // pred_check_branch
      %190 = sbr.rel (%p187) target = $region36
    $region35: #{bottleneck_forward.6} parent=5 // pred_region
      %s191 = ssub.s32 %s12, 1
      %s192 = smul.u32 32, %s17
      %p193 = scmp.lt.s32.totalorder %s192, 63
      %s194 = scalar_select %p193, %s192, 63
      %s195 = smul.addr %s194, 4
      %s196 = scalar_lea.vmem %s0, %s195
      %p197 = pneg %p38
      %p198 = pneg %p35
      %p199 = pneg %p59
      %p200 = pneg %p56
      %p201 = pneg %p80
      %p202 = pneg %p77
      %p203 = pneg %p101
      %p204 = pneg %p98
      %p205 = pneg %p127
      %p206 = pneg %p124
      %s207 = smul.u32 32, %s17
      %p208 = scmp.lt.s32.totalorder %s207, 63
      %s209 = scalar_select %p208, %s207, 63
      %s210 = smul.addr %s209, 4
      %s211 = scalar_lea.vmem %s4, %s210
      %p212 = pneg %p148
      %p213 = pneg %p145
      %s214 = smul.u32 32, %s17
      %p215 = scmp.lt.s32.totalorder %s214, 63
      %s216 = scalar_select %p215, %s214, 63
      %s217 = smul.addr %s216, 4
      %s218 = scalar_lea.vmem %s0, %s217
      %s219 = smul.u32 32, %s17
      %s220 = smul.u32 32, %s17
      %p221 = scmp.lt.s32.totalorder %s220, 63
      %s222 = scalar_select %p221, %s220, 63
      %s223 = smul.addr %s222, 4
      %s224 = scalar_lea.vmem %s4, %s223
      %s225 = smul.u32 32, %s17
      %v227 = vld [vmem:[%s218] sm:$0xf]
      %v228 = vld [vmem:[%s218 + $0x4] sm:$0xf]
      %v229 = vld [vmem:[%s218 + $0x8] sm:$0xf]
      %v230 = vld [vmem:[%s218 + $0xc] sm:$0xf]
      %v231 = vld [vmem:[%s218 + $0x10] sm:$0xf]
      %v232 = vld [vmem:[%s218 + $0x14] sm:$0xf]
      %v233 = vld [vmem:[%s218 + $0x18] sm:$0xf]
      %v234 = vld [vmem:[%s218 + $0x1c] sm:$0xf]
      %v235 = vld [vmem:[%s218 + $0x20] sm:$0xf]
      %v236 = vld [vmem:[%s218 + $0x24] sm:$0xf]
      %v237 = vld [vmem:[%s218 + $0x28] sm:$0xf]
      %v238 = vld [vmem:[%s218 + $0x2c] sm:$0xf]
      %v239 = vld [vmem:[%s218 + $0x30] sm:$0xf]
      %v240 = vld [vmem:[%s218 + $0x34] sm:$0xf]
      %v241 = vld [vmem:[%s218 + $0x38] sm:$0xf]
      %v242 = vld [vmem:[%s218 + $0x3c] sm:$0xf]
      %v243 = vld [vmem:[%s218 + $0x40] sm:$0xf]
      %v244 = vld [vmem:[%s218 + $0x44] sm:$0xf]
      %v245 = vld [vmem:[%s218 + $0x48] sm:$0xf]
      %v246 = vld [vmem:[%s218 + $0x4c] sm:$0xf]
      %v247 = vld [vmem:[%s218 + $0x50] sm:$0xf]
      %v248 = vld [vmem:[%s218 + $0x54] sm:$0xf]
      %v249 = vld [vmem:[%s218 + $0x58] sm:$0xf]
      %v250 = vld [vmem:[%s218 + $0x5c] sm:$0xf]
      %v251 = vld [vmem:[%s218 + $0x60] sm:$0xf]
      %v252 = vld [vmem:[%s218 + $0x64] sm:$0xf]
      %v253 = vld [vmem:[%s218 + $0x68] sm:$0xf]
      %v254 = vld [vmem:[%s218 + $0x6c] sm:$0xf]
      %v255 = vld [vmem:[%s218 + $0x70] sm:$0xf]
      %v256 = vld [vmem:[%s218 + $0x74] sm:$0xf]
      %v257 = vld [vmem:[%s218 + $0x78] sm:$0xf]
      %v258 = vld [vmem:[%s218 + $0x7c] sm:$0xf]
      %v259 = vunpack.c.l.bf16 %v227
      %v260 = vunpack.c.l.bf16 %v228
      %v261 = vunpack.c.l.bf16 %v229
      %v262 = vunpack.c.l.bf16 %v230
      %v263 = vunpack.c.l.bf16 %v231
      %v264 = vunpack.c.l.bf16 %v232
      %v265 = vunpack.c.l.bf16 %v233
      %v266 = vunpack.c.l.bf16 %v234
      %v267 = vunpack.c.l.bf16 %v235
      %v268 = vunpack.c.l.bf16 %v236
      %v269 = vunpack.c.l.bf16 %v237
      %v270 = vunpack.c.l.bf16 %v238
      %v271 = vunpack.c.l.bf16 %v239
      %v272 = vunpack.c.l.bf16 %v240
      %v273 = vunpack.c.l.bf16 %v241
      %v274 = vunpack.c.l.bf16 %v242
      %v275 = vunpack.c.l.bf16 %v243
      %v276 = vunpack.c.l.bf16 %v244
      %v277 = vunpack.c.l.bf16 %v245
      %v278 = vunpack.c.l.bf16 %v246
      %v279 = vunpack.c.l.bf16 %v247
      %v280 = vunpack.c.l.bf16 %v248
      %v281 = vunpack.c.l.bf16 %v249
      %v282 = vunpack.c.l.bf16 %v250
      %v283 = vunpack.c.l.bf16 %v251
      %v284 = vunpack.c.l.bf16 %v252
      %v285 = vunpack.c.l.bf16 %v253
      %v286 = vunpack.c.l.bf16 %v254
      %v287 = vunpack.c.l.bf16 %v255
      %v288 = vunpack.c.l.bf16 %v256
      %v289 = vunpack.c.l.bf16 %v257
      %v290 = vunpack.c.l.bf16 %v258
      %v291 = vld [vmem:[%s1] sm:$0x1]
      %v293 = vlaneseq
      %v294 = vshrl.u32 %v293, 7
      %v295 = vsub.s32 0, %v294
      %v296 = vrot.slane %v291, %v295
      %v298 = vmul.f32 %v259, %v296
      %v299 = vmul.f32 %v260, %v296
      %v300 = vmul.f32 %v261, %v296
      %v301 = vmul.f32 %v262, %v296
      %v302 = vmul.f32 %v263, %v296
      %v303 = vmul.f32 %v264, %v296
      %v304 = vmul.f32 %v265, %v296
      %v305 = vmul.f32 %v266, %v296
      %v306 = vmul.f32 %v267, %v296
      %v307 = vmul.f32 %v268, %v296
      %v308 = vmul.f32 %v269, %v296
      %v309 = vmul.f32 %v270, %v296
      %v310 = vmul.f32 %v271, %v296
      %v311 = vmul.f32 %v272, %v296
      %v312 = vmul.f32 %v273, %v296
      %v313 = vmul.f32 %v274, %v296
      %v314 = vmul.f32 %v275, %v296
      %v315 = vmul.f32 %v276, %v296
      %v316 = vmul.f32 %v277, %v296
      %v317 = vmul.f32 %v278, %v296
      %v318 = vmul.f32 %v279, %v296
      %v319 = vmul.f32 %v280, %v296
      %v320 = vmul.f32 %v281, %v296
      %v321 = vmul.f32 %v282, %v296
      %v322 = vmul.f32 %v283, %v296
      %v323 = vmul.f32 %v284, %v296
      %v324 = vmul.f32 %v285, %v296
      %v325 = vmul.f32 %v286, %v296
      %v326 = vmul.f32 %v287, %v296
      %v327 = vmul.f32 %v288, %v296
      %v328 = vmul.f32 %v289, %v296
      %v329 = vmul.f32 %v290, %v296
      %v330 = vld [vmem:[%s2] sm:$0x1]
      %v332 = vlaneseq
      %v333 = vshrl.u32 %v332, 7
      %v334 = vsub.s32 0, %v333
      %v335 = vrot.slane %v330, %v334
      %v337 = vadd.f32 %v298, %v335
      %v338 = vadd.f32 %v299, %v335
      %v339 = vadd.f32 %v300, %v335
      %v340 = vadd.f32 %v301, %v335
      %v341 = vadd.f32 %v302, %v335
      %v342 = vadd.f32 %v303, %v335
      %v343 = vadd.f32 %v304, %v335
      %v344 = vadd.f32 %v305, %v335
      %v345 = vadd.f32 %v306, %v335
      %v346 = vadd.f32 %v307, %v335
      %v347 = vadd.f32 %v308, %v335
      %v348 = vadd.f32 %v309, %v335
      %v349 = vadd.f32 %v310, %v335
      %v350 = vadd.f32 %v311, %v335
      %v351 = vadd.f32 %v312, %v335
      %v352 = vadd.f32 %v313, %v335
      %v353 = vadd.f32 %v314, %v335
      %v354 = vadd.f32 %v315, %v335
      %v355 = vadd.f32 %v316, %v335
      %v356 = vadd.f32 %v317, %v335
      %v357 = vadd.f32 %v318, %v335
      %v358 = vadd.f32 %v319, %v335
      %v359 = vadd.f32 %v320, %v335
      %v360 = vadd.f32 %v321, %v335
      %v361 = vadd.f32 %v322, %v335
      %v362 = vadd.f32 %v323, %v335
      %v363 = vadd.f32 %v324, %v335
      %v364 = vadd.f32 %v325, %v335
      %v365 = vadd.f32 %v326, %v335
      %v366 = vadd.f32 %v327, %v335
      %v367 = vadd.f32 %v328, %v335
      %v368 = vadd.f32 %v329, %v335
      %v369 = vmax.f32 %v337, 0.0
      %v370 = vmax.f32 %v338, 0.0
      %v371 = vmax.f32 %v339, 0.0
      %v372 = vmax.f32 %v340, 0.0
      %v373 = vmax.f32 %v341, 0.0
      %v374 = vmax.f32 %v342, 0.0
      %v375 = vmax.f32 %v343, 0.0
      %v376 = vmax.f32 %v344, 0.0
      %v377 = vmax.f32 %v345, 0.0
      %v378 = vmax.f32 %v346, 0.0
      %v379 = vmax.f32 %v347, 0.0
      %v380 = vmax.f32 %v348, 0.0
      %v381 = vmax.f32 %v349, 0.0
      %v382 = vmax.f32 %v350, 0.0
      %v383 = vmax.f32 %v351, 0.0
      %v384 = vmax.f32 %v352, 0.0
      %v385 = vmax.f32 %v353, 0.0
      %v386 = vmax.f32 %v354, 0.0
      %v387 = vmax.f32 %v355, 0.0
      %v388 = vmax.f32 %v356, 0.0
      %v389 = vmax.f32 %v357, 0.0
      %v390 = vmax.f32 %v358, 0.0
      %v391 = vmax.f32 %v359, 0.0
      %v392 = vmax.f32 %v360, 0.0
      %v393 = vmax.f32 %v361, 0.0
      %v394 = vmax.f32 %v362, 0.0
      %v395 = vmax.f32 %v363, 0.0
      %v396 = vmax.f32 %v364, 0.0
      %v397 = vmax.f32 %v365, 0.0
      %v398 = vmax.f32 %v366, 0.0
      %v399 = vmax.f32 %v367, 0.0
      %v400 = vmax.f32 %v368, 0.0
      %v401 = vpack.c.bf16 %v370, %v369
      %v402 = vpack.c.bf16 %v372, %v371
      %v403 = vpack.c.bf16 %v374, %v373
      %v404 = vpack.c.bf16 %v376, %v375
      %v405 = vpack.c.bf16 %v378, %v377
      %v406 = vpack.c.bf16 %v380, %v379
      %v407 = vpack.c.bf16 %v382, %v381
      %v408 = vpack.c.bf16 %v384, %v383
      %v409 = vpack.c.bf16 %v386, %v385
      %v410 = vpack.c.bf16 %v388, %v387
      %v411 = vpack.c.bf16 %v390, %v389
      %v412 = vpack.c.bf16 %v392, %v391
      %v413 = vpack.c.bf16 %v394, %v393
      %v414 = vpack.c.bf16 %v396, %v395
      %v415 = vpack.c.bf16 %v398, %v397
      %v416 = vpack.c.bf16 %v400, %v399
      %v417 = vld [vmem:[%s3] sm:$0x3]
      %vm418 = vcmask 31744
      %v420 = vsel %vm418, %v401, 0
      %v423 = vsel %vm418, %v402, 0
      %v426 = vsel %vm418, %v403, 0
      %v429 = vsel %vm418, %v404, 0
      %v432 = vsel %vm418, %v405, 0
      %v435 = vsel %vm418, %v406, 0
      %v438 = vsel %vm418, %v407, 0
      %v441 = vsel %vm418, %v408, 0
      %v444 = vsel %vm418, %v409, 0
      %v447 = vsel %vm418, %v410, 0
      %v450 = vsel %vm418, %v411, 0
      %v453 = vsel %vm418, %v412, 0
      %v456 = vsel %vm418, %v413, 0
      %v459 = vsel %vm418, %v414, 0
      %v462 = vsel %vm418, %v415, 0
      %v465 = vsel %vm418, %v416, 0
      %vm467 = vcmask 1041408
      %v469 = vsel %vm467, %v417, 0
      %471 = vmatprep.subr.bf16.mxu0 0
      %472 = vmatpush1.bf16.msra.mxu0 0
      %473 = vmatprep.subr.bf16.mxu0 0
      %474 = vmatpush1.bf16.msra.mxu0 0
      %475 = vmatprep.subr.bf16.mxu0 0
      %476 = vmatpush1.bf16.msra.mxu0 0
      %477 = vmatprep.subr.bf16.mxu0 0
      %478 = vmatpush1.bf16.msra.mxu0 0
      %479 = vmatprep.subr.bf16.mxu0 0
      %480 = vmatpush1.bf16.msra.mxu0 0
      %481 = vmatprep.subr.bf16.mxu0 0
      %482 = vmatpush1.bf16.msra.mxu0 0
      %483 = vmatprep.subr.bf16.mxu0 0
      %484 = vmatpush1.bf16.msra.mxu0 0
      %485 = vmatprep.subr.bf16.mxu0 0
      %486 = vmatpush1.bf16.msra.mxu0 %v469
      %487 = vmatprep.subr.bf16.mxu0 0
      %488 = vmatpush2.bf16.msra.mxu0 0
      %489 = vmatprep.subr.bf16.mxu0 0
      %490 = vmatpush2.bf16.msra.mxu0 0
      %491 = vmatprep.subr.bf16.mxu0 0
      %492 = vmatpush2.bf16.msra.mxu0 0
      %493 = vmatprep.subr.bf16.mxu0 0
      %494 = vmatpush2.bf16.msra.mxu0 0
      %495 = vmatprep.subr.bf16.mxu0 0
      %496 = vmatpush2.bf16.msra.mxu0 0
      %497 = vmatprep.subr.bf16.mxu0 0
      %498 = vmatpush2.bf16.msra.mxu0 0
      %499 = vmatprep.subr.bf16.mxu0 0
      %500 = vmatpush2.bf16.msra.mxu0 0
      %501 = vmatprep.subr.bf16.mxu0 0
      %502 = vmatpush2.bf16.msra.mxu0 0
      %503 = vmatprep.mubr.bf16.mxu0 0
      %504 = vmatmul.mubr.bf16.gmra.mxu0 %v420
      %v505 = vpop.f32.mrf.mxu0
      %v506 = vadd.f32 0.0, %v505
      %v507 = vpop.f32.mrf.mxu0
      %v508 = vpop.f32.mrf.mxu0
      %v509 = vadd.f32 0.0, %v508
      %v510 = vpop.f32.mrf.mxu0
      %511 = vmatprep.mubr.bf16.mxu0 0
      %512 = vmatmul.mubr.bf16.gmra.mxu0 %v423
      %v513 = vpop.f32.mrf.mxu0
      %v514 = vadd.f32 0.0, %v513
      %v515 = vpop.f32.mrf.mxu0
      %v516 = vpop.f32.mrf.mxu0
      %v517 = vadd.f32 0.0, %v516
      %v518 = vpop.f32.mrf.mxu0
      %519 = vmatprep.mubr.bf16.mxu0 0
      %520 = vmatmul.mubr.bf16.gmra.mxu0 %v426
      %v521 = vpop.f32.mrf.mxu0
      %v522 = vadd.f32 0.0, %v521
      %v523 = vpop.f32.mrf.mxu0
      %v524 = vpop.f32.mrf.mxu0
      %v525 = vadd.f32 0.0, %v524
      %v526 = vpop.f32.mrf.mxu0
      %527 = vmatprep.mubr.bf16.mxu0 0
      %528 = vmatmul.mubr.bf16.gmra.mxu0 %v429
      %v529 = vpop.f32.mrf.mxu0
      %v530 = vadd.f32 0.0, %v529
      %v531 = vpop.f32.mrf.mxu0
      %v532 = vpop.f32.mrf.mxu0
      %v533 = vadd.f32 0.0, %v532
      %v534 = vpop.f32.mrf.mxu0
      %535 = vmatprep.mubr.bf16.mxu0 0
      %536 = vmatmul.mubr.bf16.gmra.mxu0 %v432
      %v537 = vpop.f32.mrf.mxu0
      %v538 = vadd.f32 0.0, %v537
      %v539 = vpop.f32.mrf.mxu0
      %v540 = vpop.f32.mrf.mxu0
      %v541 = vadd.f32 0.0, %v540
      %v542 = vpop.f32.mrf.mxu0
      %543 = vmatprep.mubr.bf16.mxu0 0
      %544 = vmatmul.mubr.bf16.gmra.mxu0 %v435
      %v545 = vpop.f32.mrf.mxu0
      %v546 = vadd.f32 0.0, %v545
      %v547 = vpop.f32.mrf.mxu0
      %v548 = vpop.f32.mrf.mxu0
      %v549 = vadd.f32 0.0, %v548
      %v550 = vpop.f32.mrf.mxu0
      %551 = vmatprep.mubr.bf16.mxu0 0
      %552 = vmatmul.mubr.bf16.gmra.mxu0 %v438
      %v553 = vpop.f32.mrf.mxu0
      %v554 = vadd.f32 0.0, %v553
      %v555 = vpop.f32.mrf.mxu0
      %v556 = vpop.f32.mrf.mxu0
      %v557 = vadd.f32 0.0, %v556
      %v558 = vpop.f32.mrf.mxu0
      %559 = vmatprep.mubr.bf16.mxu0 0
      %560 = vmatmul.mubr.bf16.gmra.mxu0 %v441
      %v561 = vpop.f32.mrf.mxu0
      %v562 = vadd.f32 0.0, %v561
      %v563 = vpop.f32.mrf.mxu0
      %v564 = vpop.f32.mrf.mxu0
      %v565 = vadd.f32 0.0, %v564
      %v566 = vpop.f32.mrf.mxu0
      %567 = vmatprep.mubr.bf16.mxu0 0
      %568 = vmatmul.mubr.bf16.gmra.mxu0 %v444
      %v569 = vpop.f32.mrf.mxu0
      %v570 = vadd.f32 0.0, %v569
      %v571 = vpop.f32.mrf.mxu0
      %v572 = vpop.f32.mrf.mxu0
      %v573 = vadd.f32 0.0, %v572
      %v574 = vpop.f32.mrf.mxu0
      %575 = vmatprep.mubr.bf16.mxu0 0
      %576 = vmatmul.mubr.bf16.gmra.mxu0 %v447
      %v577 = vpop.f32.mrf.mxu0
      %v578 = vadd.f32 0.0, %v577
      %v579 = vpop.f32.mrf.mxu0
      %v580 = vpop.f32.mrf.mxu0
      %v581 = vadd.f32 0.0, %v580
      %v582 = vpop.f32.mrf.mxu0
      %583 = vmatprep.mubr.bf16.mxu0 0
      %584 = vmatmul.mubr.bf16.gmra.mxu0 %v450
      %v585 = vpop.f32.mrf.mxu0
      %v586 = vadd.f32 0.0, %v585
      %v587 = vpop.f32.mrf.mxu0
      %v588 = vpop.f32.mrf.mxu0
      %v589 = vadd.f32 0.0, %v588
      %v590 = vpop.f32.mrf.mxu0
      %591 = vmatprep.mubr.bf16.mxu0 0
      %592 = vmatmul.mubr.bf16.gmra.mxu0 %v453
      %v593 = vpop.f32.mrf.mxu0
      %v594 = vadd.f32 0.0, %v593
      %v595 = vpop.f32.mrf.mxu0
      %v596 = vpop.f32.mrf.mxu0
      %v597 = vadd.f32 0.0, %v596
      %v598 = vpop.f32.mrf.mxu0
      %599 = vmatprep.mubr.bf16.mxu0 0
      %600 = vmatmul.mubr.bf16.gmra.mxu0 %v456
      %v601 = vpop.f32.mrf.mxu0
      %v602 = vadd.f32 0.0, %v601
      %v603 = vpop.f32.mrf.mxu0
      %v604 = vpop.f32.mrf.mxu0
      %v605 = vadd.f32 0.0, %v604
      %v606 = vpop.f32.mrf.mxu0
      %607 = vmatprep.mubr.bf16.mxu0 0
      %608 = vmatmul.mubr.bf16.gmra.mxu0 %v459
      %v609 = vpop.f32.mrf.mxu0
      %v610 = vadd.f32 0.0, %v609
      %v611 = vpop.f32.mrf.mxu0
      %v612 = vpop.f32.mrf.mxu0
      %v613 = vadd.f32 0.0, %v612
      %v614 = vpop.f32.mrf.mxu0
      %615 = vmatprep.mubr.bf16.mxu0 0
      %616 = vmatmul.mubr.bf16.gmra.mxu0 %v462
      %v617 = vpop.f32.mrf.mxu0
      %v618 = vadd.f32 0.0, %v617
      %v619 = vpop.f32.mrf.mxu0
      %v620 = vpop.f32.mrf.mxu0
      %v621 = vadd.f32 0.0, %v620
      %v622 = vpop.f32.mrf.mxu0
      %623 = vmatprep.mubr.bf16.mxu0 0
      %624 = vmatmul.mubr.bf16.gmra.mxu0 %v465
      %v625 = vpop.f32.mrf.mxu0
      %v626 = vadd.f32 0.0, %v625
      %v627 = vpop.f32.mrf.mxu0
      %v628 = vpop.f32.mrf.mxu0
      %v629 = vadd.f32 0.0, %v628
      %v630 = vpop.f32.mrf.mxu0
      %631 = vdwg.mxu0
      %v632 = vpack.c.bf16 %v509, %v506
      %v633 = vpack.c.bf16 %v517, %v514
      %v634 = vpack.c.bf16 %v525, %v522
      %v635 = vpack.c.bf16 %v533, %v530
      %v636 = vpack.c.bf16 %v541, %v538
      %v637 = vpack.c.bf16 %v549, %v546
      %v638 = vpack.c.bf16 %v557, %v554
      %v639 = vpack.c.bf16 %v565, %v562
      %v640 = vpack.c.bf16 %v573, %v570
      %v641 = vpack.c.bf16 %v581, %v578
      %v642 = vpack.c.bf16 %v589, %v586
      %v643 = vpack.c.bf16 %v597, %v594
      %v644 = vpack.c.bf16 %v605, %v602
      %v645 = vpack.c.bf16 %v613, %v610
      %v646 = vpack.c.bf16 %v621, %v618
      %v647 = vpack.c.bf16 %v629, %v626
      %v664 = vunpack.c.l.b16 %v632
      %v665 = vunpack.c.h.b16 %v632
      %v666 = vunpack.c.l.b16 %v633
      %v667 = vunpack.c.h.b16 %v633
      %v668 = vunpack.c.l.b16 %v634
      %v669 = vunpack.c.h.b16 %v634
      %v670 = vunpack.c.l.b16 %v635
      %v671 = vunpack.c.h.b16 %v635
      %v672 = vunpack.c.l.b16 %v636
      %v673 = vunpack.c.h.b16 %v636
      %v674 = vunpack.c.l.b16 %v637
      %v675 = vunpack.c.h.b16 %v637
      %v676 = vunpack.c.l.b16 %v638
      %v677 = vunpack.c.h.b16 %v638
      %v678 = vunpack.c.l.b16 %v639
      %v679 = vunpack.c.h.b16 %v639
      %v680 = vunpack.c.l.b16 %v640
      %v681 = vunpack.c.h.b16 %v640
      %v682 = vunpack.c.l.b16 %v641
      %v683 = vunpack.c.h.b16 %v641
      %v684 = vunpack.c.l.b16 %v642
      %v685 = vunpack.c.h.b16 %v642
      %v686 = vunpack.c.l.b16 %v643
      %v687 = vunpack.c.h.b16 %v643
      %v688 = vunpack.c.l.b16 %v644
      %v689 = vunpack.c.h.b16 %v644
      %v690 = vunpack.c.l.b16 %v645
      %v691 = vunpack.c.h.b16 %v645
      %v692 = vunpack.c.l.b16 %v646
      %v693 = vunpack.c.h.b16 %v646
      %v694 = vunpack.c.l.b16 %v647
      %v695 = vunpack.c.h.b16 %v647
      %v696 = vpack.c.b16 %v664, %v664
      %v697 = vpack.c.b16 %v665, %v665
      %v698 = vpack.c.b16 %v666, %v666
      %v699 = vpack.c.b16 %v667, %v667
      %v700 = vpack.c.b16 %v668, %v668
      %v701 = vpack.c.b16 %v669, %v669
      %v702 = vpack.c.b16 %v670, %v670
      %v703 = vpack.c.b16 %v671, %v671
      %v704 = vpack.c.b16 %v672, %v672
      %v705 = vpack.c.b16 %v673, %v673
      %v706 = vpack.c.b16 %v674, %v674
      %v707 = vpack.c.b16 %v675, %v675
      %v708 = vpack.c.b16 %v676, %v676
      %v709 = vpack.c.b16 %v677, %v677
      %v710 = vpack.c.b16 %v678, %v678
      %v711 = vpack.c.b16 %v679, %v679
      %v712 = vpack.c.b16 %v680, %v680
      %v713 = vpack.c.b16 %v681, %v681
      %v714 = vpack.c.b16 %v682, %v682
      %v715 = vpack.c.b16 %v683, %v683
      %v716 = vpack.c.b16 %v684, %v684
      %v717 = vpack.c.b16 %v685, %v685
      %v718 = vpack.c.b16 %v686, %v686
      %v719 = vpack.c.b16 %v687, %v687
      %v720 = vpack.c.b16 %v688, %v688
      %v721 = vpack.c.b16 %v689, %v689
      %v722 = vpack.c.b16 %v690, %v690
      %v723 = vpack.c.b16 %v691, %v691
      %v724 = vpack.c.b16 %v692, %v692
      %v725 = vpack.c.b16 %v693, %v693
      %v726 = vpack.c.b16 %v694, %v694
      %v727 = vpack.c.b16 %v695, %v695
      %vm760 = vcmask 125952
      %761 = vst.msk [vmem:[%s224] sm:$0xf] %vm760, %v696
      %762 = vst.msk [vmem:[%s224 + $0x4] sm:$0xf] %vm760, %v697
      %763 = vst.msk [vmem:[%s224 + $0x8] sm:$0xf] %vm760, %v698
      %764 = vst.msk [vmem:[%s224 + $0xc] sm:$0xf] %vm760, %v699
      %765 = vst.msk [vmem:[%s224 + $0x10] sm:$0xf] %vm760, %v700
      %766 = vst.msk [vmem:[%s224 + $0x14] sm:$0xf] %vm760, %v701
      %767 = vst.msk [vmem:[%s224 + $0x18] sm:$0xf] %vm760, %v702
      %768 = vst.msk [vmem:[%s224 + $0x1c] sm:$0xf] %vm760, %v703
      %769 = vst.msk [vmem:[%s224 + $0x20] sm:$0xf] %vm760, %v704
      %770 = vst.msk [vmem:[%s224 + $0x24] sm:$0xf] %vm760, %v705
      %771 = vst.msk [vmem:[%s224 + $0x28] sm:$0xf] %vm760, %v706
      %772 = vst.msk [vmem:[%s224 + $0x2c] sm:$0xf] %vm760, %v707
      %773 = vst.msk [vmem:[%s224 + $0x30] sm:$0xf] %vm760, %v708
      %774 = vst.msk [vmem:[%s224 + $0x34] sm:$0xf] %vm760, %v709
      %775 = vst.msk [vmem:[%s224 + $0x38] sm:$0xf] %vm760, %v710
      %776 = vst.msk [vmem:[%s224 + $0x3c] sm:$0xf] %vm760, %v711
      %777 = vst.msk [vmem:[%s224 + $0x40] sm:$0xf] %vm760, %v712
      %778 = vst.msk [vmem:[%s224 + $0x44] sm:$0xf] %vm760, %v713
      %779 = vst.msk [vmem:[%s224 + $0x48] sm:$0xf] %vm760, %v714
      %780 = vst.msk [vmem:[%s224 + $0x4c] sm:$0xf] %vm760, %v715
      %781 = vst.msk [vmem:[%s224 + $0x50] sm:$0xf] %vm760, %v716
      %782 = vst.msk [vmem:[%s224 + $0x54] sm:$0xf] %vm760, %v717
      %783 = vst.msk [vmem:[%s224 + $0x58] sm:$0xf] %vm760, %v718
      %784 = vst.msk [vmem:[%s224 + $0x5c] sm:$0xf] %vm760, %v719
      %785 = vst.msk [vmem:[%s224 + $0x60] sm:$0xf] %vm760, %v720
      %786 = vst.msk [vmem:[%s224 + $0x64] sm:$0xf] %vm760, %v721
      %787 = vst.msk [vmem:[%s224 + $0x68] sm:$0xf] %vm760, %v722
      %788 = vst.msk [vmem:[%s224 + $0x6c] sm:$0xf] %vm760, %v723
      %789 = vst.msk [vmem:[%s224 + $0x70] sm:$0xf] %vm760, %v724
      %790 = vst.msk [vmem:[%s224 + $0x74] sm:$0xf] %vm760, %v725
      %791 = vst.msk [vmem:[%s224 + $0x78] sm:$0xf] %vm760, %v726
      %792 = vst.msk [vmem:[%s224 + $0x7c] sm:$0xf] %vm760, %v727
      %vm793 = vcmask 130048
      %v794 = vsel %vm793, %v506, 0.0
      %v795 = vsel %vm793, %v509, 0.0
      %v796 = vadd.f32 %v794, %v795
      %v797 = vsel %vm793, %v514, 0.0
      %v798 = vadd.f32 %v796, %v797
      %v799 = vsel %vm793, %v517, 0.0
      %v800 = vadd.f32 %v798, %v799
      %v801 = vsel %vm793, %v522, 0.0
      %v802 = vadd.f32 %v800, %v801
      %v803 = vsel %vm793, %v525, 0.0
      %v804 = vadd.f32 %v802, %v803
      %v805 = vsel %vm793, %v530, 0.0
      %v806 = vadd.f32 %v804, %v805
      %v807 = vsel %vm793, %v533, 0.0
      %v808 = vadd.f32 %v806, %v807
      %v809 = vsel %vm793, %v538, 0.0
      %v810 = vadd.f32 %v808, %v809
      %v811 = vsel %vm793, %v541, 0.0
      %v812 = vadd.f32 %v810, %v811
      %v813 = vsel %vm793, %v546, 0.0
      %v814 = vadd.f32 %v812, %v813
      %v815 = vsel %vm793, %v549, 0.0
      %v816 = vadd.f32 %v814, %v815
      %v817 = vsel %vm793, %v554, 0.0
      %v818 = vadd.f32 %v816, %v817
      %v819 = vsel %vm793, %v557, 0.0
      %v820 = vadd.f32 %v818, %v819
      %v821 = vsel %vm793, %v562, 0.0
      %v822 = vadd.f32 %v820, %v821
      %v823 = vsel %vm793, %v565, 0.0
      %v824 = vadd.f32 %v822, %v823
      %v825 = vsel %vm793, %v570, 0.0
      %v826 = vadd.f32 %v824, %v825
      %v827 = vsel %vm793, %v573, 0.0
      %v828 = vadd.f32 %v826, %v827
      %v829 = vsel %vm793, %v578, 0.0
      %v830 = vadd.f32 %v828, %v829
      %v831 = vsel %vm793, %v581, 0.0
      %v832 = vadd.f32 %v830, %v831
      %v833 = vsel %vm793, %v586, 0.0
      %v834 = vadd.f32 %v832, %v833
      %v835 = vsel %vm793, %v589, 0.0
      %v836 = vadd.f32 %v834, %v835
      %v837 = vsel %vm793, %v594, 0.0
      %v838 = vadd.f32 %v836, %v837
      %v839 = vsel %vm793, %v597, 0.0
      %v840 = vadd.f32 %v838, %v839
      %v841 = vsel %vm793, %v602, 0.0
      %v842 = vadd.f32 %v840, %v841
      %v843 = vsel %vm793, %v605, 0.0
      %v844 = vadd.f32 %v842, %v843
      %v845 = vsel %vm793, %v610, 0.0
      %v846 = vadd.f32 %v844, %v845
      %v847 = vsel %vm793, %v613, 0.0
      %v848 = vadd.f32 %v846, %v847
      %v849 = vsel %vm793, %v618, 0.0
      %v850 = vadd.f32 %v848, %v849
      %v851 = vsel %vm793, %v621, 0.0
      %v852 = vadd.f32 %v850, %v851
      %v853 = vsel %vm793, %v626, 0.0
      %v854 = vadd.f32 %v852, %v853
      %v855 = vsel %vm793, %v629, 0.0
      %v856 = vadd.f32 %v854, %v855
      %v857 = vrot.slane %v856, 4
      %v858 = vadd.f32 %v856, %v857
      %v859 = vrot.slane %v858, 2
      %v860 = vadd.f32 %v858, %v859
      %v861 = vrot.slane %v860, 1
      %v862 = vadd.f32 %v860, %v861
      %v863 = vmul.f32 %v506, %v506
      %v864 = vmul.f32 %v509, %v509
      %v865 = vmul.f32 %v514, %v514
      %v866 = vmul.f32 %v517, %v517
      %v867 = vmul.f32 %v522, %v522
      %v868 = vmul.f32 %v525, %v525
      %v869 = vmul.f32 %v530, %v530
      %v870 = vmul.f32 %v533, %v533
      %v871 = vmul.f32 %v538, %v538
      %v872 = vmul.f32 %v541, %v541
      %v873 = vmul.f32 %v546, %v546
      %v874 = vmul.f32 %v549, %v549
      %v875 = vmul.f32 %v554, %v554
      %v876 = vmul.f32 %v557, %v557
      %v877 = vmul.f32 %v562, %v562
      %v878 = vmul.f32 %v565, %v565
      %v879 = vmul.f32 %v570, %v570
      %v880 = vmul.f32 %v573, %v573
      %v881 = vmul.f32 %v578, %v578
      %v882 = vmul.f32 %v581, %v581
      %v883 = vmul.f32 %v586, %v586
      %v884 = vmul.f32 %v589, %v589
      %v885 = vmul.f32 %v594, %v594
      %v886 = vmul.f32 %v597, %v597
      %v887 = vmul.f32 %v602, %v602
      %v888 = vmul.f32 %v605, %v605
      %v889 = vmul.f32 %v610, %v610
      %v890 = vmul.f32 %v613, %v613
      %v891 = vmul.f32 %v618, %v618
      %v892 = vmul.f32 %v621, %v621
      %v893 = vmul.f32 %v626, %v626
      %v894 = vmul.f32 %v629, %v629
      %v895 = vsel %vm793, %v863, 0.0
      %v896 = vsel %vm793, %v864, 0.0
      %v897 = vadd.f32 %v895, %v896
      %v898 = vsel %vm793, %v865, 0.0
      %v899 = vadd.f32 %v897, %v898
      %v900 = vsel %vm793, %v866, 0.0
      %v901 = vadd.f32 %v899, %v900
      %v902 = vsel %vm793, %v867, 0.0
      %v903 = vadd.f32 %v901, %v902
      %v904 = vsel %vm793, %v868, 0.0
      %v905 = vadd.f32 %v903, %v904
      %v906 = vsel %vm793, %v869, 0.0
      %v907 = vadd.f32 %v905, %v906
      %v908 = vsel %vm793, %v870, 0.0
      %v909 = vadd.f32 %v907, %v908
      %v910 = vsel %vm793, %v871, 0.0
      %v911 = vadd.f32 %v909, %v910
      %v912 = vsel %vm793, %v872, 0.0
      %v913 = vadd.f32 %v911, %v912
      %v914 = vsel %vm793, %v873, 0.0
      %v915 = vadd.f32 %v913, %v914
      %v916 = vsel %vm793, %v874, 0.0
      %v917 = vadd.f32 %v915, %v916
      %v918 = vsel %vm793, %v875, 0.0
      %v919 = vadd.f32 %v917, %v918
      %v920 = vsel %vm793, %v876, 0.0
      %v921 = vadd.f32 %v919, %v920
      %v922 = vsel %vm793, %v877, 0.0
      %v923 = vadd.f32 %v921, %v922
      %v924 = vsel %vm793, %v878, 0.0
      %v925 = vadd.f32 %v923, %v924
      %v926 = vsel %vm793, %v879, 0.0
      %v927 = vadd.f32 %v925, %v926
      %v928 = vsel %vm793, %v880, 0.0
      %v929 = vadd.f32 %v927, %v928
      %v930 = vsel %vm793, %v881, 0.0
      %v931 = vadd.f32 %v929, %v930
      %v932 = vsel %vm793, %v882, 0.0
      %v933 = vadd.f32 %v931, %v932
      %v934 = vsel %vm793, %v883, 0.0
      %v935 = vadd.f32 %v933, %v934
      %v936 = vsel %vm793, %v884, 0.0
      %v937 = vadd.f32 %v935, %v936
      %v938 = vsel %vm793, %v885, 0.0
      %v939 = vadd.f32 %v937, %v938
      %v940 = vsel %vm793, %v886, 0.0
      %v941 = vadd.f32 %v939, %v940
      %v942 = vsel %vm793, %v887, 0.0
      %v943 = vadd.f32 %v941, %v942
      %v944 = vsel %vm793, %v888, 0.0
      %v945 = vadd.f32 %v943, %v944
      %v946 = vsel %vm793, %v889, 0.0
      %v947 = vadd.f32 %v945, %v946
      %v948 = vsel %vm793, %v890, 0.0
      %v949 = vadd.f32 %v947, %v948
      %v950 = vsel %vm793, %v891, 0.0
      %v951 = vadd.f32 %v949, %v950
      %v952 = vsel %vm793, %v892, 0.0
      %v953 = vadd.f32 %v951, %v952
      %v954 = vsel %vm793, %v893, 0.0
      %v955 = vadd.f32 %v953, %v954
      %v956 = vsel %vm793, %v894, 0.0
      %v957 = vadd.f32 %v955, %v956
      %v958 = vrot.slane %v957, 4
      %v959 = vadd.f32 %v957, %v958
      %v960 = vrot.slane %v959, 2
      %v961 = vadd.f32 %v959, %v960
      %v962 = vrot.slane %v961, 1
      %v963 = vadd.f32 %v961, %v962
      %p964 = scmp.eq.s32.totalorder %s17, 0
      // Predicated region
      $region37: #{bottleneck_forward.6} parent=35 // pred_check
        %p965 = pneg %p964
      $region38: #{bottleneck_forward.6} parent=35 // pred_check_branch
        %967 = sbr.rel (%p965) target = $region40
      $region39: #{bottleneck_forward.6} parent=35 // pred_region
        %vm968 = vcmask 123904
        %969 = vst.msk [vmem:[%s5] sm:$0x3] %vm968, 0.0
      $region40: #{bottleneck_forward.6} parent=35 // pred_fallthru
        _
      %v970 = vld [vmem:[%s5] sm:$0x3]
      %vm971 = vcmask 1040384
      %v972 = vsel %vm971, %v862, %v963
      %v973 = vadd.f32 %v970, %v972
      %vm974 = vcmask 123904
      %975 = vst.msk [vmem:[%s5] sm:$0x3] %vm974, %v973
      %s976 = smul.u32 32, %s17
      %p977 = scmp.lt.s32.totalorder %s976, 63
      %s978 = scalar_select %p977, %s976, 63
      %s979 = smul.addr %s978, 4
      %s980 = scalar_lea.vmem %s4, %s979
      // Predicated region
      $region41: #{bottleneck_forward.6} parent=35 // pred_check
        %p981 = pneg %p124
      $region42: #{bottleneck_forward.6} parent=35 // pred_check_branch
        %983 = sbr.rel (%p981) target = $region44
      $region43: #{bottleneck_forward.6} parent=35 // pred_region
        %s984 = smul.u32 32, %s17
      $region44: #{bottleneck_forward.6} parent=35 // pred_fallthru
        _
      // Predicated region
      $region45: #{bottleneck_forward.6} parent=35 // pred_check
        %p985 = pneg %p145
      $region46: #{bottleneck_forward.6} parent=35 // pred_check_branch
        %987 = sbr.rel (%p985) target = $region48
      $region47: #{bottleneck_forward.6} parent=35 // pred_region
        _
      $region48: #{bottleneck_forward.6} parent=35 // pred_fallthru
        _
      // Predicated region
      $region49: #{bottleneck_forward.6} parent=35 // pred_check
        %p988 = pneg %p145
      $region50: #{bottleneck_forward.6} parent=35 // pred_check_branch
        %990 = sbr.rel (%p988) target = $region52
      $region51: #{bottleneck_forward.6} parent=35 // pred_region
        _
      $region52: #{bottleneck_forward.6} parent=35 // pred_fallthru
        _
    $region36: #{bottleneck_forward.6} parent=5 // pred_fallthru
      _
    %p991 = scmp.le.s32.totalorder 2, %s12
    // Predicated region
    $region53: #{bottleneck_forward.6} parent=5 // pred_check
      %p992 = pneg %p991
    $region54: #{bottleneck_forward.6} parent=5 // pred_check_branch
      %994 = sbr.rel (%p992) target = $region56
    $region55: #{bottleneck_forward.6} parent=5 // pred_region
      %s995 = ssub.s32 %s12, 2
      // Predicated region
      $region57: #{bottleneck_forward.6} parent=55 // pred_check
        %p996 = pneg %p130
      $region58: #{bottleneck_forward.6} parent=55 // pred_check_branch
        %998 = sbr.rel (%p996) target = $region60
      $region59: #{bottleneck_forward.6} parent=55 // pred_region
        %s999 = smul.u32 32, %s18
        %p1000 = scmp.lt.s32.totalorder %s999, 63
        %s1001 = scalar_select %p1000, %s999, 63
        %s1002 = smul.addr %s1001, 4
        %s1003 = scalar_lea.vmem %s4, %s1002
      $region60: #{bottleneck_forward.6} parent=55 // pred_fallthru
        _
    $region56: #{bottleneck_forward.6} parent=5 // pred_fallthru
      _
  $region6: #{bottleneck_forward.6} parent=0 // loop_footer
    %s16 = sadd.s32 1, %s12
  $region7: #{bottleneck_forward.6} parent=0 // loop_footer_branch
    %11 = sbr.rel target = $region3
  $region8: #{bottleneck_forward.6} parent=0 // loop_exit
    _

// kernel: bottleneck_forward.7
$region0: #{bottleneck_forward.7}
  #allocation0 [shape = 'u32[]', space=smem, size = 0x4, offset = 0x4, fixed_abs, tag = 'smem constant byte address 0x4 - core index']
  #allocation1 [shape = 'u32[144,128]{1,0:T(1,128)}', space=vmem, size = 0x12000, scoped, tag = 'internal scratch']
  %s0 = inlined_call_operand.vmem [shape: bf16[32,256], index: 0, kind: input, shape index: {}]
  %s1 = inlined_call_operand.vmem [shape: f32[32,256], index: 1, kind: input, shape index: {}]
  %s2 = inlined_call_operand.vmem [shape: f32[1,256], index: 2, kind: input, shape index: {}]
  %s3 = inlined_call_operand.vmem [shape: f32[1,256], index: 3, kind: input, shape index: {}]
  %s4 = inlined_call_operand.vmem [shape: f32[32,256], index: 4, kind: output, shape index: {}]
  %s5 = sld [smem:[#allocation0]]
  $region26: #{bottleneck_forward.7} parent=0
    _
  %s7 = ssub.s32 1, %s5
  %s8 = scalar_select 0, %s7, %s5
  // Predicated region
  $region2: #{bottleneck_forward.7} parent=0 // pred_check
    _
  $region3: #{bottleneck_forward.7} parent=0 // pred_check_branch
    %10 = sbr.rel (0) target = $region5
  $region4: #{bottleneck_forward.7} parent=0 // pred_region
    _
  $region5: #{bottleneck_forward.7} parent=0 // pred_fallthru
    _
  // Predicated region
  $region6: #{bottleneck_forward.7} parent=0 // pred_check
    _
  $region7: #{bottleneck_forward.7} parent=0 // pred_check_branch
    %12 = sbr.rel (0) target = $region9
  $region8: #{bottleneck_forward.7} parent=0 // pred_region
    _
  $region9: #{bottleneck_forward.7} parent=0 // pred_fallthru
    _
  // Predicated region
  $region10: #{bottleneck_forward.7} parent=0 // pred_check
    _
  $region11: #{bottleneck_forward.7} parent=0 // pred_check_branch
    %14 = sbr.rel (0) target = $region13
  $region12: #{bottleneck_forward.7} parent=0 // pred_region
    _
  $region13: #{bottleneck_forward.7} parent=0 // pred_fallthru
    _
  // Predicated region
  $region14: #{bottleneck_forward.7} parent=0 // pred_check
    _
  $region15: #{bottleneck_forward.7} parent=0 // pred_check_branch
    %16 = sbr.rel (0) target = $region17
  $region16: #{bottleneck_forward.7} parent=0 // pred_region
    _
  $region17: #{bottleneck_forward.7} parent=0 // pred_fallthru
    _
  %v17 = vld [vmem:[%s0] sm:$0xff]
  %v18 = vld [vmem:[%s0 + $0x8] sm:$0xff]
  %v19 = vld [vmem:[%s0 + $0x10] sm:$0xff]
  %v20 = vld [vmem:[%s0 + $0x18] sm:$0xff]
  %v21 = vunpack.c.l.bf16 %v17
  %v22 = vunpack.c.h.bf16 %v17
  %v23 = vunpack.c.l.bf16 %v18
  %v24 = vunpack.c.h.bf16 %v18
  %v25 = vunpack.c.l.bf16 %v19
  %v26 = vunpack.c.h.bf16 %v19
  %v27 = vunpack.c.l.bf16 %v20
  %v28 = vunpack.c.h.bf16 %v20
  %v29 = vld [vmem:[%s2] sm:$0x3]
  %v31 = vlaneseq
  %v32 = vshrl.u32 %v31, 7
  %v33 = vsub.s32 0, %v32
  %v34 = vrot.slane %v29, %v33
  %v35 = vlaneseq
  %v36 = vshrl.u32 %v35, 7
  %v37 = vsub.s32 1, %v36
  %v38 = vrot.slane %v29, %v37
  %v41 = vmul.f32 %v21, %v34
  %v42 = vmul.f32 %v22, %v38
  %v43 = vmul.f32 %v23, %v34
  %v44 = vmul.f32 %v24, %v38
  %v45 = vmul.f32 %v25, %v34
  %v46 = vmul.f32 %v26, %v38
  %v47 = vmul.f32 %v27, %v34
  %v48 = vmul.f32 %v28, %v38
  %v49 = vld [vmem:[%s3] sm:$0x3]
  %v51 = vlaneseq
  %v52 = vshrl.u32 %v51, 7
  %v53 = vsub.s32 0, %v52
  %v54 = vrot.slane %v49, %v53
  %v55 = vlaneseq
  %v56 = vshrl.u32 %v55, 7
  %v57 = vsub.s32 1, %v56
  %v58 = vrot.slane %v49, %v57
  %v61 = vadd.f32 %v41, %v54
  %v62 = vadd.f32 %v42, %v58
  %v63 = vadd.f32 %v43, %v54
  %v64 = vadd.f32 %v44, %v58
  %v65 = vadd.f32 %v45, %v54
  %v66 = vadd.f32 %v46, %v58
  %v67 = vadd.f32 %v47, %v54
  %v68 = vadd.f32 %v48, %v58
  %v69 = vld [vmem:[%s1] sm:$0xff]
  %v70 = vld [vmem:[%s1 + $0x8] sm:$0xff]
  %v71 = vld [vmem:[%s1 + $0x10] sm:$0xff]
  %v72 = vld [vmem:[%s1 + $0x18] sm:$0xff]
  %v73 = vld [vmem:[%s1 + $0x20] sm:$0xff]
  %v74 = vld [vmem:[%s1 + $0x28] sm:$0xff]
  %v75 = vld [vmem:[%s1 + $0x30] sm:$0xff]
  %v76 = vld [vmem:[%s1 + $0x38] sm:$0xff]
  %v77 = vadd.f32 %v61, %v69
  %v78 = vadd.f32 %v62, %v70
  %v79 = vadd.f32 %v63, %v71
  %v80 = vadd.f32 %v64, %v72
  %v81 = vadd.f32 %v65, %v73
  %v82 = vadd.f32 %v66, %v74
  %v83 = vadd.f32 %v67, %v75
  %v84 = vadd.f32 %v68, %v76
  %v85 = vmax.f32 %v77, 0.0
  %v86 = vmax.f32 %v78, 0.0
  %v87 = vmax.f32 %v79, 0.0
  %v88 = vmax.f32 %v80, 0.0
  %v89 = vmax.f32 %v81, 0.0
  %v90 = vmax.f32 %v82, 0.0
  %v91 = vmax.f32 %v83, 0.0
  %v92 = vmax.f32 %v84, 0.0
  %93 = vst [vmem:[%s4] sm:$0xff] %v85
  %94 = vst [vmem:[%s4 + $0x8] sm:$0xff] %v86
  %95 = vst [vmem:[%s4 + $0x10] sm:$0xff] %v87
  %96 = vst [vmem:[%s4 + $0x18] sm:$0xff] %v88
  %97 = vst [vmem:[%s4 + $0x20] sm:$0xff] %v89
  %98 = vst [vmem:[%s4 + $0x28] sm:$0xff] %v90
  %99 = vst [vmem:[%s4 + $0x30] sm:$0xff] %v91
  %100 = vst [vmem:[%s4 + $0x38] sm:$0xff] %v92
  // Predicated region
  $region18: #{bottleneck_forward.7} parent=0 // pred_check
    _
  $region19: #{bottleneck_forward.7} parent=0 // pred_check_branch
    %102 = sbr.rel (0) target = $region21
  $region20: #{bottleneck_forward.7} parent=0 // pred_region
    _
  $region21: #{bottleneck_forward.7} parent=0 // pred_fallthru
    _
  // Predicated region
  $region22: #{bottleneck_forward.7} parent=0 // pred_check
    _
  $region23: #{bottleneck_forward.7} parent=0 // pred_check_branch
    %104 = sbr.rel (0) target = $region25
  $region24: #{bottleneck_forward.7} parent=0 // pred_region
    _
  $region25: #{bottleneck_forward.7} parent=0 // pred_fallthru
    _

// kernel: bottleneck_forward.5
$region0: #{bottleneck_forward.5}
  #allocation0 [shape = 'u32[]', space=smem, size = 0x4, offset = 0x4, fixed_abs, tag = 'smem constant byte address 0x4 - core index']
  #allocation1 [shape = 'u32[144,128]{1,0:T(1,128)}', space=vmem, size = 0x12000, scoped, tag = 'internal scratch']
  #allocation2 [shape = 'bf16[18,24,4]{2,1,0:T(8,128)(2,1)}', space=vmem, size = 0x1b000, scoped, tag = 'scratch operand']
  %s0 = inlined_call_operand.vmem [shape: bf16[2,16,16,4], index: 0, kind: input, shape index: {}]
  %s1 = inlined_call_operand.vmem [shape: f32[1,4], index: 1, kind: input, shape index: {}]
  %s2 = inlined_call_operand.vmem [shape: f32[1,4], index: 2, kind: input, shape index: {}]
  %s3 = inlined_call_operand.vmem [shape: bf16[9,4,4], index: 3, kind: input, shape index: {}]
  %s4 = inlined_call_operand.vmem [shape: bf16[2,16,16,4], index: 4, kind: output, shape index: {0}]
  %s5 = inlined_call_operand.vmem [shape: f32[2,4], index: 5, kind: output, shape index: {1}]
  %6 = xla_tuple %s4, %s5
  %s7 = sld [smem:[#allocation0]]
  $region65: #{bottleneck_forward.5} parent=0
    _
  %s9 = ssub.s32 1, %s7
  %s10 = scalar_select 0, %s9, %s7
  loop: start=0, step=1, limit=4
  $region2: #{bottleneck_forward.5} parent=0 // loop_pre_header
    _
  $region3: #{bottleneck_forward.5} parent=0 // loop_header
    %s12 = sphi 0, %s16
    %p13 = scmp.ge.s32.totalorder %s12, 4
    %s22 = sphi 0, %s24
    %s25 = sphi 0, %s22
    %s26 = sphi 0, %s25
    %s42 = sphi 0, %s26
    %s46 = sphi 0, %s46
    %s48 = sphi 0, %s46
    %s49 = sphi 0, %s48
    %s63 = sphi 0, %s49
    %s67 = sphi 0, %s67
    %s69 = sphi 0, %s67
    %s70 = sphi 0, %s69
    %s84 = sphi 0, %s70
    %s88 = sphi 0, %s88
    %s90 = sphi 0, %s88
    %s91 = sphi 0, %s90
    %s105 = sphi 0, %s91
    %s111 = sphi 0, %s113
    %s114 = sphi 0, %s111
    %s115 = sphi 0, %s114
    %s131 = sphi 0, %s115
    %s135 = sphi 0, %s135
    %s137 = sphi 0, %s135
    %s138 = sphi 0, %s137
    %s152 = sphi 0, %s138
  $region4: #{bottleneck_forward.5} parent=0 // loop_header_branch
    %15 = sbr.rel (%p13) target = $region8
  $region5: #{bottleneck_forward.5} parent=0 // loop_body
    %s17 = ssub.s32 %s12, 1
    %s18 = ssub.s32 %s12, 2
    %s19 = sadd.s32 %s12, 1
    %s20 = ssub.s32 %s12, %s19
    %p21 = scmp.eq.s32.totalorder %s20, 0
    %s23 = sadd.s32 %s22, 1
    %s24 = scalar_select %p21, %s22, %s23
    %p27 = pneg %p21
    %p28 = scmp.eq.s32.totalorder %s12, 1
    %p29 = por %p27, %p28
    %p30 = scmp.ne.s32.totalorder %s22, %s25
    %p31 = scmp.eq.s32.totalorder %s12, 0
    %p32 = por %p30, %p31
    %p33 = scmp.ne.s32.totalorder %s22, %s25
    %p34 = scmp.eq.s32.totalorder %s17, 1
    %p35 = por %p33, %p34
    %p36 = scmp.ne.s32.totalorder %s25, %s26
    %p37 = scmp.eq.s32.totalorder %s17, 0
    %p38 = por %p36, %p37
    %p39 = scmp.ne.s32.totalorder %s25, %s26
    %p40 = scmp.eq.s32.totalorder %s18, 1
    %p41 = por %p39, %p40
    %p43 = scmp.ne.s32.totalorder %s26, %s42
    %p44 = scmp.eq.s32.totalorder %s18, 0
    %p45 = por %p43, %p44
    %s47 = sadd.s32 %s46, 1
    %p50 = scmp.eq.s32.totalorder %s12, 1
    %p51 = scmp.ne.s32.totalorder %s46, %s48
    %p52 = scmp.eq.s32.totalorder %s12, 0
    %p53 = por %p51, %p52
    %p54 = scmp.ne.s32.totalorder %s46, %s48
    %p55 = scmp.eq.s32.totalorder %s17, 1
    %p56 = por %p54, %p55
    %p57 = scmp.ne.s32.totalorder %s48, %s49
    %p58 = scmp.eq.s32.totalorder %s17, 0
    %p59 = por %p57, %p58
    %p60 = scmp.ne.s32.totalorder %s48, %s49
    %p61 = scmp.eq.s32.totalorder %s18, 1
    %p62 = por %p60, %p61
    %p64 = scmp.ne.s32.totalorder %s49, %s63
    %p65 = scmp.eq.s32.totalorder %s18, 0
    %p66 = por %p64, %p65
    %s68 = sadd.s32 %s67, 1
    %p71 = scmp.eq.s32.totalorder %s12, 1
    %p72 = scmp.ne.s32.totalorder %s67, %s69
    %p73 = scmp.eq.s32.totalorder %s12, 0
    %p74 = por %p72, %p73
    %p75 = scmp.ne.s32.totalorder %s67, %s69
    %p76 = scmp.eq.s32.totalorder %s17, 1
    %p77 = por %p75, %p76
    %p78 = scmp.ne.s32.totalorder %s69, %s70
    %p79 = scmp.eq.s32.totalorder %s17, 0
    %p80 = por %p78, %p79
    %p81 = scmp.ne.s32.totalorder %s69, %s70
    %p82 = scmp.eq.s32.totalorder %s18, 1
    %p83 = por %p81, %p82
    %p85 = scmp.ne.s32.totalorder %s70, %s84
    %p86 = scmp.eq.s32.totalorder %s18, 0
    %p87 = por %p85, %p86
    %s89 = sadd.s32 %s88, 1
    %p92 = scmp.eq.s32.totalorder %s12, 1
    %p93 = scmp.ne.s32.totalorder %s88, %s90
    %p94 = scmp.eq.s32.totalorder %s12, 0
    %p95 = por %p93, %p94
    %p96 = scmp.ne.s32.totalorder %s88, %s90
    %p97 = scmp.eq.s32.totalorder %s17, 1
    %p98 = por %p96, %p97
    %p99 = scmp.ne.s32.totalorder %s90, %s91
    %p100 = scmp.eq.s32.totalorder %s17, 0
    %p101 = por %p99, %p100
    %p102 = scmp.ne.s32.totalorder %s90, %s91
    %p103 = scmp.eq.s32.totalorder %s18, 1
    %p104 = por %p102, %p103
    %p106 = scmp.ne.s32.totalorder %s91, %s105
    %p107 = scmp.eq.s32.totalorder %s18, 0
    %p108 = por %p106, %p107
    %s109 = ssub.s32 %s12, %s19
    %p110 = scmp.eq.s32.totalorder %s109, 0
    %s112 = sadd.s32 %s111, 1
    %s113 = scalar_select %p110, %s111, %s112
    %p116 = pneg %p110
    %p117 = scmp.eq.s32.totalorder %s12, 1
    %p118 = por %p116, %p117
    %p119 = scmp.ne.s32.totalorder %s111, %s114
    %p120 = scmp.eq.s32.totalorder %s12, 0
    %p121 = por %p119, %p120
    %p122 = scmp.ne.s32.totalorder %s111, %s114
    %p123 = scmp.eq.s32.totalorder %s17, 1
    %p124 = por %p122, %p123
    %p125 = scmp.ne.s32.totalorder %s114, %s115
    %p126 = scmp.eq.s32.totalorder %s17, 0
    %p127 = por %p125, %p126
    %p128 = scmp.ne.s32.totalorder %s114, %s115
    %p129 = scmp.eq.s32.totalorder %s18, 1
    %p130 = por %p128, %p129
    %p132 = scmp.ne.s32.totalorder %s115, %s131
    %p133 = scmp.eq.s32.totalorder %s18, 0
    %p134 = por %p132, %p133
    %s136 = sadd.s32 %s135, 1
    %p139 = scmp.eq.s32.totalorder %s12, 1
    %p140 = scmp.ne.s32.totalorder %s135, %s137
    %p141 = scmp.eq.s32.totalorder %s12, 0
    %p142 = por %p140, %p141
    %p143 = scmp.ne.s32.totalorder %s135, %s137
    %p144 = scmp.eq.s32.totalorder %s17, 1
    %p145 = por %p143, %p144
    %p146 = scmp.ne.s32.totalorder %s137, %s138
    %p147 = scmp.eq.s32.totalorder %s17, 0
    %p148 = por %p146, %p147
    %p149 = scmp.ne.s32.totalorder %s137, %s138
    %p150 = scmp.eq.s32.totalorder %s18, 1
    %p151 = por %p149, %p150
    %p153 = scmp.ne.s32.totalorder %s138, %s152
    %p154 = scmp.eq.s32.totalorder %s18, 0
    %p155 = por %p153, %p154
    %p156 = scmp.le.s32.totalorder 1, %s12
    %p157 = scmp.lt.s32.totalorder %s12, 3
    %p158 = pnand %p156, %p157
    %p159 = pneg %p158
    // Predicated region
    $region9: #{bottleneck_forward.5} parent=5 // pred_check
      _
    $region10: #{bottleneck_forward.5} parent=5 // pred_check_branch
      %161 = sbr.rel (%p158) target = $region12
    $region11: #{bottleneck_forward.5} parent=5 // pred_region
      %s162 = ssub.s32 %s12, 1
      // Predicated region
      $region13: #{bottleneck_forward.5} parent=11 // pred_check
        %p163 = pneg %p59
      $region14: #{bottleneck_forward.5} parent=11 // pred_check_branch
        %165 = sbr.rel (%p163) target = $region16
      $region15: #{bottleneck_forward.5} parent=11 // pred_region
        _
      $region16: #{bottleneck_forward.5} parent=11 // pred_fallthru
        _
      // Predicated region
      $region17: #{bottleneck_forward.5} parent=11 // pred_check
        %p166 = pneg %p80
      $region18: #{bottleneck_forward.5} parent=11 // pred_check_branch
        %168 = sbr.rel (%p166) target = $region20
      $region19: #{bottleneck_forward.5} parent=11 // pred_region
        _
      $region20: #{bottleneck_forward.5} parent=11 // pred_fallthru
        _
      // Predicated region
      $region21: #{bottleneck_forward.5} parent=11 // pred_check
        %p169 = pneg %p101
      $region22: #{bottleneck_forward.5} parent=11 // pred_check_branch
        %171 = sbr.rel (%p169) target = $region24
      $region23: #{bottleneck_forward.5} parent=11 // pred_region
        _
      $region24: #{bottleneck_forward.5} parent=11 // pred_fallthru
        _
    $region12: #{bottleneck_forward.5} parent=5 // pred_fallthru
      _
    %p172 = scmp.lt.s32.totalorder %s12, 2
    // Predicated region
    $region25: #{bottleneck_forward.5} parent=5 // pred_check
      %p173 = pneg %p172
    $region26: #{bottleneck_forward.5} parent=5 // pred_check_branch
      %175 = sbr.rel (%p173) target = $region28
    $region27: #{bottleneck_forward.5} parent=5 // pred_region
      // Predicated region
      $region29: #{bottleneck_forward.5} parent=27 // pred_check
        %p176 = pneg %p32
      $region30: #{bottleneck_forward.5} parent=27 // pred_check_branch
        %178 = sbr.rel (%p176) target = $region32
      $region31: #{bottleneck_forward.5} parent=27 // pred_region
        %p179 = scmp.lt.s32.totalorder %s12, 1
        %s180 = scalar_select %p179, %s12, 1
        %s181 = smul.addr %s180, 32
        %s182 = smul.addr %s181, 4
        %s183 = scalar_lea.vmem %s0, %s182
      $region32: #{bottleneck_forward.5} parent=27 // pred_fallthru
        _
    $region28: #{bottleneck_forward.5} parent=5 // pred_fallthru
      _
    %p184 = scmp.le.s32.totalorder 1, %s12
    %p185 = scmp.lt.s32.totalorder %s12, 3
    %p186 = pnand %p184, %p185
    %p187 = pneg %p186
    // Predicated region
    $region33: #{bottleneck_forward.5} parent=5 // pred_check
      _
    $region34: #{bottleneck_forward.5} parent=5 // pred_check_branch
      %189 = sbr.rel (%p186) target = $region36
    $region35: #{bottleneck_forward.5} parent=5 // pred_region
      %s190 = ssub.s32 %s12, 1
      %p191 = scmp.lt.s32.totalorder %s17, 1
      %s192 = scalar_select %p191, %s17, 1
      %s193 = smul.addr %s192, 32
      %s194 = smul.addr %s193, 4
      %s195 = scalar_lea.vmem %s0, %s194
      %p196 = pneg %p38
      %p197 = pneg %p35
      %p198 = pneg %p59
      %p199 = pneg %p56
      %p200 = pneg %p80
      %p201 = pneg %p77
      %p202 = pneg %p101
      %p203 = pneg %p98
      %p204 = pneg %p127
      %p205 = pneg %p124
      %p206 = scmp.lt.s32.totalorder %s17, 1
      %s207 = scalar_select %p206, %s17, 1
      %s208 = smul.addr %s207, 32
      %s209 = smul.addr %s208, 4
      %s210 = scalar_lea.vmem %s4, %s209
      %p211 = pneg %p148
      %p212 = pneg %p145
      %p213 = scmp.lt.s32.totalorder %s17, 1
      %s214 = scalar_select %p213, %s17, 1
      %s215 = smul.addr %s214, 32
      %s216 = smul.addr %s215, 4
      %s217 = scalar_lea.vmem %s0, %s216
      %p218 = scmp.lt.s32.totalorder %s17, 1
      %s219 = scalar_select %p218, %s17, 1
      %s220 = smul.addr %s219, 32
      %s221 = smul.addr %s220, 4
      %s222 = scalar_lea.vmem %s4, %s221
      %p224 = scmp.eq.s32.totalorder %s17, 0
      // Predicated region
      $region37: #{bottleneck_forward.5} parent=35 // pred_check
        %p225 = pneg %p224
      $region38: #{bottleneck_forward.5} parent=35 // pred_check_branch
        %227 = sbr.rel (%p225) target = $region40
      $region39: #{bottleneck_forward.5} parent=35 // pred_region
        %vm228 = vcmask 27648
        %229 = vst.msk [vmem:[#allocation2] sm:$0xf] %vm228, 0
        %230 = vst.msk [vmem:[#allocation2 + $0x4] sm:$0xf] %vm228, 0
        %231 = vst.msk [vmem:[#allocation2 + $0x8] sm:$0xf] %vm228, 0
        %232 = vst.msk [vmem:[#allocation2 + $0xc] sm:$0xf] %vm228, 0
        %233 = vst.msk [vmem:[#allocation2 + $0x10] sm:$0xf] %vm228, 0
        %234 = vst.msk [vmem:[#allocation2 + $0x14] sm:$0xf] %vm228, 0
        %235 = vst.msk [vmem:[#allocation2 + $0x18] sm:$0xf] %vm228, 0
        %236 = vst.msk [vmem:[#allocation2 + $0x1c] sm:$0xf] %vm228, 0
        %237 = vst.msk [vmem:[#allocation2 + $0x20] sm:$0xf] %vm228, 0
        %238 = vst.msk [vmem:[#allocation2 + $0x24] sm:$0xf] %vm228, 0
        %239 = vst.msk [vmem:[#allocation2 + $0x28] sm:$0xf] %vm228, 0
        %240 = vst.msk [vmem:[#allocation2 + $0x2c] sm:$0xf] %vm228, 0
        %241 = vst.msk [vmem:[#allocation2 + $0x30] sm:$0xf] %vm228, 0
        %242 = vst.msk [vmem:[#allocation2 + $0x34] sm:$0xf] %vm228, 0
        %243 = vst.msk [vmem:[#allocation2 + $0x38] sm:$0xf] %vm228, 0
        %244 = vst.msk [vmem:[#allocation2 + $0x3c] sm:$0xf] %vm228, 0
        %245 = vst.msk [vmem:[#allocation2 + $0x40] sm:$0xf] %vm228, 0
        %246 = vst.msk [vmem:[#allocation2 + $0x44] sm:$0xf] %vm228, 0
        %247 = vst.msk [vmem:[#allocation2 + $0x48] sm:$0xf] %vm228, 0
        %248 = vst.msk [vmem:[#allocation2 + $0x4c] sm:$0xf] %vm228, 0
        %249 = vst.msk [vmem:[#allocation2 + $0x50] sm:$0xf] %vm228, 0
        %250 = vst.msk [vmem:[#allocation2 + $0x54] sm:$0xf] %vm228, 0
        %251 = vst.msk [vmem:[#allocation2 + $0x58] sm:$0xf] %vm228, 0
        %252 = vst.msk [vmem:[#allocation2 + $0x5c] sm:$0xf] %vm228, 0
        %253 = vst.msk [vmem:[#allocation2 + $0x60] sm:$0xf] %vm228, 0
        %254 = vst.msk [vmem:[#allocation2 + $0x64] sm:$0xf] %vm228, 0
        %255 = vst.msk [vmem:[#allocation2 + $0x68] sm:$0xf] %vm228, 0
        %256 = vst.msk [vmem:[#allocation2 + $0x6c] sm:$0xf] %vm228, 0
        %257 = vst.msk [vmem:[#allocation2 + $0x70] sm:$0xf] %vm228, 0
        %258 = vst.msk [vmem:[#allocation2 + $0x74] sm:$0xf] %vm228, 0
        %259 = vst.msk [vmem:[#allocation2 + $0x78] sm:$0xf] %vm228, 0
        %260 = vst.msk [vmem:[#allocation2 + $0x7c] sm:$0xf] %vm228, 0
        %261 = vst.msk [vmem:[#allocation2 + $0x80] sm:$0xf] %vm228, 0
        %262 = vst.msk [vmem:[#allocation2 + $0x84] sm:$0xf] %vm228, 0
        %263 = vst.msk [vmem:[#allocation2 + $0x88] sm:$0xf] %vm228, 0
        %264 = vst.msk [vmem:[#allocation2 + $0x8c] sm:$0xf] %vm228, 0
        %265 = vst.msk [vmem:[#allocation2 + $0x90] sm:$0xf] %vm228, 0
        %266 = vst.msk [vmem:[#allocation2 + $0x94] sm:$0xf] %vm228, 0
        %267 = vst.msk [vmem:[#allocation2 + $0x98] sm:$0xf] %vm228, 0
        %268 = vst.msk [vmem:[#allocation2 + $0x9c] sm:$0xf] %vm228, 0
        %269 = vst.msk [vmem:[#allocation2 + $0xa0] sm:$0xf] %vm228, 0
        %270 = vst.msk [vmem:[#allocation2 + $0xa4] sm:$0xf] %vm228, 0
        %271 = vst.msk [vmem:[#allocation2 + $0xa8] sm:$0xf] %vm228, 0
        %272 = vst.msk [vmem:[#allocation2 + $0xac] sm:$0xf] %vm228, 0
        %273 = vst.msk [vmem:[#allocation2 + $0xb0] sm:$0xf] %vm228, 0
        %274 = vst.msk [vmem:[#allocation2 + $0xb4] sm:$0xf] %vm228, 0
        %275 = vst.msk [vmem:[#allocation2 + $0xb8] sm:$0xf] %vm228, 0
        %276 = vst.msk [vmem:[#allocation2 + $0xbc] sm:$0xf] %vm228, 0
        %277 = vst.msk [vmem:[#allocation2 + $0xc0] sm:$0xf] %vm228, 0
        %278 = vst.msk [vmem:[#allocation2 + $0xc4] sm:$0xf] %vm228, 0
        %279 = vst.msk [vmem:[#allocation2 + $0xc8] sm:$0xf] %vm228, 0
        %280 = vst.msk [vmem:[#allocation2 + $0xcc] sm:$0xf] %vm228, 0
        %281 = vst.msk [vmem:[#allocation2 + $0xd0] sm:$0xf] %vm228, 0
        %282 = vst.msk [vmem:[#allocation2 + $0xd4] sm:$0xf] %vm228, 0
      $region40: #{bottleneck_forward.5} parent=35 // pred_fallthru
        _
      %v283 = vld [vmem:[%s217] sm:$0xf]
      %v284 = vld [vmem:[%s217 + $0x4] sm:$0xf]
      %v285 = vld [vmem:[%s217 + $0x8] sm:$0xf]
      %v286 = vld [vmem:[%s217 + $0xc] sm:$0xf]
      %v287 = vld [vmem:[%s217 + $0x10] sm:$0xf]
      %v288 = vld [vmem:[%s217 + $0x14] sm:$0xf]
      %v289 = vld [vmem:[%s217 + $0x18] sm:$0xf]
      %v290 = vld [vmem:[%s217 + $0x1c] sm:$0xf]
      %v291 = vld [vmem:[%s217 + $0x20] sm:$0xf]
      %v292 = vld [vmem:[%s217 + $0x24] sm:$0xf]
      %v293 = vld [vmem:[%s217 + $0x28] sm:$0xf]
      %v294 = vld [vmem:[%s217 + $0x2c] sm:$0xf]
      %v295 = vld [vmem:[%s217 + $0x30] sm:$0xf]
      %v296 = vld [vmem:[%s217 + $0x34] sm:$0xf]
      %v297 = vld [vmem:[%s217 + $0x38] sm:$0xf]
      %v298 = vld [vmem:[%s217 + $0x3c] sm:$0xf]
      %v299 = vld [vmem:[%s217 + $0x40] sm:$0xf]
      %v300 = vld [vmem:[%s217 + $0x44] sm:$0xf]
      %v301 = vld [vmem:[%s217 + $0x48] sm:$0xf]
      %v302 = vld [vmem:[%s217 + $0x4c] sm:$0xf]
      %v303 = vld [vmem:[%s217 + $0x50] sm:$0xf]
      %v304 = vld [vmem:[%s217 + $0x54] sm:$0xf]
      %v305 = vld [vmem:[%s217 + $0x58] sm:$0xf]
      %v306 = vld [vmem:[%s217 + $0x5c] sm:$0xf]
      %v307 = vld [vmem:[%s217 + $0x60] sm:$0xf]
      %v308 = vld [vmem:[%s217 + $0x64] sm:$0xf]
      %v309 = vld [vmem:[%s217 + $0x68] sm:$0xf]
      %v310 = vld [vmem:[%s217 + $0x6c] sm:$0xf]
      %v311 = vld [vmem:[%s217 + $0x70] sm:$0xf]
      %v312 = vld [vmem:[%s217 + $0x74] sm:$0xf]
      %v313 = vld [vmem:[%s217 + $0x78] sm:$0xf]
      %v314 = vld [vmem:[%s217 + $0x7c] sm:$0xf]
      %v315 = vunpack.c.l.bf16 %v283
      %v316 = vunpack.c.l.bf16 %v284
      %v317 = vunpack.c.l.bf16 %v285
      %v318 = vunpack.c.l.bf16 %v286
      %v319 = vunpack.c.l.bf16 %v287
      %v320 = vunpack.c.l.bf16 %v288
      %v321 = vunpack.c.l.bf16 %v289
      %v322 = vunpack.c.l.bf16 %v290
      %v323 = vunpack.c.l.bf16 %v291
      %v324 = vunpack.c.l.bf16 %v292
      %v325 = vunpack.c.l.bf16 %v293
      %v326 = vunpack.c.l.bf16 %v294
      %v327 = vunpack.c.l.bf16 %v295
      %v328 = vunpack.c.l.bf16 %v296
      %v329 = vunpack.c.l.bf16 %v297
      %v330 = vunpack.c.l.bf16 %v298
      %v331 = vunpack.c.l.bf16 %v299
      %v332 = vunpack.c.l.bf16 %v300
      %v333 = vunpack.c.l.bf16 %v301
      %v334 = vunpack.c.l.bf16 %v302
      %v335 = vunpack.c.l.bf16 %v303
      %v336 = vunpack.c.l.bf16 %v304
      %v337 = vunpack.c.l.bf16 %v305
      %v338 = vunpack.c.l.bf16 %v306
      %v339 = vunpack.c.l.bf16 %v307
      %v340 = vunpack.c.l.bf16 %v308
      %v341 = vunpack.c.l.bf16 %v309
      %v342 = vunpack.c.l.bf16 %v310
      %v343 = vunpack.c.l.bf16 %v311
      %v344 = vunpack.c.l.bf16 %v312
      %v345 = vunpack.c.l.bf16 %v313
      %v346 = vunpack.c.l.bf16 %v314
      %v347 = vld [vmem:[%s1] sm:$0x1]
      %v349 = vlaneseq
      %v350 = vshrl.u32 %v349, 7
      %v351 = vsub.s32 0, %v350
      %v352 = vrot.slane %v347, %v351
      %v354 = vmul.f32 %v315, %v352
      %v355 = vmul.f32 %v316, %v352
      %v356 = vmul.f32 %v317, %v352
      %v357 = vmul.f32 %v318, %v352
      %v358 = vmul.f32 %v319, %v352
      %v359 = vmul.f32 %v320, %v352
      %v360 = vmul.f32 %v321, %v352
      %v361 = vmul.f32 %v322, %v352
      %v362 = vmul.f32 %v323, %v352
      %v363 = vmul.f32 %v324, %v352
      %v364 = vmul.f32 %v325, %v352
      %v365 = vmul.f32 %v326, %v352
      %v366 = vmul.f32 %v327, %v352
      %v367 = vmul.f32 %v328, %v352
      %v368 = vmul.f32 %v329, %v352
      %v369 = vmul.f32 %v330, %v352
      %v370 = vmul.f32 %v331, %v352
      %v371 = vmul.f32 %v332, %v352
      %v372 = vmul.f32 %v333, %v352
      %v373 = vmul.f32 %v334, %v352
      %v374 = vmul.f32 %v335, %v352
      %v375 = vmul.f32 %v336, %v352
      %v376 = vmul.f32 %v337, %v352
      %v377 = vmul.f32 %v338, %v352
      %v378 = vmul.f32 %v339, %v352
      %v379 = vmul.f32 %v340, %v352
      %v380 = vmul.f32 %v341, %v352
      %v381 = vmul.f32 %v342, %v352
      %v382 = vmul.f32 %v343, %v352
      %v383 = vmul.f32 %v344, %v352
      %v384 = vmul.f32 %v345, %v352
      %v385 = vmul.f32 %v346, %v352
      %v386 = vld [vmem:[%s2] sm:$0x1]
      %v388 = vlaneseq
      %v389 = vshrl.u32 %v388, 7
      %v390 = vsub.s32 0, %v389
      %v391 = vrot.slane %v386, %v390
      %v393 = vadd.f32 %v354, %v391
      %v394 = vadd.f32 %v355, %v391
      %v395 = vadd.f32 %v356, %v391
      %v396 = vadd.f32 %v357, %v391
      %v397 = vadd.f32 %v358, %v391
      %v398 = vadd.f32 %v359, %v391
      %v399 = vadd.f32 %v360, %v391
      %v400 = vadd.f32 %v361, %v391
      %v401 = vadd.f32 %v362, %v391
      %v402 = vadd.f32 %v363, %v391
      %v403 = vadd.f32 %v364, %v391
      %v404 = vadd.f32 %v365, %v391
      %v405 = vadd.f32 %v366, %v391
      %v406 = vadd.f32 %v367, %v391
      %v407 = vadd.f32 %v368, %v391
      %v408 = vadd.f32 %v369, %v391
      %v409 = vadd.f32 %v370, %v391
      %v410 = vadd.f32 %v371, %v391
      %v411 = vadd.f32 %v372, %v391
      %v412 = vadd.f32 %v373, %v391
      %v413 = vadd.f32 %v374, %v391
      %v414 = vadd.f32 %v375, %v391
      %v415 = vadd.f32 %v376, %v391
      %v416 = vadd.f32 %v377, %v391
      %v417 = vadd.f32 %v378, %v391
      %v418 = vadd.f32 %v379, %v391
      %v419 = vadd.f32 %v380, %v391
      %v420 = vadd.f32 %v381, %v391
      %v421 = vadd.f32 %v382, %v391
      %v422 = vadd.f32 %v383, %v391
      %v423 = vadd.f32 %v384, %v391
      %v424 = vadd.f32 %v385, %v391
      %v425 = vmax.f32 %v393, 0.0
      %v426 = vmax.f32 %v394, 0.0
      %v427 = vmax.f32 %v395, 0.0
      %v428 = vmax.f32 %v396, 0.0
      %v429 = vmax.f32 %v397, 0.0
      %v430 = vmax.f32 %v398, 0.0
      %v431 = vmax.f32 %v399, 0.0
      %v432 = vmax.f32 %v400, 0.0
      %v433 = vmax.f32 %v401, 0.0
      %v434 = vmax.f32 %v402, 0.0
      %v435 = vmax.f32 %v403, 0.0
      %v436 = vmax.f32 %v404, 0.0
      %v437 = vmax.f32 %v405, 0.0
      %v438 = vmax.f32 %v406, 0.0
      %v439 = vmax.f32 %v407, 0.0
      %v440 = vmax.f32 %v408, 0.0
      %v441 = vmax.f32 %v409, 0.0
      %v442 = vmax.f32 %v410, 0.0
      %v443 = vmax.f32 %v411, 0.0
      %v444 = vmax.f32 %v412, 0.0
      %v445 = vmax.f32 %v413, 0.0
      %v446 = vmax.f32 %v414, 0.0
      %v447 = vmax.f32 %v415, 0.0
      %v448 = vmax.f32 %v416, 0.0
      %v449 = vmax.f32 %v417, 0.0
      %v450 = vmax.f32 %v418, 0.0
      %v451 = vmax.f32 %v419, 0.0
      %v452 = vmax.f32 %v420, 0.0
      %v453 = vmax.f32 %v421, 0.0
      %v454 = vmax.f32 %v422, 0.0
      %v455 = vmax.f32 %v423, 0.0
      %v456 = vmax.f32 %v424, 0.0
      %v457 = vpack.c.bf16 %v426, %v425
      %v458 = vpack.c.bf16 %v428, %v427
      %v459 = vpack.c.bf16 %v430, %v429
      %v460 = vpack.c.bf16 %v432, %v431
      %v461 = vpack.c.bf16 %v434, %v433
      %v462 = vpack.c.bf16 %v436, %v435
      %v463 = vpack.c.bf16 %v438, %v437
      %v464 = vpack.c.bf16 %v440, %v439
      %v465 = vpack.c.bf16 %v442, %v441
      %v466 = vpack.c.bf16 %v444, %v443
      %v467 = vpack.c.bf16 %v446, %v445
      %v468 = vpack.c.bf16 %v448, %v447
      %v469 = vpack.c.bf16 %v450, %v449
      %v470 = vpack.c.bf16 %v452, %v451
      %v471 = vpack.c.bf16 %v454, %v453
      %v472 = vpack.c.bf16 %v456, %v455
      %v489 = vunpack.c.l.b16 %v457
      %v490 = vunpack.c.h.b16 %v457
      %v491 = vunpack.c.l.b16 %v458
      %v492 = vunpack.c.h.b16 %v458
      %v493 = vunpack.c.l.b16 %v459
      %v494 = vunpack.c.h.b16 %v459
      %v495 = vunpack.c.l.b16 %v460
      %v496 = vunpack.c.h.b16 %v460
      %v497 = vunpack.c.l.b16 %v461
      %v498 = vunpack.c.h.b16 %v461
      %v499 = vunpack.c.l.b16 %v462
      %v500 = vunpack.c.h.b16 %v462
      %v501 = vunpack.c.l.b16 %v463
      %v502 = vunpack.c.h.b16 %v463
      %v503 = vunpack.c.l.b16 %v464
      %v504 = vunpack.c.h.b16 %v464
      %v505 = vunpack.c.l.b16 %v465
      %v506 = vunpack.c.h.b16 %v465
      %v507 = vunpack.c.l.b16 %v466
      %v508 = vunpack.c.h.b16 %v466
      %v509 = vunpack.c.l.b16 %v467
      %v510 = vunpack.c.h.b16 %v467
      %v511 = vunpack.c.l.b16 %v468
      %v512 = vunpack.c.h.b16 %v468
      %v513 = vunpack.c.l.b16 %v469
      %v514 = vunpack.c.h.b16 %v469
      %v515 = vunpack.c.l.b16 %v470
      %v516 = vunpack.c.h.b16 %v470
      %v517 = vunpack.c.l.b16 %v471
      %v518 = vunpack.c.h.b16 %v471
      %v519 = vunpack.c.l.b16 %v472
      %v520 = vunpack.c.h.b16 %v472
      %v521 = vpack.c.b16 %v489, %v489
      %v522 = vpack.c.b16 %v490, %v490
      %v523 = vpack.c.b16 %v491, %v491
      %v524 = vpack.c.b16 %v492, %v492
      %v525 = vpack.c.b16 %v493, %v493
      %v526 = vpack.c.b16 %v494, %v494
      %v527 = vpack.c.b16 %v495, %v495
      %v528 = vpack.c.b16 %v496, %v496
      %v529 = vpack.c.b16 %v497, %v497
      %v530 = vpack.c.b16 %v498, %v498
      %v531 = vpack.c.b16 %v499, %v499
      %v532 = vpack.c.b16 %v500, %v500
      %v533 = vpack.c.b16 %v501, %v501
      %v534 = vpack.c.b16 %v502, %v502
      %v535 = vpack.c.b16 %v503, %v503
      %v536 = vpack.c.b16 %v504, %v504
      %v537 = vpack.c.b16 %v505, %v505
      %v538 = vpack.c.b16 %v506, %v506
      %v539 = vpack.c.b16 %v507, %v507
      %v540 = vpack.c.b16 %v508, %v508
      %v541 = vpack.c.b16 %v509, %v509
      %v542 = vpack.c.b16 %v510, %v510
      %v543 = vpack.c.b16 %v511, %v511
      %v544 = vpack.c.b16 %v512, %v512
      %v545 = vpack.c.b16 %v513, %v513
      %v546 = vpack.c.b16 %v514, %v514
      %v547 = vpack.c.b16 %v515, %v515
      %v548 = vpack.c.b16 %v516, %v516
      %v549 = vpack.c.b16 %v517, %v517
      %v550 = vpack.c.b16 %v518, %v518
      %v551 = vpack.c.b16 %v519, %v519
      %v552 = vpack.c.b16 %v520, %v520
      %vm553 = vsmask.f32 256
      %vm554 = vsmask.f32 4368
      %vm555 = vmor %vm553, %vm554
      %v557 = vshrl.u32 %v521, 16
      %v559 = vrot.slane %v557, 7
      %v560 = vshll.u32 %v521, 16
      %v562 = vor.u32 %v559, %v560
      %v563 = vrot.slane %v559, 4
      %v565 = vshrl.u32 %v522, 16
      %v567 = vrot.slane %v565, 7
      %v568 = vshll.u32 %v522, 16
      %v570 = vor.u32 %v567, %v568
      %v571 = vsel %vm555, %v563, %v570
      %v572 = vrot.slane %v567, 4
      %v574 = vshrl.u32 %v523, 16
      %v576 = vrot.slane %v574, 7
      %v577 = vshll.u32 %v523, 16
      %v579 = vor.u32 %v576, %v577
      %v580 = vrot.slane %v576, 4
      %v582 = vshrl.u32 %v524, 16
      %v584 = vrot.slane %v582, 7
      %v585 = vshll.u32 %v524, 16
      %v587 = vor.u32 %v584, %v585
      %v588 = vsel %vm555, %v580, %v587
      %v589 = vrot.slane %v584, 4
      %v591 = vshrl.u32 %v525, 16
      %v593 = vrot.slane %v591, 7
      %v594 = vshll.u32 %v525, 16
      %v596 = vor.u32 %v593, %v594
      %v597 = vrot.slane %v593, 4
      %v599 = vshrl.u32 %v526, 16
      %v601 = vrot.slane %v599, 7
      %v602 = vshll.u32 %v526, 16
      %v604 = vor.u32 %v601, %v602
      %v605 = vsel %vm555, %v597, %v604
      %v606 = vrot.slane %v601, 4
      %v608 = vshrl.u32 %v527, 16
      %v610 = vrot.slane %v608, 7
      %v611 = vshll.u32 %v527, 16
      %v613 = vor.u32 %v610, %v611
      %v614 = vrot.slane %v610, 4
      %v616 = vshrl.u32 %v528, 16
      %v618 = vrot.slane %v616, 7
      %v619 = vshll.u32 %v528, 16
      %v621 = vor.u32 %v618, %v619
      %v622 = vsel %vm555, %v614, %v621
      %v623 = vrot.slane %v618, 4
      %v625 = vshrl.u32 %v529, 16
      %v627 = vrot.slane %v625, 7
      %v628 = vshll.u32 %v529, 16
      %v630 = vor.u32 %v627, %v628
      %v631 = vrot.slane %v627, 4
      %v633 = vshrl.u32 %v530, 16
      %v635 = vrot.slane %v633, 7
      %v636 = vshll.u32 %v530, 16
      %v638 = vor.u32 %v635, %v636
      %v639 = vsel %vm555, %v631, %v638
      %v640 = vrot.slane %v635, 4
      %v642 = vshrl.u32 %v531, 16
      %v644 = vrot.slane %v642, 7
      %v645 = vshll.u32 %v531, 16
      %v647 = vor.u32 %v644, %v645
      %v648 = vrot.slane %v644, 4
      %v650 = vshrl.u32 %v532, 16
      %v652 = vrot.slane %v650, 7
      %v653 = vshll.u32 %v532, 16
      %v655 = vor.u32 %v652, %v653
      %v656 = vsel %vm555, %v648, %v655
      %v657 = vrot.slane %v652, 4
      %v659 = vshrl.u32 %v533, 16
      %v661 = vrot.slane %v659, 7
      %v662 = vshll.u32 %v533, 16
      %v664 = vor.u32 %v661, %v662
      %v665 = vrot.slane %v661, 4
      %v667 = vshrl.u32 %v534, 16
      %v669 = vrot.slane %v667, 7
      %v670 = vshll.u32 %v534, 16
      %v672 = vor.u32 %v669, %v670
      %v673 = vsel %vm555, %v665, %v672
      %v674 = vrot.slane %v669, 4
      %v676 = vshrl.u32 %v535, 16
      %v678 = vrot.slane %v676, 7
      %v679 = vshll.u32 %v535, 16
      %v681 = vor.u32 %v678, %v679
      %v682 = vrot.slane %v678, 4
      %v684 = vshrl.u32 %v536, 16
      %v686 = vrot.slane %v684, 7
      %v687 = vshll.u32 %v536, 16
      %v689 = vor.u32 %v686, %v687
      %v690 = vsel %vm555, %v682, %v689
      %v691 = vrot.slane %v686, 4
      %v693 = vshrl.u32 %v537, 16
      %v695 = vrot.slane %v693, 7
      %v696 = vshll.u32 %v537, 16
      %v698 = vor.u32 %v695, %v696
      %v699 = vrot.slane %v695, 4
      %v701 = vshrl.u32 %v538, 16
      %v703 = vrot.slane %v701, 7
      %v704 = vshll.u32 %v538, 16
      %v706 = vor.u32 %v703, %v704
      %v707 = vsel %vm555, %v699, %v706
      %v708 = vrot.slane %v703, 4
      %v710 = vshrl.u32 %v539, 16
      %v712 = vrot.slane %v710, 7
      %v713 = vshll.u32 %v539, 16
      %v715 = vor.u32 %v712, %v713
      %v716 = vrot.slane %v712, 4
      %v718 = vshrl.u32 %v540, 16
      %v720 = vrot.slane %v718, 7
      %v721 = vshll.u32 %v540, 16
      %v723 = vor.u32 %v720, %v721
      %v724 = vsel %vm555, %v716, %v723
      %v725 = vrot.slane %v720, 4
      %v727 = vshrl.u32 %v541, 16
      %v729 = vrot.slane %v727, 7
      %v730 = vshll.u32 %v541, 16
      %v732 = vor.u32 %v729, %v730
      %v733 = vrot.slane %v729, 4
      %v735 = vshrl.u32 %v542, 16
      %v737 = vrot.slane %v735, 7
      %v738 = vshll.u32 %v542, 16
      %v740 = vor.u32 %v737, %v738
      %v741 = vsel %vm555, %v733, %v740
      %v742 = vrot.slane %v737, 4
      %v744 = vshrl.u32 %v543, 16
      %v746 = vrot.slane %v744, 7
      %v747 = vshll.u32 %v543, 16
      %v749 = vor.u32 %v746, %v747
      %v750 = vrot.slane %v746, 4
      %v752 = vshrl.u32 %v544, 16
      %v754 = vrot.slane %v752, 7
      %v755 = vshll.u32 %v544, 16
      %v757 = vor.u32 %v754, %v755
      %v758 = vsel %vm555, %v750, %v757
      %v759 = vrot.slane %v754, 4
      %v761 = vshrl.u32 %v545, 16
      %v763 = vrot.slane %v761, 7
      %v764 = vshll.u32 %v545, 16
      %v766 = vor.u32 %v763, %v764
      %v767 = vrot.slane %v763, 4
      %v769 = vshrl.u32 %v546, 16
      %v771 = vrot.slane %v769, 7
      %v772 = vshll.u32 %v546, 16
      %v774 = vor.u32 %v771, %v772
      %v775 = vsel %vm555, %v767, %v774
      %v776 = vrot.slane %v771, 4
      %v778 = vshrl.u32 %v547, 16
      %v780 = vrot.slane %v778, 7
      %v781 = vshll.u32 %v547, 16
      %v783 = vor.u32 %v780, %v781
      %v784 = vrot.slane %v780, 4
      %v786 = vshrl.u32 %v548, 16
      %v788 = vrot.slane %v786, 7
      %v789 = vshll.u32 %v548, 16
      %v791 = vor.u32 %v788, %v789
      %v792 = vsel %vm555, %v784, %v791
      %v793 = vrot.slane %v788, 4
      %v795 = vshrl.u32 %v549, 16
      %v797 = vrot.slane %v795, 7
      %v798 = vshll.u32 %v549, 16
      %v800 = vor.u32 %v797, %v798
      %v801 = vrot.slane %v797, 4
      %v803 = vshrl.u32 %v550, 16
      %v805 = vrot.slane %v803, 7
      %v806 = vshll.u32 %v550, 16
      %v808 = vor.u32 %v805, %v806
      %v809 = vsel %vm555, %v801, %v808
      %v810 = vrot.slane %v805, 4
      %v812 = vshrl.u32 %v551, 16
      %v814 = vrot.slane %v812, 7
      %v815 = vshll.u32 %v551, 16
      %v817 = vor.u32 %v814, %v815
      %v818 = vrot.slane %v814, 4
      %v820 = vshrl.u32 %v552, 16
      %v822 = vrot.slane %v820, 7
      %v823 = vshll.u32 %v552, 16
      %v825 = vor.u32 %v822, %v823
      %v826 = vsel %vm555, %v818, %v825
      %v827 = vrot.slane %v822, 4
      %s876 = scalar_lea.vmem [#allocation2], 12
      %vm877 = vcmask 27648
      %vm878 = vsmask.f32 7938
      %vm879 = vmand %vm877, %vm878
      %v880 = vld [vmem:[%s876] sm:$0xf]
      %v881 = vsel %vm879, %v562, %v880
      %882 = vst [vmem:[%s876] sm:$0xf] %v881
      %vm883 = vcmask 27648
      %884 = vst.msk [vmem:[%s876 + $0x4] sm:$0xf] %vm883, %v571
      %vm885 = vcmask 24576
      %vm886 = vmand %vm885, %vm553
      %v887 = vld [vmem:[%s876 + $0x8] sm:$0x1]
      %v888 = vsel %vm886, %v572, %v887
      %889 = vst [vmem:[%s876 + $0x8] sm:$0x1] %v888
      %v890 = vld [vmem:[%s876 + $0xc] sm:$0xf]
      %v891 = vsel %vm879, %v579, %v890
      %892 = vst [vmem:[%s876 + $0xc] sm:$0xf] %v891
      %893 = vst.msk [vmem:[%s876 + $0x10] sm:$0xf] %vm883, %v588
      %v894 = vld [vmem:[%s876 + $0x14] sm:$0x1]
      %v895 = vsel %vm886, %v589, %v894
      %896 = vst [vmem:[%s876 + $0x14] sm:$0x1] %v895
      %v897 = vld [vmem:[%s876 + $0x18] sm:$0xf]
      %v898 = vsel %vm879, %v596, %v897
      %899 = vst [vmem:[%s876 + $0x18] sm:$0xf] %v898
      %900 = vst.msk [vmem:[%s876 + $0x1c] sm:$0xf] %vm883, %v605
      %v901 = vld [vmem:[%s876 + $0x20] sm:$0x1]
      %v902 = vsel %vm886, %v606, %v901
      %903 = vst [vmem:[%s876 + $0x20] sm:$0x1] %v902
      %v904 = vld [vmem:[%s876 + $0x24] sm:$0xf]
      %v905 = vsel %vm879, %v613, %v904
      %906 = vst [vmem:[%s876 + $0x24] sm:$0xf] %v905
      %907 = vst.msk [vmem:[%s876 + $0x28] sm:$0xf] %vm883, %v622
      %v908 = vld [vmem:[%s876 + $0x2c] sm:$0x1]
      %v909 = vsel %vm886, %v623, %v908
      %910 = vst [vmem:[%s876 + $0x2c] sm:$0x1] %v909
      %v911 = vld [vmem:[%s876 + $0x30] sm:$0xf]
      %v912 = vsel %vm879, %v630, %v911
      %913 = vst [vmem:[%s876 + $0x30] sm:$0xf] %v912
      %914 = vst.msk [vmem:[%s876 + $0x34] sm:$0xf] %vm883, %v639
      %v915 = vld [vmem:[%s876 + $0x38] sm:$0x1]
      %v916 = vsel %vm886, %v640, %v915
      %917 = vst [vmem:[%s876 + $0x38] sm:$0x1] %v916
      %v918 = vld [vmem:[%s876 + $0x3c] sm:$0xf]
      %v919 = vsel %vm879, %v647, %v918
      %920 = vst [vmem:[%s876 + $0x3c] sm:$0xf] %v919
      %921 = vst.msk [vmem:[%s876 + $0x40] sm:$0xf] %vm883, %v656
      %v922 = vld [vmem:[%s876 + $0x44] sm:$0x1]
      %v923 = vsel %vm886, %v657, %v922
      %924 = vst [vmem:[%s876 + $0x44] sm:$0x1] %v923
      %v925 = vld [vmem:[%s876 + $0x48] sm:$0xf]
      %v926 = vsel %vm879, %v664, %v925
      %927 = vst [vmem:[%s876 + $0x48] sm:$0xf] %v926
      %928 = vst.msk [vmem:[%s876 + $0x4c] sm:$0xf] %vm883, %v673
      %v929 = vld [vmem:[%s876 + $0x50] sm:$0x1]
      %v930 = vsel %vm886, %v674, %v929
      %931 = vst [vmem:[%s876 + $0x50] sm:$0x1] %v930
      %v932 = vld [vmem:[%s876 + $0x54] sm:$0xf]
      %v933 = vsel %vm879, %v681, %v932
      %934 = vst [vmem:[%s876 + $0x54] sm:$0xf] %v933
      %935 = vst.msk [vmem:[%s876 + $0x58] sm:$0xf] %vm883, %v690
      %v936 = vld [vmem:[%s876 + $0x5c] sm:$0x1]
      %v937 = vsel %vm886, %v691, %v936
      %938 = vst [vmem:[%s876 + $0x5c] sm:$0x1] %v937
      %v939 = vld [vmem:[%s876 + $0x60] sm:$0xf]
      %v940 = vsel %vm879, %v698, %v939
      %941 = vst [vmem:[%s876 + $0x60] sm:$0xf] %v940
      %942 = vst.msk [vmem:[%s876 + $0x64] sm:$0xf] %vm883, %v707
      %v943 = vld [vmem:[%s876 + $0x68] sm:$0x1]
      %v944 = vsel %vm886, %v708, %v943
      %945 = vst [vmem:[%s876 + $0x68] sm:$0x1] %v944
      %v946 = vld [vmem:[%s876 + $0x6c] sm:$0xf]
      %v947 = vsel %vm879, %v715, %v946
      %948 = vst [vmem:[%s876 + $0x6c] sm:$0xf] %v947
      %949 = vst.msk [vmem:[%s876 + $0x70] sm:$0xf] %vm883, %v724
      %v950 = vld [vmem:[%s876 + $0x74] sm:$0x1]
      %v951 = vsel %vm886, %v725, %v950
      %952 = vst [vmem:[%s876 + $0x74] sm:$0x1] %v951
      %v953 = vld [vmem:[%s876 + $0x78] sm:$0xf]
      %v954 = vsel %vm879, %v732, %v953
      %955 = vst [vmem:[%s876 + $0x78] sm:$0xf] %v954
      %956 = vst.msk [vmem:[%s876 + $0x7c] sm:$0xf] %vm883, %v741
      %v957 = vld [vmem:[%s876 + $0x80] sm:$0x1]
      %v958 = vsel %vm886, %v742, %v957
      %959 = vst [vmem:[%s876 + $0x80] sm:$0x1] %v958
      %v960 = vld [vmem:[%s876 + $0x84] sm:$0xf]
      %v961 = vsel %vm879, %v749, %v960
      %962 = vst [vmem:[%s876 + $0x84] sm:$0xf] %v961
      %963 = vst.msk [vmem:[%s876 + $0x88] sm:$0xf] %vm883, %v758
      %v964 = vld [vmem:[%s876 + $0x8c] sm:$0x1]
      %v965 = vsel %vm886, %v759, %v964
      %966 = vst [vmem:[%s876 + $0x8c] sm:$0x1] %v965
      %v967 = vld [vmem:[%s876 + $0x90] sm:$0xf]
      %v968 = vsel %vm879, %v766, %v967
      %969 = vst [vmem:[%s876 + $0x90] sm:$0xf] %v968
      %970 = vst.msk [vmem:[%s876 + $0x94] sm:$0xf] %vm883, %v775
      %v971 = vld [vmem:[%s876 + $0x98] sm:$0x1]
      %v972 = vsel %vm886, %v776, %v971
      %973 = vst [vmem:[%s876 + $0x98] sm:$0x1] %v972
      %v974 = vld [vmem:[%s876 + $0x9c] sm:$0xf]
      %v975 = vsel %vm879, %v783, %v974
      %976 = vst [vmem:[%s876 + $0x9c] sm:$0xf] %v975
      %977 = vst.msk [vmem:[%s876 + $0xa0] sm:$0xf] %vm883, %v792
      %v978 = vld [vmem:[%s876 + $0xa4] sm:$0x1]
      %v979 = vsel %vm886, %v793, %v978
      %980 = vst [vmem:[%s876 + $0xa4] sm:$0x1] %v979
      %v981 = vld [vmem:[%s876 + $0xa8] sm:$0xf]
      %v982 = vsel %vm879, %v800, %v981
      %983 = vst [vmem:[%s876 + $0xa8] sm:$0xf] %v982
      %984 = vst.msk [vmem:[%s876 + $0xac] sm:$0xf] %vm883, %v809
      %v985 = vld [vmem:[%s876 + $0xb0] sm:$0x1]
      %v986 = vsel %vm886, %v810, %v985
      %987 = vst [vmem:[%s876 + $0xb0] sm:$0x1] %v986
      %v988 = vld [vmem:[%s876 + $0xb4] sm:$0xf]
      %v989 = vsel %vm879, %v817, %v988
      %990 = vst [vmem:[%s876 + $0xb4] sm:$0xf] %v989
      %991 = vst.msk [vmem:[%s876 + $0xb8] sm:$0xf] %vm883, %v826
      %v992 = vld [vmem:[%s876 + $0xbc] sm:$0x1]
      %v993 = vsel %vm886, %v827, %v992
      %994 = vst [vmem:[%s876 + $0xbc] sm:$0x1] %v993
      %v995 = vld [vmem:[#allocation2] sm:$0xf]
      %v996 = vld [vmem:[#allocation2 + $0x4] sm:$0xf]
      %v997 = vld [vmem:[#allocation2 + $0xc] sm:$0xf]
      %v998 = vld [vmem:[#allocation2 + $0x10] sm:$0xf]
      %v999 = vld [vmem:[#allocation2 + $0x18] sm:$0xf]
      %v1000 = vld [vmem:[#allocation2 + $0x1c] sm:$0xf]
      %v1001 = vld [vmem:[#allocation2 + $0x24] sm:$0xf]
      %v1002 = vld [vmem:[#allocation2 + $0x28] sm:$0xf]
      %v1003 = vld [vmem:[#allocation2 + $0x30] sm:$0xf]
      %v1004 = vld [vmem:[#allocation2 + $0x34] sm:$0xf]
      %v1005 = vld [vmem:[#allocation2 + $0x3c] sm:$0xf]
      %v1006 = vld [vmem:[#allocation2 + $0x40] sm:$0xf]
      %v1007 = vld [vmem:[#allocation2 + $0x48] sm:$0xf]
      %v1008 = vld [vmem:[#allocation2 + $0x4c] sm:$0xf]
      %v1009 = vld [vmem:[#allocation2 + $0x54] sm:$0xf]
      %v1010 = vld [vmem:[#allocation2 + $0x58] sm:$0xf]
      %v1011 = vld [vmem:[#allocation2 + $0x60] sm:$0xf]
      %v1012 = vld [vmem:[#allocation2 + $0x64] sm:$0xf]
      %v1013 = vld [vmem:[#allocation2 + $0x6c] sm:$0xf]
      %v1014 = vld [vmem:[#allocation2 + $0x70] sm:$0xf]
      %v1015 = vld [vmem:[#allocation2 + $0x78] sm:$0xf]
      %v1016 = vld [vmem:[#allocation2 + $0x7c] sm:$0xf]
      %v1017 = vld [vmem:[#allocation2 + $0x84] sm:$0xf]
      %v1018 = vld [vmem:[#allocation2 + $0x88] sm:$0xf]
      %v1019 = vld [vmem:[#allocation2 + $0x90] sm:$0xf]
      %v1020 = vld [vmem:[#allocation2 + $0x94] sm:$0xf]
      %v1021 = vld [vmem:[#allocation2 + $0x9c] sm:$0xf]
      %v1022 = vld [vmem:[#allocation2 + $0xa0] sm:$0xf]
      %v1023 = vld [vmem:[#allocation2 + $0xa8] sm:$0xf]
      %v1024 = vld [vmem:[#allocation2 + $0xac] sm:$0xf]
      %v1025 = vld [vmem:[#allocation2 + $0xb4] sm:$0xf]
      %v1026 = vld [vmem:[#allocation2 + $0xb8] sm:$0xf]
      %v1027 = vld [vmem:[%s3] sm:$0x3]
      %v1028 = vld [vmem:[#allocation2 + $0x8] sm:$0x1]
      %v1029 = vld [vmem:[#allocation2 + $0x14] sm:$0x1]
      %v1030 = vld [vmem:[#allocation2 + $0x20] sm:$0x1]
      %v1031 = vld [vmem:[#allocation2 + $0x2c] sm:$0x1]
      %v1032 = vld [vmem:[#allocation2 + $0x38] sm:$0x1]
      %v1033 = vld [vmem:[#allocation2 + $0x44] sm:$0x1]
      %v1034 = vld [vmem:[#allocation2 + $0x50] sm:$0x1]
      %v1035 = vld [vmem:[#allocation2 + $0x5c] sm:$0x1]
      %v1036 = vld [vmem:[#allocation2 + $0x68] sm:$0x1]
      %v1037 = vld [vmem:[#allocation2 + $0x74] sm:$0x1]
      %v1038 = vld [vmem:[#allocation2 + $0x80] sm:$0x1]
      %v1039 = vld [vmem:[#allocation2 + $0x8c] sm:$0x1]
      %v1040 = vld [vmem:[#allocation2 + $0x98] sm:$0x1]
      %v1041 = vld [vmem:[#allocation2 + $0xa4] sm:$0x1]
      %v1042 = vld [vmem:[#allocation2 + $0xb0] sm:$0x1]
      %v1043 = vld [vmem:[#allocation2 + $0xbc] sm:$0x1]
      %vm1044 = vsmask.f32 3328
      %vm1045 = vsmask.f32 7440
      %vm1046 = vmor %vm1044, %vm1045
      %v1048 = vshrl.u32 %v995, 16
      %v1050 = vrot.slane %v1048, 4
      %v1051 = vshll.u32 %v995, 16
      %v1053 = vrot.slane %v1051, 5
      %v1054 = vor.u32 %v1050, %v1053
      %v1055 = vrot.slane %v1054, 4
      %v1057 = vshll.u32 %v996, 16
      %v1059 = vrot.slane %v1057, 5
      %v1060 = vsel %vm1046, %v1055, %v1059
      %v1061 = vshrl.u32 %v996, 16
      %v1063 = vrot.slane %v1061, 4
      %v1064 = vor.u32 %v1063, %v1059
      %v1065 = vrot.slane %v1064, 4
      %v1067 = vshll.u32 %v1028, 16
      %v1069 = vrot.slane %v1067, 5
      %v1070 = vsel %vm1046, %v1065, %v1069
      %v1072 = vshrl.u32 %v997, 16
      %v1074 = vrot.slane %v1072, 4
      %v1075 = vshll.u32 %v997, 16
      %v1077 = vrot.slane %v1075, 5
      %v1078 = vor.u32 %v1074, %v1077
      %v1079 = vrot.slane %v1078, 4
      %v1081 = vshll.u32 %v998, 16
      %v1083 = vrot.slane %v1081, 5
      %v1084 = vsel %vm1046, %v1079, %v1083
      %v1085 = vshrl.u32 %v998, 16
      %v1087 = vrot.slane %v1085, 4
      %v1088 = vor.u32 %v1087, %v1083
      %v1089 = vrot.slane %v1088, 4
      %v1091 = vshll.u32 %v1029, 16
      %v1093 = vrot.slane %v1091, 5
      %v1094 = vsel %vm1046, %v1089, %v1093
      %v1096 = vshrl.u32 %v999, 16
      %v1098 = vrot.slane %v1096, 4
      %v1099 = vshll.u32 %v999, 16
      %v1101 = vrot.slane %v1099, 5
      %v1102 = vor.u32 %v1098, %v1101
      %v1103 = vrot.slane %v1102, 4
      %v1105 = vshll.u32 %v1000, 16
      %v1107 = vrot.slane %v1105, 5
      %v1108 = vsel %vm1046, %v1103, %v1107
      %v1109 = vshrl.u32 %v1000, 16
      %v1111 = vrot.slane %v1109, 4
      %v1112 = vor.u32 %v1111, %v1107
      %v1113 = vrot.slane %v1112, 4
      %v1115 = vshll.u32 %v1030, 16
      %v1117 = vrot.slane %v1115, 5
      %v1118 = vsel %vm1046, %v1113, %v1117
      %v1120 = vshrl.u32 %v1001, 16
      %v1122 = vrot.slane %v1120, 4
      %v1123 = vshll.u32 %v1001, 16
      %v1125 = vrot.slane %v1123, 5
      %v1126 = vor.u32 %v1122, %v1125
      %v1127 = vrot.slane %v1126, 4
      %v1129 = vshll.u32 %v1002, 16
      %v1131 = vrot.slane %v1129, 5
      %v1132 = vsel %vm1046, %v1127, %v1131
      %v1133 = vshrl.u32 %v1002, 16
      %v1135 = vrot.slane %v1133, 4
      %v1136 = vor.u32 %v1135, %v1131
      %v1137 = vrot.slane %v1136, 4
      %v1139 = vshll.u32 %v1031, 16
      %v1141 = vrot.slane %v1139, 5
      %v1142 = vsel %vm1046, %v1137, %v1141
      %v1144 = vshrl.u32 %v1003, 16
      %v1146 = vrot.slane %v1144, 4
      %v1147 = vshll.u32 %v1003, 16
      %v1149 = vrot.slane %v1147, 5
      %v1150 = vor.u32 %v1146, %v1149
      %v1151 = vrot.slane %v1150, 4
      %v1153 = vshll.u32 %v1004, 16
      %v1155 = vrot.slane %v1153, 5
      %v1156 = vsel %vm1046, %v1151, %v1155
      %v1157 = vshrl.u32 %v1004, 16
      %v1159 = vrot.slane %v1157, 4
      %v1160 = vor.u32 %v1159, %v1155
      %v1161 = vrot.slane %v1160, 4
      %v1163 = vshll.u32 %v1032, 16
      %v1165 = vrot.slane %v1163, 5
      %v1166 = vsel %vm1046, %v1161, %v1165
      %v1168 = vshrl.u32 %v1005, 16
      %v1170 = vrot.slane %v1168, 4
      %v1171 = vshll.u32 %v1005, 16
      %v1173 = vrot.slane %v1171, 5
      %v1174 = vor.u32 %v1170, %v1173
      %v1175 = vrot.slane %v1174, 4
      %v1177 = vshll.u32 %v1006, 16
      %v1179 = vrot.slane %v1177, 5
      %v1180 = vsel %vm1046, %v1175, %v1179
      %v1181 = vshrl.u32 %v1006, 16
      %v1183 = vrot.slane %v1181, 4
      %v1184 = vor.u32 %v1183, %v1179
      %v1185 = vrot.slane %v1184, 4
      %v1187 = vshll.u32 %v1033, 16
      %v1189 = vrot.slane %v1187, 5
      %v1190 = vsel %vm1046, %v1185, %v1189
      %v1192 = vshrl.u32 %v1007, 16
      %v1194 = vrot.slane %v1192, 4
      %v1195 = vshll.u32 %v1007, 16
      %v1197 = vrot.slane %v1195, 5
      %v1198 = vor.u32 %v1194, %v1197
      %v1199 = vrot.slane %v1198, 4
      %v1201 = vshll.u32 %v1008, 16
      %v1203 = vrot.slane %v1201, 5
      %v1204 = vsel %vm1046, %v1199, %v1203
      %v1205 = vshrl.u32 %v1008, 16
      %v1207 = vrot.slane %v1205, 4
      %v1208 = vor.u32 %v1207, %v1203
      %v1209 = vrot.slane %v1208, 4
      %v1211 = vshll.u32 %v1034, 16
      %v1213 = vrot.slane %v1211, 5
      %v1214 = vsel %vm1046, %v1209, %v1213
      %v1216 = vshrl.u32 %v1009, 16
      %v1218 = vrot.slane %v1216, 4
      %v1219 = vshll.u32 %v1009, 16
      %v1221 = vrot.slane %v1219, 5
      %v1222 = vor.u32 %v1218, %v1221
      %v1223 = vrot.slane %v1222, 4
      %v1225 = vshll.u32 %v1010, 16
      %v1227 = vrot.slane %v1225, 5
      %v1228 = vsel %vm1046, %v1223, %v1227
      %v1229 = vshrl.u32 %v1010, 16
      %v1231 = vrot.slane %v1229, 4
      %v1232 = vor.u32 %v1231, %v1227
      %v1233 = vrot.slane %v1232, 4
      %v1235 = vshll.u32 %v1035, 16
      %v1237 = vrot.slane %v1235, 5
      %v1238 = vsel %vm1046, %v1233, %v1237
      %v1240 = vshrl.u32 %v1011, 16
      %v1242 = vrot.slane %v1240, 4
      %v1243 = vshll.u32 %v1011, 16
      %v1245 = vrot.slane %v1243, 5
      %v1246 = vor.u32 %v1242, %v1245
      %v1247 = vrot.slane %v1246, 4
      %v1249 = vshll.u32 %v1012, 16
      %v1251 = vrot.slane %v1249, 5
      %v1252 = vsel %vm1046, %v1247, %v1251
      %v1253 = vshrl.u32 %v1012, 16
      %v1255 = vrot.slane %v1253, 4
      %v1256 = vor.u32 %v1255, %v1251
      %v1257 = vrot.slane %v1256, 4
      %v1259 = vshll.u32 %v1036, 16
      %v1261 = vrot.slane %v1259, 5
      %v1262 = vsel %vm1046, %v1257, %v1261
      %v1264 = vshrl.u32 %v1013, 16
      %v1266 = vrot.slane %v1264, 4
      %v1267 = vshll.u32 %v1013, 16
      %v1269 = vrot.slane %v1267, 5
      %v1270 = vor.u32 %v1266, %v1269
      %v1271 = vrot.slane %v1270, 4
      %v1273 = vshll.u32 %v1014, 16
      %v1275 = vrot.slane %v1273, 5
      %v1276 = vsel %vm1046, %v1271, %v1275
      %v1277 = vshrl.u32 %v1014, 16
      %v1279 = vrot.slane %v1277, 4
      %v1280 = vor.u32 %v1279, %v1275
      %v1281 = vrot.slane %v1280, 4
      %v1283 = vshll.u32 %v1037, 16
      %v1285 = vrot.slane %v1283, 5
      %v1286 = vsel %vm1046, %v1281, %v1285
      %v1288 = vshrl.u32 %v1015, 16
      %v1290 = vrot.slane %v1288, 4
      %v1291 = vshll.u32 %v1015, 16
      %v1293 = vrot.slane %v1291, 5
      %v1294 = vor.u32 %v1290, %v1293
      %v1295 = vrot.slane %v1294, 4
      %v1297 = vshll.u32 %v1016, 16
      %v1299 = vrot.slane %v1297, 5
      %v1300 = vsel %vm1046, %v1295, %v1299
      %v1301 = vshrl.u32 %v1016, 16
      %v1303 = vrot.slane %v1301, 4
      %v1304 = vor.u32 %v1303, %v1299
      %v1305 = vrot.slane %v1304, 4
      %v1307 = vshll.u32 %v1038, 16
      %v1309 = vrot.slane %v1307, 5
      %v1310 = vsel %vm1046, %v1305, %v1309
      %v1312 = vshrl.u32 %v1017, 16
      %v1314 = vrot.slane %v1312, 4
      %v1315 = vshll.u32 %v1017, 16
      %v1317 = vrot.slane %v1315, 5
      %v1318 = vor.u32 %v1314, %v1317
      %v1319 = vrot.slane %v1318, 4
      %v1321 = vshll.u32 %v1018, 16
      %v1323 = vrot.slane %v1321, 5
      %v1324 = vsel %vm1046, %v1319, %v1323
      %v1325 = vshrl.u32 %v1018, 16
      %v1327 = vrot.slane %v1325, 4
      %v1328 = vor.u32 %v1327, %v1323
      %v1329 = vrot.slane %v1328, 4
      %v1331 = vshll.u32 %v1039, 16
      %v1333 = vrot.slane %v1331, 5
      %v1334 = vsel %vm1046, %v1329, %v1333
      %v1336 = vshrl.u32 %v1019, 16
      %v1338 = vrot.slane %v1336, 4
      %v1339 = vshll.u32 %v1019, 16
      %v1341 = vrot.slane %v1339, 5
      %v1342 = vor.u32 %v1338, %v1341
      %v1343 = vrot.slane %v1342, 4
      %v1345 = vshll.u32 %v1020, 16
      %v1347 = vrot.slane %v1345, 5
      %v1348 = vsel %vm1046, %v1343, %v1347
      %v1349 = vshrl.u32 %v1020, 16
      %v1351 = vrot.slane %v1349, 4
      %v1352 = vor.u32 %v1351, %v1347
      %v1353 = vrot.slane %v1352, 4
      %v1355 = vshll.u32 %v1040, 16
      %v1357 = vrot.slane %v1355, 5
      %v1358 = vsel %vm1046, %v1353, %v1357
      %v1360 = vshrl.u32 %v1021, 16
      %v1362 = vrot.slane %v1360, 4
      %v1363 = vshll.u32 %v1021, 16
      %v1365 = vrot.slane %v1363, 5
      %v1366 = vor.u32 %v1362, %v1365
      %v1367 = vrot.slane %v1366, 4
      %v1369 = vshll.u32 %v1022, 16
      %v1371 = vrot.slane %v1369, 5
      %v1372 = vsel %vm1046, %v1367, %v1371
      %v1373 = vshrl.u32 %v1022, 16
      %v1375 = vrot.slane %v1373, 4
      %v1376 = vor.u32 %v1375, %v1371
      %v1377 = vrot.slane %v1376, 4
      %v1379 = vshll.u32 %v1041, 16
      %v1381 = vrot.slane %v1379, 5
      %v1382 = vsel %vm1046, %v1377, %v1381
      %v1384 = vshrl.u32 %v1023, 16
      %v1386 = vrot.slane %v1384, 4
      %v1387 = vshll.u32 %v1023, 16
      %v1389 = vrot.slane %v1387, 5
      %v1390 = vor.u32 %v1386, %v1389
      %v1391 = vrot.slane %v1390, 4
      %v1393 = vshll.u32 %v1024, 16
      %v1395 = vrot.slane %v1393, 5
      %v1396 = vsel %vm1046, %v1391, %v1395
      %v1397 = vshrl.u32 %v1024, 16
      %v1399 = vrot.slane %v1397, 4
      %v1400 = vor.u32 %v1399, %v1395
      %v1401 = vrot.slane %v1400, 4
      %v1403 = vshll.u32 %v1042, 16
      %v1405 = vrot.slane %v1403, 5
      %v1406 = vsel %vm1046, %v1401, %v1405
      %v1408 = vshrl.u32 %v1025, 16
      %v1410 = vrot.slane %v1408, 4
      %v1411 = vshll.u32 %v1025, 16
      %v1413 = vrot.slane %v1411, 5
      %v1414 = vor.u32 %v1410, %v1413
      %v1415 = vrot.slane %v1414, 4
      %v1417 = vshll.u32 %v1026, 16
      %v1419 = vrot.slane %v1417, 5
      %v1420 = vsel %vm1046, %v1415, %v1419
      %v1421 = vshrl.u32 %v1026, 16
      %v1423 = vrot.slane %v1421, 4
      %v1424 = vor.u32 %v1423, %v1419
      %v1425 = vrot.slane %v1424, 4
      %v1427 = vshll.u32 %v1043, 16
      %v1429 = vrot.slane %v1427, 5
      %v1430 = vsel %vm1046, %v1425, %v1429
      %s1431 = scalar_lea.vmem %s3, 2
      %v1432 = vld [vmem:[%s1431] sm:$0x3]
      %v1433 = vunpack.c.l.b16 %v1060
      %v1434 = vunpack.c.l.b16 %v1070
      %v1435 = vunpack.c.l.b16 %v1084
      %v1436 = vunpack.c.l.b16 %v1094
      %v1437 = vunpack.c.l.b16 %v1108
      %v1438 = vunpack.c.l.b16 %v1118
      %v1439 = vunpack.c.l.b16 %v1132
      %v1440 = vunpack.c.l.b16 %v1142
      %v1441 = vunpack.c.l.b16 %v1156
      %v1442 = vunpack.c.l.b16 %v1166
      %v1443 = vunpack.c.l.b16 %v1180
      %v1444 = vunpack.c.l.b16 %v1190
      %v1445 = vunpack.c.l.b16 %v1204
      %v1446 = vunpack.c.l.b16 %v1214
      %v1447 = vunpack.c.l.b16 %v1228
      %v1448 = vunpack.c.l.b16 %v1238
      %v1449 = vunpack.c.l.b16 %v1252
      %v1450 = vunpack.c.l.b16 %v1262
      %v1451 = vunpack.c.l.b16 %v1276
      %v1452 = vunpack.c.l.b16 %v1286
      %v1453 = vunpack.c.l.b16 %v1300
      %v1454 = vunpack.c.l.b16 %v1310
      %v1455 = vunpack.c.l.b16 %v1324
      %v1456 = vunpack.c.l.b16 %v1334
      %v1457 = vunpack.c.l.b16 %v1348
      %v1458 = vunpack.c.l.b16 %v1358
      %v1459 = vunpack.c.l.b16 %v1372
      %v1460 = vunpack.c.l.b16 %v1382
      %v1461 = vunpack.c.l.b16 %v1396
      %v1462 = vunpack.c.l.b16 %v1406
      %v1463 = vunpack.c.l.b16 %v1420
      %v1464 = vunpack.c.l.b16 %v1430
      %v1465 = vpack.c.b16 %v1434, %v1433
      %v1466 = vpack.c.b16 %v1436, %v1435
      %v1467 = vpack.c.b16 %v1438, %v1437
      %v1468 = vpack.c.b16 %v1440, %v1439
      %v1469 = vpack.c.b16 %v1442, %v1441
      %v1470 = vpack.c.b16 %v1444, %v1443
      %v1471 = vpack.c.b16 %v1446, %v1445
      %v1472 = vpack.c.b16 %v1448, %v1447
      %v1473 = vpack.c.b16 %v1450, %v1449
      %v1474 = vpack.c.b16 %v1452, %v1451
      %v1475 = vpack.c.b16 %v1454, %v1453
      %v1476 = vpack.c.b16 %v1456, %v1455
      %v1477 = vpack.c.b16 %v1458, %v1457
      %v1478 = vpack.c.b16 %v1460, %v1459
      %v1479 = vpack.c.b16 %v1462, %v1461
      %v1480 = vpack.c.b16 %v1464, %v1463
      %vm1481 = vcmask 31744
      %v1483 = vsel %vm1481, %v1465, 0
      %v1486 = vsel %vm1481, %v1466, 0
      %v1489 = vsel %vm1481, %v1467, 0
      %v1492 = vsel %vm1481, %v1468, 0
      %v1495 = vsel %vm1481, %v1469, 0
      %v1498 = vsel %vm1481, %v1470, 0
      %v1501 = vsel %vm1481, %v1471, 0
      %v1504 = vsel %vm1481, %v1472, 0
      %v1507 = vsel %vm1481, %v1473, 0
      %v1510 = vsel %vm1481, %v1474, 0
      %v1513 = vsel %vm1481, %v1475, 0
      %v1516 = vsel %vm1481, %v1476, 0
      %v1519 = vsel %vm1481, %v1477, 0
      %v1522 = vsel %vm1481, %v1478, 0
      %v1525 = vsel %vm1481, %v1479, 0
      %v1528 = vsel %vm1481, %v1480, 0
      %vm1530 = vcmask 1041408
      %v1532 = vsel %vm1530, %v1432, 0
      %1534 = vmatprep.subr.bf16.mxu0 0
      %1535 = vmatpush1.bf16.msra.mxu0 0
      %1536 = vmatprep.subr.bf16.mxu0 0
      %1537 = vmatpush1.bf16.msra.mxu0 0
      %1538 = vmatprep.subr.bf16.mxu0 0
      %1539 = vmatpush1.bf16.msra.mxu0 0
      %1540 = vmatprep.subr.bf16.mxu0 0
      %1541 = vmatpush1.bf16.msra.mxu0 0
      %1542 = vmatprep.subr.bf16.mxu0 0
      %1543 = vmatpush1.bf16.msra.mxu0 0
      %1544 = vmatprep.subr.bf16.mxu0 0
      %1545 = vmatpush1.bf16.msra.mxu0 0
      %1546 = vmatprep.subr.bf16.mxu0 0
      %1547 = vmatpush1.bf16.msra.mxu0 0
      %1548 = vmatprep.subr.bf16.mxu0 0
      %1549 = vmatpush1.bf16.msra.mxu0 %v1532
      %1550 = vmatprep.subr.bf16.mxu0 0
      %1551 = vmatpush2.bf16.msra.mxu0 0
      %1552 = vmatprep.subr.bf16.mxu0 0
      %1553 = vmatpush2.bf16.msra.mxu0 0
      %1554 = vmatprep.subr.bf16.mxu0 0
      %1555 = vmatpush2.bf16.msra.mxu0 0
      %1556 = vmatprep.subr.bf16.mxu0 0
      %1557 = vmatpush2.bf16.msra.mxu0 0
      %1558 = vmatprep.subr.bf16.mxu0 0
      %1559 = vmatpush2.bf16.msra.mxu0 0
      %1560 = vmatprep.subr.bf16.mxu0 0
      %1561 = vmatpush2.bf16.msra.mxu0 0
      %1562 = vmatprep.subr.bf16.mxu0 0
      %1563 = vmatpush2.bf16.msra.mxu0 0
      %1564 = vmatprep.subr.bf16.mxu0 0
      %1565 = vmatpush2.bf16.msra.mxu0 0
      %1566 = vmatprep.mubr.bf16.mxu0 0
      %1567 = vmatmul.mubr.bf16.gmra.mxu0 %v1483
      %v1568 = vpop.f32.mrf.mxu0
      %v1569 = vadd.f32 0.0, %v1568
      %v1570 = vpop.f32.mrf.mxu0
      %v1571 = vpop.f32.mrf.mxu0
      %v1572 = vadd.f32 0.0, %v1571
      %v1573 = vpop.f32.mrf.mxu0
      %1574 = vmatprep.mubr.bf16.mxu0 0
      %1575 = vmatmul.mubr.bf16.gmra.mxu0 %v1486
      %v1576 = vpop.f32.mrf.mxu0
      %v1577 = vadd.f32 0.0, %v1576
      %v1578 = vpop.f32.mrf.mxu0
      %v1579 = vpop.f32.mrf.mxu0
      %v1580 = vadd.f32 0.0, %v1579
      %v1581 = vpop.f32.mrf.mxu0
      %1582 = vmatprep.mubr.bf16.mxu0 0
      %1583 = vmatmul.mubr.bf16.gmra.mxu0 %v1489
      %v1584 = vpop.f32.mrf.mxu0
      %v1585 = vadd.f32 0.0, %v1584
      %v1586 = vpop.f32.mrf.mxu0
      %v1587 = vpop.f32.mrf.mxu0
      %v1588 = vadd.f32 0.0, %v1587
      %v1589 = vpop.f32.mrf.mxu0
      %1590 = vmatprep.mubr.bf16.mxu0 0
      %1591 = vmatmul.mubr.bf16.gmra.mxu0 %v1492
      %v1592 = vpop.f32.mrf.mxu0
      %v1593 = vadd.f32 0.0, %v1592
      %v1594 = vpop.f32.mrf.mxu0
      %v1595 = vpop.f32.mrf.mxu0
      %v1596 = vadd.f32 0.0, %v1595
      %v1597 = vpop.f32.mrf.mxu0
      %1598 = vmatprep.mubr.bf16.mxu0 0
      %1599 = vmatmul.mubr.bf16.gmra.mxu0 %v1495
      %v1600 = vpop.f32.mrf.mxu0
      %v1601 = vadd.f32 0.0, %v1600
      %v1602 = vpop.f32.mrf.mxu0
      %v1603 = vpop.f32.mrf.mxu0
      %v1604 = vadd.f32 0.0, %v1603
      %v1605 = vpop.f32.mrf.mxu0
      %1606 = vmatprep.mubr.bf16.mxu0 0
      %1607 = vmatmul.mubr.bf16.gmra.mxu0 %v1498
      %v1608 = vpop.f32.mrf.mxu0
      %v1609 = vadd.f32 0.0, %v1608
      %v1610 = vpop.f32.mrf.mxu0
      %v1611 = vpop.f32.mrf.mxu0
      %v1612 = vadd.f32 0.0, %v1611
      %v1613 = vpop.f32.mrf.mxu0
      %1614 = vmatprep.mubr.bf16.mxu0 0
      %1615 = vmatmul.mubr.bf16.gmra.mxu0 %v1501
      %v1616 = vpop.f32.mrf.mxu0
      %v1617 = vadd.f32 0.0, %v1616
      %v1618 = vpop.f32.mrf.mxu0
      %v1619 = vpop.f32.mrf.mxu0
      %v1620 = vadd.f32 0.0, %v1619
      %v1621 = vpop.f32.mrf.mxu0
      %1622 = vmatprep.mubr.bf16.mxu0 0
      %1623 = vmatmul.mubr.bf16.gmra.mxu0 %v1504
      %v1624 = vpop.f32.mrf.mxu0
      %v1625 = vadd.f32 0.0, %v1624
      %v1626 = vpop.f32.mrf.mxu0
      %v1627 = vpop.f32.mrf.mxu0
      %v1628 = vadd.f32 0.0, %v1627
      %v1629 = vpop.f32.mrf.mxu0
      %1630 = vmatprep.mubr.bf16.mxu0 0
      %1631 = vmatmul.mubr.bf16.gmra.mxu0 %v1507
      %v1632 = vpop.f32.mrf.mxu0
      %v1633 = vadd.f32 0.0, %v1632
      %v1634 = vpop.f32.mrf.mxu0
      %v1635 = vpop.f32.mrf.mxu0
      %v1636 = vadd.f32 0.0, %v1635
      %v1637 = vpop.f32.mrf.mxu0
      %1638 = vmatprep.mubr.bf16.mxu0 0
      %1639 = vmatmul.mubr.bf16.gmra.mxu0 %v1510
      %v1640 = vpop.f32.mrf.mxu0
      %v1641 = vadd.f32 0.0, %v1640
      %v1642 = vpop.f32.mrf.mxu0
      %v1643 = vpop.f32.mrf.mxu0
      %v1644 = vadd.f32 0.0, %v1643
      %v1645 = vpop.f32.mrf.mxu0
      %1646 = vmatprep.mubr.bf16.mxu0 0
      %1647 = vmatmul.mubr.bf16.gmra.mxu0 %v1513
      %v1648 = vpop.f32.mrf.mxu0
      %v1649 = vadd.f32 0.0, %v1648
      %v1650 = vpop.f32.mrf.mxu0
      %v1651 = vpop.f32.mrf.mxu0
      %v1652 = vadd.f32 0.0, %v1651
      %v1653 = vpop.f32.mrf.mxu0
      %1654 = vmatprep.mubr.bf16.mxu0 0
      %1655 = vmatmul.mubr.bf16.gmra.mxu0 %v1516
      %v1656 = vpop.f32.mrf.mxu0
      %v1657 = vadd.f32 0.0, %v1656
      %v1658 = vpop.f32.mrf.mxu0
      %v1659 = vpop.f32.mrf.mxu0
      %v1660 = vadd.f32 0.0, %v1659
      %v1661 = vpop.f32.mrf.mxu0
      %1662 = vmatprep.mubr.bf16.mxu0 0
      %1663 = vmatmul.mubr.bf16.gmra.mxu0 %v1519
      %v1664 = vpop.f32.mrf.mxu0
      %v1665 = vadd.f32 0.0, %v1664
      %v1666 = vpop.f32.mrf.mxu0
      %v1667 = vpop.f32.mrf.mxu0
      %v1668 = vadd.f32 0.0, %v1667
      %v1669 = vpop.f32.mrf.mxu0
      %1670 = vmatprep.mubr.bf16.mxu0 0
      %1671 = vmatmul.mubr.bf16.gmra.mxu0 %v1522
      %v1672 = vpop.f32.mrf.mxu0
      %v1673 = vadd.f32 0.0, %v1672
      %v1674 = vpop.f32.mrf.mxu0
      %v1675 = vpop.f32.mrf.mxu0
      %v1676 = vadd.f32 0.0, %v1675
      %v1677 = vpop.f32.mrf.mxu0
      %1678 = vmatprep.mubr.bf16.mxu0 0
      %1679 = vmatmul.mubr.bf16.gmra.mxu0 %v1525
      %v1680 = vpop.f32.mrf.mxu0
      %v1681 = vadd.f32 0.0, %v1680
      %v1682 = vpop.f32.mrf.mxu0
      %v1683 = vpop.f32.mrf.mxu0
      %v1684 = vadd.f32 0.0, %v1683
      %v1685 = vpop.f32.mrf.mxu0
      %1686 = vmatprep.mubr.bf16.mxu0 0
      %1687 = vmatmul.mubr.bf16.gmra.mxu0 %v1528
      %v1688 = vpop.f32.mrf.mxu0
      %v1689 = vadd.f32 0.0, %v1688
      %v1690 = vpop.f32.mrf.mxu0
      %v1691 = vpop.f32.mrf.mxu0
      %v1692 = vadd.f32 0.0, %v1691
      %v1693 = vpop.f32.mrf.mxu0
      %1694 = vdwg.mxu0
      %v1727 = vunpack.c.l.b16 %v995
      %v1728 = vunpack.c.l.b16 %v996
      %v1729 = vunpack.c.l.b16 %v997
      %v1730 = vunpack.c.l.b16 %v998
      %v1731 = vunpack.c.l.b16 %v999
      %v1732 = vunpack.c.l.b16 %v1000
      %v1733 = vunpack.c.l.b16 %v1001
      %v1734 = vunpack.c.l.b16 %v1002
      %v1735 = vunpack.c.l.b16 %v1003
      %v1736 = vunpack.c.l.b16 %v1004
      %v1737 = vunpack.c.l.b16 %v1005
      %v1738 = vunpack.c.l.b16 %v1006
      %v1739 = vunpack.c.l.b16 %v1007
      %v1740 = vunpack.c.l.b16 %v1008
      %v1741 = vunpack.c.l.b16 %v1009
      %v1742 = vunpack.c.l.b16 %v1010
      %v1743 = vunpack.c.l.b16 %v1011
      %v1744 = vunpack.c.l.b16 %v1012
      %v1745 = vunpack.c.l.b16 %v1013
      %v1746 = vunpack.c.l.b16 %v1014
      %v1747 = vunpack.c.l.b16 %v1015
      %v1748 = vunpack.c.l.b16 %v1016
      %v1749 = vunpack.c.l.b16 %v1017
      %v1750 = vunpack.c.l.b16 %v1018
      %v1751 = vunpack.c.l.b16 %v1019
      %v1752 = vunpack.c.l.b16 %v1020
      %v1753 = vunpack.c.l.b16 %v1021
      %v1754 = vunpack.c.l.b16 %v1022
      %v1755 = vunpack.c.l.b16 %v1023
      %v1756 = vunpack.c.l.b16 %v1024
      %v1757 = vunpack.c.l.b16 %v1025
      %v1758 = vunpack.c.l.b16 %v1026
      %v1759 = vpack.c.b16 %v1728, %v1727
      %v1760 = vpack.c.b16 %v1730, %v1729
      %v1761 = vpack.c.b16 %v1732, %v1731
      %v1762 = vpack.c.b16 %v1734, %v1733
      %v1763 = vpack.c.b16 %v1736, %v1735
      %v1764 = vpack.c.b16 %v1738, %v1737
      %v1765 = vpack.c.b16 %v1740, %v1739
      %v1766 = vpack.c.b16 %v1742, %v1741
      %v1767 = vpack.c.b16 %v1744, %v1743
      %v1768 = vpack.c.b16 %v1746, %v1745
      %v1769 = vpack.c.b16 %v1748, %v1747
      %v1770 = vpack.c.b16 %v1750, %v1749
      %v1771 = vpack.c.b16 %v1752, %v1751
      %v1772 = vpack.c.b16 %v1754, %v1753
      %v1773 = vpack.c.b16 %v1756, %v1755
      %v1774 = vpack.c.b16 %v1758, %v1757
      %v1776 = vsel %vm1481, %v1759, 0
      %v1779 = vsel %vm1481, %v1760, 0
      %v1782 = vsel %vm1481, %v1761, 0
      %v1785 = vsel %vm1481, %v1762, 0
      %v1788 = vsel %vm1481, %v1763, 0
      %v1791 = vsel %vm1481, %v1764, 0
      %v1794 = vsel %vm1481, %v1765, 0
      %v1797 = vsel %vm1481, %v1766, 0
      %v1800 = vsel %vm1481, %v1767, 0
      %v1803 = vsel %vm1481, %v1768, 0
      %v1806 = vsel %vm1481, %v1769, 0
      %v1809 = vsel %vm1481, %v1770, 0
      %v1812 = vsel %vm1481, %v1771, 0
      %v1815 = vsel %vm1481, %v1772, 0
      %v1818 = vsel %vm1481, %v1773, 0
      %v1821 = vsel %vm1481, %v1774, 0
      %v1824 = vsel %vm1530, %v1027, 0
      %1826 = vmatprep.subr.bf16.mxu0 0
      %1827 = vmatpush1.bf16.msra.mxu0 0
      %1828 = vmatprep.subr.bf16.mxu0 0
      %1829 = vmatpush1.bf16.msra.mxu0 0
      %1830 = vmatprep.subr.bf16.mxu0 0
      %1831 = vmatpush1.bf16.msra.mxu0 0
      %1832 = vmatprep.subr.bf16.mxu0 0
      %1833 = vmatpush1.bf16.msra.mxu0 0
      %1834 = vmatprep.subr.bf16.mxu0 0
      %1835 = vmatpush1.bf16.msra.mxu0 0
      %1836 = vmatprep.subr.bf16.mxu0 0
      %1837 = vmatpush1.bf16.msra.mxu0 0
      %1838 = vmatprep.subr.bf16.mxu0 0
      %1839 = vmatpush1.bf16.msra.mxu0 0
      %1840 = vmatprep.subr.bf16.mxu0 0
      %1841 = vmatpush1.bf16.msra.mxu0 %v1824
      %1842 = vmatprep.subr.bf16.mxu0 0
      %1843 = vmatpush2.bf16.msra.mxu0 0
      %1844 = vmatprep.subr.bf16.mxu0 0
      %1845 = vmatpush2.bf16.msra.mxu0 0
      %1846 = vmatprep.subr.bf16.mxu0 0
      %1847 = vmatpush2.bf16.msra.mxu0 0
      %1848 = vmatprep.subr.bf16.mxu0 0
      %1849 = vmatpush2.bf16.msra.mxu0 0
      %1850 = vmatprep.subr.bf16.mxu0 0
      %1851 = vmatpush2.bf16.msra.mxu0 0
      %1852 = vmatprep.subr.bf16.mxu0 0
      %1853 = vmatpush2.bf16.msra.mxu0 0
      %1854 = vmatprep.subr.bf16.mxu0 0
      %1855 = vmatpush2.bf16.msra.mxu0 0
      %1856 = vmatprep.subr.bf16.mxu0 0
      %1857 = vmatpush2.bf16.msra.mxu0 0
      %1858 = vmatprep.mubr.bf16.mxu0 0
      %1859 = vmatmul.mubr.bf16.gmra.mxu0 %v1776
      %v1860 = vpop.f32.mrf.mxu0
      %v1861 = vadd.f32 %v1569, %v1860
      %v1862 = vpop.f32.mrf.mxu0
      %v1863 = vpop.f32.mrf.mxu0
      %v1864 = vadd.f32 %v1572, %v1863
      %v1865 = vpop.f32.mrf.mxu0
      %1866 = vmatprep.mubr.bf16.mxu0 0
      %1867 = vmatmul.mubr.bf16.gmra.mxu0 %v1779
      %v1868 = vpop.f32.mrf.mxu0
      %v1869 = vadd.f32 %v1577, %v1868
      %v1870 = vpop.f32.mrf.mxu0
      %v1871 = vpop.f32.mrf.mxu0
      %v1872 = vadd.f32 %v1580, %v1871
      %v1873 = vpop.f32.mrf.mxu0
      %1874 = vmatprep.mubr.bf16.mxu0 0
      %1875 = vmatmul.mubr.bf16.gmra.mxu0 %v1782
      %v1876 = vpop.f32.mrf.mxu0
      %v1877 = vadd.f32 %v1585, %v1876
      %v1878 = vpop.f32.mrf.mxu0
      %v1879 = vpop.f32.mrf.mxu0
      %v1880 = vadd.f32 %v1588, %v1879
      %v1881 = vpop.f32.mrf.mxu0
      %1882 = vmatprep.mubr.bf16.mxu0 0
      %1883 = vmatmul.mubr.bf16.gmra.mxu0 %v1785
      %v1884 = vpop.f32.mrf.mxu0
      %v1885 = vadd.f32 %v1593, %v1884
      %v1886 = vpop.f32.mrf.mxu0
      %v1887 = vpop.f32.mrf.mxu0
      %v1888 = vadd.f32 %v1596, %v1887
      %v1889 = vpop.f32.mrf.mxu0
      %1890 = vmatprep.mubr.bf16.mxu0 0
      %1891 = vmatmul.mubr.bf16.gmra.mxu0 %v1788
      %v1892 = vpop.f32.mrf.mxu0
      %v1893 = vadd.f32 %v1601, %v1892
      %v1894 = vpop.f32.mrf.mxu0
      %v1895 = vpop.f32.mrf.mxu0
      %v1896 = vadd.f32 %v1604, %v1895
      %v1897 = vpop.f32.mrf.mxu0
      %1898 = vmatprep.mubr.bf16.mxu0 0
      %1899 = vmatmul.mubr.bf16.gmra.mxu0 %v1791
      %v1900 = vpop.f32.mrf.mxu0
      %v1901 = vadd.f32 %v1609, %v1900
      %v1902 = vpop.f32.mrf.mxu0
      %v1903 = vpop.f32.mrf.mxu0
      %v1904 = vadd.f32 %v1612, %v1903
      %v1905 = vpop.f32.mrf.mxu0
      %1906 = vmatprep.mubr.bf16.mxu0 0
      %1907 = vmatmul.mubr.bf16.gmra.mxu0 %v1794
      %v1908 = vpop.f32.mrf.mxu0
      %v1909 = vadd.f32 %v1617, %v1908
      %v1910 = vpop.f32.mrf.mxu0
      %v1911 = vpop.f32.mrf.mxu0
      %v1912 = vadd.f32 %v1620, %v1911
      %v1913 = vpop.f32.mrf.mxu0
      %1914 = vmatprep.mubr.bf16.mxu0 0
      %1915 = vmatmul.mubr.bf16.gmra.mxu0 %v1797
      %v1916 = vpop.f32.mrf.mxu0
      %v1917 = vadd.f32 %v1625, %v1916
      %v1918 = vpop.f32.mrf.mxu0
      %v1919 = vpop.f32.mrf.mxu0
      %v1920 = vadd.f32 %v1628, %v1919
      %v1921 = vpop.f32.mrf.mxu0
      %1922 = vmatprep.mubr.bf16.mxu0 0
      %1923 = vmatmul.mubr.bf16.gmra.mxu0 %v1800
      %v1924 = vpop.f32.mrf.mxu0
      %v1925 = vadd.f32 %v1633, %v1924
      %v1926 = vpop.f32.mrf.mxu0
      %v1927 = vpop.f32.mrf.mxu0
      %v1928 = vadd.f32 %v1636, %v1927
      %v1929 = vpop.f32.mrf.mxu0
      %1930 = vmatprep.mubr.bf16.mxu0 0
      %1931 = vmatmul.mubr.bf16.gmra.mxu0 %v1803
      %v1932 = vpop.f32.mrf.mxu0
      %v1933 = vadd.f32 %v1641, %v1932
      %v1934 = vpop.f32.mrf.mxu0
      %v1935 = vpop.f32.mrf.mxu0
      %v1936 = vadd.f32 %v1644, %v1935
      %v1937 = vpop.f32.mrf.mxu0
      %1938 = vmatprep.mubr.bf16.mxu0 0
      %1939 = vmatmul.mubr.bf16.gmra.mxu0 %v1806
      %v1940 = vpop.f32.mrf.mxu0
      %v1941 = vadd.f32 %v1649, %v1940
      %v1942 = vpop.f32.mrf.mxu0
      %v1943 = vpop.f32.mrf.mxu0
      %v1944 = vadd.f32 %v1652, %v1943
      %v1945 = vpop.f32.mrf.mxu0
      %1946 = vmatprep.mubr.bf16.mxu0 0
      %1947 = vmatmul.mubr.bf16.gmra.mxu0 %v1809
      %v1948 = vpop.f32.mrf.mxu0
      %v1949 = vadd.f32 %v1657, %v1948
      %v1950 = vpop.f32.mrf.mxu0
      %v1951 = vpop.f32.mrf.mxu0
      %v1952 = vadd.f32 %v1660, %v1951
      %v1953 = vpop.f32.mrf.mxu0
      %1954 = vmatprep.mubr.bf16.mxu0 0
      %1955 = vmatmul.mubr.bf16.gmra.mxu0 %v1812
      %v1956 = vpop.f32.mrf.mxu0
      %v1957 = vadd.f32 %v1665, %v1956
      %v1958 = vpop.f32.mrf.mxu0
      %v1959 = vpop.f32.mrf.mxu0
      %v1960 = vadd.f32 %v1668, %v1959
      %v1961 = vpop.f32.mrf.mxu0
      %1962 = vmatprep.mubr.bf16.mxu0 0
      %1963 = vmatmul.mubr.bf16.gmra.mxu0 %v1815
      %v1964 = vpop.f32.mrf.mxu0
      %v1965 = vadd.f32 %v1673, %v1964
      %v1966 = vpop.f32.mrf.mxu0
      %v1967 = vpop.f32.mrf.mxu0
      %v1968 = vadd.f32 %v1676, %v1967
      %v1969 = vpop.f32.mrf.mxu0
      %1970 = vmatprep.mubr.bf16.mxu0 0
      %1971 = vmatmul.mubr.bf16.gmra.mxu0 %v1818
      %v1972 = vpop.f32.mrf.mxu0
      %v1973 = vadd.f32 %v1681, %v1972
      %v1974 = vpop.f32.mrf.mxu0
      %v1975 = vpop.f32.mrf.mxu0
      %v1976 = vadd.f32 %v1684, %v1975
      %v1977 = vpop.f32.mrf.mxu0
      %1978 = vmatprep.mubr.bf16.mxu0 0
      %1979 = vmatmul.mubr.bf16.gmra.mxu0 %v1821
      %v1980 = vpop.f32.mrf.mxu0
      %v1981 = vadd.f32 %v1689, %v1980
      %v1982 = vpop.f32.mrf.mxu0
      %v1983 = vpop.f32.mrf.mxu0
      %v1984 = vadd.f32 %v1692, %v1983
      %v1985 = vpop.f32.mrf.mxu0
      %1986 = vdwg.mxu0
      %v1987 = vld [vmem:[#allocation2] sm:$0xe]
      %v1988 = vld [vmem:[#allocation2 + $0xc] sm:$0xe]
      %v1989 = vld [vmem:[#allocation2 + $0x18] sm:$0xe]
      %v1990 = vld [vmem:[#allocation2 + $0x24] sm:$0xe]
      %v1991 = vld [vmem:[#allocation2 + $0x30] sm:$0xe]
      %v1992 = vld [vmem:[#allocation2 + $0x3c] sm:$0xe]
      %v1993 = vld [vmem:[#allocation2 + $0x48] sm:$0xe]
      %v1994 = vld [vmem:[#allocation2 + $0x54] sm:$0xe]
      %v1995 = vld [vmem:[#allocation2 + $0x60] sm:$0xe]
      %v1996 = vld [vmem:[#allocation2 + $0x6c] sm:$0xe]
      %v1997 = vld [vmem:[#allocation2 + $0x78] sm:$0xe]
      %v1998 = vld [vmem:[#allocation2 + $0x84] sm:$0xe]
      %v1999 = vld [vmem:[#allocation2 + $0x90] sm:$0xe]
      %v2000 = vld [vmem:[#allocation2 + $0x9c] sm:$0xe]
      %v2001 = vld [vmem:[#allocation2 + $0xa8] sm:$0xe]
      %v2002 = vld [vmem:[#allocation2 + $0xb4] sm:$0xe]
      %vm2035 = vcmask 1042432
      %vm2036 = vcmask 1046532
      %vm2037 = vmor %vm2035, %vm2036
      %v2038 = vrot.slane %v1987, 5
      %v2039 = vrot.slane %v2038, 4
      %v2040 = vrot.slane %v996, 5
      %v2041 = vsel %vm2037, %v2039, %v2040
      %v2042 = vrot.slane %v2040, 4
      %v2043 = vrot.slane %v1028, 5
      %v2044 = vsel %vm2037, %v2042, %v2043
      %v2045 = vrot.slane %v1988, 5
      %v2046 = vrot.slane %v2045, 4
      %v2047 = vrot.slane %v998, 5
      %v2048 = vsel %vm2037, %v2046, %v2047
      %v2049 = vrot.slane %v2047, 4
      %v2050 = vrot.slane %v1029, 5
      %v2051 = vsel %vm2037, %v2049, %v2050
      %v2052 = vrot.slane %v1989, 5
      %v2053 = vrot.slane %v2052, 4
      %v2054 = vrot.slane %v1000, 5
      %v2055 = vsel %vm2037, %v2053, %v2054
      %v2056 = vrot.slane %v2054, 4
      %v2057 = vrot.slane %v1030, 5
      %v2058 = vsel %vm2037, %v2056, %v2057
      %v2059 = vrot.slane %v1990, 5
      %v2060 = vrot.slane %v2059, 4
      %v2061 = vrot.slane %v1002, 5
      %v2062 = vsel %vm2037, %v2060, %v2061
      %v2063 = vrot.slane %v2061, 4
      %v2064 = vrot.slane %v1031, 5
      %v2065 = vsel %vm2037, %v2063, %v2064
      %v2066 = vrot.slane %v1991, 5
      %v2067 = vrot.slane %v2066, 4
      %v2068 = vrot.slane %v1004, 5
      %v2069 = vsel %vm2037, %v2067, %v2068
      %v2070 = vrot.slane %v2068, 4
      %v2071 = vrot.slane %v1032, 5
      %v2072 = vsel %vm2037, %v2070, %v2071
      %v2073 = vrot.slane %v1992, 5
      %v2074 = vrot.slane %v2073, 4
      %v2075 = vrot.slane %v1006, 5
      %v2076 = vsel %vm2037, %v2074, %v2075
      %v2077 = vrot.slane %v2075, 4
      %v2078 = vrot.slane %v1033, 5
      %v2079 = vsel %vm2037, %v2077, %v2078
      %v2080 = vrot.slane %v1993, 5
      %v2081 = vrot.slane %v2080, 4
      %v2082 = vrot.slane %v1008, 5
      %v2083 = vsel %vm2037, %v2081, %v2082
      %v2084 = vrot.slane %v2082, 4
      %v2085 = vrot.slane %v1034, 5
      %v2086 = vsel %vm2037, %v2084, %v2085
      %v2087 = vrot.slane %v1994, 5
      %v2088 = vrot.slane %v2087, 4
      %v2089 = vrot.slane %v1010, 5
      %v2090 = vsel %vm2037, %v2088, %v2089
      %v2091 = vrot.slane %v2089, 4
      %v2092 = vrot.slane %v1035, 5
      %v2093 = vsel %vm2037, %v2091, %v2092
      %v2094 = vrot.slane %v1995, 5
      %v2095 = vrot.slane %v2094, 4
      %v2096 = vrot.slane %v1012, 5
      %v2097 = vsel %vm2037, %v2095, %v2096
      %v2098 = vrot.slane %v2096, 4
      %v2099 = vrot.slane %v1036, 5
      %v2100 = vsel %vm2037, %v2098, %v2099
      %v2101 = vrot.slane %v1996, 5
      %v2102 = vrot.slane %v2101, 4
      %v2103 = vrot.slane %v1014, 5
      %v2104 = vsel %vm2037, %v2102, %v2103
      %v2105 = vrot.slane %v2103, 4
      %v2106 = vrot.slane %v1037, 5
      %v2107 = vsel %vm2037, %v2105, %v2106
      %v2108 = vrot.slane %v1997, 5
      %v2109 = vrot.slane %v2108, 4
      %v2110 = vrot.slane %v1016, 5
      %v2111 = vsel %vm2037, %v2109, %v2110
      %v2112 = vrot.slane %v2110, 4
      %v2113 = vrot.slane %v1038, 5
      %v2114 = vsel %vm2037, %v2112, %v2113
      %v2115 = vrot.slane %v1998, 5
      %v2116 = vrot.slane %v2115, 4
      %v2117 = vrot.slane %v1018, 5
      %v2118 = vsel %vm2037, %v2116, %v2117
      %v2119 = vrot.slane %v2117, 4
      %v2120 = vrot.slane %v1039, 5
      %v2121 = vsel %vm2037, %v2119, %v2120
      %v2122 = vrot.slane %v1999, 5
      %v2123 = vrot.slane %v2122, 4
      %v2124 = vrot.slane %v1020, 5
      %v2125 = vsel %vm2037, %v2123, %v2124
      %v2126 = vrot.slane %v2124, 4
      %v2127 = vrot.slane %v1040, 5
      %v2128 = vsel %vm2037, %v2126, %v2127
      %v2129 = vrot.slane %v2000, 5
      %v2130 = vrot.slane %v2129, 4
      %v2131 = vrot.slane %v1022, 5
      %v2132 = vsel %vm2037, %v2130, %v2131
      %v2133 = vrot.slane %v2131, 4
      %v2134 = vrot.slane %v1041, 5
      %v2135 = vsel %vm2037, %v2133, %v2134
      %v2136 = vrot.slane %v2001, 5
      %v2137 = vrot.slane %v2136, 4
      %v2138 = vrot.slane %v1024, 5
      %v2139 = vsel %vm2037, %v2137, %v2138
      %v2140 = vrot.slane %v2138, 4
      %v2141 = vrot.slane %v1042, 5
      %v2142 = vsel %vm2037, %v2140, %v2141
      %v2143 = vrot.slane %v2002, 5
      %v2144 = vrot.slane %v2143, 4
      %v2145 = vrot.slane %v1026, 5
      %v2146 = vsel %vm2037, %v2144, %v2145
      %v2147 = vrot.slane %v2145, 4
      %v2148 = vrot.slane %v1043, 5
      %v2149 = vsel %vm2037, %v2147, %v2148
      %s2150 = scalar_lea.vmem %s3, 4
      %v2151 = vld [vmem:[%s2150] sm:$0x3]
      %v2152 = vunpack.c.l.b16 %v2041
      %v2153 = vunpack.c.l.b16 %v2044
      %v2154 = vunpack.c.l.b16 %v2048
      %v2155 = vunpack.c.l.b16 %v2051
      %v2156 = vunpack.c.l.b16 %v2055
      %v2157 = vunpack.c.l.b16 %v2058
      %v2158 = vunpack.c.l.b16 %v2062
      %v2159 = vunpack.c.l.b16 %v2065
      %v2160 = vunpack.c.l.b16 %v2069
      %v2161 = vunpack.c.l.b16 %v2072
      %v2162 = vunpack.c.l.b16 %v2076
      %v2163 = vunpack.c.l.b16 %v2079
      %v2164 = vunpack.c.l.b16 %v2083
      %v2165 = vunpack.c.l.b16 %v2086
      %v2166 = vunpack.c.l.b16 %v2090
      %v2167 = vunpack.c.l.b16 %v2093
      %v2168 = vunpack.c.l.b16 %v2097
      %v2169 = vunpack.c.l.b16 %v2100
      %v2170 = vunpack.c.l.b16 %v2104
      %v2171 = vunpack.c.l.b16 %v2107
      %v2172 = vunpack.c.l.b16 %v2111
      %v2173 = vunpack.c.l.b16 %v2114
      %v2174 = vunpack.c.l.b16 %v2118
      %v2175 = vunpack.c.l.b16 %v2121
      %v2176 = vunpack.c.l.b16 %v2125
      %v2177 = vunpack.c.l.b16 %v2128
      %v2178 = vunpack.c.l.b16 %v2132
      %v2179 = vunpack.c.l.b16 %v2135
      %v2180 = vunpack.c.l.b16 %v2139
      %v2181 = vunpack.c.l.b16 %v2142
      %v2182 = vunpack.c.l.b16 %v2146
      %v2183 = vunpack.c.l.b16 %v2149
      %v2184 = vpack.c.b16 %v2153, %v2152
      %v2185 = vpack.c.b16 %v2155, %v2154
      %v2186 = vpack.c.b16 %v2157, %v2156
      %v2187 = vpack.c.b16 %v2159, %v2158
      %v2188 = vpack.c.b16 %v2161, %v2160
      %v2189 = vpack.c.b16 %v2163, %v2162
      %v2190 = vpack.c.b16 %v2165, %v2164
      %v2191 = vpack.c.b16 %v2167, %v2166
      %v2192 = vpack.c.b16 %v2169, %v2168
      %v2193 = vpack.c.b16 %v2171, %v2170
      %v2194 = vpack.c.b16 %v2173, %v2172
      %v2195 = vpack.c.b16 %v2175, %v2174
      %v2196 = vpack.c.b16 %v2177, %v2176
      %v2197 = vpack.c.b16 %v2179, %v2178
      %v2198 = vpack.c.b16 %v2181, %v2180
      %v2199 = vpack.c.b16 %v2183, %v2182
      %v2201 = vsel %vm1481, %v2184, 0
      %v2204 = vsel %vm1481, %v2185, 0
      %v2207 = vsel %vm1481, %v2186, 0
      %v2210 = vsel %vm1481, %v2187, 0
      %v2213 = vsel %vm1481, %v2188, 0
      %v2216 = vsel %vm1481, %v2189, 0
      %v2219 = vsel %vm1481, %v2190, 0
      %v2222 = vsel %vm1481, %v2191, 0
      %v2225 = vsel %vm1481, %v2192, 0
      %v2228 = vsel %vm1481, %v2193, 0
      %v2231 = vsel %vm1481, %v2194, 0
      %v2234 = vsel %vm1481, %v2195, 0
      %v2237 = vsel %vm1481, %v2196, 0
      %v2240 = vsel %vm1481, %v2197, 0
      %v2243 = vsel %vm1481, %v2198, 0
      %v2246 = vsel %vm1481, %v2199, 0
      %v2249 = vsel %vm1530, %v2151, 0
      %2251 = vmatprep.subr.bf16.mxu0 0
      %2252 = vmatpush1.bf16.msra.mxu0 0
      %2253 = vmatprep.subr.bf16.mxu0 0
      %2254 = vmatpush1.bf16.msra.mxu0 0
      %2255 = vmatprep.subr.bf16.mxu0 0
      %2256 = vmatpush1.bf16.msra.mxu0 0
      %2257 = vmatprep.subr.bf16.mxu0 0
      %2258 = vmatpush1.bf16.msra.mxu0 0
      %2259 = vmatprep.subr.bf16.mxu0 0
      %2260 = vmatpush1.bf16.msra.mxu0 0
      %2261 = vmatprep.subr.bf16.mxu0 0
      %2262 = vmatpush1.bf16.msra.mxu0 0
      %2263 = vmatprep.subr.bf16.mxu0 0
      %2264 = vmatpush1.bf16.msra.mxu0 0
      %2265 = vmatprep.subr.bf16.mxu0 0
      %2266 = vmatpush1.bf16.msra.mxu0 %v2249
      %2267 = vmatprep.subr.bf16.mxu0 0
      %2268 = vmatpush2.bf16.msra.mxu0 0
      %2269 = vmatprep.subr.bf16.mxu0 0
      %2270 = vmatpush2.bf16.msra.mxu0 0
      %2271 = vmatprep.subr.bf16.mxu0 0
      %2272 = vmatpush2.bf16.msra.mxu0 0
      %2273 = vmatprep.subr.bf16.mxu0 0
      %2274 = vmatpush2.bf16.msra.mxu0 0
      %2275 = vmatprep.subr.bf16.mxu0 0
      %2276 = vmatpush2.bf16.msra.mxu0 0
      %2277 = vmatprep.subr.bf16.mxu0 0
      %2278 = vmatpush2.bf16.msra.mxu0 0
      %2279 = vmatprep.subr.bf16.mxu0 0
      %2280 = vmatpush2.bf16.msra.mxu0 0
      %2281 = vmatprep.subr.bf16.mxu0 0
      %2282 = vmatpush2.bf16.msra.mxu0 0
      %2283 = vmatprep.mubr.bf16.mxu0 0
      %2284 = vmatmul.mubr.bf16.gmra.mxu0 %v2201
      %v2285 = vpop.f32.mrf.mxu0
      %v2286 = vadd.f32 0.0, %v2285
      %v2287 = vpop.f32.mrf.mxu0
      %v2288 = vpop.f32.mrf.mxu0
      %v2289 = vadd.f32 0.0, %v2288
      %v2290 = vpop.f32.mrf.mxu0
      %2291 = vmatprep.mubr.bf16.mxu0 0
      %2292 = vmatmul.mubr.bf16.gmra.mxu0 %v2204
      %v2293 = vpop.f32.mrf.mxu0
      %v2294 = vadd.f32 0.0, %v2293
      %v2295 = vpop.f32.mrf.mxu0
      %v2296 = vpop.f32.mrf.mxu0
      %v2297 = vadd.f32 0.0, %v2296
      %v2298 = vpop.f32.mrf.mxu0
      %2299 = vmatprep.mubr.bf16.mxu0 0
      %2300 = vmatmul.mubr.bf16.gmra.mxu0 %v2207
      %v2301 = vpop.f32.mrf.mxu0
      %v2302 = vadd.f32 0.0, %v2301
      %v2303 = vpop.f32.mrf.mxu0
      %v2304 = vpop.f32.mrf.mxu0
      %v2305 = vadd.f32 0.0, %v2304
      %v2306 = vpop.f32.mrf.mxu0
      %2307 = vmatprep.mubr.bf16.mxu0 0
      %2308 = vmatmul.mubr.bf16.gmra.mxu0 %v2210
      %v2309 = vpop.f32.mrf.mxu0
      %v2310 = vadd.f32 0.0, %v2309
      %v2311 = vpop.f32.mrf.mxu0
      %v2312 = vpop.f32.mrf.mxu0
      %v2313 = vadd.f32 0.0, %v2312
      %v2314 = vpop.f32.mrf.mxu0
      %2315 = vmatprep.mubr.bf16.mxu0 0
      %2316 = vmatmul.mubr.bf16.gmra.mxu0 %v2213
      %v2317 = vpop.f32.mrf.mxu0
      %v2318 = vadd.f32 0.0, %v2317
      %v2319 = vpop.f32.mrf.mxu0
      %v2320 = vpop.f32.mrf.mxu0
      %v2321 = vadd.f32 0.0, %v2320
      %v2322 = vpop.f32.mrf.mxu0
      %2323 = vmatprep.mubr.bf16.mxu0 0
      %2324 = vmatmul.mubr.bf16.gmra.mxu0 %v2216
      %v2325 = vpop.f32.mrf.mxu0
      %v2326 = vadd.f32 0.0, %v2325
      %v2327 = vpop.f32.mrf.mxu0
      %v2328 = vpop.f32.mrf.mxu0
      %v2329 = vadd.f32 0.0, %v2328
      %v2330 = vpop.f32.mrf.mxu0
      %2331 = vmatprep.mubr.bf16.mxu0 0
      %2332 = vmatmul.mubr.bf16.gmra.mxu0 %v2219
      %v2333 = vpop.f32.mrf.mxu0
      %v2334 = vadd.f32 0.0, %v2333
      %v2335 = vpop.f32.mrf.mxu0
      %v2336 = vpop.f32.mrf.mxu0
      %v2337 = vadd.f32 0.0, %v2336
      %v2338 = vpop.f32.mrf.mxu0
      %2339 = vmatprep.mubr.bf16.mxu0 0
      %2340 = vmatmul.mubr.bf16.gmra.mxu0 %v2222
      %v2341 = vpop.f32.mrf.mxu0
      %v2342 = vadd.f32 0.0, %v2341
      %v2343 = vpop.f32.mrf.mxu0
      %v2344 = vpop.f32.mrf.mxu0
      %v2345 = vadd.f32 0.0, %v2344
      %v2346 = vpop.f32.mrf.mxu0
      %2347 = vmatprep.mubr.bf16.mxu0 0
      %2348 = vmatmul.mubr.bf16.gmra.mxu0 %v2225
      %v2349 = vpop.f32.mrf.mxu0
      %v2350 = vadd.f32 0.0, %v2349
      %v2351 = vpop.f32.mrf.mxu0
      %v2352 = vpop.f32.mrf.mxu0
      %v2353 = vadd.f32 0.0, %v2352
      %v2354 = vpop.f32.mrf.mxu0
      %2355 = vmatprep.mubr.bf16.mxu0 0
      %2356 = vmatmul.mubr.bf16.gmra.mxu0 %v2228
      %v2357 = vpop.f32.mrf.mxu0
      %v2358 = vadd.f32 0.0, %v2357
      %v2359 = vpop.f32.mrf.mxu0
      %v2360 = vpop.f32.mrf.mxu0
      %v2361 = vadd.f32 0.0, %v2360
      %v2362 = vpop.f32.mrf.mxu0
      %2363 = vmatprep.mubr.bf16.mxu0 0
      %2364 = vmatmul.mubr.bf16.gmra.mxu0 %v2231
      %v2365 = vpop.f32.mrf.mxu0
      %v2366 = vadd.f32 0.0, %v2365
      %v2367 = vpop.f32.mrf.mxu0
      %v2368 = vpop.f32.mrf.mxu0
      %v2369 = vadd.f32 0.0, %v2368
      %v2370 = vpop.f32.mrf.mxu0
      %2371 = vmatprep.mubr.bf16.mxu0 0
      %2372 = vmatmul.mubr.bf16.gmra.mxu0 %v2234
      %v2373 = vpop.f32.mrf.mxu0
      %v2374 = vadd.f32 0.0, %v2373
      %v2375 = vpop.f32.mrf.mxu0
      %v2376 = vpop.f32.mrf.mxu0
      %v2377 = vadd.f32 0.0, %v2376
      %v2378 = vpop.f32.mrf.mxu0
      %2379 = vmatprep.mubr.bf16.mxu0 0
      %2380 = vmatmul.mubr.bf16.gmra.mxu0 %v2237
      %v2381 = vpop.f32.mrf.mxu0
      %v2382 = vadd.f32 0.0, %v2381
      %v2383 = vpop.f32.mrf.mxu0
      %v2384 = vpop.f32.mrf.mxu0
      %v2385 = vadd.f32 0.0, %v2384
      %v2386 = vpop.f32.mrf.mxu0
      %2387 = vmatprep.mubr.bf16.mxu0 0
      %2388 = vmatmul.mubr.bf16.gmra.mxu0 %v2240
      %v2389 = vpop.f32.mrf.mxu0
      %v2390 = vadd.f32 0.0, %v2389
      %v2391 = vpop.f32.mrf.mxu0
      %v2392 = vpop.f32.mrf.mxu0
      %v2393 = vadd.f32 0.0, %v2392
      %v2394 = vpop.f32.mrf.mxu0
      %2395 = vmatprep.mubr.bf16.mxu0 0
      %2396 = vmatmul.mubr.bf16.gmra.mxu0 %v2243
      %v2397 = vpop.f32.mrf.mxu0
      %v2398 = vadd.f32 0.0, %v2397
      %v2399 = vpop.f32.mrf.mxu0
      %v2400 = vpop.f32.mrf.mxu0
      %v2401 = vadd.f32 0.0, %v2400
      %v2402 = vpop.f32.mrf.mxu0
      %2403 = vmatprep.mubr.bf16.mxu0 0
      %2404 = vmatmul.mubr.bf16.gmra.mxu0 %v2246
      %v2405 = vpop.f32.mrf.mxu0
      %v2406 = vadd.f32 0.0, %v2405
      %v2407 = vpop.f32.mrf.mxu0
      %v2408 = vpop.f32.mrf.mxu0
      %v2409 = vadd.f32 0.0, %v2408
      %v2410 = vpop.f32.mrf.mxu0
      %2411 = vdwg.mxu0
      %v2412 = vadd.f32 %v1861, %v2286
      %v2413 = vadd.f32 %v1864, %v2289
      %v2414 = vadd.f32 %v1869, %v2294
      %v2415 = vadd.f32 %v1872, %v2297
      %v2416 = vadd.f32 %v1877, %v2302
      %v2417 = vadd.f32 %v1880, %v2305
      %v2418 = vadd.f32 %v1885, %v2310
      %v2419 = vadd.f32 %v1888, %v2313
      %v2420 = vadd.f32 %v1893, %v2318
      %v2421 = vadd.f32 %v1896, %v2321
      %v2422 = vadd.f32 %v1901, %v2326
      %v2423 = vadd.f32 %v1904, %v2329
      %v2424 = vadd.f32 %v1909, %v2334
      %v2425 = vadd.f32 %v1912, %v2337
      %v2426 = vadd.f32 %v1917, %v2342
      %v2427 = vadd.f32 %v1920, %v2345
      %v2428 = vadd.f32 %v1925, %v2350
      %v2429 = vadd.f32 %v1928, %v2353
      %v2430 = vadd.f32 %v1933, %v2358
      %v2431 = vadd.f32 %v1936, %v2361
      %v2432 = vadd.f32 %v1941, %v2366
      %v2433 = vadd.f32 %v1944, %v2369
      %v2434 = vadd.f32 %v1949, %v2374
      %v2435 = vadd.f32 %v1952, %v2377
      %v2436 = vadd.f32 %v1957, %v2382
      %v2437 = vadd.f32 %v1960, %v2385
      %v2438 = vadd.f32 %v1965, %v2390
      %v2439 = vadd.f32 %v1968, %v2393
      %v2440 = vadd.f32 %v1973, %v2398
      %v2441 = vadd.f32 %v1976, %v2401
      %v2442 = vadd.f32 %v1981, %v2406
      %v2443 = vadd.f32 %v1984, %v2409
      %v2444 = vld [vmem:[%s876] sm:$0xf]
      %v2445 = vld [vmem:[%s876 + $0x4] sm:$0xf]
      %v2446 = vld [vmem:[%s876 + $0xc] sm:$0xf]
      %v2447 = vld [vmem:[%s876 + $0x10] sm:$0xf]
      %v2448 = vld [vmem:[%s876 + $0x18] sm:$0xf]
      %v2449 = vld [vmem:[%s876 + $0x1c] sm:$0xf]
      %v2450 = vld [vmem:[%s876 + $0x24] sm:$0xf]
      %v2451 = vld [vmem:[%s876 + $0x28] sm:$0xf]
      %v2452 = vld [vmem:[%s876 + $0x30] sm:$0xf]
      %v2453 = vld [vmem:[%s876 + $0x34] sm:$0xf]
      %v2454 = vld [vmem:[%s876 + $0x3c] sm:$0xf]
      %v2455 = vld [vmem:[%s876 + $0x40] sm:$0xf]
      %v2456 = vld [vmem:[%s876 + $0x48] sm:$0xf]
      %v2457 = vld [vmem:[%s876 + $0x4c] sm:$0xf]
      %v2458 = vld [vmem:[%s876 + $0x54] sm:$0xf]
      %v2459 = vld [vmem:[%s876 + $0x58] sm:$0xf]
      %v2460 = vld [vmem:[%s876 + $0x60] sm:$0xf]
      %v2461 = vld [vmem:[%s876 + $0x64] sm:$0xf]
      %v2462 = vld [vmem:[%s876 + $0x6c] sm:$0xf]
      %v2463 = vld [vmem:[%s876 + $0x70] sm:$0xf]
      %v2464 = vld [vmem:[%s876 + $0x78] sm:$0xf]
      %v2465 = vld [vmem:[%s876 + $0x7c] sm:$0xf]
      %v2466 = vld [vmem:[%s876 + $0x84] sm:$0xf]
      %v2467 = vld [vmem:[%s876 + $0x88] sm:$0xf]
      %v2468 = vld [vmem:[%s876 + $0x90] sm:$0xf]
      %v2469 = vld [vmem:[%s876 + $0x94] sm:$0xf]
      %v2470 = vld [vmem:[%s876 + $0x9c] sm:$0xf]
      %v2471 = vld [vmem:[%s876 + $0xa0] sm:$0xf]
      %v2472 = vld [vmem:[%s876 + $0xa8] sm:$0xf]
      %v2473 = vld [vmem:[%s876 + $0xac] sm:$0xf]
      %v2474 = vld [vmem:[%s876 + $0xb4] sm:$0xf]
      %v2475 = vld [vmem:[%s876 + $0xb8] sm:$0xf]
      %s2476 = scalar_lea.vmem %s3, 6
      %v2477 = vld [vmem:[%s2476] sm:$0x3]
      %v2510 = vunpack.c.l.b16 %v2444
      %v2511 = vunpack.c.l.b16 %v2445
      %v2512 = vunpack.c.l.b16 %v2446
      %v2513 = vunpack.c.l.b16 %v2447
      %v2514 = vunpack.c.l.b16 %v2448
      %v2515 = vunpack.c.l.b16 %v2449
      %v2516 = vunpack.c.l.b16 %v2450
      %v2517 = vunpack.c.l.b16 %v2451
      %v2518 = vunpack.c.l.b16 %v2452
      %v2519 = vunpack.c.l.b16 %v2453
      %v2520 = vunpack.c.l.b16 %v2454
      %v2521 = vunpack.c.l.b16 %v2455
      %v2522 = vunpack.c.l.b16 %v2456
      %v2523 = vunpack.c.l.b16 %v2457
      %v2524 = vunpack.c.l.b16 %v2458
      %v2525 = vunpack.c.l.b16 %v2459
      %v2526 = vunpack.c.l.b16 %v2460
      %v2527 = vunpack.c.l.b16 %v2461
      %v2528 = vunpack.c.l.b16 %v2462
      %v2529 = vunpack.c.l.b16 %v2463
      %v2530 = vunpack.c.l.b16 %v2464
      %v2531 = vunpack.c.l.b16 %v2465
      %v2532 = vunpack.c.l.b16 %v2466
      %v2533 = vunpack.c.l.b16 %v2467
      %v2534 = vunpack.c.l.b16 %v2468
      %v2535 = vunpack.c.l.b16 %v2469
      %v2536 = vunpack.c.l.b16 %v2470
      %v2537 = vunpack.c.l.b16 %v2471
      %v2538 = vunpack.c.l.b16 %v2472
      %v2539 = vunpack.c.l.b16 %v2473
      %v2540 = vunpack.c.l.b16 %v2474
      %v2541 = vunpack.c.l.b16 %v2475
      %v2542 = vpack.c.b16 %v2511, %v2510
      %v2543 = vpack.c.b16 %v2513, %v2512
      %v2544 = vpack.c.b16 %v2515, %v2514
      %v2545 = vpack.c.b16 %v2517, %v2516
      %v2546 = vpack.c.b16 %v2519, %v2518
      %v2547 = vpack.c.b16 %v2521, %v2520
      %v2548 = vpack.c.b16 %v2523, %v2522
      %v2549 = vpack.c.b16 %v2525, %v2524
      %v2550 = vpack.c.b16 %v2527, %v2526
      %v2551 = vpack.c.b16 %v2529, %v2528
      %v2552 = vpack.c.b16 %v2531, %v2530
      %v2553 = vpack.c.b16 %v2533, %v2532
      %v2554 = vpack.c.b16 %v2535, %v2534
      %v2555 = vpack.c.b16 %v2537, %v2536
      %v2556 = vpack.c.b16 %v2539, %v2538
      %v2557 = vpack.c.b16 %v2541, %v2540
      %v2559 = vsel %vm1481, %v2542, 0
      %v2562 = vsel %vm1481, %v2543, 0
      %v2565 = vsel %vm1481, %v2544, 0
      %v2568 = vsel %vm1481, %v2545, 0
      %v2571 = vsel %vm1481, %v2546, 0
      %v2574 = vsel %vm1481, %v2547, 0
      %v2577 = vsel %vm1481, %v2548, 0
      %v2580 = vsel %vm1481, %v2549, 0
      %v2583 = vsel %vm1481, %v2550, 0
      %v2586 = vsel %vm1481, %v2551, 0
      %v2589 = vsel %vm1481, %v2552, 0
      %v2592 = vsel %vm1481, %v2553, 0
      %v2595 = vsel %vm1481, %v2554, 0
      %v2598 = vsel %vm1481, %v2555, 0
      %v2601 = vsel %vm1481, %v2556, 0
      %v2604 = vsel %vm1481, %v2557, 0
      %v2607 = vsel %vm1530, %v2477, 0
      %2609 = vmatprep.subr.bf16.mxu0 0
      %2610 = vmatpush1.bf16.msra.mxu0 0
      %2611 = vmatprep.subr.bf16.mxu0 0
      %2612 = vmatpush1.bf16.msra.mxu0 0
      %2613 = vmatprep.subr.bf16.mxu0 0
      %2614 = vmatpush1.bf16.msra.mxu0 0
      %2615 = vmatprep.subr.bf16.mxu0 0
      %2616 = vmatpush1.bf16.msra.mxu0 0
      %2617 = vmatprep.subr.bf16.mxu0 0
      %2618 = vmatpush1.bf16.msra.mxu0 0
      %2619 = vmatprep.subr.bf16.mxu0 0
      %2620 = vmatpush1.bf16.msra.mxu0 0
      %2621 = vmatprep.subr.bf16.mxu0 0
      %2622 = vmatpush1.bf16.msra.mxu0 0
      %2623 = vmatprep.subr.bf16.mxu0 0
      %2624 = vmatpush1.bf16.msra.mxu0 %v2607
      %2625 = vmatprep.subr.bf16.mxu0 0
      %2626 = vmatpush2.bf16.msra.mxu0 0
      %2627 = vmatprep.subr.bf16.mxu0 0
      %2628 = vmatpush2.bf16.msra.mxu0 0
      %2629 = vmatprep.subr.bf16.mxu0 0
      %2630 = vmatpush2.bf16.msra.mxu0 0
      %2631 = vmatprep.subr.bf16.mxu0 0
      %2632 = vmatpush2.bf16.msra.mxu0 0
      %2633 = vmatprep.subr.bf16.mxu0 0
      %2634 = vmatpush2.bf16.msra.mxu0 0
      %2635 = vmatprep.subr.bf16.mxu0 0
      %2636 = vmatpush2.bf16.msra.mxu0 0
      %2637 = vmatprep.subr.bf16.mxu0 0
      %2638 = vmatpush2.bf16.msra.mxu0 0
      %2639 = vmatprep.subr.bf16.mxu0 0
      %2640 = vmatpush2.bf16.msra.mxu0 0
      %2641 = vmatprep.mubr.bf16.mxu0 0
      %2642 = vmatmul.mubr.bf16.gmra.mxu0 %v2559
      %v2643 = vpop.f32.mrf.mxu0
      %v2644 = vadd.f32 0.0, %v2643
      %v2645 = vpop.f32.mrf.mxu0
      %v2646 = vpop.f32.mrf.mxu0
      %v2647 = vadd.f32 0.0, %v2646
      %v2648 = vpop.f32.mrf.mxu0
      %2649 = vmatprep.mubr.bf16.mxu0 0
      %2650 = vmatmul.mubr.bf16.gmra.mxu0 %v2562
      %v2651 = vpop.f32.mrf.mxu0
      %v2652 = vadd.f32 0.0, %v2651
      %v2653 = vpop.f32.mrf.mxu0
      %v2654 = vpop.f32.mrf.mxu0
      %v2655 = vadd.f32 0.0, %v2654
      %v2656 = vpop.f32.mrf.mxu0
      %2657 = vmatprep.mubr.bf16.mxu0 0
      %2658 = vmatmul.mubr.bf16.gmra.mxu0 %v2565
      %v2659 = vpop.f32.mrf.mxu0
      %v2660 = vadd.f32 0.0, %v2659
      %v2661 = vpop.f32.mrf.mxu0
      %v2662 = vpop.f32.mrf.mxu0
      %v2663 = vadd.f32 0.0, %v2662
      %v2664 = vpop.f32.mrf.mxu0
      %2665 = vmatprep.mubr.bf16.mxu0 0
      %2666 = vmatmul.mubr.bf16.gmra.mxu0 %v2568
      %v2667 = vpop.f32.mrf.mxu0
      %v2668 = vadd.f32 0.0, %v2667
      %v2669 = vpop.f32.mrf.mxu0
      %v2670 = vpop.f32.mrf.mxu0
      %v2671 = vadd.f32 0.0, %v2670
      %v2672 = vpop.f32.mrf.mxu0
      %2673 = vmatprep.mubr.bf16.mxu0 0
      %2674 = vmatmul.mubr.bf16.gmra.mxu0 %v2571
      %v2675 = vpop.f32.mrf.mxu0
      %v2676 = vadd.f32 0.0, %v2675
      %v2677 = vpop.f32.mrf.mxu0
      %v2678 = vpop.f32.mrf.mxu0
      %v2679 = vadd.f32 0.0, %v2678
      %v2680 = vpop.f32.mrf.mxu0
      %2681 = vmatprep.mubr.bf16.mxu0 0
      %2682 = vmatmul.mubr.bf16.gmra.mxu0 %v2574
      %v2683 = vpop.f32.mrf.mxu0
      %v2684 = vadd.f32 0.0, %v2683
      %v2685 = vpop.f32.mrf.mxu0
      %v2686 = vpop.f32.mrf.mxu0
      %v2687 = vadd.f32 0.0, %v2686
      %v2688 = vpop.f32.mrf.mxu0
      %2689 = vmatprep.mubr.bf16.mxu0 0
      %2690 = vmatmul.mubr.bf16.gmra.mxu0 %v2577
      %v2691 = vpop.f32.mrf.mxu0
      %v2692 = vadd.f32 0.0, %v2691
      %v2693 = vpop.f32.mrf.mxu0
      %v2694 = vpop.f32.mrf.mxu0
      %v2695 = vadd.f32 0.0, %v2694
      %v2696 = vpop.f32.mrf.mxu0
      %2697 = vmatprep.mubr.bf16.mxu0 0
      %2698 = vmatmul.mubr.bf16.gmra.mxu0 %v2580
      %v2699 = vpop.f32.mrf.mxu0
      %v2700 = vadd.f32 0.0, %v2699
      %v2701 = vpop.f32.mrf.mxu0
      %v2702 = vpop.f32.mrf.mxu0
      %v2703 = vadd.f32 0.0, %v2702
      %v2704 = vpop.f32.mrf.mxu0
      %2705 = vmatprep.mubr.bf16.mxu0 0
      %2706 = vmatmul.mubr.bf16.gmra.mxu0 %v2583
      %v2707 = vpop.f32.mrf.mxu0
      %v2708 = vadd.f32 0.0, %v2707
      %v2709 = vpop.f32.mrf.mxu0
      %v2710 = vpop.f32.mrf.mxu0
      %v2711 = vadd.f32 0.0, %v2710
      %v2712 = vpop.f32.mrf.mxu0
      %2713 = vmatprep.mubr.bf16.mxu0 0
      %2714 = vmatmul.mubr.bf16.gmra.mxu0 %v2586
      %v2715 = vpop.f32.mrf.mxu0
      %v2716 = vadd.f32 0.0, %v2715
      %v2717 = vpop.f32.mrf.mxu0
      %v2718 = vpop.f32.mrf.mxu0
      %v2719 = vadd.f32 0.0, %v2718
      %v2720 = vpop.f32.mrf.mxu0
      %2721 = vmatprep.mubr.bf16.mxu0 0
      %2722 = vmatmul.mubr.bf16.gmra.mxu0 %v2589
      %v2723 = vpop.f32.mrf.mxu0
      %v2724 = vadd.f32 0.0, %v2723
      %v2725 = vpop.f32.mrf.mxu0
      %v2726 = vpop.f32.mrf.mxu0
      %v2727 = vadd.f32 0.0, %v2726
      %v2728 = vpop.f32.mrf.mxu0
      %2729 = vmatprep.mubr.bf16.mxu0 0
      %2730 = vmatmul.mubr.bf16.gmra.mxu0 %v2592
      %v2731 = vpop.f32.mrf.mxu0
      %v2732 = vadd.f32 0.0, %v2731
      %v2733 = vpop.f32.mrf.mxu0
      %v2734 = vpop.f32.mrf.mxu0
      %v2735 = vadd.f32 0.0, %v2734
      %v2736 = vpop.f32.mrf.mxu0
      %2737 = vmatprep.mubr.bf16.mxu0 0
      %2738 = vmatmul.mubr.bf16.gmra.mxu0 %v2595
      %v2739 = vpop.f32.mrf.mxu0
      %v2740 = vadd.f32 0.0, %v2739
      %v2741 = vpop.f32.mrf.mxu0
      %v2742 = vpop.f32.mrf.mxu0
      %v2743 = vadd.f32 0.0, %v2742
      %v2744 = vpop.f32.mrf.mxu0
      %2745 = vmatprep.mubr.bf16.mxu0 0
      %2746 = vmatmul.mubr.bf16.gmra.mxu0 %v2598
      %v2747 = vpop.f32.mrf.mxu0
      %v2748 = vadd.f32 0.0, %v2747
      %v2749 = vpop.f32.mrf.mxu0
      %v2750 = vpop.f32.mrf.mxu0
      %v2751 = vadd.f32 0.0, %v2750
      %v2752 = vpop.f32.mrf.mxu0
      %2753 = vmatprep.mubr.bf16.mxu0 0
      %2754 = vmatmul.mubr.bf16.gmra.mxu0 %v2601
      %v2755 = vpop.f32.mrf.mxu0
      %v2756 = vadd.f32 0.0, %v2755
      %v2757 = vpop.f32.mrf.mxu0
      %v2758 = vpop.f32.mrf.mxu0
      %v2759 = vadd.f32 0.0, %v2758
      %v2760 = vpop.f32.mrf.mxu0
      %2761 = vmatprep.mubr.bf16.mxu0 0
      %2762 = vmatmul.mubr.bf16.gmra.mxu0 %v2604
      %v2763 = vpop.f32.mrf.mxu0
      %v2764 = vadd.f32 0.0, %v2763
      %v2765 = vpop.f32.mrf.mxu0
      %v2766 = vpop.f32.mrf.mxu0
      %v2767 = vadd.f32 0.0, %v2766
      %v2768 = vpop.f32.mrf.mxu0
      %2769 = vdwg.mxu0
      %v2770 = vadd.f32 %v2412, %v2644
      %v2771 = vadd.f32 %v2413, %v2647
      %v2772 = vadd.f32 %v2414, %v2652
      %v2773 = vadd.f32 %v2415, %v2655
      %v2774 = vadd.f32 %v2416, %v2660
      %v2775 = vadd.f32 %v2417, %v2663
      %v2776 = vadd.f32 %v2418, %v2668
      %v2777 = vadd.f32 %v2419, %v2671
      %v2778 = vadd.f32 %v2420, %v2676
      %v2779 = vadd.f32 %v2421, %v2679
      %v2780 = vadd.f32 %v2422, %v2684
      %v2781 = vadd.f32 %v2423, %v2687
      %v2782 = vadd.f32 %v2424, %v2692
      %v2783 = vadd.f32 %v2425, %v2695
      %v2784 = vadd.f32 %v2426, %v2700
      %v2785 = vadd.f32 %v2427, %v2703
      %v2786 = vadd.f32 %v2428, %v2708
      %v2787 = vadd.f32 %v2429, %v2711
      %v2788 = vadd.f32 %v2430, %v2716
      %v2789 = vadd.f32 %v2431, %v2719
      %v2790 = vadd.f32 %v2432, %v2724
      %v2791 = vadd.f32 %v2433, %v2727
      %v2792 = vadd.f32 %v2434, %v2732
      %v2793 = vadd.f32 %v2435, %v2735
      %v2794 = vadd.f32 %v2436, %v2740
      %v2795 = vadd.f32 %v2437, %v2743
      %v2796 = vadd.f32 %v2438, %v2748
      %v2797 = vadd.f32 %v2439, %v2751
      %v2798 = vadd.f32 %v2440, %v2756
      %v2799 = vadd.f32 %v2441, %v2759
      %v2800 = vadd.f32 %v2442, %v2764
      %v2801 = vadd.f32 %v2443, %v2767
      %v2802 = vld [vmem:[%s876] sm:$0xf]
      %v2803 = vld [vmem:[%s876 + $0x4] sm:$0xf]
      %v2804 = vld [vmem:[%s876 + $0x8] sm:$0x1]
      %v2805 = vld [vmem:[%s876 + $0xc] sm:$0xf]
      %v2806 = vld [vmem:[%s876 + $0x10] sm:$0xf]
      %v2807 = vld [vmem:[%s876 + $0x14] sm:$0x1]
      %v2808 = vld [vmem:[%s876 + $0x18] sm:$0xf]
      %v2809 = vld [vmem:[%s876 + $0x1c] sm:$0xf]
      %v2810 = vld [vmem:[%s876 + $0x20] sm:$0x1]
      %v2811 = vld [vmem:[%s876 + $0x24] sm:$0xf]
      %v2812 = vld [vmem:[%s876 + $0x28] sm:$0xf]
      %v2813 = vld [vmem:[%s876 + $0x2c] sm:$0x1]
      %v2814 = vld [vmem:[%s876 + $0x30] sm:$0xf]
      %v2815 = vld [vmem:[%s876 + $0x34] sm:$0xf]
      %v2816 = vld [vmem:[%s876 + $0x38] sm:$0x1]
      %v2817 = vld [vmem:[%s876 + $0x3c] sm:$0xf]
      %v2818 = vld [vmem:[%s876 + $0x40] sm:$0xf]
      %v2819 = vld [vmem:[%s876 + $0x44] sm:$0x1]
      %v2820 = vld [vmem:[%s876 + $0x48] sm:$0xf]
      %v2821 = vld [vmem:[%s876 + $0x4c] sm:$0xf]
      %v2822 = vld [vmem:[%s876 + $0x50] sm:$0x1]
      %v2823 = vld [vmem:[%s876 + $0x54] sm:$0xf]
      %v2824 = vld [vmem:[%s876 + $0x58] sm:$0xf]
      %v2825 = vld [vmem:[%s876 + $0x5c] sm:$0x1]
      %v2826 = vld [vmem:[%s876 + $0x60] sm:$0xf]
      %v2827 = vld [vmem:[%s876 + $0x64] sm:$0xf]
      %v2828 = vld [vmem:[%s876 + $0x68] sm:$0x1]
      %v2829 = vld [vmem:[%s876 + $0x6c] sm:$0xf]
      %v2830 = vld [vmem:[%s876 + $0x70] sm:$0xf]
      %v2831 = vld [vmem:[%s876 + $0x74] sm:$0x1]
      %v2832 = vld [vmem:[%s876 + $0x78] sm:$0xf]
      %v2833 = vld [vmem:[%s876 + $0x7c] sm:$0xf]
      %v2834 = vld [vmem:[%s876 + $0x80] sm:$0x1]
      %v2835 = vld [vmem:[%s876 + $0x84] sm:$0xf]
      %v2836 = vld [vmem:[%s876 + $0x88] sm:$0xf]
      %v2837 = vld [vmem:[%s876 + $0x8c] sm:$0x1]
      %v2838 = vld [vmem:[%s876 + $0x90] sm:$0xf]
      %v2839 = vld [vmem:[%s876 + $0x94] sm:$0xf]
      %v2840 = vld [vmem:[%s876 + $0x98] sm:$0x1]
      %v2841 = vld [vmem:[%s876 + $0x9c] sm:$0xf]
      %v2842 = vld [vmem:[%s876 + $0xa0] sm:$0xf]
      %v2843 = vld [vmem:[%s876 + $0xa4] sm:$0x1]
      %v2844 = vld [vmem:[%s876 + $0xa8] sm:$0xf]
      %v2845 = vld [vmem:[%s876 + $0xac] sm:$0xf]
      %v2846 = vld [vmem:[%s876 + $0xb0] sm:$0x1]
      %v2847 = vld [vmem:[%s876 + $0xb4] sm:$0xf]
      %v2848 = vld [vmem:[%s876 + $0xb8] sm:$0xf]
      %v2849 = vld [vmem:[%s876 + $0xbc] sm:$0x1]
      %v2851 = vshrl.u32 %v2802, 16
      %v2853 = vrot.slane %v2851, 4
      %v2854 = vshll.u32 %v2802, 16
      %v2856 = vrot.slane %v2854, 5
      %v2857 = vor.u32 %v2853, %v2856
      %v2858 = vrot.slane %v2857, 4
      %v2860 = vshll.u32 %v2803, 16
      %v2862 = vrot.slane %v2860, 5
      %v2863 = vsel %vm1046, %v2858, %v2862
      %v2864 = vshrl.u32 %v2803, 16
      %v2866 = vrot.slane %v2864, 4
      %v2867 = vor.u32 %v2866, %v2862
      %v2868 = vrot.slane %v2867, 4
      %v2870 = vshll.u32 %v2804, 16
      %v2872 = vrot.slane %v2870, 5
      %v2873 = vsel %vm1046, %v2868, %v2872
      %v2875 = vshrl.u32 %v2805, 16
      %v2877 = vrot.slane %v2875, 4
      %v2878 = vshll.u32 %v2805, 16
      %v2880 = vrot.slane %v2878, 5
      %v2881 = vor.u32 %v2877, %v2880
      %v2882 = vrot.slane %v2881, 4
      %v2884 = vshll.u32 %v2806, 16
      %v2886 = vrot.slane %v2884, 5
      %v2887 = vsel %vm1046, %v2882, %v2886
      %v2888 = vshrl.u32 %v2806, 16
      %v2890 = vrot.slane %v2888, 4
      %v2891 = vor.u32 %v2890, %v2886
      %v2892 = vrot.slane %v2891, 4
      %v2894 = vshll.u32 %v2807, 16
      %v2896 = vrot.slane %v2894, 5
      %v2897 = vsel %vm1046, %v2892, %v2896
      %v2899 = vshrl.u32 %v2808, 16
      %v2901 = vrot.slane %v2899, 4
      %v2902 = vshll.u32 %v2808, 16
      %v2904 = vrot.slane %v2902, 5
      %v2905 = vor.u32 %v2901, %v2904
      %v2906 = vrot.slane %v2905, 4
      %v2908 = vshll.u32 %v2809, 16
      %v2910 = vrot.slane %v2908, 5
      %v2911 = vsel %vm1046, %v2906, %v2910
      %v2912 = vshrl.u32 %v2809, 16
      %v2914 = vrot.slane %v2912, 4
      %v2915 = vor.u32 %v2914, %v2910
      %v2916 = vrot.slane %v2915, 4
      %v2918 = vshll.u32 %v2810, 16
      %v2920 = vrot.slane %v2918, 5
      %v2921 = vsel %vm1046, %v2916, %v2920
      %v2923 = vshrl.u32 %v2811, 16
      %v2925 = vrot.slane %v2923, 4
      %v2926 = vshll.u32 %v2811, 16
      %v2928 = vrot.slane %v2926, 5
      %v2929 = vor.u32 %v2925, %v2928
      %v2930 = vrot.slane %v2929, 4
      %v2932 = vshll.u32 %v2812, 16
      %v2934 = vrot.slane %v2932, 5
      %v2935 = vsel %vm1046, %v2930, %v2934
      %v2936 = vshrl.u32 %v2812, 16
      %v2938 = vrot.slane %v2936, 4
      %v2939 = vor.u32 %v2938, %v2934
      %v2940 = vrot.slane %v2939, 4
      %v2942 = vshll.u32 %v2813, 16
      %v2944 = vrot.slane %v2942, 5
      %v2945 = vsel %vm1046, %v2940, %v2944
      %v2947 = vshrl.u32 %v2814, 16
      %v2949 = vrot.slane %v2947, 4
      %v2950 = vshll.u32 %v2814, 16
      %v2952 = vrot.slane %v2950, 5
      %v2953 = vor.u32 %v2949, %v2952
      %v2954 = vrot.slane %v2953, 4
      %v2956 = vshll.u32 %v2815, 16
      %v2958 = vrot.slane %v2956, 5
      %v2959 = vsel %vm1046, %v2954, %v2958
      %v2960 = vshrl.u32 %v2815, 16
      %v2962 = vrot.slane %v2960, 4
      %v2963 = vor.u32 %v2962, %v2958
      %v2964 = vrot.slane %v2963, 4
      %v2966 = vshll.u32 %v2816, 16
      %v2968 = vrot.slane %v2966, 5
      %v2969 = vsel %vm1046, %v2964, %v2968
      %v2971 = vshrl.u32 %v2817, 16
      %v2973 = vrot.slane %v2971, 4
      %v2974 = vshll.u32 %v2817, 16
      %v2976 = vrot.slane %v2974, 5
      %v2977 = vor.u32 %v2973, %v2976
      %v2978 = vrot.slane %v2977, 4
      %v2980 = vshll.u32 %v2818, 16
      %v2982 = vrot.slane %v2980, 5
      %v2983 = vsel %vm1046, %v2978, %v2982
      %v2984 = vshrl.u32 %v2818, 16
      %v2986 = vrot.slane %v2984, 4
      %v2987 = vor.u32 %v2986, %v2982
      %v2988 = vrot.slane %v2987, 4
      %v2990 = vshll.u32 %v2819, 16
      %v2992 = vrot.slane %v2990, 5
      %v2993 = vsel %vm1046, %v2988, %v2992
      %v2995 = vshrl.u32 %v2820, 16
      %v2997 = vrot.slane %v2995, 4
      %v2998 = vshll.u32 %v2820, 16
      %v3000 = vrot.slane %v2998, 5
      %v3001 = vor.u32 %v2997, %v3000
      %v3002 = vrot.slane %v3001, 4
      %v3004 = vshll.u32 %v2821, 16
      %v3006 = vrot.slane %v3004, 5
      %v3007 = vsel %vm1046, %v3002, %v3006
      %v3008 = vshrl.u32 %v2821, 16
      %v3010 = vrot.slane %v3008, 4
      %v3011 = vor.u32 %v3010, %v3006
      %v3012 = vrot.slane %v3011, 4
      %v3014 = vshll.u32 %v2822, 16
      %v3016 = vrot.slane %v3014, 5
      %v3017 = vsel %vm1046, %v3012, %v3016
      %v3019 = vshrl.u32 %v2823, 16
      %v3021 = vrot.slane %v3019, 4
      %v3022 = vshll.u32 %v2823, 16
      %v3024 = vrot.slane %v3022, 5
      %v3025 = vor.u32 %v3021, %v3024
      %v3026 = vrot.slane %v3025, 4
      %v3028 = vshll.u32 %v2824, 16
      %v3030 = vrot.slane %v3028, 5
      %v3031 = vsel %vm1046, %v3026, %v3030
      %v3032 = vshrl.u32 %v2824, 16
      %v3034 = vrot.slane %v3032, 4
      %v3035 = vor.u32 %v3034, %v3030
      %v3036 = vrot.slane %v3035, 4
      %v3038 = vshll.u32 %v2825, 16
      %v3040 = vrot.slane %v3038, 5
      %v3041 = vsel %vm1046, %v3036, %v3040
      %v3043 = vshrl.u32 %v2826, 16
      %v3045 = vrot.slane %v3043, 4
      %v3046 = vshll.u32 %v2826, 16
      %v3048 = vrot.slane %v3046, 5
      %v3049 = vor.u32 %v3045, %v3048
      %v3050 = vrot.slane %v3049, 4
      %v3052 = vshll.u32 %v2827, 16
      %v3054 = vrot.slane %v3052, 5
      %v3055 = vsel %vm1046, %v3050, %v3054
      %v3056 = vshrl.u32 %v2827, 16
      %v3058 = vrot.slane %v3056, 4
      %v3059 = vor.u32 %v3058, %v3054
      %v3060 = vrot.slane %v3059, 4
      %v3062 = vshll.u32 %v2828, 16
      %v3064 = vrot.slane %v3062, 5
      %v3065 = vsel %vm1046, %v3060, %v3064
      %v3067 = vshrl.u32 %v2829, 16
      %v3069 = vrot.slane %v3067, 4
      %v3070 = vshll.u32 %v2829, 16
      %v3072 = vrot.slane %v3070, 5
      %v3073 = vor.u32 %v3069, %v3072
      %v3074 = vrot.slane %v3073, 4
      %v3076 = vshll.u32 %v2830, 16
      %v3078 = vrot.slane %v3076, 5
      %v3079 = vsel %vm1046, %v3074, %v3078
      %v3080 = vshrl.u32 %v2830, 16
      %v3082 = vrot.slane %v3080, 4
      %v3083 = vor.u32 %v3082, %v3078
      %v3084 = vrot.slane %v3083, 4
      %v3086 = vshll.u32 %v2831, 16
      %v3088 = vrot.slane %v3086, 5
      %v3089 = vsel %vm1046, %v3084, %v3088
      %v3091 = vshrl.u32 %v2832, 16
      %v3093 = vrot.slane %v3091, 4
      %v3094 = vshll.u32 %v2832, 16
      %v3096 = vrot.slane %v3094, 5
      %v3097 = vor.u32 %v3093, %v3096
      %v3098 = vrot.slane %v3097, 4
      %v3100 = vshll.u32 %v2833, 16
      %v3102 = vrot.slane %v3100, 5
      %v3103 = vsel %vm1046, %v3098, %v3102
      %v3104 = vshrl.u32 %v2833, 16
      %v3106 = vrot.slane %v3104, 4
      %v3107 = vor.u32 %v3106, %v3102
      %v3108 = vrot.slane %v3107, 4
      %v3110 = vshll.u32 %v2834, 16
      %v3112 = vrot.slane %v3110, 5
      %v3113 = vsel %vm1046, %v3108, %v3112
      %v3115 = vshrl.u32 %v2835, 16
      %v3117 = vrot.slane %v3115, 4
      %v3118 = vshll.u32 %v2835, 16
      %v3120 = vrot.slane %v3118, 5
      %v3121 = vor.u32 %v3117, %v3120
      %v3122 = vrot.slane %v3121, 4
      %v3124 = vshll.u32 %v2836, 16
      %v3126 = vrot.slane %v3124, 5
      %v3127 = vsel %vm1046, %v3122, %v3126
      %v3128 = vshrl.u32 %v2836, 16
      %v3130 = vrot.slane %v3128, 4
      %v3131 = vor.u32 %v3130, %v3126
      %v3132 = vrot.slane %v3131, 4
      %v3134 = vshll.u32 %v2837, 16
      %v3136 = vrot.slane %v3134, 5
      %v3137 = vsel %vm1046, %v3132, %v3136
      %v3139 = vshrl.u32 %v2838, 16
      %v3141 = vrot.slane %v3139, 4
      %v3142 = vshll.u32 %v2838, 16
      %v3144 = vrot.slane %v3142, 5
      %v3145 = vor.u32 %v3141, %v3144
      %v3146 = vrot.slane %v3145, 4
      %v3148 = vshll.u32 %v2839, 16
      %v3150 = vrot.slane %v3148, 5
      %v3151 = vsel %vm1046, %v3146, %v3150
      %v3152 = vshrl.u32 %v2839, 16
      %v3154 = vrot.slane %v3152, 4
      %v3155 = vor.u32 %v3154, %v3150
      %v3156 = vrot.slane %v3155, 4
      %v3158 = vshll.u32 %v2840, 16
      %v3160 = vrot.slane %v3158, 5
      %v3161 = vsel %vm1046, %v3156, %v3160
      %v3163 = vshrl.u32 %v2841, 16
      %v3165 = vrot.slane %v3163, 4
      %v3166 = vshll.u32 %v2841, 16
      %v3168 = vrot.slane %v3166, 5
      %v3169 = vor.u32 %v3165, %v3168
      %v3170 = vrot.slane %v3169, 4
      %v3172 = vshll.u32 %v2842, 16
      %v3174 = vrot.slane %v3172, 5
      %v3175 = vsel %vm1046, %v3170, %v3174
      %v3176 = vshrl.u32 %v2842, 16
      %v3178 = vrot.slane %v3176, 4
      %v3179 = vor.u32 %v3178, %v3174
      %v3180 = vrot.slane %v3179, 4
      %v3182 = vshll.u32 %v2843, 16
      %v3184 = vrot.slane %v3182, 5
      %v3185 = vsel %vm1046, %v3180, %v3184
      %v3187 = vshrl.u32 %v2844, 16
      %v3189 = vrot.slane %v3187, 4
      %v3190 = vshll.u32 %v2844, 16
      %v3192 = vrot.slane %v3190, 5
      %v3193 = vor.u32 %v3189, %v3192
      %v3194 = vrot.slane %v3193, 4
      %v3196 = vshll.u32 %v2845, 16
      %v3198 = vrot.slane %v3196, 5
      %v3199 = vsel %vm1046, %v3194, %v3198
      %v3200 = vshrl.u32 %v2845, 16
      %v3202 = vrot.slane %v3200, 4
      %v3203 = vor.u32 %v3202, %v3198
      %v3204 = vrot.slane %v3203, 4
      %v3206 = vshll.u32 %v2846, 16
      %v3208 = vrot.slane %v3206, 5
      %v3209 = vsel %vm1046, %v3204, %v3208
      %v3211 = vshrl.u32 %v2847, 16
      %v3213 = vrot.slane %v3211, 4
      %v3214 = vshll.u32 %v2847, 16
      %v3216 = vrot.slane %v3214, 5
      %v3217 = vor.u32 %v3213, %v3216
      %v3218 = vrot.slane %v3217, 4
      %v3220 = vshll.u32 %v2848, 16
      %v3222 = vrot.slane %v3220, 5
      %v3223 = vsel %vm1046, %v3218, %v3222
      %v3224 = vshrl.u32 %v2848, 16
      %v3226 = vrot.slane %v3224, 4
      %v3227 = vor.u32 %v3226, %v3222
      %v3228 = vrot.slane %v3227, 4
      %v3230 = vshll.u32 %v2849, 16
      %v3232 = vrot.slane %v3230, 5
      %v3233 = vsel %vm1046, %v3228, %v3232
      %s3234 = scalar_lea.vmem %s3, 8
      %v3235 = vld [vmem:[%s3234] sm:$0x3]
      %v3236 = vunpack.c.l.b16 %v2863
      %v3237 = vunpack.c.l.b16 %v2873
      %v3238 = vunpack.c.l.b16 %v2887
      %v3239 = vunpack.c.l.b16 %v2897
      %v3240 = vunpack.c.l.b16 %v2911
      %v3241 = vunpack.c.l.b16 %v2921
      %v3242 = vunpack.c.l.b16 %v2935
      %v3243 = vunpack.c.l.b16 %v2945
      %v3244 = vunpack.c.l.b16 %v2959
      %v3245 = vunpack.c.l.b16 %v2969
      %v3246 = vunpack.c.l.b16 %v2983
      %v3247 = vunpack.c.l.b16 %v2993
      %v3248 = vunpack.c.l.b16 %v3007
      %v3249 = vunpack.c.l.b16 %v3017
      %v3250 = vunpack.c.l.b16 %v3031
      %v3251 = vunpack.c.l.b16 %v3041
      %v3252 = vunpack.c.l.b16 %v3055
      %v3253 = vunpack.c.l.b16 %v3065
      %v3254 = vunpack.c.l.b16 %v3079
      %v3255 = vunpack.c.l.b16 %v3089
      %v3256 = vunpack.c.l.b16 %v3103
      %v3257 = vunpack.c.l.b16 %v3113
      %v3258 = vunpack.c.l.b16 %v3127
      %v3259 = vunpack.c.l.b16 %v3137
      %v3260 = vunpack.c.l.b16 %v3151
      %v3261 = vunpack.c.l.b16 %v3161
      %v3262 = vunpack.c.l.b16 %v3175
      %v3263 = vunpack.c.l.b16 %v3185
      %v3264 = vunpack.c.l.b16 %v3199
      %v3265 = vunpack.c.l.b16 %v3209
      %v3266 = vunpack.c.l.b16 %v3223
      %v3267 = vunpack.c.l.b16 %v3233
      %v3268 = vpack.c.b16 %v3237, %v3236
      %v3269 = vpack.c.b16 %v3239, %v3238
      %v3270 = vpack.c.b16 %v3241, %v3240
      %v3271 = vpack.c.b16 %v3243, %v3242
      %v3272 = vpack.c.b16 %v3245, %v3244
      %v3273 = vpack.c.b16 %v3247, %v3246
      %v3274 = vpack.c.b16 %v3249, %v3248
      %v3275 = vpack.c.b16 %v3251, %v3250
      %v3276 = vpack.c.b16 %v3253, %v3252
      %v3277 = vpack.c.b16 %v3255, %v3254
      %v3278 = vpack.c.b16 %v3257, %v3256
      %v3279 = vpack.c.b16 %v3259, %v3258
      %v3280 = vpack.c.b16 %v3261, %v3260
      %v3281 = vpack.c.b16 %v3263, %v3262
      %v3282 = vpack.c.b16 %v3265, %v3264
      %v3283 = vpack.c.b16 %v3267, %v3266
      %v3285 = vsel %vm1481, %v3268, 0
      %v3288 = vsel %vm1481, %v3269, 0
      %v3291 = vsel %vm1481, %v3270, 0
      %v3294 = vsel %vm1481, %v3271, 0
      %v3297 = vsel %vm1481, %v3272, 0
      %v3300 = vsel %vm1481, %v3273, 0
      %v3303 = vsel %vm1481, %v3274, 0
      %v3306 = vsel %vm1481, %v3275, 0
      %v3309 = vsel %vm1481, %v3276, 0
      %v3312 = vsel %vm1481, %v3277, 0
      %v3315 = vsel %vm1481, %v3278, 0
      %v3318 = vsel %vm1481, %v3279, 0
      %v3321 = vsel %vm1481, %v3280, 0
      %v3324 = vsel %vm1481, %v3281, 0
      %v3327 = vsel %vm1481, %v3282, 0
      %v3330 = vsel %vm1481, %v3283, 0
      %v3333 = vsel %vm1530, %v3235, 0
      %3335 = vmatprep.subr.bf16.mxu0 0
      %3336 = vmatpush1.bf16.msra.mxu0 0
      %3337 = vmatprep.subr.bf16.mxu0 0
      %3338 = vmatpush1.bf16.msra.mxu0 0
      %3339 = vmatprep.subr.bf16.mxu0 0
      %3340 = vmatpush1.bf16.msra.mxu0 0
      %3341 = vmatprep.subr.bf16.mxu0 0
      %3342 = vmatpush1.bf16.msra.mxu0 0
      %3343 = vmatprep.subr.bf16.mxu0 0
      %3344 = vmatpush1.bf16.msra.mxu0 0
      %3345 = vmatprep.subr.bf16.mxu0 0
      %3346 = vmatpush1.bf16.msra.mxu0 0
      %3347 = vmatprep.subr.bf16.mxu0 0
      %3348 = vmatpush1.bf16.msra.mxu0 0
      %3349 = vmatprep.subr.bf16.mxu0 0
      %3350 = vmatpush1.bf16.msra.mxu0 %v3333
      %3351 = vmatprep.subr.bf16.mxu0 0
      %3352 = vmatpush2.bf16.msra.mxu0 0
      %3353 = vmatprep.subr.bf16.mxu0 0
      %3354 = vmatpush2.bf16.msra.mxu0 0
      %3355 = vmatprep.subr.bf16.mxu0 0
      %3356 = vmatpush2.bf16.msra.mxu0 0
      %3357 = vmatprep.subr.bf16.mxu0 0
      %3358 = vmatpush2.bf16.msra.mxu0 0
      %3359 = vmatprep.subr.bf16.mxu0 0
      %3360 = vmatpush2.bf16.msra.mxu0 0
      %3361 = vmatprep.subr.bf16.mxu0 0
      %3362 = vmatpush2.bf16.msra.mxu0 0
      %3363 = vmatprep.subr.bf16.mxu0 0
      %3364 = vmatpush2.bf16.msra.mxu0 0
      %3365 = vmatprep.subr.bf16.mxu0 0
      %3366 = vmatpush2.bf16.msra.mxu0 0
      %3367 = vmatprep.mubr.bf16.mxu0 0
      %3368 = vmatmul.mubr.bf16.gmra.mxu0 %v3285
      %v3369 = vpop.f32.mrf.mxu0
      %v3370 = vadd.f32 0.0, %v3369
      %v3371 = vpop.f32.mrf.mxu0
      %v3372 = vpop.f32.mrf.mxu0
      %v3373 = vadd.f32 0.0, %v3372
      %v3374 = vpop.f32.mrf.mxu0
      %3375 = vmatprep.mubr.bf16.mxu0 0
      %3376 = vmatmul.mubr.bf16.gmra.mxu0 %v3288
      %v3377 = vpop.f32.mrf.mxu0
      %v3378 = vadd.f32 0.0, %v3377
      %v3379 = vpop.f32.mrf.mxu0
      %v3380 = vpop.f32.mrf.mxu0
      %v3381 = vadd.f32 0.0, %v3380
      %v3382 = vpop.f32.mrf.mxu0
      %3383 = vmatprep.mubr.bf16.mxu0 0
      %3384 = vmatmul.mubr.bf16.gmra.mxu0 %v3291
      %v3385 = vpop.f32.mrf.mxu0
      %v3386 = vadd.f32 0.0, %v3385
      %v3387 = vpop.f32.mrf.mxu0
      %v3388 = vpop.f32.mrf.mxu0
      %v3389 = vadd.f32 0.0, %v3388
      %v3390 = vpop.f32.mrf.mxu0
      %3391 = vmatprep.mubr.bf16.mxu0 0
      %3392 = vmatmul.mubr.bf16.gmra.mxu0 %v3294
      %v3393 = vpop.f32.mrf.mxu0
      %v3394 = vadd.f32 0.0, %v3393
      %v3395 = vpop.f32.mrf.mxu0
      %v3396 = vpop.f32.mrf.mxu0
      %v3397 = vadd.f32 0.0, %v3396
      %v3398 = vpop.f32.mrf.mxu0
      %3399 = vmatprep.mubr.bf16.mxu0 0
      %3400 = vmatmul.mubr.bf16.gmra.mxu0 %v3297
      %v3401 = vpop.f32.mrf.mxu0
      %v3402 = vadd.f32 0.0, %v3401
      %v3403 = vpop.f32.mrf.mxu0
      %v3404 = vpop.f32.mrf.mxu0
      %v3405 = vadd.f32 0.0, %v3404
      %v3406 = vpop.f32.mrf.mxu0
      %3407 = vmatprep.mubr.bf16.mxu0 0
      %3408 = vmatmul.mubr.bf16.gmra.mxu0 %v3300
      %v3409 = vpop.f32.mrf.mxu0
      %v3410 = vadd.f32 0.0, %v3409
      %v3411 = vpop.f32.mrf.mxu0
      %v3412 = vpop.f32.mrf.mxu0
      %v3413 = vadd.f32 0.0, %v3412
      %v3414 = vpop.f32.mrf.mxu0
      %3415 = vmatprep.mubr.bf16.mxu0 0
      %3416 = vmatmul.mubr.bf16.gmra.mxu0 %v3303
      %v3417 = vpop.f32.mrf.mxu0
      %v3418 = vadd.f32 0.0, %v3417
      %v3419 = vpop.f32.mrf.mxu0
      %v3420 = vpop.f32.mrf.mxu0
      %v3421 = vadd.f32 0.0, %v3420
      %v3422 = vpop.f32.mrf.mxu0
      %3423 = vmatprep.mubr.bf16.mxu0 0
      %3424 = vmatmul.mubr.bf16.gmra.mxu0 %v3306
      %v3425 = vpop.f32.mrf.mxu0
      %v3426 = vadd.f32 0.0, %v3425
      %v3427 = vpop.f32.mrf.mxu0
      %v3428 = vpop.f32.mrf.mxu0
      %v3429 = vadd.f32 0.0, %v3428
      %v3430 = vpop.f32.mrf.mxu0
      %3431 = vmatprep.mubr.bf16.mxu0 0
      %3432 = vmatmul.mubr.bf16.gmra.mxu0 %v3309
      %v3433 = vpop.f32.mrf.mxu0
      %v3434 = vadd.f32 0.0, %v3433
      %v3435 = vpop.f32.mrf.mxu0
      %v3436 = vpop.f32.mrf.mxu0
      %v3437 = vadd.f32 0.0, %v3436
      %v3438 = vpop.f32.mrf.mxu0
      %3439 = vmatprep.mubr.bf16.mxu0 0
      %3440 = vmatmul.mubr.bf16.gmra.mxu0 %v3312
      %v3441 = vpop.f32.mrf.mxu0
      %v3442 = vadd.f32 0.0, %v3441
      %v3443 = vpop.f32.mrf.mxu0
      %v3444 = vpop.f32.mrf.mxu0
      %v3445 = vadd.f32 0.0, %v3444
      %v3446 = vpop.f32.mrf.mxu0
      %3447 = vmatprep.mubr.bf16.mxu0 0
      %3448 = vmatmul.mubr.bf16.gmra.mxu0 %v3315
      %v3449 = vpop.f32.mrf.mxu0
      %v3450 = vadd.f32 0.0, %v3449
      %v3451 = vpop.f32.mrf.mxu0
      %v3452 = vpop.f32.mrf.mxu0
      %v3453 = vadd.f32 0.0, %v3452
      %v3454 = vpop.f32.mrf.mxu0
      %3455 = vmatprep.mubr.bf16.mxu0 0
      %3456 = vmatmul.mubr.bf16.gmra.mxu0 %v3318
      %v3457 = vpop.f32.mrf.mxu0
      %v3458 = vadd.f32 0.0, %v3457
      %v3459 = vpop.f32.mrf.mxu0
      %v3460 = vpop.f32.mrf.mxu0
      %v3461 = vadd.f32 0.0, %v3460
      %v3462 = vpop.f32.mrf.mxu0
      %3463 = vmatprep.mubr.bf16.mxu0 0
      %3464 = vmatmul.mubr.bf16.gmra.mxu0 %v3321
      %v3465 = vpop.f32.mrf.mxu0
      %v3466 = vadd.f32 0.0, %v3465
      %v3467 = vpop.f32.mrf.mxu0
      %v3468 = vpop.f32.mrf.mxu0
      %v3469 = vadd.f32 0.0, %v3468
      %v3470 = vpop.f32.mrf.mxu0
      %3471 = vmatprep.mubr.bf16.mxu0 0
      %3472 = vmatmul.mubr.bf16.gmra.mxu0 %v3324
      %v3473 = vpop.f32.mrf.mxu0
      %v3474 = vadd.f32 0.0, %v3473
      %v3475 = vpop.f32.mrf.mxu0
      %v3476 = vpop.f32.mrf.mxu0
      %v3477 = vadd.f32 0.0, %v3476
      %v3478 = vpop.f32.mrf.mxu0
      %3479 = vmatprep.mubr.bf16.mxu0 0
      %3480 = vmatmul.mubr.bf16.gmra.mxu0 %v3327
      %v3481 = vpop.f32.mrf.mxu0
      %v3482 = vadd.f32 0.0, %v3481
      %v3483 = vpop.f32.mrf.mxu0
      %v3484 = vpop.f32.mrf.mxu0
      %v3485 = vadd.f32 0.0, %v3484
      %v3486 = vpop.f32.mrf.mxu0
      %3487 = vmatprep.mubr.bf16.mxu0 0
      %3488 = vmatmul.mubr.bf16.gmra.mxu0 %v3330
      %v3489 = vpop.f32.mrf.mxu0
      %v3490 = vadd.f32 0.0, %v3489
      %v3491 = vpop.f32.mrf.mxu0
      %v3492 = vpop.f32.mrf.mxu0
      %v3493 = vadd.f32 0.0, %v3492
      %v3494 = vpop.f32.mrf.mxu0
      %3495 = vdwg.mxu0
      %v3496 = vadd.f32 %v2770, %v3370
      %v3497 = vadd.f32 %v2771, %v3373
      %v3498 = vadd.f32 %v2772, %v3378
      %v3499 = vadd.f32 %v2773, %v3381
      %v3500 = vadd.f32 %v2774, %v3386
      %v3501 = vadd.f32 %v2775, %v3389
      %v3502 = vadd.f32 %v2776, %v3394
      %v3503 = vadd.f32 %v2777, %v3397
      %v3504 = vadd.f32 %v2778, %v3402
      %v3505 = vadd.f32 %v2779, %v3405
      %v3506 = vadd.f32 %v2780, %v3410
      %v3507 = vadd.f32 %v2781, %v3413
      %v3508 = vadd.f32 %v2782, %v3418
      %v3509 = vadd.f32 %v2783, %v3421
      %v3510 = vadd.f32 %v2784, %v3426
      %v3511 = vadd.f32 %v2785, %v3429
      %v3512 = vadd.f32 %v2786, %v3434
      %v3513 = vadd.f32 %v2787, %v3437
      %v3514 = vadd.f32 %v2788, %v3442
      %v3515 = vadd.f32 %v2789, %v3445
      %v3516 = vadd.f32 %v2790, %v3450
      %v3517 = vadd.f32 %v2791, %v3453
      %v3518 = vadd.f32 %v2792, %v3458
      %v3519 = vadd.f32 %v2793, %v3461
      %v3520 = vadd.f32 %v2794, %v3466
      %v3521 = vadd.f32 %v2795, %v3469
      %v3522 = vadd.f32 %v2796, %v3474
      %v3523 = vadd.f32 %v2797, %v3477
      %v3524 = vadd.f32 %v2798, %v3482
      %v3525 = vadd.f32 %v2799, %v3485
      %v3526 = vadd.f32 %v2800, %v3490
      %v3527 = vadd.f32 %v2801, %v3493
      %v3528 = vld [vmem:[%s876] sm:$0xe]
      %v3529 = vld [vmem:[%s876 + $0xc] sm:$0xe]
      %v3530 = vld [vmem:[%s876 + $0x18] sm:$0xe]
      %v3531 = vld [vmem:[%s876 + $0x24] sm:$0xe]
      %v3532 = vld [vmem:[%s876 + $0x30] sm:$0xe]
      %v3533 = vld [vmem:[%s876 + $0x3c] sm:$0xe]
      %v3534 = vld [vmem:[%s876 + $0x48] sm:$0xe]
      %v3535 = vld [vmem:[%s876 + $0x54] sm:$0xe]
      %v3536 = vld [vmem:[%s876 + $0x60] sm:$0xe]
      %v3537 = vld [vmem:[%s876 + $0x6c] sm:$0xe]
      %v3538 = vld [vmem:[%s876 + $0x78] sm:$0xe]
      %v3539 = vld [vmem:[%s876 + $0x84] sm:$0xe]
      %v3540 = vld [vmem:[%s876 + $0x90] sm:$0xe]
      %v3541 = vld [vmem:[%s876 + $0x9c] sm:$0xe]
      %v3542 = vld [vmem:[%s876 + $0xa8] sm:$0xe]
      %v3543 = vld [vmem:[%s876 + $0xb4] sm:$0xe]
      %v3592 = vrot.slane %v3528, 5
      %v3593 = vrot.slane %v3592, 4
      %v3594 = vrot.slane %v2803, 5
      %v3595 = vsel %vm2037, %v3593, %v3594
      %v3596 = vrot.slane %v3594, 4
      %v3597 = vrot.slane %v2804, 5
      %v3598 = vsel %vm2037, %v3596, %v3597
      %v3599 = vrot.slane %v3529, 5
      %v3600 = vrot.slane %v3599, 4
      %v3601 = vrot.slane %v2806, 5
      %v3602 = vsel %vm2037, %v3600, %v3601
      %v3603 = vrot.slane %v3601, 4
      %v3604 = vrot.slane %v2807, 5
      %v3605 = vsel %vm2037, %v3603, %v3604
      %v3606 = vrot.slane %v3530, 5
      %v3607 = vrot.slane %v3606, 4
      %v3608 = vrot.slane %v2809, 5
      %v3609 = vsel %vm2037, %v3607, %v3608
      %v3610 = vrot.slane %v3608, 4
      %v3611 = vrot.slane %v2810, 5
      %v3612 = vsel %vm2037, %v3610, %v3611
      %v3613 = vrot.slane %v3531, 5
      %v3614 = vrot.slane %v3613, 4
      %v3615 = vrot.slane %v2812, 5
      %v3616 = vsel %vm2037, %v3614, %v3615
      %v3617 = vrot.slane %v3615, 4
      %v3618 = vrot.slane %v2813, 5
      %v3619 = vsel %vm2037, %v3617, %v3618
      %v3620 = vrot.slane %v3532, 5
      %v3621 = vrot.slane %v3620, 4
      %v3622 = vrot.slane %v2815, 5
      %v3623 = vsel %vm2037, %v3621, %v3622
      %v3624 = vrot.slane %v3622, 4
      %v3625 = vrot.slane %v2816, 5
      %v3626 = vsel %vm2037, %v3624, %v3625
      %v3627 = vrot.slane %v3533, 5
      %v3628 = vrot.slane %v3627, 4
      %v3629 = vrot.slane %v2818, 5
      %v3630 = vsel %vm2037, %v3628, %v3629
      %v3631 = vrot.slane %v3629, 4
      %v3632 = vrot.slane %v2819, 5
      %v3633 = vsel %vm2037, %v3631, %v3632
      %v3634 = vrot.slane %v3534, 5
      %v3635 = vrot.slane %v3634, 4
      %v3636 = vrot.slane %v2821, 5
      %v3637 = vsel %vm2037, %v3635, %v3636
      %v3638 = vrot.slane %v3636, 4
      %v3639 = vrot.slane %v2822, 5
      %v3640 = vsel %vm2037, %v3638, %v3639
      %v3641 = vrot.slane %v3535, 5
      %v3642 = vrot.slane %v3641, 4
      %v3643 = vrot.slane %v2824, 5
      %v3644 = vsel %vm2037, %v3642, %v3643
      %v3645 = vrot.slane %v3643, 4
      %v3646 = vrot.slane %v2825, 5
      %v3647 = vsel %vm2037, %v3645, %v3646
      %v3648 = vrot.slane %v3536, 5
      %v3649 = vrot.slane %v3648, 4
      %v3650 = vrot.slane %v2827, 5
      %v3651 = vsel %vm2037, %v3649, %v3650
      %v3652 = vrot.slane %v3650, 4
      %v3653 = vrot.slane %v2828, 5
      %v3654 = vsel %vm2037, %v3652, %v3653
      %v3655 = vrot.slane %v3537, 5
      %v3656 = vrot.slane %v3655, 4
      %v3657 = vrot.slane %v2830, 5
      %v3658 = vsel %vm2037, %v3656, %v3657
      %v3659 = vrot.slane %v3657, 4
      %v3660 = vrot.slane %v2831, 5
      %v3661 = vsel %vm2037, %v3659, %v3660
      %v3662 = vrot.slane %v3538, 5
      %v3663 = vrot.slane %v3662, 4
      %v3664 = vrot.slane %v2833, 5
      %v3665 = vsel %vm2037, %v3663, %v3664
      %v3666 = vrot.slane %v3664, 4
      %v3667 = vrot.slane %v2834, 5
      %v3668 = vsel %vm2037, %v3666, %v3667
      %v3669 = vrot.slane %v3539, 5
      %v3670 = vrot.slane %v3669, 4
      %v3671 = vrot.slane %v2836, 5
      %v3672 = vsel %vm2037, %v3670, %v3671
      %v3673 = vrot.slane %v3671, 4
      %v3674 = vrot.slane %v2837, 5
      %v3675 = vsel %vm2037, %v3673, %v3674
      %v3676 = vrot.slane %v3540, 5
      %v3677 = vrot.slane %v3676, 4
      %v3678 = vrot.slane %v2839, 5
      %v3679 = vsel %vm2037, %v3677, %v3678
      %v3680 = vrot.slane %v3678, 4
      %v3681 = vrot.slane %v2840, 5
      %v3682 = vsel %vm2037, %v3680, %v3681
      %v3683 = vrot.slane %v3541, 5
      %v3684 = vrot.slane %v3683, 4
      %v3685 = vrot.slane %v2842, 5
      %v3686 = vsel %vm2037, %v3684, %v3685
      %v3687 = vrot.slane %v3685, 4
      %v3688 = vrot.slane %v2843, 5
      %v3689 = vsel %vm2037, %v3687, %v3688
      %v3690 = vrot.slane %v3542, 5
      %v3691 = vrot.slane %v3690, 4
      %v3692 = vrot.slane %v2845, 5
      %v3693 = vsel %vm2037, %v3691, %v3692
      %v3694 = vrot.slane %v3692, 4
      %v3695 = vrot.slane %v2846, 5
      %v3696 = vsel %vm2037, %v3694, %v3695
      %v3697 = vrot.slane %v3543, 5
      %v3698 = vrot.slane %v3697, 4
      %v3699 = vrot.slane %v2848, 5
      %v3700 = vsel %vm2037, %v3698, %v3699
      %v3701 = vrot.slane %v3699, 4
      %v3702 = vrot.slane %v2849, 5
      %v3703 = vsel %vm2037, %v3701, %v3702
      %s3704 = scalar_lea.vmem %s3, 10
      %v3705 = vld [vmem:[%s3704] sm:$0x3]
      %v3706 = vunpack.c.l.b16 %v3595
      %v3707 = vunpack.c.l.b16 %v3598
      %v3708 = vunpack.c.l.b16 %v3602
      %v3709 = vunpack.c.l.b16 %v3605
      %v3710 = vunpack.c.l.b16 %v3609
      %v3711 = vunpack.c.l.b16 %v3612
      %v3712 = vunpack.c.l.b16 %v3616
      %v3713 = vunpack.c.l.b16 %v3619
      %v3714 = vunpack.c.l.b16 %v3623
      %v3715 = vunpack.c.l.b16 %v3626
      %v3716 = vunpack.c.l.b16 %v3630
      %v3717 = vunpack.c.l.b16 %v3633
      %v3718 = vunpack.c.l.b16 %v3637
      %v3719 = vunpack.c.l.b16 %v3640
      %v3720 = vunpack.c.l.b16 %v3644
      %v3721 = vunpack.c.l.b16 %v3647
      %v3722 = vunpack.c.l.b16 %v3651
      %v3723 = vunpack.c.l.b16 %v3654
      %v3724 = vunpack.c.l.b16 %v3658
      %v3725 = vunpack.c.l.b16 %v3661
      %v3726 = vunpack.c.l.b16 %v3665
      %v3727 = vunpack.c.l.b16 %v3668
      %v3728 = vunpack.c.l.b16 %v3672
      %v3729 = vunpack.c.l.b16 %v3675
      %v3730 = vunpack.c.l.b16 %v3679
      %v3731 = vunpack.c.l.b16 %v3682
      %v3732 = vunpack.c.l.b16 %v3686
      %v3733 = vunpack.c.l.b16 %v3689
      %v3734 = vunpack.c.l.b16 %v3693
      %v3735 = vunpack.c.l.b16 %v3696
      %v3736 = vunpack.c.l.b16 %v3700
      %v3737 = vunpack.c.l.b16 %v3703
      %v3738 = vpack.c.b16 %v3707, %v3706
      %v3739 = vpack.c.b16 %v3709, %v3708
      %v3740 = vpack.c.b16 %v3711, %v3710
      %v3741 = vpack.c.b16 %v3713, %v3712
      %v3742 = vpack.c.b16 %v3715, %v3714
      %v3743 = vpack.c.b16 %v3717, %v3716
      %v3744 = vpack.c.b16 %v3719, %v3718
      %v3745 = vpack.c.b16 %v3721, %v3720
      %v3746 = vpack.c.b16 %v3723, %v3722
      %v3747 = vpack.c.b16 %v3725, %v3724
      %v3748 = vpack.c.b16 %v3727, %v3726
      %v3749 = vpack.c.b16 %v3729, %v3728
      %v3750 = vpack.c.b16 %v3731, %v3730
      %v3751 = vpack.c.b16 %v3733, %v3732
      %v3752 = vpack.c.b16 %v3735, %v3734
      %v3753 = vpack.c.b16 %v3737, %v3736
      %v3755 = vsel %vm1481, %v3738, 0
      %v3758 = vsel %vm1481, %v3739, 0
      %v3761 = vsel %vm1481, %v3740, 0
      %v3764 = vsel %vm1481, %v3741, 0
      %v3767 = vsel %vm1481, %v3742, 0
      %v3770 = vsel %vm1481, %v3743, 0
      %v3773 = vsel %vm1481, %v3744, 0
      %v3776 = vsel %vm1481, %v3745, 0
      %v3779 = vsel %vm1481, %v3746, 0
      %v3782 = vsel %vm1481, %v3747, 0
      %v3785 = vsel %vm1481, %v3748, 0
      %v3788 = vsel %vm1481, %v3749, 0
      %v3791 = vsel %vm1481, %v3750, 0
      %v3794 = vsel %vm1481, %v3751, 0
      %v3797 = vsel %vm1481, %v3752, 0
      %v3800 = vsel %vm1481, %v3753, 0
      %v3803 = vsel %vm1530, %v3705, 0
      %3805 = vmatprep.subr.bf16.mxu0 0
      %3806 = vmatpush1.bf16.msra.mxu0 0
      %3807 = vmatprep.subr.bf16.mxu0 0
      %3808 = vmatpush1.bf16.msra.mxu0 0
      %3809 = vmatprep.subr.bf16.mxu0 0
      %3810 = vmatpush1.bf16.msra.mxu0 0
      %3811 = vmatprep.subr.bf16.mxu0 0
      %3812 = vmatpush1.bf16.msra.mxu0 0
      %3813 = vmatprep.subr.bf16.mxu0 0
      %3814 = vmatpush1.bf16.msra.mxu0 0
      %3815 = vmatprep.subr.bf16.mxu0 0
      %3816 = vmatpush1.bf16.msra.mxu0 0
      %3817 = vmatprep.subr.bf16.mxu0 0
      %3818 = vmatpush1.bf16.msra.mxu0 0
      %3819 = vmatprep.subr.bf16.mxu0 0
      %3820 = vmatpush1.bf16.msra.mxu0 %v3803
      %3821 = vmatprep.subr.bf16.mxu0 0
      %3822 = vmatpush2.bf16.msra.mxu0 0
      %3823 = vmatprep.subr.bf16.mxu0 0
      %3824 = vmatpush2.bf16.msra.mxu0 0
      %3825 = vmatprep.subr.bf16.mxu0 0
      %3826 = vmatpush2.bf16.msra.mxu0 0
      %3827 = vmatprep.subr.bf16.mxu0 0
      %3828 = vmatpush2.bf16.msra.mxu0 0
      %3829 = vmatprep.subr.bf16.mxu0 0
      %3830 = vmatpush2.bf16.msra.mxu0 0
      %3831 = vmatprep.subr.bf16.mxu0 0
      %3832 = vmatpush2.bf16.msra.mxu0 0
      %3833 = vmatprep.subr.bf16.mxu0 0
      %3834 = vmatpush2.bf16.msra.mxu0 0
      %3835 = vmatprep.subr.bf16.mxu0 0
      %3836 = vmatpush2.bf16.msra.mxu0 0
      %3837 = vmatprep.mubr.bf16.mxu0 0
      %3838 = vmatmul.mubr.bf16.gmra.mxu0 %v3755
      %v3839 = vpop.f32.mrf.mxu0
      %v3840 = vadd.f32 0.0, %v3839
      %v3841 = vpop.f32.mrf.mxu0
      %v3842 = vpop.f32.mrf.mxu0
      %v3843 = vadd.f32 0.0, %v3842
      %v3844 = vpop.f32.mrf.mxu0
      %3845 = vmatprep.mubr.bf16.mxu0 0
      %3846 = vmatmul.mubr.bf16.gmra.mxu0 %v3758
      %v3847 = vpop.f32.mrf.mxu0
      %v3848 = vadd.f32 0.0, %v3847
      %v3849 = vpop.f32.mrf.mxu0
      %v3850 = vpop.f32.mrf.mxu0
      %v3851 = vadd.f32 0.0, %v3850
      %v3852 = vpop.f32.mrf.mxu0
      %3853 = vmatprep.mubr.bf16.mxu0 0
      %3854 = vmatmul.mubr.bf16.gmra.mxu0 %v3761
      %v3855 = vpop.f32.mrf.mxu0
      %v3856 = vadd.f32 0.0, %v3855
      %v3857 = vpop.f32.mrf.mxu0
      %v3858 = vpop.f32.mrf.mxu0
      %v3859 = vadd.f32 0.0, %v3858
      %v3860 = vpop.f32.mrf.mxu0
      %3861 = vmatprep.mubr.bf16.mxu0 0
      %3862 = vmatmul.mubr.bf16.gmra.mxu0 %v3764
      %v3863 = vpop.f32.mrf.mxu0
      %v3864 = vadd.f32 0.0, %v3863
      %v3865 = vpop.f32.mrf.mxu0
      %v3866 = vpop.f32.mrf.mxu0
      %v3867 = vadd.f32 0.0, %v3866
      %v3868 = vpop.f32.mrf.mxu0
      %3869 = vmatprep.mubr.bf16.mxu0 0
      %3870 = vmatmul.mubr.bf16.gmra.mxu0 %v3767
      %v3871 = vpop.f32.mrf.mxu0
      %v3872 = vadd.f32 0.0, %v3871
      %v3873 = vpop.f32.mrf.mxu0
      %v3874 = vpop.f32.mrf.mxu0
      %v3875 = vadd.f32 0.0, %v3874
      %v3876 = vpop.f32.mrf.mxu0
      %3877 = vmatprep.mubr.bf16.mxu0 0
      %3878 = vmatmul.mubr.bf16.gmra.mxu0 %v3770
      %v3879 = vpop.f32.mrf.mxu0
      %v3880 = vadd.f32 0.0, %v3879
      %v3881 = vpop.f32.mrf.mxu0
      %v3882 = vpop.f32.mrf.mxu0
      %v3883 = vadd.f32 0.0, %v3882
      %v3884 = vpop.f32.mrf.mxu0
      %3885 = vmatprep.mubr.bf16.mxu0 0
      %3886 = vmatmul.mubr.bf16.gmra.mxu0 %v3773
      %v3887 = vpop.f32.mrf.mxu0
      %v3888 = vadd.f32 0.0, %v3887
      %v3889 = vpop.f32.mrf.mxu0
      %v3890 = vpop.f32.mrf.mxu0
      %v3891 = vadd.f32 0.0, %v3890
      %v3892 = vpop.f32.mrf.mxu0
      %3893 = vmatprep.mubr.bf16.mxu0 0
      %3894 = vmatmul.mubr.bf16.gmra.mxu0 %v3776
      %v3895 = vpop.f32.mrf.mxu0
      %v3896 = vadd.f32 0.0, %v3895
      %v3897 = vpop.f32.mrf.mxu0
      %v3898 = vpop.f32.mrf.mxu0
      %v3899 = vadd.f32 0.0, %v3898
      %v3900 = vpop.f32.mrf.mxu0
      %3901 = vmatprep.mubr.bf16.mxu0 0
      %3902 = vmatmul.mubr.bf16.gmra.mxu0 %v3779
      %v3903 = vpop.f32.mrf.mxu0
      %v3904 = vadd.f32 0.0, %v3903
      %v3905 = vpop.f32.mrf.mxu0
      %v3906 = vpop.f32.mrf.mxu0
      %v3907 = vadd.f32 0.0, %v3906
      %v3908 = vpop.f32.mrf.mxu0
      %3909 = vmatprep.mubr.bf16.mxu0 0
      %3910 = vmatmul.mubr.bf16.gmra.mxu0 %v3782
      %v3911 = vpop.f32.mrf.mxu0
      %v3912 = vadd.f32 0.0, %v3911
      %v3913 = vpop.f32.mrf.mxu0
      %v3914 = vpop.f32.mrf.mxu0
      %v3915 = vadd.f32 0.0, %v3914
      %v3916 = vpop.f32.mrf.mxu0
      %3917 = vmatprep.mubr.bf16.mxu0 0
      %3918 = vmatmul.mubr.bf16.gmra.mxu0 %v3785
      %v3919 = vpop.f32.mrf.mxu0
      %v3920 = vadd.f32 0.0, %v3919
      %v3921 = vpop.f32.mrf.mxu0
      %v3922 = vpop.f32.mrf.mxu0
      %v3923 = vadd.f32 0.0, %v3922
      %v3924 = vpop.f32.mrf.mxu0
      %3925 = vmatprep.mubr.bf16.mxu0 0
      %3926 = vmatmul.mubr.bf16.gmra.mxu0 %v3788
      %v3927 = vpop.f32.mrf.mxu0
      %v3928 = vadd.f32 0.0, %v3927
      %v3929 = vpop.f32.mrf.mxu0
      %v3930 = vpop.f32.mrf.mxu0
      %v3931 = vadd.f32 0.0, %v3930
      %v3932 = vpop.f32.mrf.mxu0
      %3933 = vmatprep.mubr.bf16.mxu0 0
      %3934 = vmatmul.mubr.bf16.gmra.mxu0 %v3791
      %v3935 = vpop.f32.mrf.mxu0
      %v3936 = vadd.f32 0.0, %v3935
      %v3937 = vpop.f32.mrf.mxu0
      %v3938 = vpop.f32.mrf.mxu0
      %v3939 = vadd.f32 0.0, %v3938
      %v3940 = vpop.f32.mrf.mxu0
      %3941 = vmatprep.mubr.bf16.mxu0 0
      %3942 = vmatmul.mubr.bf16.gmra.mxu0 %v3794
      %v3943 = vpop.f32.mrf.mxu0
      %v3944 = vadd.f32 0.0, %v3943
      %v3945 = vpop.f32.mrf.mxu0
      %v3946 = vpop.f32.mrf.mxu0
      %v3947 = vadd.f32 0.0, %v3946
      %v3948 = vpop.f32.mrf.mxu0
      %3949 = vmatprep.mubr.bf16.mxu0 0
      %3950 = vmatmul.mubr.bf16.gmra.mxu0 %v3797
      %v3951 = vpop.f32.mrf.mxu0
      %v3952 = vadd.f32 0.0, %v3951
      %v3953 = vpop.f32.mrf.mxu0
      %v3954 = vpop.f32.mrf.mxu0
      %v3955 = vadd.f32 0.0, %v3954
      %v3956 = vpop.f32.mrf.mxu0
      %3957 = vmatprep.mubr.bf16.mxu0 0
      %3958 = vmatmul.mubr.bf16.gmra.mxu0 %v3800
      %v3959 = vpop.f32.mrf.mxu0
      %v3960 = vadd.f32 0.0, %v3959
      %v3961 = vpop.f32.mrf.mxu0
      %v3962 = vpop.f32.mrf.mxu0
      %v3963 = vadd.f32 0.0, %v3962
      %v3964 = vpop.f32.mrf.mxu0
      %3965 = vdwg.mxu0
      %v3966 = vadd.f32 %v3496, %v3840
      %v3967 = vadd.f32 %v3497, %v3843
      %v3968 = vadd.f32 %v3498, %v3848
      %v3969 = vadd.f32 %v3499, %v3851
      %v3970 = vadd.f32 %v3500, %v3856
      %v3971 = vadd.f32 %v3501, %v3859
      %v3972 = vadd.f32 %v3502, %v3864
      %v3973 = vadd.f32 %v3503, %v3867
      %v3974 = vadd.f32 %v3504, %v3872
      %v3975 = vadd.f32 %v3505, %v3875
      %v3976 = vadd.f32 %v3506, %v3880
      %v3977 = vadd.f32 %v3507, %v3883
      %v3978 = vadd.f32 %v3508, %v3888
      %v3979 = vadd.f32 %v3509, %v3891
      %v3980 = vadd.f32 %v3510, %v3896
      %v3981 = vadd.f32 %v3511, %v3899
      %v3982 = vadd.f32 %v3512, %v3904
      %v3983 = vadd.f32 %v3513, %v3907
      %v3984 = vadd.f32 %v3514, %v3912
      %v3985 = vadd.f32 %v3515, %v3915
      %v3986 = vadd.f32 %v3516, %v3920
      %v3987 = vadd.f32 %v3517, %v3923
      %v3988 = vadd.f32 %v3518, %v3928
      %v3989 = vadd.f32 %v3519, %v3931
      %v3990 = vadd.f32 %v3520, %v3936
      %v3991 = vadd.f32 %v3521, %v3939
      %v3992 = vadd.f32 %v3522, %v3944
      %v3993 = vadd.f32 %v3523, %v3947
      %v3994 = vadd.f32 %v3524, %v3952
      %v3995 = vadd.f32 %v3525, %v3955
      %v3996 = vadd.f32 %v3526, %v3960
      %v3997 = vadd.f32 %v3527, %v3963
      %s3998 = scalar_lea.vmem [#allocation2], 24
      %v3999 = vld [vmem:[%s3998] sm:$0xf]
      %v4000 = vld [vmem:[%s3998 + $0x4] sm:$0xf]
      %v4001 = vld [vmem:[%s3998 + $0xc] sm:$0xf]
      %v4002 = vld [vmem:[%s3998 + $0x10] sm:$0xf]
      %v4003 = vld [vmem:[%s3998 + $0x18] sm:$0xf]
      %v4004 = vld [vmem:[%s3998 + $0x1c] sm:$0xf]
      %v4005 = vld [vmem:[%s3998 + $0x24] sm:$0xf]
      %v4006 = vld [vmem:[%s3998 + $0x28] sm:$0xf]
      %v4007 = vld [vmem:[%s3998 + $0x30] sm:$0xf]
      %v4008 = vld [vmem:[%s3998 + $0x34] sm:$0xf]
      %v4009 = vld [vmem:[%s3998 + $0x3c] sm:$0xf]
      %v4010 = vld [vmem:[%s3998 + $0x40] sm:$0xf]
      %v4011 = vld [vmem:[%s3998 + $0x48] sm:$0xf]
      %v4012 = vld [vmem:[%s3998 + $0x4c] sm:$0xf]
      %v4013 = vld [vmem:[%s3998 + $0x54] sm:$0xf]
      %v4014 = vld [vmem:[%s3998 + $0x58] sm:$0xf]
      %v4015 = vld [vmem:[%s3998 + $0x60] sm:$0xf]
      %v4016 = vld [vmem:[%s3998 + $0x64] sm:$0xf]
      %v4017 = vld [vmem:[%s3998 + $0x6c] sm:$0xf]
      %v4018 = vld [vmem:[%s3998 + $0x70] sm:$0xf]
      %v4019 = vld [vmem:[%s3998 + $0x78] sm:$0xf]
      %v4020 = vld [vmem:[%s3998 + $0x7c] sm:$0xf]
      %v4021 = vld [vmem:[%s3998 + $0x84] sm:$0xf]
      %v4022 = vld [vmem:[%s3998 + $0x88] sm:$0xf]
      %v4023 = vld [vmem:[%s3998 + $0x90] sm:$0xf]
      %v4024 = vld [vmem:[%s3998 + $0x94] sm:$0xf]
      %v4025 = vld [vmem:[%s3998 + $0x9c] sm:$0xf]
      %v4026 = vld [vmem:[%s3998 + $0xa0] sm:$0xf]
      %v4027 = vld [vmem:[%s3998 + $0xa8] sm:$0xf]
      %v4028 = vld [vmem:[%s3998 + $0xac] sm:$0xf]
      %v4029 = vld [vmem:[%s3998 + $0xb4] sm:$0xf]
      %v4030 = vld [vmem:[%s3998 + $0xb8] sm:$0xf]
      %s4031 = scalar_lea.vmem %s3, 12
      %v4032 = vld [vmem:[%s4031] sm:$0x3]
      %v4065 = vunpack.c.l.b16 %v3999
      %v4066 = vunpack.c.l.b16 %v4000
      %v4067 = vunpack.c.l.b16 %v4001
      %v4068 = vunpack.c.l.b16 %v4002
      %v4069 = vunpack.c.l.b16 %v4003
      %v4070 = vunpack.c.l.b16 %v4004
      %v4071 = vunpack.c.l.b16 %v4005
      %v4072 = vunpack.c.l.b16 %v4006
      %v4073 = vunpack.c.l.b16 %v4007
      %v4074 = vunpack.c.l.b16 %v4008
      %v4075 = vunpack.c.l.b16 %v4009
      %v4076 = vunpack.c.l.b16 %v4010
      %v4077 = vunpack.c.l.b16 %v4011
      %v4078 = vunpack.c.l.b16 %v4012
      %v4079 = vunpack.c.l.b16 %v4013
      %v4080 = vunpack.c.l.b16 %v4014
      %v4081 = vunpack.c.l.b16 %v4015
      %v4082 = vunpack.c.l.b16 %v4016
      %v4083 = vunpack.c.l.b16 %v4017
      %v4084 = vunpack.c.l.b16 %v4018
      %v4085 = vunpack.c.l.b16 %v4019
      %v4086 = vunpack.c.l.b16 %v4020
      %v4087 = vunpack.c.l.b16 %v4021
      %v4088 = vunpack.c.l.b16 %v4022
      %v4089 = vunpack.c.l.b16 %v4023
      %v4090 = vunpack.c.l.b16 %v4024
      %v4091 = vunpack.c.l.b16 %v4025
      %v4092 = vunpack.c.l.b16 %v4026
      %v4093 = vunpack.c.l.b16 %v4027
      %v4094 = vunpack.c.l.b16 %v4028
      %v4095 = vunpack.c.l.b16 %v4029
      %v4096 = vunpack.c.l.b16 %v4030
      %v4097 = vpack.c.b16 %v4066, %v4065
      %v4098 = vpack.c.b16 %v4068, %v4067
      %v4099 = vpack.c.b16 %v4070, %v4069
      %v4100 = vpack.c.b16 %v4072, %v4071
      %v4101 = vpack.c.b16 %v4074, %v4073
      %v4102 = vpack.c.b16 %v4076, %v4075
      %v4103 = vpack.c.b16 %v4078, %v4077
      %v4104 = vpack.c.b16 %v4080, %v4079
      %v4105 = vpack.c.b16 %v4082, %v4081
      %v4106 = vpack.c.b16 %v4084, %v4083
      %v4107 = vpack.c.b16 %v4086, %v4085
      %v4108 = vpack.c.b16 %v4088, %v4087
      %v4109 = vpack.c.b16 %v4090, %v4089
      %v4110 = vpack.c.b16 %v4092, %v4091
      %v4111 = vpack.c.b16 %v4094, %v4093
      %v4112 = vpack.c.b16 %v4096, %v4095
      %v4114 = vsel %vm1481, %v4097, 0
      %v4117 = vsel %vm1481, %v4098, 0
      %v4120 = vsel %vm1481, %v4099, 0
      %v4123 = vsel %vm1481, %v4100, 0
      %v4126 = vsel %vm1481, %v4101, 0
      %v4129 = vsel %vm1481, %v4102, 0
      %v4132 = vsel %vm1481, %v4103, 0
      %v4135 = vsel %vm1481, %v4104, 0
      %v4138 = vsel %vm1481, %v4105, 0
      %v4141 = vsel %vm1481, %v4106, 0
      %v4144 = vsel %vm1481, %v4107, 0
      %v4147 = vsel %vm1481, %v4108, 0
      %v4150 = vsel %vm1481, %v4109, 0
      %v4153 = vsel %vm1481, %v4110, 0
      %v4156 = vsel %vm1481, %v4111, 0
      %v4159 = vsel %vm1481, %v4112, 0
      %v4162 = vsel %vm1530, %v4032, 0
      %4164 = vmatprep.subr.bf16.mxu0 0
      %4165 = vmatpush1.bf16.msra.mxu0 0
      %4166 = vmatprep.subr.bf16.mxu0 0
      %4167 = vmatpush1.bf16.msra.mxu0 0
      %4168 = vmatprep.subr.bf16.mxu0 0
      %4169 = vmatpush1.bf16.msra.mxu0 0
      %4170 = vmatprep.subr.bf16.mxu0 0
      %4171 = vmatpush1.bf16.msra.mxu0 0
      %4172 = vmatprep.subr.bf16.mxu0 0
      %4173 = vmatpush1.bf16.msra.mxu0 0
      %4174 = vmatprep.subr.bf16.mxu0 0
      %4175 = vmatpush1.bf16.msra.mxu0 0
      %4176 = vmatprep.subr.bf16.mxu0 0
      %4177 = vmatpush1.bf16.msra.mxu0 0
      %4178 = vmatprep.subr.bf16.mxu0 0
      %4179 = vmatpush1.bf16.msra.mxu0 %v4162
      %4180 = vmatprep.subr.bf16.mxu0 0
      %4181 = vmatpush2.bf16.msra.mxu0 0
      %4182 = vmatprep.subr.bf16.mxu0 0
      %4183 = vmatpush2.bf16.msra.mxu0 0
      %4184 = vmatprep.subr.bf16.mxu0 0
      %4185 = vmatpush2.bf16.msra.mxu0 0
      %4186 = vmatprep.subr.bf16.mxu0 0
      %4187 = vmatpush2.bf16.msra.mxu0 0
      %4188 = vmatprep.subr.bf16.mxu0 0
      %4189 = vmatpush2.bf16.msra.mxu0 0
      %4190 = vmatprep.subr.bf16.mxu0 0
      %4191 = vmatpush2.bf16.msra.mxu0 0
      %4192 = vmatprep.subr.bf16.mxu0 0
      %4193 = vmatpush2.bf16.msra.mxu0 0
      %4194 = vmatprep.subr.bf16.mxu0 0
      %4195 = vmatpush2.bf16.msra.mxu0 0
      %4196 = vmatprep.mubr.bf16.mxu0 0
      %4197 = vmatmul.mubr.bf16.gmra.mxu0 %v4114
      %v4198 = vpop.f32.mrf.mxu0
      %v4199 = vadd.f32 0.0, %v4198
      %v4200 = vpop.f32.mrf.mxu0
      %v4201 = vpop.f32.mrf.mxu0
      %v4202 = vadd.f32 0.0, %v4201
      %v4203 = vpop.f32.mrf.mxu0
      %4204 = vmatprep.mubr.bf16.mxu0 0
      %4205 = vmatmul.mubr.bf16.gmra.mxu0 %v4117
      %v4206 = vpop.f32.mrf.mxu0
      %v4207 = vadd.f32 0.0, %v4206
      %v4208 = vpop.f32.mrf.mxu0
      %v4209 = vpop.f32.mrf.mxu0
      %v4210 = vadd.f32 0.0, %v4209
      %v4211 = vpop.f32.mrf.mxu0
      %4212 = vmatprep.mubr.bf16.mxu0 0
      %4213 = vmatmul.mubr.bf16.gmra.mxu0 %v4120
      %v4214 = vpop.f32.mrf.mxu0
      %v4215 = vadd.f32 0.0, %v4214
      %v4216 = vpop.f32.mrf.mxu0
      %v4217 = vpop.f32.mrf.mxu0
      %v4218 = vadd.f32 0.0, %v4217
      %v4219 = vpop.f32.mrf.mxu0
      %4220 = vmatprep.mubr.bf16.mxu0 0
      %4221 = vmatmul.mubr.bf16.gmra.mxu0 %v4123
      %v4222 = vpop.f32.mrf.mxu0
      %v4223 = vadd.f32 0.0, %v4222
      %v4224 = vpop.f32.mrf.mxu0
      %v4225 = vpop.f32.mrf.mxu0
      %v4226 = vadd.f32 0.0, %v4225
      %v4227 = vpop.f32.mrf.mxu0
      %4228 = vmatprep.mubr.bf16.mxu0 0
      %4229 = vmatmul.mubr.bf16.gmra.mxu0 %v4126
      %v4230 = vpop.f32.mrf.mxu0
      %v4231 = vadd.f32 0.0, %v4230
      %v4232 = vpop.f32.mrf.mxu0
      %v4233 = vpop.f32.mrf.mxu0
      %v4234 = vadd.f32 0.0, %v4233
      %v4235 = vpop.f32.mrf.mxu0
      %4236 = vmatprep.mubr.bf16.mxu0 0
      %4237 = vmatmul.mubr.bf16.gmra.mxu0 %v4129
      %v4238 = vpop.f32.mrf.mxu0
      %v4239 = vadd.f32 0.0, %v4238
      %v4240 = vpop.f32.mrf.mxu0
      %v4241 = vpop.f32.mrf.mxu0
      %v4242 = vadd.f32 0.0, %v4241
      %v4243 = vpop.f32.mrf.mxu0
      %4244 = vmatprep.mubr.bf16.mxu0 0
      %4245 = vmatmul.mubr.bf16.gmra.mxu0 %v4132
      %v4246 = vpop.f32.mrf.mxu0
      %v4247 = vadd.f32 0.0, %v4246
      %v4248 = vpop.f32.mrf.mxu0
      %v4249 = vpop.f32.mrf.mxu0
      %v4250 = vadd.f32 0.0, %v4249
      %v4251 = vpop.f32.mrf.mxu0
      %4252 = vmatprep.mubr.bf16.mxu0 0
      %4253 = vmatmul.mubr.bf16.gmra.mxu0 %v4135
      %v4254 = vpop.f32.mrf.mxu0
      %v4255 = vadd.f32 0.0, %v4254
      %v4256 = vpop.f32.mrf.mxu0
      %v4257 = vpop.f32.mrf.mxu0
      %v4258 = vadd.f32 0.0, %v4257
      %v4259 = vpop.f32.mrf.mxu0
      %4260 = vmatprep.mubr.bf16.mxu0 0
      %4261 = vmatmul.mubr.bf16.gmra.mxu0 %v4138
      %v4262 = vpop.f32.mrf.mxu0
      %v4263 = vadd.f32 0.0, %v4262
      %v4264 = vpop.f32.mrf.mxu0
      %v4265 = vpop.f32.mrf.mxu0
      %v4266 = vadd.f32 0.0, %v4265
      %v4267 = vpop.f32.mrf.mxu0
      %4268 = vmatprep.mubr.bf16.mxu0 0
      %4269 = vmatmul.mubr.bf16.gmra.mxu0 %v4141
      %v4270 = vpop.f32.mrf.mxu0
      %v4271 = vadd.f32 0.0, %v4270
      %v4272 = vpop.f32.mrf.mxu0
      %v4273 = vpop.f32.mrf.mxu0
      %v4274 = vadd.f32 0.0, %v4273
      %v4275 = vpop.f32.mrf.mxu0
      %4276 = vmatprep.mubr.bf16.mxu0 0
      %4277 = vmatmul.mubr.bf16.gmra.mxu0 %v4144
      %v4278 = vpop.f32.mrf.mxu0
      %v4279 = vadd.f32 0.0, %v4278
      %v4280 = vpop.f32.mrf.mxu0
      %v4281 = vpop.f32.mrf.mxu0
      %v4282 = vadd.f32 0.0, %v4281
      %v4283 = vpop.f32.mrf.mxu0
      %4284 = vmatprep.mubr.bf16.mxu0 0
      %4285 = vmatmul.mubr.bf16.gmra.mxu0 %v4147
      %v4286 = vpop.f32.mrf.mxu0
      %v4287 = vadd.f32 0.0, %v4286
      %v4288 = vpop.f32.mrf.mxu0
      %v4289 = vpop.f32.mrf.mxu0
      %v4290 = vadd.f32 0.0, %v4289
      %v4291 = vpop.f32.mrf.mxu0
      %4292 = vmatprep.mubr.bf16.mxu0 0
      %4293 = vmatmul.mubr.bf16.gmra.mxu0 %v4150
      %v4294 = vpop.f32.mrf.mxu0
      %v4295 = vadd.f32 0.0, %v4294
      %v4296 = vpop.f32.mrf.mxu0
      %v4297 = vpop.f32.mrf.mxu0
      %v4298 = vadd.f32 0.0, %v4297
      %v4299 = vpop.f32.mrf.mxu0
      %4300 = vmatprep.mubr.bf16.mxu0 0
      %4301 = vmatmul.mubr.bf16.gmra.mxu0 %v4153
      %v4302 = vpop.f32.mrf.mxu0
      %v4303 = vadd.f32 0.0, %v4302
      %v4304 = vpop.f32.mrf.mxu0
      %v4305 = vpop.f32.mrf.mxu0
      %v4306 = vadd.f32 0.0, %v4305
      %v4307 = vpop.f32.mrf.mxu0
      %4308 = vmatprep.mubr.bf16.mxu0 0
      %4309 = vmatmul.mubr.bf16.gmra.mxu0 %v4156
      %v4310 = vpop.f32.mrf.mxu0
      %v4311 = vadd.f32 0.0, %v4310
      %v4312 = vpop.f32.mrf.mxu0
      %v4313 = vpop.f32.mrf.mxu0
      %v4314 = vadd.f32 0.0, %v4313
      %v4315 = vpop.f32.mrf.mxu0
      %4316 = vmatprep.mubr.bf16.mxu0 0
      %4317 = vmatmul.mubr.bf16.gmra.mxu0 %v4159
      %v4318 = vpop.f32.mrf.mxu0
      %v4319 = vadd.f32 0.0, %v4318
      %v4320 = vpop.f32.mrf.mxu0
      %v4321 = vpop.f32.mrf.mxu0
      %v4322 = vadd.f32 0.0, %v4321
      %v4323 = vpop.f32.mrf.mxu0
      %4324 = vdwg.mxu0
      %v4325 = vadd.f32 %v3966, %v4199
      %v4326 = vadd.f32 %v3967, %v4202
      %v4327 = vadd.f32 %v3968, %v4207
      %v4328 = vadd.f32 %v3969, %v4210
      %v4329 = vadd.f32 %v3970, %v4215
      %v4330 = vadd.f32 %v3971, %v4218
      %v4331 = vadd.f32 %v3972, %v4223
      %v4332 = vadd.f32 %v3973, %v4226
      %v4333 = vadd.f32 %v3974, %v4231
      %v4334 = vadd.f32 %v3975, %v4234
      %v4335 = vadd.f32 %v3976, %v4239
      %v4336 = vadd.f32 %v3977, %v4242
      %v4337 = vadd.f32 %v3978, %v4247
      %v4338 = vadd.f32 %v3979, %v4250
      %v4339 = vadd.f32 %v3980, %v4255
      %v4340 = vadd.f32 %v3981, %v4258
      %v4341 = vadd.f32 %v3982, %v4263
      %v4342 = vadd.f32 %v3983, %v4266
      %v4343 = vadd.f32 %v3984, %v4271
      %v4344 = vadd.f32 %v3985, %v4274
      %v4345 = vadd.f32 %v3986, %v4279
      %v4346 = vadd.f32 %v3987, %v4282
      %v4347 = vadd.f32 %v3988, %v4287
      %v4348 = vadd.f32 %v3989, %v4290
      %v4349 = vadd.f32 %v3990, %v4295
      %v4350 = vadd.f32 %v3991, %v4298
      %v4351 = vadd.f32 %v3992, %v4303
      %v4352 = vadd.f32 %v3993, %v4306
      %v4353 = vadd.f32 %v3994, %v4311
      %v4354 = vadd.f32 %v3995, %v4314
      %v4355 = vadd.f32 %v3996, %v4319
      %v4356 = vadd.f32 %v3997, %v4322
      %v4357 = vld [vmem:[%s3998] sm:$0xf]
      %v4358 = vld [vmem:[%s3998 + $0x4] sm:$0xf]
      %v4359 = vld [vmem:[%s3998 + $0x8] sm:$0x1]
      %v4360 = vld [vmem:[%s3998 + $0xc] sm:$0xf]
      %v4361 = vld [vmem:[%s3998 + $0x10] sm:$0xf]
      %v4362 = vld [vmem:[%s3998 + $0x14] sm:$0x1]
      %v4363 = vld [vmem:[%s3998 + $0x18] sm:$0xf]
      %v4364 = vld [vmem:[%s3998 + $0x1c] sm:$0xf]
      %v4365 = vld [vmem:[%s3998 + $0x20] sm:$0x1]
      %v4366 = vld [vmem:[%s3998 + $0x24] sm:$0xf]
      %v4367 = vld [vmem:[%s3998 + $0x28] sm:$0xf]
      %v4368 = vld [vmem:[%s3998 + $0x2c] sm:$0x1]
      %v4369 = vld [vmem:[%s3998 + $0x30] sm:$0xf]
      %v4370 = vld [vmem:[%s3998 + $0x34] sm:$0xf]
      %v4371 = vld [vmem:[%s3998 + $0x38] sm:$0x1]
      %v4372 = vld [vmem:[%s3998 + $0x3c] sm:$0xf]
      %v4373 = vld [vmem:[%s3998 + $0x40] sm:$0xf]
      %v4374 = vld [vmem:[%s3998 + $0x44] sm:$0x1]
      %v4375 = vld [vmem:[%s3998 + $0x48] sm:$0xf]
      %v4376 = vld [vmem:[%s3998 + $0x4c] sm:$0xf]
      %v4377 = vld [vmem:[%s3998 + $0x50] sm:$0x1]
      %v4378 = vld [vmem:[%s3998 + $0x54] sm:$0xf]
      %v4379 = vld [vmem:[%s3998 + $0x58] sm:$0xf]
      %v4380 = vld [vmem:[%s3998 + $0x5c] sm:$0x1]
      %v4381 = vld [vmem:[%s3998 + $0x60] sm:$0xf]
      %v4382 = vld [vmem:[%s3998 + $0x64] sm:$0xf]
      %v4383 = vld [vmem:[%s3998 + $0x68] sm:$0x1]
      %v4384 = vld [vmem:[%s3998 + $0x6c] sm:$0xf]
      %v4385 = vld [vmem:[%s3998 + $0x70] sm:$0xf]
      %v4386 = vld [vmem:[%s3998 + $0x74] sm:$0x1]
      %v4387 = vld [vmem:[%s3998 + $0x78] sm:$0xf]
      %v4388 = vld [vmem:[%s3998 + $0x7c] sm:$0xf]
      %v4389 = vld [vmem:[%s3998 + $0x80] sm:$0x1]
      %v4390 = vld [vmem:[%s3998 + $0x84] sm:$0xf]
      %v4391 = vld [vmem:[%s3998 + $0x88] sm:$0xf]
      %v4392 = vld [vmem:[%s3998 + $0x8c] sm:$0x1]
      %v4393 = vld [vmem:[%s3998 + $0x90] sm:$0xf]
      %v4394 = vld [vmem:[%s3998 + $0x94] sm:$0xf]
      %v4395 = vld [vmem:[%s3998 + $0x98] sm:$0x1]
      %v4396 = vld [vmem:[%s3998 + $0x9c] sm:$0xf]
      %v4397 = vld [vmem:[%s3998 + $0xa0] sm:$0xf]
      %v4398 = vld [vmem:[%s3998 + $0xa4] sm:$0x1]
      %v4399 = vld [vmem:[%s3998 + $0xa8] sm:$0xf]
      %v4400 = vld [vmem:[%s3998 + $0xac] sm:$0xf]
      %v4401 = vld [vmem:[%s3998 + $0xb0] sm:$0x1]
      %v4402 = vld [vmem:[%s3998 + $0xb4] sm:$0xf]
      %v4403 = vld [vmem:[%s3998 + $0xb8] sm:$0xf]
      %v4404 = vld [vmem:[%s3998 + $0xbc] sm:$0x1]
      %v4406 = vshrl.u32 %v4357, 16
      %v4408 = vrot.slane %v4406, 4
      %v4409 = vshll.u32 %v4357, 16
      %v4411 = vrot.slane %v4409, 5
      %v4412 = vor.u32 %v4408, %v4411
      %v4413 = vrot.slane %v4412, 4
      %v4415 = vshll.u32 %v4358, 16
      %v4417 = vrot.slane %v4415, 5
      %v4418 = vsel %vm1046, %v4413, %v4417
      %v4419 = vshrl.u32 %v4358, 16
      %v4421 = vrot.slane %v4419, 4
      %v4422 = vor.u32 %v4421, %v4417
      %v4423 = vrot.slane %v4422, 4
      %v4425 = vshll.u32 %v4359, 16
      %v4427 = vrot.slane %v4425, 5
      %v4428 = vsel %vm1046, %v4423, %v4427
      %v4430 = vshrl.u32 %v4360, 16
      %v4432 = vrot.slane %v4430, 4
      %v4433 = vshll.u32 %v4360, 16
      %v4435 = vrot.slane %v4433, 5
      %v4436 = vor.u32 %v4432, %v4435
      %v4437 = vrot.slane %v4436, 4
      %v4439 = vshll.u32 %v4361, 16
      %v4441 = vrot.slane %v4439, 5
      %v4442 = vsel %vm1046, %v4437, %v4441
      %v4443 = vshrl.u32 %v4361, 16
      %v4445 = vrot.slane %v4443, 4
      %v4446 = vor.u32 %v4445, %v4441
      %v4447 = vrot.slane %v4446, 4
      %v4449 = vshll.u32 %v4362, 16
      %v4451 = vrot.slane %v4449, 5
      %v4452 = vsel %vm1046, %v4447, %v4451
      %v4454 = vshrl.u32 %v4363, 16
      %v4456 = vrot.slane %v4454, 4
      %v4457 = vshll.u32 %v4363, 16
      %v4459 = vrot.slane %v4457, 5
      %v4460 = vor.u32 %v4456, %v4459
      %v4461 = vrot.slane %v4460, 4
      %v4463 = vshll.u32 %v4364, 16
      %v4465 = vrot.slane %v4463, 5
      %v4466 = vsel %vm1046, %v4461, %v4465
      %v4467 = vshrl.u32 %v4364, 16
      %v4469 = vrot.slane %v4467, 4
      %v4470 = vor.u32 %v4469, %v4465
      %v4471 = vrot.slane %v4470, 4
      %v4473 = vshll.u32 %v4365, 16
      %v4475 = vrot.slane %v4473, 5
      %v4476 = vsel %vm1046, %v4471, %v4475
      %v4478 = vshrl.u32 %v4366, 16
      %v4480 = vrot.slane %v4478, 4
      %v4481 = vshll.u32 %v4366, 16
      %v4483 = vrot.slane %v4481, 5
      %v4484 = vor.u32 %v4480, %v4483
      %v4485 = vrot.slane %v4484, 4
      %v4487 = vshll.u32 %v4367, 16
      %v4489 = vrot.slane %v4487, 5
      %v4490 = vsel %vm1046, %v4485, %v4489
      %v4491 = vshrl.u32 %v4367, 16
      %v4493 = vrot.slane %v4491, 4
      %v4494 = vor.u32 %v4493, %v4489
      %v4495 = vrot.slane %v4494, 4
      %v4497 = vshll.u32 %v4368, 16
      %v4499 = vrot.slane %v4497, 5
      %v4500 = vsel %vm1046, %v4495, %v4499
      %v4502 = vshrl.u32 %v4369, 16
      %v4504 = vrot.slane %v4502, 4
      %v4505 = vshll.u32 %v4369, 16
      %v4507 = vrot.slane %v4505, 5
      %v4508 = vor.u32 %v4504, %v4507
      %v4509 = vrot.slane %v4508, 4
      %v4511 = vshll.u32 %v4370, 16
      %v4513 = vrot.slane %v4511, 5
      %v4514 = vsel %vm1046, %v4509, %v4513
      %v4515 = vshrl.u32 %v4370, 16
      %v4517 = vrot.slane %v4515, 4
      %v4518 = vor.u32 %v4517, %v4513
      %v4519 = vrot.slane %v4518, 4
      %v4521 = vshll.u32 %v4371, 16
      %v4523 = vrot.slane %v4521, 5
      %v4524 = vsel %vm1046, %v4519, %v4523
      %v4526 = vshrl.u32 %v4372, 16
      %v4528 = vrot.slane %v4526, 4
      %v4529 = vshll.u32 %v4372, 16
      %v4531 = vrot.slane %v4529, 5
      %v4532 = vor.u32 %v4528, %v4531
      %v4533 = vrot.slane %v4532, 4
      %v4535 = vshll.u32 %v4373, 16
      %v4537 = vrot.slane %v4535, 5
      %v4538 = vsel %vm1046, %v4533, %v4537
      %v4539 = vshrl.u32 %v4373, 16
      %v4541 = vrot.slane %v4539, 4
      %v4542 = vor.u32 %v4541, %v4537
      %v4543 = vrot.slane %v4542, 4
      %v4545 = vshll.u32 %v4374, 16
      %v4547 = vrot.slane %v4545, 5
      %v4548 = vsel %vm1046, %v4543, %v4547
      %v4550 = vshrl.u32 %v4375, 16
      %v4552 = vrot.slane %v4550, 4
      %v4553 = vshll.u32 %v4375, 16
      %v4555 = vrot.slane %v4553, 5
      %v4556 = vor.u32 %v4552, %v4555
      %v4557 = vrot.slane %v4556, 4
      %v4559 = vshll.u32 %v4376, 16
      %v4561 = vrot.slane %v4559, 5
      %v4562 = vsel %vm1046, %v4557, %v4561
      %v4563 = vshrl.u32 %v4376, 16
      %v4565 = vrot.slane %v4563, 4
      %v4566 = vor.u32 %v4565, %v4561
      %v4567 = vrot.slane %v4566, 4
      %v4569 = vshll.u32 %v4377, 16
      %v4571 = vrot.slane %v4569, 5
      %v4572 = vsel %vm1046, %v4567, %v4571
      %v4574 = vshrl.u32 %v4378, 16
      %v4576 = vrot.slane %v4574, 4
      %v4577 = vshll.u32 %v4378, 16
      %v4579 = vrot.slane %v4577, 5
      %v4580 = vor.u32 %v4576, %v4579
      %v4581 = vrot.slane %v4580, 4
      %v4583 = vshll.u32 %v4379, 16
      %v4585 = vrot.slane %v4583, 5
      %v4586 = vsel %vm1046, %v4581, %v4585
      %v4587 = vshrl.u32 %v4379, 16
      %v4589 = vrot.slane %v4587, 4
      %v4590 = vor.u32 %v4589, %v4585
      %v4591 = vrot.slane %v4590, 4
      %v4593 = vshll.u32 %v4380, 16
      %v4595 = vrot.slane %v4593, 5
      %v4596 = vsel %vm1046, %v4591, %v4595
      %v4598 = vshrl.u32 %v4381, 16
      %v4600 = vrot.slane %v4598, 4
      %v4601 = vshll.u32 %v4381, 16
      %v4603 = vrot.slane %v4601, 5
      %v4604 = vor.u32 %v4600, %v4603
      %v4605 = vrot.slane %v4604, 4
      %v4607 = vshll.u32 %v4382, 16
      %v4609 = vrot.slane %v4607, 5
      %v4610 = vsel %vm1046, %v4605, %v4609
      %v4611 = vshrl.u32 %v4382, 16
      %v4613 = vrot.slane %v4611, 4
      %v4614 = vor.u32 %v4613, %v4609
      %v4615 = vrot.slane %v4614, 4
      %v4617 = vshll.u32 %v4383, 16
      %v4619 = vrot.slane %v4617, 5
      %v4620 = vsel %vm1046, %v4615, %v4619
      %v4622 = vshrl.u32 %v4384, 16
      %v4624 = vrot.slane %v4622, 4
      %v4625 = vshll.u32 %v4384, 16
      %v4627 = vrot.slane %v4625, 5
      %v4628 = vor.u32 %v4624, %v4627
      %v4629 = vrot.slane %v4628, 4
      %v4631 = vshll.u32 %v4385, 16
      %v4633 = vrot.slane %v4631, 5
      %v4634 = vsel %vm1046, %v4629, %v4633
      %v4635 = vshrl.u32 %v4385, 16
      %v4637 = vrot.slane %v4635, 4
      %v4638 = vor.u32 %v4637, %v4633
      %v4639 = vrot.slane %v4638, 4
      %v4641 = vshll.u32 %v4386, 16
      %v4643 = vrot.slane %v4641, 5
      %v4644 = vsel %vm1046, %v4639, %v4643
      %v4646 = vshrl.u32 %v4387, 16
      %v4648 = vrot.slane %v4646, 4
      %v4649 = vshll.u32 %v4387, 16
      %v4651 = vrot.slane %v4649, 5
      %v4652 = vor.u32 %v4648, %v4651
      %v4653 = vrot.slane %v4652, 4
      %v4655 = vshll.u32 %v4388, 16
      %v4657 = vrot.slane %v4655, 5
      %v4658 = vsel %vm1046, %v4653, %v4657
      %v4659 = vshrl.u32 %v4388, 16
      %v4661 = vrot.slane %v4659, 4
      %v4662 = vor.u32 %v4661, %v4657
      %v4663 = vrot.slane %v4662, 4
      %v4665 = vshll.u32 %v4389, 16
      %v4667 = vrot.slane %v4665, 5
      %v4668 = vsel %vm1046, %v4663, %v4667
      %v4670 = vshrl.u32 %v4390, 16
      %v4672 = vrot.slane %v4670, 4
      %v4673 = vshll.u32 %v4390, 16
      %v4675 = vrot.slane %v4673, 5
      %v4676 = vor.u32 %v4672, %v4675
      %v4677 = vrot.slane %v4676, 4
      %v4679 = vshll.u32 %v4391, 16
      %v4681 = vrot.slane %v4679, 5
      %v4682 = vsel %vm1046, %v4677, %v4681
      %v4683 = vshrl.u32 %v4391, 16
      %v4685 = vrot.slane %v4683, 4
      %v4686 = vor.u32 %v4685, %v4681
      %v4687 = vrot.slane %v4686, 4
      %v4689 = vshll.u32 %v4392, 16
      %v4691 = vrot.slane %v4689, 5
      %v4692 = vsel %vm1046, %v4687, %v4691
      %v4694 = vshrl.u32 %v4393, 16
      %v4696 = vrot.slane %v4694, 4
      %v4697 = vshll.u32 %v4393, 16
      %v4699 = vrot.slane %v4697, 5
      %v4700 = vor.u32 %v4696, %v4699
      %v4701 = vrot.slane %v4700, 4
      %v4703 = vshll.u32 %v4394, 16
      %v4705 = vrot.slane %v4703, 5
      %v4706 = vsel %vm1046, %v4701, %v4705
      %v4707 = vshrl.u32 %v4394, 16
      %v4709 = vrot.slane %v4707, 4
      %v4710 = vor.u32 %v4709, %v4705
      %v4711 = vrot.slane %v4710, 4
      %v4713 = vshll.u32 %v4395, 16
      %v4715 = vrot.slane %v4713, 5
      %v4716 = vsel %vm1046, %v4711, %v4715
      %v4718 = vshrl.u32 %v4396, 16
      %v4720 = vrot.slane %v4718, 4
      %v4721 = vshll.u32 %v4396, 16
      %v4723 = vrot.slane %v4721, 5
      %v4724 = vor.u32 %v4720, %v4723
      %v4725 = vrot.slane %v4724, 4
      %v4727 = vshll.u32 %v4397, 16
      %v4729 = vrot.slane %v4727, 5
      %v4730 = vsel %vm1046, %v4725, %v4729
      %v4731 = vshrl.u32 %v4397, 16
      %v4733 = vrot.slane %v4731, 4
      %v4734 = vor.u32 %v4733, %v4729
      %v4735 = vrot.slane %v4734, 4
      %v4737 = vshll.u32 %v4398, 16
      %v4739 = vrot.slane %v4737, 5
      %v4740 = vsel %vm1046, %v4735, %v4739
      %v4742 = vshrl.u32 %v4399, 16
      %v4744 = vrot.slane %v4742, 4
      %v4745 = vshll.u32 %v4399, 16
      %v4747 = vrot.slane %v4745, 5
      %v4748 = vor.u32 %v4744, %v4747
      %v4749 = vrot.slane %v4748, 4
      %v4751 = vshll.u32 %v4400, 16
      %v4753 = vrot.slane %v4751, 5
      %v4754 = vsel %vm1046, %v4749, %v4753
      %v4755 = vshrl.u32 %v4400, 16
      %v4757 = vrot.slane %v4755, 4
      %v4758 = vor.u32 %v4757, %v4753
      %v4759 = vrot.slane %v4758, 4
      %v4761 = vshll.u32 %v4401, 16
      %v4763 = vrot.slane %v4761, 5
      %v4764 = vsel %vm1046, %v4759, %v4763
      %v4766 = vshrl.u32 %v4402, 16
      %v4768 = vrot.slane %v4766, 4
      %v4769 = vshll.u32 %v4402, 16
      %v4771 = vrot.slane %v4769, 5
      %v4772 = vor.u32 %v4768, %v4771
      %v4773 = vrot.slane %v4772, 4
      %v4775 = vshll.u32 %v4403, 16
      %v4777 = vrot.slane %v4775, 5
      %v4778 = vsel %vm1046, %v4773, %v4777
      %v4779 = vshrl.u32 %v4403, 16
      %v4781 = vrot.slane %v4779, 4
      %v4782 = vor.u32 %v4781, %v4777
      %v4783 = vrot.slane %v4782, 4
      %v4785 = vshll.u32 %v4404, 16
      %v4787 = vrot.slane %v4785, 5
      %v4788 = vsel %vm1046, %v4783, %v4787
      %s4789 = scalar_lea.vmem %s3, 14
      %v4790 = vld [vmem:[%s4789] sm:$0x3]
      %v4791 = vunpack.c.l.b16 %v4418
      %v4792 = vunpack.c.l.b16 %v4428
      %v4793 = vunpack.c.l.b16 %v4442
      %v4794 = vunpack.c.l.b16 %v4452
      %v4795 = vunpack.c.l.b16 %v4466
      %v4796 = vunpack.c.l.b16 %v4476
      %v4797 = vunpack.c.l.b16 %v4490
      %v4798 = vunpack.c.l.b16 %v4500
      %v4799 = vunpack.c.l.b16 %v4514
      %v4800 = vunpack.c.l.b16 %v4524
      %v4801 = vunpack.c.l.b16 %v4538
      %v4802 = vunpack.c.l.b16 %v4548
      %v4803 = vunpack.c.l.b16 %v4562
      %v4804 = vunpack.c.l.b16 %v4572
      %v4805 = vunpack.c.l.b16 %v4586
      %v4806 = vunpack.c.l.b16 %v4596
      %v4807 = vunpack.c.l.b16 %v4610
      %v4808 = vunpack.c.l.b16 %v4620
      %v4809 = vunpack.c.l.b16 %v4634
      %v4810 = vunpack.c.l.b16 %v4644
      %v4811 = vunpack.c.l.b16 %v4658
      %v4812 = vunpack.c.l.b16 %v4668
      %v4813 = vunpack.c.l.b16 %v4682
      %v4814 = vunpack.c.l.b16 %v4692
      %v4815 = vunpack.c.l.b16 %v4706
      %v4816 = vunpack.c.l.b16 %v4716
      %v4817 = vunpack.c.l.b16 %v4730
      %v4818 = vunpack.c.l.b16 %v4740
      %v4819 = vunpack.c.l.b16 %v4754
      %v4820 = vunpack.c.l.b16 %v4764
      %v4821 = vunpack.c.l.b16 %v4778
      %v4822 = vunpack.c.l.b16 %v4788
      %v4823 = vpack.c.b16 %v4792, %v4791
      %v4824 = vpack.c.b16 %v4794, %v4793
      %v4825 = vpack.c.b16 %v4796, %v4795
      %v4826 = vpack.c.b16 %v4798, %v4797
      %v4827 = vpack.c.b16 %v4800, %v4799
      %v4828 = vpack.c.b16 %v4802, %v4801
      %v4829 = vpack.c.b16 %v4804, %v4803
      %v4830 = vpack.c.b16 %v4806, %v4805
      %v4831 = vpack.c.b16 %v4808, %v4807
      %v4832 = vpack.c.b16 %v4810, %v4809
      %v4833 = vpack.c.b16 %v4812, %v4811
      %v4834 = vpack.c.b16 %v4814, %v4813
      %v4835 = vpack.c.b16 %v4816, %v4815
      %v4836 = vpack.c.b16 %v4818, %v4817
      %v4837 = vpack.c.b16 %v4820, %v4819
      %v4838 = vpack.c.b16 %v4822, %v4821
      %v4840 = vsel %vm1481, %v4823, 0
      %v4843 = vsel %vm1481, %v4824, 0
      %v4846 = vsel %vm1481, %v4825, 0
      %v4849 = vsel %vm1481, %v4826, 0
      %v4852 = vsel %vm1481, %v4827, 0
      %v4855 = vsel %vm1481, %v4828, 0
      %v4858 = vsel %vm1481, %v4829, 0
      %v4861 = vsel %vm1481, %v4830, 0
      %v4864 = vsel %vm1481, %v4831, 0
      %v4867 = vsel %vm1481, %v4832, 0
      %v4870 = vsel %vm1481, %v4833, 0
      %v4873 = vsel %vm1481, %v4834, 0
      %v4876 = vsel %vm1481, %v4835, 0
      %v4879 = vsel %vm1481, %v4836, 0
      %v4882 = vsel %vm1481, %v4837, 0
      %v4885 = vsel %vm1481, %v4838, 0
      %v4888 = vsel %vm1530, %v4790, 0
      %4890 = vmatprep.subr.bf16.mxu0 0
      %4891 = vmatpush1.bf16.msra.mxu0 0
      %4892 = vmatprep.subr.bf16.mxu0 0
      %4893 = vmatpush1.bf16.msra.mxu0 0
      %4894 = vmatprep.subr.bf16.mxu0 0
      %4895 = vmatpush1.bf16.msra.mxu0 0
      %4896 = vmatprep.subr.bf16.mxu0 0
      %4897 = vmatpush1.bf16.msra.mxu0 0
      %4898 = vmatprep.subr.bf16.mxu0 0
      %4899 = vmatpush1.bf16.msra.mxu0 0
      %4900 = vmatprep.subr.bf16.mxu0 0
      %4901 = vmatpush1.bf16.msra.mxu0 0
      %4902 = vmatprep.subr.bf16.mxu0 0
      %4903 = vmatpush1.bf16.msra.mxu0 0
      %4904 = vmatprep.subr.bf16.mxu0 0
      %4905 = vmatpush1.bf16.msra.mxu0 %v4888
      %4906 = vmatprep.subr.bf16.mxu0 0
      %4907 = vmatpush2.bf16.msra.mxu0 0
      %4908 = vmatprep.subr.bf16.mxu0 0
      %4909 = vmatpush2.bf16.msra.mxu0 0
      %4910 = vmatprep.subr.bf16.mxu0 0
      %4911 = vmatpush2.bf16.msra.mxu0 0
      %4912 = vmatprep.subr.bf16.mxu0 0
      %4913 = vmatpush2.bf16.msra.mxu0 0
      %4914 = vmatprep.subr.bf16.mxu0 0
      %4915 = vmatpush2.bf16.msra.mxu0 0
      %4916 = vmatprep.subr.bf16.mxu0 0
      %4917 = vmatpush2.bf16.msra.mxu0 0
      %4918 = vmatprep.subr.bf16.mxu0 0
      %4919 = vmatpush2.bf16.msra.mxu0 0
      %4920 = vmatprep.subr.bf16.mxu0 0
      %4921 = vmatpush2.bf16.msra.mxu0 0
      %4922 = vmatprep.mubr.bf16.mxu0 0
      %4923 = vmatmul.mubr.bf16.gmra.mxu0 %v4840
      %v4924 = vpop.f32.mrf.mxu0
      %v4925 = vadd.f32 0.0, %v4924
      %v4926 = vpop.f32.mrf.mxu0
      %v4927 = vpop.f32.mrf.mxu0
      %v4928 = vadd.f32 0.0, %v4927
      %v4929 = vpop.f32.mrf.mxu0
      %4930 = vmatprep.mubr.bf16.mxu0 0
      %4931 = vmatmul.mubr.bf16.gmra.mxu0 %v4843
      %v4932 = vpop.f32.mrf.mxu0
      %v4933 = vadd.f32 0.0, %v4932
      %v4934 = vpop.f32.mrf.mxu0
      %v4935 = vpop.f32.mrf.mxu0
      %v4936 = vadd.f32 0.0, %v4935
      %v4937 = vpop.f32.mrf.mxu0
      %4938 = vmatprep.mubr.bf16.mxu0 0
      %4939 = vmatmul.mubr.bf16.gmra.mxu0 %v4846
      %v4940 = vpop.f32.mrf.mxu0
      %v4941 = vadd.f32 0.0, %v4940
      %v4942 = vpop.f32.mrf.mxu0
      %v4943 = vpop.f32.mrf.mxu0
      %v4944 = vadd.f32 0.0, %v4943
      %v4945 = vpop.f32.mrf.mxu0
      %4946 = vmatprep.mubr.bf16.mxu0 0
      %4947 = vmatmul.mubr.bf16.gmra.mxu0 %v4849
      %v4948 = vpop.f32.mrf.mxu0
      %v4949 = vadd.f32 0.0, %v4948
      %v4950 = vpop.f32.mrf.mxu0
      %v4951 = vpop.f32.mrf.mxu0
      %v4952 = vadd.f32 0.0, %v4951
      %v4953 = vpop.f32.mrf.mxu0
      %4954 = vmatprep.mubr.bf16.mxu0 0
      %4955 = vmatmul.mubr.bf16.gmra.mxu0 %v4852
      %v4956 = vpop.f32.mrf.mxu0
      %v4957 = vadd.f32 0.0, %v4956
      %v4958 = vpop.f32.mrf.mxu0
      %v4959 = vpop.f32.mrf.mxu0
      %v4960 = vadd.f32 0.0, %v4959
      %v4961 = vpop.f32.mrf.mxu0
      %4962 = vmatprep.mubr.bf16.mxu0 0
      %4963 = vmatmul.mubr.bf16.gmra.mxu0 %v4855
      %v4964 = vpop.f32.mrf.mxu0
      %v4965 = vadd.f32 0.0, %v4964
      %v4966 = vpop.f32.mrf.mxu0
      %v4967 = vpop.f32.mrf.mxu0
      %v4968 = vadd.f32 0.0, %v4967
      %v4969 = vpop.f32.mrf.mxu0
      %4970 = vmatprep.mubr.bf16.mxu0 0
      %4971 = vmatmul.mubr.bf16.gmra.mxu0 %v4858
      %v4972 = vpop.f32.mrf.mxu0
      %v4973 = vadd.f32 0.0, %v4972
      %v4974 = vpop.f32.mrf.mxu0
      %v4975 = vpop.f32.mrf.mxu0
      %v4976 = vadd.f32 0.0, %v4975
      %v4977 = vpop.f32.mrf.mxu0
      %4978 = vmatprep.mubr.bf16.mxu0 0
      %4979 = vmatmul.mubr.bf16.gmra.mxu0 %v4861
      %v4980 = vpop.f32.mrf.mxu0
      %v4981 = vadd.f32 0.0, %v4980
      %v4982 = vpop.f32.mrf.mxu0
      %v4983 = vpop.f32.mrf.mxu0
      %v4984 = vadd.f32 0.0, %v4983
      %v4985 = vpop.f32.mrf.mxu0
      %4986 = vmatprep.mubr.bf16.mxu0 0
      %4987 = vmatmul.mubr.bf16.gmra.mxu0 %v4864
      %v4988 = vpop.f32.mrf.mxu0
      %v4989 = vadd.f32 0.0, %v4988
      %v4990 = vpop.f32.mrf.mxu0
      %v4991 = vpop.f32.mrf.mxu0
      %v4992 = vadd.f32 0.0, %v4991
      %v4993 = vpop.f32.mrf.mxu0
      %4994 = vmatprep.mubr.bf16.mxu0 0
      %4995 = vmatmul.mubr.bf16.gmra.mxu0 %v4867
      %v4996 = vpop.f32.mrf.mxu0
      %v4997 = vadd.f32 0.0, %v4996
      %v4998 = vpop.f32.mrf.mxu0
      %v4999 = vpop.f32.mrf.mxu0
      %v5000 = vadd.f32 0.0, %v4999
      %v5001 = vpop.f32.mrf.mxu0
      %5002 = vmatprep.mubr.bf16.mxu0 0
      %5003 = vmatmul.mubr.bf16.gmra.mxu0 %v4870
      %v5004 = vpop.f32.mrf.mxu0
      %v5005 = vadd.f32 0.0, %v5004
      %v5006 = vpop.f32.mrf.mxu0
      %v5007 = vpop.f32.mrf.mxu0
      %v5008 = vadd.f32 0.0, %v5007
      %v5009 = vpop.f32.mrf.mxu0
      %5010 = vmatprep.mubr.bf16.mxu0 0
      %5011 = vmatmul.mubr.bf16.gmra.mxu0 %v4873
      %v5012 = vpop.f32.mrf.mxu0
      %v5013 = vadd.f32 0.0, %v5012
      %v5014 = vpop.f32.mrf.mxu0
      %v5015 = vpop.f32.mrf.mxu0
      %v5016 = vadd.f32 0.0, %v5015
      %v5017 = vpop.f32.mrf.mxu0
      %5018 = vmatprep.mubr.bf16.mxu0 0
      %5019 = vmatmul.mubr.bf16.gmra.mxu0 %v4876
      %v5020 = vpop.f32.mrf.mxu0
      %v5021 = vadd.f32 0.0, %v5020
      %v5022 = vpop.f32.mrf.mxu0
      %v5023 = vpop.f32.mrf.mxu0
      %v5024 = vadd.f32 0.0, %v5023
      %v5025 = vpop.f32.mrf.mxu0
      %5026 = vmatprep.mubr.bf16.mxu0 0
      %5027 = vmatmul.mubr.bf16.gmra.mxu0 %v4879
      %v5028 = vpop.f32.mrf.mxu0
      %v5029 = vadd.f32 0.0, %v5028
      %v5030 = vpop.f32.mrf.mxu0
      %v5031 = vpop.f32.mrf.mxu0
      %v5032 = vadd.f32 0.0, %v5031
      %v5033 = vpop.f32.mrf.mxu0
      %5034 = vmatprep.mubr.bf16.mxu0 0
      %5035 = vmatmul.mubr.bf16.gmra.mxu0 %v4882
      %v5036 = vpop.f32.mrf.mxu0
      %v5037 = vadd.f32 0.0, %v5036
      %v5038 = vpop.f32.mrf.mxu0
      %v5039 = vpop.f32.mrf.mxu0
      %v5040 = vadd.f32 0.0, %v5039
      %v5041 = vpop.f32.mrf.mxu0
      %5042 = vmatprep.mubr.bf16.mxu0 0
      %5043 = vmatmul.mubr.bf16.gmra.mxu0 %v4885
      %v5044 = vpop.f32.mrf.mxu0
      %v5045 = vadd.f32 0.0, %v5044
      %v5046 = vpop.f32.mrf.mxu0
      %v5047 = vpop.f32.mrf.mxu0
      %v5048 = vadd.f32 0.0, %v5047
      %v5049 = vpop.f32.mrf.mxu0
      %5050 = vdwg.mxu0
      %v5051 = vadd.f32 %v4325, %v4925
      %v5052 = vadd.f32 %v4326, %v4928
      %v5053 = vadd.f32 %v4327, %v4933
      %v5054 = vadd.f32 %v4328, %v4936
      %v5055 = vadd.f32 %v4329, %v4941
      %v5056 = vadd.f32 %v4330, %v4944
      %v5057 = vadd.f32 %v4331, %v4949
      %v5058 = vadd.f32 %v4332, %v4952
      %v5059 = vadd.f32 %v4333, %v4957
      %v5060 = vadd.f32 %v4334, %v4960
      %v5061 = vadd.f32 %v4335, %v4965
      %v5062 = vadd.f32 %v4336, %v4968
      %v5063 = vadd.f32 %v4337, %v4973
      %v5064 = vadd.f32 %v4338, %v4976
      %v5065 = vadd.f32 %v4339, %v4981
      %v5066 = vadd.f32 %v4340, %v4984
      %v5067 = vadd.f32 %v4341, %v4989
      %v5068 = vadd.f32 %v4342, %v4992
      %v5069 = vadd.f32 %v4343, %v4997
      %v5070 = vadd.f32 %v4344, %v5000
      %v5071 = vadd.f32 %v4345, %v5005
      %v5072 = vadd.f32 %v4346, %v5008
      %v5073 = vadd.f32 %v4347, %v5013
      %v5074 = vadd.f32 %v4348, %v5016
      %v5075 = vadd.f32 %v4349, %v5021
      %v5076 = vadd.f32 %v4350, %v5024
      %v5077 = vadd.f32 %v4351, %v5029
      %v5078 = vadd.f32 %v4352, %v5032
      %v5079 = vadd.f32 %v4353, %v5037
      %v5080 = vadd.f32 %v4354, %v5040
      %v5081 = vadd.f32 %v4355, %v5045
      %v5082 = vadd.f32 %v4356, %v5048
      %v5083 = vld [vmem:[%s3998] sm:$0xe]
      %v5084 = vld [vmem:[%s3998 + $0xc] sm:$0xe]
      %v5085 = vld [vmem:[%s3998 + $0x18] sm:$0xe]
      %v5086 = vld [vmem:[%s3998 + $0x24] sm:$0xe]
      %v5087 = vld [vmem:[%s3998 + $0x30] sm:$0xe]
      %v5088 = vld [vmem:[%s3998 + $0x3c] sm:$0xe]
      %v5089 = vld [vmem:[%s3998 + $0x48] sm:$0xe]
      %v5090 = vld [vmem:[%s3998 + $0x54] sm:$0xe]
      %v5091 = vld [vmem:[%s3998 + $0x60] sm:$0xe]
      %v5092 = vld [vmem:[%s3998 + $0x6c] sm:$0xe]
      %v5093 = vld [vmem:[%s3998 + $0x78] sm:$0xe]
      %v5094 = vld [vmem:[%s3998 + $0x84] sm:$0xe]
      %v5095 = vld [vmem:[%s3998 + $0x90] sm:$0xe]
      %v5096 = vld [vmem:[%s3998 + $0x9c] sm:$0xe]
      %v5097 = vld [vmem:[%s3998 + $0xa8] sm:$0xe]
      %v5098 = vld [vmem:[%s3998 + $0xb4] sm:$0xe]
      %v5147 = vrot.slane %v5083, 5
      %v5148 = vrot.slane %v5147, 4
      %v5149 = vrot.slane %v4358, 5
      %v5150 = vsel %vm2037, %v5148, %v5149
      %v5151 = vrot.slane %v5149, 4
      %v5152 = vrot.slane %v4359, 5
      %v5153 = vsel %vm2037, %v5151, %v5152
      %v5154 = vrot.slane %v5084, 5
      %v5155 = vrot.slane %v5154, 4
      %v5156 = vrot.slane %v4361, 5
      %v5157 = vsel %vm2037, %v5155, %v5156
      %v5158 = vrot.slane %v5156, 4
      %v5159 = vrot.slane %v4362, 5
      %v5160 = vsel %vm2037, %v5158, %v5159
      %v5161 = vrot.slane %v5085, 5
      %v5162 = vrot.slane %v5161, 4
      %v5163 = vrot.slane %v4364, 5
      %v5164 = vsel %vm2037, %v5162, %v5163
      %v5165 = vrot.slane %v5163, 4
      %v5166 = vrot.slane %v4365, 5
      %v5167 = vsel %vm2037, %v5165, %v5166
      %v5168 = vrot.slane %v5086, 5
      %v5169 = vrot.slane %v5168, 4
      %v5170 = vrot.slane %v4367, 5
      %v5171 = vsel %vm2037, %v5169, %v5170
      %v5172 = vrot.slane %v5170, 4
      %v5173 = vrot.slane %v4368, 5
      %v5174 = vsel %vm2037, %v5172, %v5173
      %v5175 = vrot.slane %v5087, 5
      %v5176 = vrot.slane %v5175, 4
      %v5177 = vrot.slane %v4370, 5
      %v5178 = vsel %vm2037, %v5176, %v5177
      %v5179 = vrot.slane %v5177, 4
      %v5180 = vrot.slane %v4371, 5
      %v5181 = vsel %vm2037, %v5179, %v5180
      %v5182 = vrot.slane %v5088, 5
      %v5183 = vrot.slane %v5182, 4
      %v5184 = vrot.slane %v4373, 5
      %v5185 = vsel %vm2037, %v5183, %v5184
      %v5186 = vrot.slane %v5184, 4
      %v5187 = vrot.slane %v4374, 5
      %v5188 = vsel %vm2037, %v5186, %v5187
      %v5189 = vrot.slane %v5089, 5
      %v5190 = vrot.slane %v5189, 4
      %v5191 = vrot.slane %v4376, 5
      %v5192 = vsel %vm2037, %v5190, %v5191
      %v5193 = vrot.slane %v5191, 4
      %v5194 = vrot.slane %v4377, 5
      %v5195 = vsel %vm2037, %v5193, %v5194
      %v5196 = vrot.slane %v5090, 5
      %v5197 = vrot.slane %v5196, 4
      %v5198 = vrot.slane %v4379, 5
      %v5199 = vsel %vm2037, %v5197, %v5198
      %v5200 = vrot.slane %v5198, 4
      %v5201 = vrot.slane %v4380, 5
      %v5202 = vsel %vm2037, %v5200, %v5201
      %v5203 = vrot.slane %v5091, 5
      %v5204 = vrot.slane %v5203, 4
      %v5205 = vrot.slane %v4382, 5
      %v5206 = vsel %vm2037, %v5204, %v5205
      %v5207 = vrot.slane %v5205, 4
      %v5208 = vrot.slane %v4383, 5
      %v5209 = vsel %vm2037, %v5207, %v5208
      %v5210 = vrot.slane %v5092, 5
      %v5211 = vrot.slane %v5210, 4
      %v5212 = vrot.slane %v4385, 5
      %v5213 = vsel %vm2037, %v5211, %v5212
      %v5214 = vrot.slane %v5212, 4
      %v5215 = vrot.slane %v4386, 5
      %v5216 = vsel %vm2037, %v5214, %v5215
      %v5217 = vrot.slane %v5093, 5
      %v5218 = vrot.slane %v5217, 4
      %v5219 = vrot.slane %v4388, 5
      %v5220 = vsel %vm2037, %v5218, %v5219
      %v5221 = vrot.slane %v5219, 4
      %v5222 = vrot.slane %v4389, 5
      %v5223 = vsel %vm2037, %v5221, %v5222
      %v5224 = vrot.slane %v5094, 5
      %v5225 = vrot.slane %v5224, 4
      %v5226 = vrot.slane %v4391, 5
      %v5227 = vsel %vm2037, %v5225, %v5226
      %v5228 = vrot.slane %v5226, 4
      %v5229 = vrot.slane %v4392, 5
      %v5230 = vsel %vm2037, %v5228, %v5229
      %v5231 = vrot.slane %v5095, 5
      %v5232 = vrot.slane %v5231, 4
      %v5233 = vrot.slane %v4394, 5
      %v5234 = vsel %vm2037, %v5232, %v5233
      %v5235 = vrot.slane %v5233, 4
      %v5236 = vrot.slane %v4395, 5
      %v5237 = vsel %vm2037, %v5235, %v5236
      %v5238 = vrot.slane %v5096, 5
      %v5239 = vrot.slane %v5238, 4
      %v5240 = vrot.slane %v4397, 5
      %v5241 = vsel %vm2037, %v5239, %v5240
      %v5242 = vrot.slane %v5240, 4
      %v5243 = vrot.slane %v4398, 5
      %v5244 = vsel %vm2037, %v5242, %v5243
      %v5245 = vrot.slane %v5097, 5
      %v5246 = vrot.slane %v5245, 4
      %v5247 = vrot.slane %v4400, 5
      %v5248 = vsel %vm2037, %v5246, %v5247
      %v5249 = vrot.slane %v5247, 4
      %v5250 = vrot.slane %v4401, 5
      %v5251 = vsel %vm2037, %v5249, %v5250
      %v5252 = vrot.slane %v5098, 5
      %v5253 = vrot.slane %v5252, 4
      %v5254 = vrot.slane %v4403, 5
      %v5255 = vsel %vm2037, %v5253, %v5254
      %v5256 = vrot.slane %v5254, 4
      %v5257 = vrot.slane %v4404, 5
      %v5258 = vsel %vm2037, %v5256, %v5257
      %s5259 = scalar_lea.vmem %s3, 16
      %v5260 = vld [vmem:[%s5259] sm:$0x3]
      %v5261 = vunpack.c.l.b16 %v5150
      %v5262 = vunpack.c.l.b16 %v5153
      %v5263 = vunpack.c.l.b16 %v5157
      %v5264 = vunpack.c.l.b16 %v5160
      %v5265 = vunpack.c.l.b16 %v5164
      %v5266 = vunpack.c.l.b16 %v5167
      %v5267 = vunpack.c.l.b16 %v5171
      %v5268 = vunpack.c.l.b16 %v5174
      %v5269 = vunpack.c.l.b16 %v5178
      %v5270 = vunpack.c.l.b16 %v5181
      %v5271 = vunpack.c.l.b16 %v5185
      %v5272 = vunpack.c.l.b16 %v5188
      %v5273 = vunpack.c.l.b16 %v5192
      %v5274 = vunpack.c.l.b16 %v5195
      %v5275 = vunpack.c.l.b16 %v5199
      %v5276 = vunpack.c.l.b16 %v5202
      %v5277 = vunpack.c.l.b16 %v5206
      %v5278 = vunpack.c.l.b16 %v5209
      %v5279 = vunpack.c.l.b16 %v5213
      %v5280 = vunpack.c.l.b16 %v5216
      %v5281 = vunpack.c.l.b16 %v5220
      %v5282 = vunpack.c.l.b16 %v5223
      %v5283 = vunpack.c.l.b16 %v5227
      %v5284 = vunpack.c.l.b16 %v5230
      %v5285 = vunpack.c.l.b16 %v5234
      %v5286 = vunpack.c.l.b16 %v5237
      %v5287 = vunpack.c.l.b16 %v5241
      %v5288 = vunpack.c.l.b16 %v5244
      %v5289 = vunpack.c.l.b16 %v5248
      %v5290 = vunpack.c.l.b16 %v5251
      %v5291 = vunpack.c.l.b16 %v5255
      %v5292 = vunpack.c.l.b16 %v5258
      %v5293 = vpack.c.b16 %v5262, %v5261
      %v5294 = vpack.c.b16 %v5264, %v5263
      %v5295 = vpack.c.b16 %v5266, %v5265
      %v5296 = vpack.c.b16 %v5268, %v5267
      %v5297 = vpack.c.b16 %v5270, %v5269
      %v5298 = vpack.c.b16 %v5272, %v5271
      %v5299 = vpack.c.b16 %v5274, %v5273
      %v5300 = vpack.c.b16 %v5276, %v5275
      %v5301 = vpack.c.b16 %v5278, %v5277
      %v5302 = vpack.c.b16 %v5280, %v5279
      %v5303 = vpack.c.b16 %v5282, %v5281
      %v5304 = vpack.c.b16 %v5284, %v5283
      %v5305 = vpack.c.b16 %v5286, %v5285
      %v5306 = vpack.c.b16 %v5288, %v5287
      %v5307 = vpack.c.b16 %v5290, %v5289
      %v5308 = vpack.c.b16 %v5292, %v5291
      %v5310 = vsel %vm1481, %v5293, 0
      %v5313 = vsel %vm1481, %v5294, 0
      %v5316 = vsel %vm1481, %v5295, 0
      %v5319 = vsel %vm1481, %v5296, 0
      %v5322 = vsel %vm1481, %v5297, 0
      %v5325 = vsel %vm1481, %v5298, 0
      %v5328 = vsel %vm1481, %v5299, 0
      %v5331 = vsel %vm1481, %v5300, 0
      %v5334 = vsel %vm1481, %v5301, 0
      %v5337 = vsel %vm1481, %v5302, 0
      %v5340 = vsel %vm1481, %v5303, 0
      %v5343 = vsel %vm1481, %v5304, 0
      %v5346 = vsel %vm1481, %v5305, 0
      %v5349 = vsel %vm1481, %v5306, 0
      %v5352 = vsel %vm1481, %v5307, 0
      %v5355 = vsel %vm1481, %v5308, 0
      %v5358 = vsel %vm1530, %v5260, 0
      %5360 = vmatprep.subr.bf16.mxu0 0
      %5361 = vmatpush1.bf16.msra.mxu0 0
      %5362 = vmatprep.subr.bf16.mxu0 0
      %5363 = vmatpush1.bf16.msra.mxu0 0
      %5364 = vmatprep.subr.bf16.mxu0 0
      %5365 = vmatpush1.bf16.msra.mxu0 0
      %5366 = vmatprep.subr.bf16.mxu0 0
      %5367 = vmatpush1.bf16.msra.mxu0 0
      %5368 = vmatprep.subr.bf16.mxu0 0
      %5369 = vmatpush1.bf16.msra.mxu0 0
      %5370 = vmatprep.subr.bf16.mxu0 0
      %5371 = vmatpush1.bf16.msra.mxu0 0
      %5372 = vmatprep.subr.bf16.mxu0 0
      %5373 = vmatpush1.bf16.msra.mxu0 0
      %5374 = vmatprep.subr.bf16.mxu0 0
      %5375 = vmatpush1.bf16.msra.mxu0 %v5358
      %5376 = vmatprep.subr.bf16.mxu0 0
      %5377 = vmatpush2.bf16.msra.mxu0 0
      %5378 = vmatprep.subr.bf16.mxu0 0
      %5379 = vmatpush2.bf16.msra.mxu0 0
      %5380 = vmatprep.subr.bf16.mxu0 0
      %5381 = vmatpush2.bf16.msra.mxu0 0
      %5382 = vmatprep.subr.bf16.mxu0 0
      %5383 = vmatpush2.bf16.msra.mxu0 0
      %5384 = vmatprep.subr.bf16.mxu0 0
      %5385 = vmatpush2.bf16.msra.mxu0 0
      %5386 = vmatprep.subr.bf16.mxu0 0
      %5387 = vmatpush2.bf16.msra.mxu0 0
      %5388 = vmatprep.subr.bf16.mxu0 0
      %5389 = vmatpush2.bf16.msra.mxu0 0
      %5390 = vmatprep.subr.bf16.mxu0 0
      %5391 = vmatpush2.bf16.msra.mxu0 0
      %5392 = vmatprep.mubr.bf16.mxu0 0
      %5393 = vmatmul.mubr.bf16.gmra.mxu0 %v5310
      %v5394 = vpop.f32.mrf.mxu0
      %v5395 = vadd.f32 0.0, %v5394
      %v5396 = vpop.f32.mrf.mxu0
      %v5397 = vpop.f32.mrf.mxu0
      %v5398 = vadd.f32 0.0, %v5397
      %v5399 = vpop.f32.mrf.mxu0
      %5400 = vmatprep.mubr.bf16.mxu0 0
      %5401 = vmatmul.mubr.bf16.gmra.mxu0 %v5313
      %v5402 = vpop.f32.mrf.mxu0
      %v5403 = vadd.f32 0.0, %v5402
      %v5404 = vpop.f32.mrf.mxu0
      %v5405 = vpop.f32.mrf.mxu0
      %v5406 = vadd.f32 0.0, %v5405
      %v5407 = vpop.f32.mrf.mxu0
      %5408 = vmatprep.mubr.bf16.mxu0 0
      %5409 = vmatmul.mubr.bf16.gmra.mxu0 %v5316
      %v5410 = vpop.f32.mrf.mxu0
      %v5411 = vadd.f32 0.0, %v5410
      %v5412 = vpop.f32.mrf.mxu0
      %v5413 = vpop.f32.mrf.mxu0
      %v5414 = vadd.f32 0.0, %v5413
      %v5415 = vpop.f32.mrf.mxu0
      %5416 = vmatprep.mubr.bf16.mxu0 0
      %5417 = vmatmul.mubr.bf16.gmra.mxu0 %v5319
      %v5418 = vpop.f32.mrf.mxu0
      %v5419 = vadd.f32 0.0, %v5418
      %v5420 = vpop.f32.mrf.mxu0
      %v5421 = vpop.f32.mrf.mxu0
      %v5422 = vadd.f32 0.0, %v5421
      %v5423 = vpop.f32.mrf.mxu0
      %5424 = vmatprep.mubr.bf16.mxu0 0
      %5425 = vmatmul.mubr.bf16.gmra.mxu0 %v5322
      %v5426 = vpop.f32.mrf.mxu0
      %v5427 = vadd.f32 0.0, %v5426
      %v5428 = vpop.f32.mrf.mxu0
      %v5429 = vpop.f32.mrf.mxu0
      %v5430 = vadd.f32 0.0, %v5429
      %v5431 = vpop.f32.mrf.mxu0
      %5432 = vmatprep.mubr.bf16.mxu0 0
      %5433 = vmatmul.mubr.bf16.gmra.mxu0 %v5325
      %v5434 = vpop.f32.mrf.mxu0
      %v5435 = vadd.f32 0.0, %v5434
      %v5436 = vpop.f32.mrf.mxu0
      %v5437 = vpop.f32.mrf.mxu0
      %v5438 = vadd.f32 0.0, %v5437
      %v5439 = vpop.f32.mrf.mxu0
      %5440 = vmatprep.mubr.bf16.mxu0 0
      %5441 = vmatmul.mubr.bf16.gmra.mxu0 %v5328
      %v5442 = vpop.f32.mrf.mxu0
      %v5443 = vadd.f32 0.0, %v5442
      %v5444 = vpop.f32.mrf.mxu0
      %v5445 = vpop.f32.mrf.mxu0
      %v5446 = vadd.f32 0.0, %v5445
      %v5447 = vpop.f32.mrf.mxu0
      %5448 = vmatprep.mubr.bf16.mxu0 0
      %5449 = vmatmul.mubr.bf16.gmra.mxu0 %v5331
      %v5450 = vpop.f32.mrf.mxu0
      %v5451 = vadd.f32 0.0, %v5450
      %v5452 = vpop.f32.mrf.mxu0
      %v5453 = vpop.f32.mrf.mxu0
      %v5454 = vadd.f32 0.0, %v5453
      %v5455 = vpop.f32.mrf.mxu0
      %5456 = vmatprep.mubr.bf16.mxu0 0
      %5457 = vmatmul.mubr.bf16.gmra.mxu0 %v5334
      %v5458 = vpop.f32.mrf.mxu0
      %v5459 = vadd.f32 0.0, %v5458
      %v5460 = vpop.f32.mrf.mxu0
      %v5461 = vpop.f32.mrf.mxu0
      %v5462 = vadd.f32 0.0, %v5461
      %v5463 = vpop.f32.mrf.mxu0
      %5464 = vmatprep.mubr.bf16.mxu0 0
      %5465 = vmatmul.mubr.bf16.gmra.mxu0 %v5337
      %v5466 = vpop.f32.mrf.mxu0
      %v5467 = vadd.f32 0.0, %v5466
      %v5468 = vpop.f32.mrf.mxu0
      %v5469 = vpop.f32.mrf.mxu0
      %v5470 = vadd.f32 0.0, %v5469
      %v5471 = vpop.f32.mrf.mxu0
      %5472 = vmatprep.mubr.bf16.mxu0 0
      %5473 = vmatmul.mubr.bf16.gmra.mxu0 %v5340
      %v5474 = vpop.f32.mrf.mxu0
      %v5475 = vadd.f32 0.0, %v5474
      %v5476 = vpop.f32.mrf.mxu0
      %v5477 = vpop.f32.mrf.mxu0
      %v5478 = vadd.f32 0.0, %v5477
      %v5479 = vpop.f32.mrf.mxu0
      %5480 = vmatprep.mubr.bf16.mxu0 0
      %5481 = vmatmul.mubr.bf16.gmra.mxu0 %v5343
      %v5482 = vpop.f32.mrf.mxu0
      %v5483 = vadd.f32 0.0, %v5482
      %v5484 = vpop.f32.mrf.mxu0
      %v5485 = vpop.f32.mrf.mxu0
      %v5486 = vadd.f32 0.0, %v5485
      %v5487 = vpop.f32.mrf.mxu0
      %5488 = vmatprep.mubr.bf16.mxu0 0
      %5489 = vmatmul.mubr.bf16.gmra.mxu0 %v5346
      %v5490 = vpop.f32.mrf.mxu0
      %v5491 = vadd.f32 0.0, %v5490
      %v5492 = vpop.f32.mrf.mxu0
      %v5493 = vpop.f32.mrf.mxu0
      %v5494 = vadd.f32 0.0, %v5493
      %v5495 = vpop.f32.mrf.mxu0
      %5496 = vmatprep.mubr.bf16.mxu0 0
      %5497 = vmatmul.mubr.bf16.gmra.mxu0 %v5349
      %v5498 = vpop.f32.mrf.mxu0
      %v5499 = vadd.f32 0.0, %v5498
      %v5500 = vpop.f32.mrf.mxu0
      %v5501 = vpop.f32.mrf.mxu0
      %v5502 = vadd.f32 0.0, %v5501
      %v5503 = vpop.f32.mrf.mxu0
      %5504 = vmatprep.mubr.bf16.mxu0 0
      %5505 = vmatmul.mubr.bf16.gmra.mxu0 %v5352
      %v5506 = vpop.f32.mrf.mxu0
      %v5507 = vadd.f32 0.0, %v5506
      %v5508 = vpop.f32.mrf.mxu0
      %v5509 = vpop.f32.mrf.mxu0
      %v5510 = vadd.f32 0.0, %v5509
      %v5511 = vpop.f32.mrf.mxu0
      %5512 = vmatprep.mubr.bf16.mxu0 0
      %5513 = vmatmul.mubr.bf16.gmra.mxu0 %v5355
      %v5514 = vpop.f32.mrf.mxu0
      %v5515 = vadd.f32 0.0, %v5514
      %v5516 = vpop.f32.mrf.mxu0
      %v5517 = vpop.f32.mrf.mxu0
      %v5518 = vadd.f32 0.0, %v5517
      %v5519 = vpop.f32.mrf.mxu0
      %5520 = vdwg.mxu0
      %v5521 = vadd.f32 %v5051, %v5395
      %v5522 = vadd.f32 %v5052, %v5398
      %v5523 = vadd.f32 %v5053, %v5403
      %v5524 = vadd.f32 %v5054, %v5406
      %v5525 = vadd.f32 %v5055, %v5411
      %v5526 = vadd.f32 %v5056, %v5414
      %v5527 = vadd.f32 %v5057, %v5419
      %v5528 = vadd.f32 %v5058, %v5422
      %v5529 = vadd.f32 %v5059, %v5427
      %v5530 = vadd.f32 %v5060, %v5430
      %v5531 = vadd.f32 %v5061, %v5435
      %v5532 = vadd.f32 %v5062, %v5438
      %v5533 = vadd.f32 %v5063, %v5443
      %v5534 = vadd.f32 %v5064, %v5446
      %v5535 = vadd.f32 %v5065, %v5451
      %v5536 = vadd.f32 %v5066, %v5454
      %v5537 = vadd.f32 %v5067, %v5459
      %v5538 = vadd.f32 %v5068, %v5462
      %v5539 = vadd.f32 %v5069, %v5467
      %v5540 = vadd.f32 %v5070, %v5470
      %v5541 = vadd.f32 %v5071, %v5475
      %v5542 = vadd.f32 %v5072, %v5478
      %v5543 = vadd.f32 %v5073, %v5483
      %v5544 = vadd.f32 %v5074, %v5486
      %v5545 = vadd.f32 %v5075, %v5491
      %v5546 = vadd.f32 %v5076, %v5494
      %v5547 = vadd.f32 %v5077, %v5499
      %v5548 = vadd.f32 %v5078, %v5502
      %v5549 = vadd.f32 %v5079, %v5507
      %v5550 = vadd.f32 %v5080, %v5510
      %v5551 = vadd.f32 %v5081, %v5515
      %v5552 = vadd.f32 %v5082, %v5518
      %v5553 = vpack.c.bf16 %v5522, %v5521
      %v5554 = vpack.c.bf16 %v5524, %v5523
      %v5555 = vpack.c.bf16 %v5526, %v5525
      %v5556 = vpack.c.bf16 %v5528, %v5527
      %v5557 = vpack.c.bf16 %v5530, %v5529
      %v5558 = vpack.c.bf16 %v5532, %v5531
      %v5559 = vpack.c.bf16 %v5534, %v5533
      %v5560 = vpack.c.bf16 %v5536, %v5535
      %v5561 = vpack.c.bf16 %v5538, %v5537
      %v5562 = vpack.c.bf16 %v5540, %v5539
      %v5563 = vpack.c.bf16 %v5542, %v5541
      %v5564 = vpack.c.bf16 %v5544, %v5543
      %v5565 = vpack.c.bf16 %v5546, %v5545
      %v5566 = vpack.c.bf16 %v5548, %v5547
      %v5567 = vpack.c.bf16 %v5550, %v5549
      %v5568 = vpack.c.bf16 %v5552, %v5551
      %v5585 = vunpack.c.l.b16 %v5553
      %v5586 = vunpack.c.h.b16 %v5553
      %v5587 = vunpack.c.l.b16 %v5554
      %v5588 = vunpack.c.h.b16 %v5554
      %v5589 = vunpack.c.l.b16 %v5555
      %v5590 = vunpack.c.h.b16 %v5555
      %v5591 = vunpack.c.l.b16 %v5556
      %v5592 = vunpack.c.h.b16 %v5556
      %v5593 = vunpack.c.l.b16 %v5557
      %v5594 = vunpack.c.h.b16 %v5557
      %v5595 = vunpack.c.l.b16 %v5558
      %v5596 = vunpack.c.h.b16 %v5558
      %v5597 = vunpack.c.l.b16 %v5559
      %v5598 = vunpack.c.h.b16 %v5559
      %v5599 = vunpack.c.l.b16 %v5560
      %v5600 = vunpack.c.h.b16 %v5560
      %v5601 = vunpack.c.l.b16 %v5561
      %v5602 = vunpack.c.h.b16 %v5561
      %v5603 = vunpack.c.l.b16 %v5562
      %v5604 = vunpack.c.h.b16 %v5562
      %v5605 = vunpack.c.l.b16 %v5563
      %v5606 = vunpack.c.h.b16 %v5563
      %v5607 = vunpack.c.l.b16 %v5564
      %v5608 = vunpack.c.h.b16 %v5564
      %v5609 = vunpack.c.l.b16 %v5565
      %v5610 = vunpack.c.h.b16 %v5565
      %v5611 = vunpack.c.l.b16 %v5566
      %v5612 = vunpack.c.h.b16 %v5566
      %v5613 = vunpack.c.l.b16 %v5567
      %v5614 = vunpack.c.h.b16 %v5567
      %v5615 = vunpack.c.l.b16 %v5568
      %v5616 = vunpack.c.h.b16 %v5568
      %v5617 = vpack.c.b16 %v5585, %v5585
      %v5618 = vpack.c.b16 %v5586, %v5586
      %v5619 = vpack.c.b16 %v5587, %v5587
      %v5620 = vpack.c.b16 %v5588, %v5588
      %v5621 = vpack.c.b16 %v5589, %v5589
      %v5622 = vpack.c.b16 %v5590, %v5590
      %v5623 = vpack.c.b16 %v5591, %v5591
      %v5624 = vpack.c.b16 %v5592, %v5592
      %v5625 = vpack.c.b16 %v5593, %v5593
      %v5626 = vpack.c.b16 %v5594, %v5594
      %v5627 = vpack.c.b16 %v5595, %v5595
      %v5628 = vpack.c.b16 %v5596, %v5596
      %v5629 = vpack.c.b16 %v5597, %v5597
      %v5630 = vpack.c.b16 %v5598, %v5598
      %v5631 = vpack.c.b16 %v5599, %v5599
      %v5632 = vpack.c.b16 %v5600, %v5600
      %v5633 = vpack.c.b16 %v5601, %v5601
      %v5634 = vpack.c.b16 %v5602, %v5602
      %v5635 = vpack.c.b16 %v5603, %v5603
      %v5636 = vpack.c.b16 %v5604, %v5604
      %v5637 = vpack.c.b16 %v5605, %v5605
      %v5638 = vpack.c.b16 %v5606, %v5606
      %v5639 = vpack.c.b16 %v5607, %v5607
      %v5640 = vpack.c.b16 %v5608, %v5608
      %v5641 = vpack.c.b16 %v5609, %v5609
      %v5642 = vpack.c.b16 %v5610, %v5610
      %v5643 = vpack.c.b16 %v5611, %v5611
      %v5644 = vpack.c.b16 %v5612, %v5612
      %v5645 = vpack.c.b16 %v5613, %v5613
      %v5646 = vpack.c.b16 %v5614, %v5614
      %v5647 = vpack.c.b16 %v5615, %v5615
      %v5648 = vpack.c.b16 %v5616, %v5616
      %5681 = vst.msk [vmem:[%s222] sm:$0xf] %vm883, %v5617
      %5682 = vst.msk [vmem:[%s222 + $0x4] sm:$0xf] %vm883, %v5618
      %5683 = vst.msk [vmem:[%s222 + $0x8] sm:$0xf] %vm883, %v5619
      %5684 = vst.msk [vmem:[%s222 + $0xc] sm:$0xf] %vm883, %v5620
      %5685 = vst.msk [vmem:[%s222 + $0x10] sm:$0xf] %vm883, %v5621
      %5686 = vst.msk [vmem:[%s222 + $0x14] sm:$0xf] %vm883, %v5622
      %5687 = vst.msk [vmem:[%s222 + $0x18] sm:$0xf] %vm883, %v5623
      %5688 = vst.msk [vmem:[%s222 + $0x1c] sm:$0xf] %vm883, %v5624
      %5689 = vst.msk [vmem:[%s222 + $0x20] sm:$0xf] %vm883, %v5625
      %5690 = vst.msk [vmem:[%s222 + $0x24] sm:$0xf] %vm883, %v5626
      %5691 = vst.msk [vmem:[%s222 + $0x28] sm:$0xf] %vm883, %v5627
      %5692 = vst.msk [vmem:[%s222 + $0x2c] sm:$0xf] %vm883, %v5628
      %5693 = vst.msk [vmem:[%s222 + $0x30] sm:$0xf] %vm883, %v5629
      %5694 = vst.msk [vmem:[%s222 + $0x34] sm:$0xf] %vm883, %v5630
      %5695 = vst.msk [vmem:[%s222 + $0x38] sm:$0xf] %vm883, %v5631
      %5696 = vst.msk [vmem:[%s222 + $0x3c] sm:$0xf] %vm883, %v5632
      %5697 = vst.msk [vmem:[%s222 + $0x40] sm:$0xf] %vm883, %v5633
      %5698 = vst.msk [vmem:[%s222 + $0x44] sm:$0xf] %vm883, %v5634
      %5699 = vst.msk [vmem:[%s222 + $0x48] sm:$0xf] %vm883, %v5635
      %5700 = vst.msk [vmem:[%s222 + $0x4c] sm:$0xf] %vm883, %v5636
      %5701 = vst.msk [vmem:[%s222 + $0x50] sm:$0xf] %vm883, %v5637
      %5702 = vst.msk [vmem:[%s222 + $0x54] sm:$0xf] %vm883, %v5638
      %5703 = vst.msk [vmem:[%s222 + $0x58] sm:$0xf] %vm883, %v5639
      %5704 = vst.msk [vmem:[%s222 + $0x5c] sm:$0xf] %vm883, %v5640
      %5705 = vst.msk [vmem:[%s222 + $0x60] sm:$0xf] %vm883, %v5641
      %5706 = vst.msk [vmem:[%s222 + $0x64] sm:$0xf] %vm883, %v5642
      %5707 = vst.msk [vmem:[%s222 + $0x68] sm:$0xf] %vm883, %v5643
      %5708 = vst.msk [vmem:[%s222 + $0x6c] sm:$0xf] %vm883, %v5644
      %5709 = vst.msk [vmem:[%s222 + $0x70] sm:$0xf] %vm883, %v5645
      %5710 = vst.msk [vmem:[%s222 + $0x74] sm:$0xf] %vm883, %v5646
      %5711 = vst.msk [vmem:[%s222 + $0x78] sm:$0xf] %vm883, %v5647
      %5712 = vst.msk [vmem:[%s222 + $0x7c] sm:$0xf] %vm883, %v5648
      %v5713 = vsel %vm1481, %v5521, 0.0
      %v5714 = vsel %vm1481, %v5522, 0.0
      %v5715 = vadd.f32 %v5713, %v5714
      %v5716 = vsel %vm1481, %v5523, 0.0
      %v5717 = vadd.f32 %v5715, %v5716
      %v5718 = vsel %vm1481, %v5524, 0.0
      %v5719 = vadd.f32 %v5717, %v5718
      %v5720 = vsel %vm1481, %v5525, 0.0
      %v5721 = vadd.f32 %v5719, %v5720
      %v5722 = vsel %vm1481, %v5526, 0.0
      %v5723 = vadd.f32 %v5721, %v5722
      %v5724 = vsel %vm1481, %v5527, 0.0
      %v5725 = vadd.f32 %v5723, %v5724
      %v5726 = vsel %vm1481, %v5528, 0.0
      %v5727 = vadd.f32 %v5725, %v5726
      %v5728 = vsel %vm1481, %v5529, 0.0
      %v5729 = vadd.f32 %v5727, %v5728
      %v5730 = vsel %vm1481, %v5530, 0.0
      %v5731 = vadd.f32 %v5729, %v5730
      %v5732 = vsel %vm1481, %v5531, 0.0
      %v5733 = vadd.f32 %v5731, %v5732
      %v5734 = vsel %vm1481, %v5532, 0.0
      %v5735 = vadd.f32 %v5733, %v5734
      %v5736 = vsel %vm1481, %v5533, 0.0
      %v5737 = vadd.f32 %v5735, %v5736
      %v5738 = vsel %vm1481, %v5534, 0.0
      %v5739 = vadd.f32 %v5737, %v5738
      %v5740 = vsel %vm1481, %v5535, 0.0
      %v5741 = vadd.f32 %v5739, %v5740
      %v5742 = vsel %vm1481, %v5536, 0.0
      %v5743 = vadd.f32 %v5741, %v5742
      %v5744 = vsel %vm1481, %v5537, 0.0
      %v5745 = vadd.f32 %v5743, %v5744
      %v5746 = vsel %vm1481, %v5538, 0.0
      %v5747 = vadd.f32 %v5745, %v5746
      %v5748 = vsel %vm1481, %v5539, 0.0
      %v5749 = vadd.f32 %v5747, %v5748
      %v5750 = vsel %vm1481, %v5540, 0.0
      %v5751 = vadd.f32 %v5749, %v5750
      %v5752 = vsel %vm1481, %v5541, 0.0
      %v5753 = vadd.f32 %v5751, %v5752
      %v5754 = vsel %vm1481, %v5542, 0.0
      %v5755 = vadd.f32 %v5753, %v5754
      %v5756 = vsel %vm1481, %v5543, 0.0
      %v5757 = vadd.f32 %v5755, %v5756
      %v5758 = vsel %vm1481, %v5544, 0.0
      %v5759 = vadd.f32 %v5757, %v5758
      %v5760 = vsel %vm1481, %v5545, 0.0
      %v5761 = vadd.f32 %v5759, %v5760
      %v5762 = vsel %vm1481, %v5546, 0.0
      %v5763 = vadd.f32 %v5761, %v5762
      %v5764 = vsel %vm1481, %v5547, 0.0
      %v5765 = vadd.f32 %v5763, %v5764
      %v5766 = vsel %vm1481, %v5548, 0.0
      %v5767 = vadd.f32 %v5765, %v5766
      %v5768 = vsel %vm1481, %v5549, 0.0
      %v5769 = vadd.f32 %v5767, %v5768
      %v5770 = vsel %vm1481, %v5550, 0.0
      %v5771 = vadd.f32 %v5769, %v5770
      %v5772 = vsel %vm1481, %v5551, 0.0
      %v5773 = vadd.f32 %v5771, %v5772
      %v5774 = vsel %vm1481, %v5552, 0.0
      %v5775 = vadd.f32 %v5773, %v5774
      %v5776 = vrot.slane %v5775, 4
      %v5777 = vadd.f32 %v5775, %v5776
      %v5778 = vrot.slane %v5777, 2
      %v5779 = vadd.f32 %v5777, %v5778
      %v5780 = vrot.slane %v5779, 1
      %v5781 = vadd.f32 %v5779, %v5780
      %v5782 = vmul.f32 %v5521, %v5521
      %v5783 = vmul.f32 %v5522, %v5522
      %v5784 = vmul.f32 %v5523, %v5523
      %v5785 = vmul.f32 %v5524, %v5524
      %v5786 = vmul.f32 %v5525, %v5525
      %v5787 = vmul.f32 %v5526, %v5526
      %v5788 = vmul.f32 %v5527, %v5527
      %v5789 = vmul.f32 %v5528, %v5528
      %v5790 = vmul.f32 %v5529, %v5529
      %v5791 = vmul.f32 %v5530, %v5530
      %v5792 = vmul.f32 %v5531, %v5531
      %v5793 = vmul.f32 %v5532, %v5532
      %v5794 = vmul.f32 %v5533, %v5533
      %v5795 = vmul.f32 %v5534, %v5534
      %v5796 = vmul.f32 %v5535, %v5535
      %v5797 = vmul.f32 %v5536, %v5536
      %v5798 = vmul.f32 %v5537, %v5537
      %v5799 = vmul.f32 %v5538, %v5538
      %v5800 = vmul.f32 %v5539, %v5539
      %v5801 = vmul.f32 %v5540, %v5540
      %v5802 = vmul.f32 %v5541, %v5541
      %v5803 = vmul.f32 %v5542, %v5542
      %v5804 = vmul.f32 %v5543, %v5543
      %v5805 = vmul.f32 %v5544, %v5544
      %v5806 = vmul.f32 %v5545, %v5545
      %v5807 = vmul.f32 %v5546, %v5546
      %v5808 = vmul.f32 %v5547, %v5547
      %v5809 = vmul.f32 %v5548, %v5548
      %v5810 = vmul.f32 %v5549, %v5549
      %v5811 = vmul.f32 %v5550, %v5550
      %v5812 = vmul.f32 %v5551, %v5551
      %v5813 = vmul.f32 %v5552, %v5552
      %v5814 = vsel %vm1481, %v5782, 0.0
      %v5815 = vsel %vm1481, %v5783, 0.0
      %v5816 = vadd.f32 %v5814, %v5815
      %v5817 = vsel %vm1481, %v5784, 0.0
      %v5818 = vadd.f32 %v5816, %v5817
      %v5819 = vsel %vm1481, %v5785, 0.0
      %v5820 = vadd.f32 %v5818, %v5819
      %v5821 = vsel %vm1481, %v5786, 0.0
      %v5822 = vadd.f32 %v5820, %v5821
      %v5823 = vsel %vm1481, %v5787, 0.0
      %v5824 = vadd.f32 %v5822, %v5823
      %v5825 = vsel %vm1481, %v5788, 0.0
      %v5826 = vadd.f32 %v5824, %v5825
      %v5827 = vsel %vm1481, %v5789, 0.0
      %v5828 = vadd.f32 %v5826, %v5827
      %v5829 = vsel %vm1481, %v5790, 0.0
      %v5830 = vadd.f32 %v5828, %v5829
      %v5831 = vsel %vm1481, %v5791, 0.0
      %v5832 = vadd.f32 %v5830, %v5831
      %v5833 = vsel %vm1481, %v5792, 0.0
      %v5834 = vadd.f32 %v5832, %v5833
      %v5835 = vsel %vm1481, %v5793, 0.0
      %v5836 = vadd.f32 %v5834, %v5835
      %v5837 = vsel %vm1481, %v5794, 0.0
      %v5838 = vadd.f32 %v5836, %v5837
      %v5839 = vsel %vm1481, %v5795, 0.0
      %v5840 = vadd.f32 %v5838, %v5839
      %v5841 = vsel %vm1481, %v5796, 0.0
      %v5842 = vadd.f32 %v5840, %v5841
      %v5843 = vsel %vm1481, %v5797, 0.0
      %v5844 = vadd.f32 %v5842, %v5843
      %v5845 = vsel %vm1481, %v5798, 0.0
      %v5846 = vadd.f32 %v5844, %v5845
      %v5847 = vsel %vm1481, %v5799, 0.0
      %v5848 = vadd.f32 %v5846, %v5847
      %v5849 = vsel %vm1481, %v5800, 0.0
      %v5850 = vadd.f32 %v5848, %v5849
      %v5851 = vsel %vm1481, %v5801, 0.0
      %v5852 = vadd.f32 %v5850, %v5851
      %v5853 = vsel %vm1481, %v5802, 0.0
      %v5854 = vadd.f32 %v5852, %v5853
      %v5855 = vsel %vm1481, %v5803, 0.0
      %v5856 = vadd.f32 %v5854, %v5855
      %v5857 = vsel %vm1481, %v5804, 0.0
      %v5858 = vadd.f32 %v5856, %v5857
      %v5859 = vsel %vm1481, %v5805, 0.0
      %v5860 = vadd.f32 %v5858, %v5859
      %v5861 = vsel %vm1481, %v5806, 0.0
      %v5862 = vadd.f32 %v5860, %v5861
      %v5863 = vsel %vm1481, %v5807, 0.0
      %v5864 = vadd.f32 %v5862, %v5863
      %v5865 = vsel %vm1481, %v5808, 0.0
      %v5866 = vadd.f32 %v5864, %v5865
      %v5867 = vsel %vm1481, %v5809, 0.0
      %v5868 = vadd.f32 %v5866, %v5867
      %v5869 = vsel %vm1481, %v5810, 0.0
      %v5870 = vadd.f32 %v5868, %v5869
      %v5871 = vsel %vm1481, %v5811, 0.0
      %v5872 = vadd.f32 %v5870, %v5871
      %v5873 = vsel %vm1481, %v5812, 0.0
      %v5874 = vadd.f32 %v5872, %v5873
      %v5875 = vsel %vm1481, %v5813, 0.0
      %v5876 = vadd.f32 %v5874, %v5875
      %v5877 = vrot.slane %v5876, 4
      %v5878 = vadd.f32 %v5876, %v5877
      %v5879 = vrot.slane %v5878, 2
      %v5880 = vadd.f32 %v5878, %v5879
      %v5881 = vrot.slane %v5880, 1
      %v5882 = vadd.f32 %v5880, %v5881
      // Predicated region
      $region41: #{bottleneck_forward.5} parent=35 // pred_check
        %p5883 = pneg %p224
      $region42: #{bottleneck_forward.5} parent=35 // pred_check_branch
        %5885 = sbr.rel (%p5883) target = $region44
      $region43: #{bottleneck_forward.5} parent=35 // pred_region
        %vm5886 = vcmask 25600
        %5887 = vst.msk [vmem:[%s5] sm:$0x3] %vm5886, 0.0
      $region44: #{bottleneck_forward.5} parent=35 // pred_fallthru
        _
      %v5888 = vld [vmem:[%s5] sm:$0x3]
      %vm5889 = vcmask 1040384
      %v5890 = vsel %vm5889, %v5781, %v5882
      %v5891 = vadd.f32 %v5888, %v5890
      %vm5892 = vcmask 25600
      %5893 = vst.msk [vmem:[%s5] sm:$0x3] %vm5892, %v5891
      %p5894 = scmp.lt.s32.totalorder %s17, 1
      %s5895 = scalar_select %p5894, %s17, 1
      %s5896 = smul.addr %s5895, 32
      %s5897 = smul.addr %s5896, 4
      %s5898 = scalar_lea.vmem %s4, %s5897
      // Predicated region
      $region45: #{bottleneck_forward.5} parent=35 // pred_check
        %p5899 = pneg %p124
      $region46: #{bottleneck_forward.5} parent=35 // pred_check_branch
        %5901 = sbr.rel (%p5899) target = $region48
      $region47: #{bottleneck_forward.5} parent=35 // pred_region
        _
      $region48: #{bottleneck_forward.5} parent=35 // pred_fallthru
        _
      // Predicated region
      $region49: #{bottleneck_forward.5} parent=35 // pred_check
        %p5902 = pneg %p145
      $region50: #{bottleneck_forward.5} parent=35 // pred_check_branch
        %5904 = sbr.rel (%p5902) target = $region52
      $region51: #{bottleneck_forward.5} parent=35 // pred_region
        _
      $region52: #{bottleneck_forward.5} parent=35 // pred_fallthru
        _
      // Predicated region
      $region53: #{bottleneck_forward.5} parent=35 // pred_check
        %p5905 = pneg %p145
      $region54: #{bottleneck_forward.5} parent=35 // pred_check_branch
        %5907 = sbr.rel (%p5905) target = $region56
      $region55: #{bottleneck_forward.5} parent=35 // pred_region
        _
      $region56: #{bottleneck_forward.5} parent=35 // pred_fallthru
        _
    $region36: #{bottleneck_forward.5} parent=5 // pred_fallthru
      _
    %p5908 = scmp.le.s32.totalorder 2, %s12
    // Predicated region
    $region57: #{bottleneck_forward.5} parent=5 // pred_check
      %p5909 = pneg %p5908
    $region58: #{bottleneck_forward.5} parent=5 // pred_check_branch
      %5911 = sbr.rel (%p5909) target = $region60
    $region59: #{bottleneck_forward.5} parent=5 // pred_region
      %s5912 = ssub.s32 %s12, 2
      // Predicated region
      $region61: #{bottleneck_forward.5} parent=59 // pred_check
        %p5913 = pneg %p130
      $region62: #{bottleneck_forward.5} parent=59 // pred_check_branch
        %5915 = sbr.rel (%p5913) target = $region64
      $region63: #{bottleneck_forward.5} parent=59 // pred_region
        %p5916 = scmp.lt.s32.totalorder %s18, 1
        %s5917 = scalar_select %p5916, %s18, 1
        %s5918 = smul.addr %s5917, 32
        %s5919 = smul.addr %s5918, 4
        %s5920 = scalar_lea.vmem %s4, %s5919
      $region64: #{bottleneck_forward.5} parent=59 // pred_fallthru
        _
    $region60: #{bottleneck_forward.5} parent=5 // pred_fallthru
      _
  $region6: #{bottleneck_forward.5} parent=0 // loop_footer
    %s16 = sadd.s32 1, %s12
  $region7: #{bottleneck_forward.5} parent=0 // loop_footer_branch
    %11 = sbr.rel target = $region3
  $region8: #{bottleneck_forward.5} parent=0 // loop_exit
    _

</llo_original>
